<compile_context>
chip_gen: v7x
topology: tpu7x:2x2x1
jax: 0.10.0
libtpu: 0.0.40
codegen_flags: <defaults>
</compile_context>

<pallas_src>
import functools

import jax
import jax.numpy as jnp
from jax import lax
from jax.experimental import pallas as pl
from jax.experimental.pallas import tpu as pltpu


# ---------------------------------------------------------------------------
# Helpers
# ---------------------------------------------------------------------------
def _round_up(x, m):
    return ((x + m - 1) // m) * m


def _cdiv(a, b):
    return (a + b - 1) // b


def _compute_vmem_budget_bytes():
    # Half of physical VMEM -> headroom for double-buffering + compiler scratch.
    # (v5e/v6e: 64 MiB budget, v7x: 32 MiB.)
    try:
        info = pltpu.get_tpu_info()
        cap = getattr(info, "vmem_capacity_bytes", None)
        if cap:
            return int(cap) // 2
    except Exception:
        pass
    return 32 << 20  # safe fallback on any generation


_VMEM_BUDGET_BYTES = _compute_vmem_budget_bytes()


# ---------------------------------------------------------------------------
# Fused conv kernel: 5x5 / stride-2 / pad-2 conv + bias + LeakyReLU(0.2).
#
# Input block  : (R+2, 2, BW, 2C) -- (pair-rows, row parity, col pairs, col parity*C)
#                 = padded input rows [2*oh0, 2*oh0 + 2R + 3] of one image.
# Weight block : (5, 3, 2C, OCp)  -- Wk[kh, dw, p*C + c, oc] = W[oc, c, kh, 2*dw + p]
#                 (zero for the non-existent tap 2*dw + p == 5).
# Bias block   : (1, OCp) f32.
# Output block : (R, OW, OCp)     -- R output rows, written exactly once per step.
# ---------------------------------------------------------------------------
def _make_conv_lrelu_kernel(R, OW, C, OCp):
    def kernel(x_ref, w_ref, b_ref, o_ref):
        acc = jnp.zeros((R * OW, OCp), jnp.float32)
        for kh in range(5):                       # fully unrolled: 5 x 3 = 15 dots
            pr, par = kh // 2, kh % 2
            row = x_ref[pr:pr + R, par, :, :]     # (R, BW, 2C)
            for dw in range(3):
                xs = row[:, dw:dw + OW, :].reshape(R * OW, 2 * C)
                acc = acc + jnp.dot(xs, w_ref[kh, dw, :, :],
                                    preferred_element_type=jnp.float32)
        y = acc + b_ref[...]                      # (R*OW, OCp) + (1, OCp)
        y = jnp.where(y > 0, y, 0.2 * y)          # LeakyReLU(0.2)
        o_ref[...] = y.reshape(R, OW, OCp).astype(o_ref.dtype)
    return kernel


def _pick_rows_per_tile(OH, OW, C, OCp, out_itemsize):
    """Rows of output per grid step: target ~1k output pixels, capped by VMEM budget."""
    BW = OW + 2
    R = max(1, min(OH, _cdiv(1024, max(OW, 1))))

    def vmem_bytes(r):
        in_blk = (r + 2) * 2 * _round_up(BW, 8) * _round_up(2 * C, 128) * 2
        w_blk = 5 * 3 * _round_up(2 * C, 8) * _round_up(OCp, 128) * 2
        out_blk = r * _round_up(OW, 8) * OCp * out_itemsize
        acc = _round_up(r * OW, 8) * OCp * 4
        # double-buffered in/out blocks + resident weights + acc + one slice temp
        return 2 * in_blk + w_blk + 2 * out_blk + acc + in_blk

    while R > 1 and vmem_bytes(R) > (_VMEM_BUDGET_BYTES * 3) // 4:
        R = max(1, R // 2)
    return R


# ---------------------------------------------------------------------------
# One dis_conv layer: Conv2d(k=5, s=2, p=2) + LeakyReLU(0.2), NHWC in/out.
# ---------------------------------------------------------------------------
def dis_conv_layer(x_nhwc, wk, b2d, out_ch, *, out_dtype=jnp.bfloat16):
    N, H, W, C = x_nhwc.shape
    OH = (H - 1) // 2 + 1
    OW = (W - 1) // 2 + 1
    kh5, dw3, twoC, OCp = wk.shape
    assert (kh5, dw3, twoC) == (5, 3, 2 * C), (wk.shape, C)

    out_itemsize = jnp.dtype(out_dtype).itemsize
    R = _pick_rows_per_tile(OH, OW, C, OCp, out_itemsize)
    T = _cdiv(OH, R)
    OHp = T * R
    BW = OW + 2
    HP = 2 * (OHp + 2)                      # padded rows (>= 2*OH + 3 needed)
    WP = 2 * BW                             # padded cols (>= 2*OW + 3 needed)

    # Zero padding (top/left = 2 exactly as the PyTorch conv; extra bottom/right rows
    # only feed output rows that are sliced off) + (pair, parity) layout reshape.
    xp = jnp.pad(x_nhwc, ((0, 0), (2, HP - 2 - H), (2, WP - 2 - W), (0, 0)))
    x_prep = xp.reshape(N, OHp + 2, 2, BW, 2 * C)
    # Halo-duplicated row tiles (2 pair-rows of overlap) so BlockSpec tiles are
    # disjoint and the standard auto-pipeline handles every DMA.
    x_halo = jnp.stack(
        [x_prep[:, t * R:t * R + R + 2] for t in range(T)], axis=1
    )  # (N, T, R+2, 2, BW, 2C)

    kernel = _make_conv_lrelu_kernel(R, OW, C, OCp)
    flops = 2 * N * OH * OW * 25 * C * out_ch
    bytes_accessed = (x_halo.size * x_halo.dtype.itemsize
                      + wk.size * wk.dtype.itemsize
                      + b2d.size * b2d.dtype.itemsize
                      + N * OHp * OW * OCp * out_itemsize)

    out = pl.pallas_call(
        kernel,
        out_shape=jax.ShapeDtypeStruct((N, OHp, OW, OCp), out_dtype),
        grid_spec=pltpu.PrefetchScalarGridSpec(
            num_scalar_prefetch=0,
            grid=(N, T),
            in_specs=[
                pl.BlockSpec((None, None, R + 2, 2, BW, 2 * C),
                             lambda n, t: (n, t, 0, 0, 0, 0)),
                pl.BlockSpec((5, 3, 2 * C, OCp), lambda n, t: (0, 0, 0, 0)),
                pl.BlockSpec((1, OCp), lambda n, t: (0, 0)),
            ],
            out_specs=pl.BlockSpec((None, R, OW, OCp), lambda n, t: (n, t, 0, 0)),
        ),
        compiler_params=pltpu.CompilerParams(
            dimension_semantics=("parallel", "parallel"),
            vmem_limit_bytes=_VMEM_BUDGET_BYTES,
        ),
        cost_estimate=pl.CostEstimate(flops=flops, transcendentals=0,
                                      bytes_accessed=bytes_accessed),
    )(x_halo, wk, b2d)

    return out[:, :OH, :, :out_ch]


# ---------------------------------------------------------------------------
# Parameter init (PyTorch layout) + one-time packing to kernel layout
# ---------------------------------------------------------------------------
def init_dis_conv_module(key, input_dim, cnum):
    dims = [(input_dim, cnum), (cnum, 2 * cnum), (2 * cnum, 4 * cnum),
            (4 * cnum, 4 * cnum)]
    params = []
    for i, (cin, cout) in enumerate(dims):
        kw_key, kb_key = jax.random.split(jax.random.fold_in(key, i))
        fan_in = cin * 5 * 5
        bound = 1.0 / jnp.sqrt(fan_in)
        w = jax.random.uniform(kw_key, (cout, cin, 5, 5), jnp.float32, -bound, bound)
        b = jax.random.uniform(kb_key, (cout,), jnp.float32, -bound, bound)
        params.append((w, b))
    return params


def pack_params(params):
    """Pre-pack weights once (outside the jitted forward):
       (OC, C, 5, 5) -> (5, 3, 2*C, OCpad) bf16 with Wk[kh,dw,p*C+c,oc] =
       W[oc,c,kh,2*dw+p] (zero for the padded tap 2*dw+p == 5); bias -> (1, OCpad) f32."""
    packed, out_channels = [], []
    for (w, b) in params:
        OC, C, KH, KW = w.shape
        assert (KH, KW) == (5, 5)
        OCp = _round_up(OC, 128)
        wt = jnp.transpose(w, (2, 3, 1, 0))                        # (5, 5, C, OC)
        wt = jnp.pad(wt, ((0, 0), (0, 1), (0, 0), (0, OCp - OC)))  # kw -> 6, OC -> OCp
        wk = wt.reshape(5, 3, 2 * C, OCp).astype(jnp.bfloat16)
        b2d = jnp.pad(b, (0, OCp - OC)).reshape(1, OCp).astype(jnp.float32)
        packed.append((wk, b2d))
        out_channels.append(OC)
    return packed, tuple(out_channels)


# ---------------------------------------------------------------------------
# DisConvModule forward
# ---------------------------------------------------------------------------
@functools.partial(jax.jit, static_argnums=(2,))
def dis_conv_module_forward(x_nchw, packed, out_channels):
    # x_nchw: (N, C, H, W) float32 -> (N, 4*cnum, H/16, W/16) NCHW float32
    x = jnp.transpose(x_nchw, (0, 2, 3, 1)).astype(jnp.bfloat16)  # NCHW -> NHWC, bf16
    n_layers = len(out_channels)
    for i, ((wk, b2d), oc) in enumerate(zip(packed, out_channels)):
        out_dtype = jnp.float32 if i == n_layers - 1 else jnp.bfloat16
        x = dis_conv_layer(x, wk, b2d, oc, out_dtype=out_dtype)
    return jnp.transpose(x, (0, 3, 1, 2))                          # NHWC -> NCHW


# ---------------------------------------------------------------------------
# Pure-JAX reference (f32) for correctness check
# ---------------------------------------------------------------------------
def _reference_forward(x_nchw, params):
    x = x_nchw
    for (w, b) in params:
        y = lax.conv_general_dilated(
            x, w, window_strides=(2, 2), padding=((2, 2), (2, 2)),
            dimension_numbers=("NCHW", "OIHW", "NCHW"))
        y = y + b[None, :, None, None]
        x = jnp.where(y > 0, y, 0.2 * y)
    return x


if __name__ == "__main__":
    key = jax.random.PRNGKey(0)
    input_dim, cnum = 4, 8
    N, H, W = 2, 16, 16

    k_x, k_p = jax.random.split(key)
    x = jax.random.normal(k_x, (N, input_dim, H, W), jnp.float32)
    params = init_dis_conv_module(k_p, input_dim, cnum)
    packed, out_channels = pack_params(params)

    out = dis_conv_module_forward(x, packed, out_channels)
    out = jax.block_until_ready(out)

    ref = _reference_forward(x, params)
    assert out.shape == (N, 4 * cnum, H // 16, W // 16), out.shape
    # bf16 MXU operands + bf16 inter-layer activations (f32 accumulation) -> small
    # drift vs. the all-f32 reference.
    max_err = float(jnp.max(jnp.abs(out - ref)))
    assert max_err < 5e-2, f"mismatch vs reference, max abs err={max_err}"

    print("KERNEL_OK")
</pallas_src>

<mosaic_0001>
module attributes {stable_mosaic.version = 11 : i64} {
  func.func @kernel(%arg0: i32, %arg1: i32, %arg2: memref<1x1x10x2x10x8xbf16, #tpu.memory_space<vmem>>, %arg3: memref<5x3x8x128xbf16, #tpu.memory_space<vmem>>, %arg4: memref<1x128xf32, #tpu.memory_space<vmem>>, %arg5: memref<1x8x8x128xbf16, #tpu.memory_space<vmem>>) attributes {dimension_semantics = [#tpu.dimension_semantics<parallel>, #tpu.dimension_semantics<parallel>], iteration_bounds = array<i64: 2, 1>, scalar_prefetch = 0 : i64, scratch_operands = 0 : i64, tpu.core_type = #tpu.core_type<tc>, window_params = [{transform_indices = @transform_0, window_bounds = array<i64: 1, 1, 10, 2, 10, 8>}, {pipeline_mode = #tpu.pipeline_mode<synchronous>, transform_indices = @transform_1, window_bounds = array<i64: 5, 3, 8, 128>}, {pipeline_mode = #tpu.pipeline_mode<synchronous>, transform_indices = @transform_2, window_bounds = array<i64: 1, 128>}, {transform_indices = @transform_3, window_bounds = array<i64: 1, 8, 8, 128>}]} {
    %cst = arith.constant 0.000000e+00 : f32
    %0 = vector.broadcast %cst : f32 to vector<64x128xf32>
    %c0 = arith.constant 0 : index
    %c0_0 = arith.constant 0 : index
    %c0_1 = arith.constant 0 : index
    %c0_2 = arith.constant 0 : index
    %c0_3 = arith.constant 0 : index
    %c0_4 = arith.constant 0 : index
    %1 = vector.load %arg2[%c0, %c0_0, %c0_1, %c0_2, %c0_3, %c0_4] : memref<1x1x10x2x10x8xbf16, #tpu.memory_space<vmem>>, vector<1x1x8x1x10x8xbf16>
    %2 = vector.shape_cast %1 : vector<1x1x8x1x10x8xbf16> to vector<8x10x8xbf16>
    %3 = vector.extract_strided_slice %2 {offsets = [0, 0, 0], sizes = [8, 8, 8], strides = [1, 1, 1]} : vector<8x10x8xbf16> to vector<8x8x8xbf16>
    %4 = vector.shape_cast %3 : vector<8x8x8xbf16> to vector<64x8xbf16>
    %c0_5 = arith.constant 0 : index
    %c0_6 = arith.constant 0 : index
    %c0_7 = arith.constant 0 : index
    %c0_8 = arith.constant 0 : index
    %5 = vector.load %arg3[%c0_5, %c0_6, %c0_7, %c0_8] : memref<5x3x8x128xbf16, #tpu.memory_space<vmem>>, vector<1x1x8x128xbf16>
    %6 = vector.shape_cast %5 : vector<1x1x8x128xbf16> to vector<8x128xbf16>
    %cst_9 = arith.constant dense<0.000000e+00> : vector<64x128xf32>
    %7 = tpu.matmul %4, %6, %cst_9 {dimension_numbers = #tpu.dot_dimension_numbers<[1], [0], [0], [1], [0, 0, 1, 1], [], []>} : vector<64x8xbf16>, vector<8x128xbf16>, vector<64x128xf32> -> vector<64x128xf32>
    %8 = arith.addf %0, %7 : vector<64x128xf32>
    %9 = vector.extract_strided_slice %2 {offsets = [0, 1, 0], sizes = [8, 8, 8], strides = [1, 1, 1]} : vector<8x10x8xbf16> to vector<8x8x8xbf16>
    %10 = vector.shape_cast %9 : vector<8x8x8xbf16> to vector<64x8xbf16>
    %c0_10 = arith.constant 0 : index
    %c1 = arith.constant 1 : index
    %c0_11 = arith.constant 0 : index
    %c0_12 = arith.constant 0 : index
    %11 = vector.load %arg3[%c0_10, %c1, %c0_11, %c0_12] : memref<5x3x8x128xbf16, #tpu.memory_space<vmem>>, vector<1x1x8x128xbf16>
    %12 = vector.shape_cast %11 : vector<1x1x8x128xbf16> to vector<8x128xbf16>
    %cst_13 = arith.constant dense<0.000000e+00> : vector<64x128xf32>
    %13 = tpu.matmul %10, %12, %cst_13 {dimension_numbers = #tpu.dot_dimension_numbers<[1], [0], [0], [1], [0, 0, 1, 1], [], []>} : vector<64x8xbf16>, vector<8x128xbf16>, vector<64x128xf32> -> vector<64x128xf32>
    %14 = arith.addf %8, %13 : vector<64x128xf32>
    %15 = vector.extract_strided_slice %2 {offsets = [0, 2, 0], sizes = [8, 8, 8], strides = [1, 1, 1]} : vector<8x10x8xbf16> to vector<8x8x8xbf16>
    %16 = vector.shape_cast %15 : vector<8x8x8xbf16> to vector<64x8xbf16>
    %c0_14 = arith.constant 0 : index
    %c2 = arith.constant 2 : index
    %c0_15 = arith.constant 0 : index
    %c0_16 = arith.constant 0 : index
    %17 = vector.load %arg3[%c0_14, %c2, %c0_15, %c0_16] : memref<5x3x8x128xbf16, #tpu.memory_space<vmem>>, vector<1x1x8x128xbf16>
    %18 = vector.shape_cast %17 : vector<1x1x8x128xbf16> to vector<8x128xbf16>
    %cst_17 = arith.constant dense<0.000000e+00> : vector<64x128xf32>
    %19 = tpu.matmul %16, %18, %cst_17 {dimension_numbers = #tpu.dot_dimension_numbers<[1], [0], [0], [1], [0, 0, 1, 1], [], []>} : vector<64x8xbf16>, vector<8x128xbf16>, vector<64x128xf32> -> vector<64x128xf32>
    %20 = arith.addf %14, %19 : vector<64x128xf32>
    %c0_18 = arith.constant 0 : index
    %c0_19 = arith.constant 0 : index
    %c0_20 = arith.constant 0 : index
    %c1_21 = arith.constant 1 : index
    %c0_22 = arith.constant 0 : index
    %c0_23 = arith.constant 0 : index
    %21 = vector.load %arg2[%c0_18, %c0_19, %c0_20, %c1_21, %c0_22, %c0_23] : memref<1x1x10x2x10x8xbf16, #tpu.memory_space<vmem>>, vector<1x1x8x1x10x8xbf16>
    %22 = vector.shape_cast %21 : vector<1x1x8x1x10x8xbf16> to vector<8x10x8xbf16>
    %23 = vector.extract_strided_slice %22 {offsets = [0, 0, 0], sizes = [8, 8, 8], strides = [1, 1, 1]} : vector<8x10x8xbf16> to vector<8x8x8xbf16>
    %24 = vector.shape_cast %23 : vector<8x8x8xbf16> to vector<64x8xbf16>
    %c1_24 = arith.constant 1 : index
    %c0_25 = arith.constant 0 : index
    %c0_26 = arith.constant 0 : index
    %c0_27 = arith.constant 0 : index
    %25 = vector.load %arg3[%c1_24, %c0_25, %c0_26, %c0_27] : memref<5x3x8x128xbf16, #tpu.memory_space<vmem>>, vector<1x1x8x128xbf16>
    %26 = vector.shape_cast %25 : vector<1x1x8x128xbf16> to vector<8x128xbf16>
    %cst_28 = arith.constant dense<0.000000e+00> : vector<64x128xf32>
    %27 = tpu.matmul %24, %26, %cst_28 {dimension_numbers = #tpu.dot_dimension_numbers<[1], [0], [0], [1], [0, 0, 1, 1], [], []>} : vector<64x8xbf16>, vector<8x128xbf16>, vector<64x128xf32> -> vector<64x128xf32>
    %28 = arith.addf %20, %27 : vector<64x128xf32>
    %29 = vector.extract_strided_slice %22 {offsets = [0, 1, 0], sizes = [8, 8, 8], strides = [1, 1, 1]} : vector<8x10x8xbf16> to vector<8x8x8xbf16>
    %30 = vector.shape_cast %29 : vector<8x8x8xbf16> to vector<64x8xbf16>
    %c1_29 = arith.constant 1 : index
    %c1_30 = arith.constant 1 : index
    %c0_31 = arith.constant 0 : index
    %c0_32 = arith.constant 0 : index
    %31 = vector.load %arg3[%c1_29, %c1_30, %c0_31, %c0_32] : memref<5x3x8x128xbf16, #tpu.memory_space<vmem>>, vector<1x1x8x128xbf16>
    %32 = vector.shape_cast %31 : vector<1x1x8x128xbf16> to vector<8x128xbf16>
    %cst_33 = arith.constant dense<0.000000e+00> : vector<64x128xf32>
    %33 = tpu.matmul %30, %32, %cst_33 {dimension_numbers = #tpu.dot_dimension_numbers<[1], [0], [0], [1], [0, 0, 1, 1], [], []>} : vector<64x8xbf16>, vector<8x128xbf16>, vector<64x128xf32> -> vector<64x128xf32>
    %34 = arith.addf %28, %33 : vector<64x128xf32>
    %35 = vector.extract_strided_slice %22 {offsets = [0, 2, 0], sizes = [8, 8, 8], strides = [1, 1, 1]} : vector<8x10x8xbf16> to vector<8x8x8xbf16>
    %36 = vector.shape_cast %35 : vector<8x8x8xbf16> to vector<64x8xbf16>
    %c1_34 = arith.constant 1 : index
    %c2_35 = arith.constant 2 : index
    %c0_36 = arith.constant 0 : index
    %c0_37 = arith.constant 0 : index
    %37 = vector.load %arg3[%c1_34, %c2_35, %c0_36, %c0_37] : memref<5x3x8x128xbf16, #tpu.memory_space<vmem>>, vector<1x1x8x128xbf16>
    %38 = vector.shape_cast %37 : vector<1x1x8x128xbf16> to vector<8x128xbf16>
    %cst_38 = arith.constant dense<0.000000e+00> : vector<64x128xf32>
    %39 = tpu.matmul %36, %38, %cst_38 {dimension_numbers = #tpu.dot_dimension_numbers<[1], [0], [0], [1], [0, 0, 1, 1], [], []>} : vector<64x8xbf16>, vector<8x128xbf16>, vector<64x128xf32> -> vector<64x128xf32>
    %40 = arith.addf %34, %39 : vector<64x128xf32>
    %c0_39 = arith.constant 0 : index
    %c0_40 = arith.constant 0 : index
    %c1_41 = arith.constant 1 : index
    %c0_42 = arith.constant 0 : index
    %c0_43 = arith.constant 0 : index
    %c0_44 = arith.constant 0 : index
    %41 = vector.load %arg2[%c0_39, %c0_40, %c1_41, %c0_42, %c0_43, %c0_44] : memref<1x1x10x2x10x8xbf16, #tpu.memory_space<vmem>>, vector<1x1x8x1x10x8xbf16>
    %42 = vector.shape_cast %41 : vector<1x1x8x1x10x8xbf16> to vector<8x10x8xbf16>
    %43 = vector.extract_strided_slice %42 {offsets = [0, 0, 0], sizes = [8, 8, 8], strides = [1, 1, 1]} : vector<8x10x8xbf16> to vector<8x8x8xbf16>
    %44 = vector.shape_cast %43 : vector<8x8x8xbf16> to vector<64x8xbf16>
    %c2_45 = arith.constant 2 : index
    %c0_46 = arith.constant 0 : index
    %c0_47 = arith.constant 0 : index
    %c0_48 = arith.constant 0 : index
    %45 = vector.load %arg3[%c2_45, %c0_46, %c0_47, %c0_48] : memref<5x3x8x128xbf16, #tpu.memory_space<vmem>>, vector<1x1x8x128xbf16>
    %46 = vector.shape_cast %45 : vector<1x1x8x128xbf16> to vector<8x128xbf16>
    %cst_49 = arith.constant dense<0.000000e+00> : vector<64x128xf32>
    %47 = tpu.matmul %44, %46, %cst_49 {dimension_numbers = #tpu.dot_dimension_numbers<[1], [0], [0], [1], [0, 0, 1, 1], [], []>} : vector<64x8xbf16>, vector<8x128xbf16>, vector<64x128xf32> -> vector<64x128xf32>
    %48 = arith.addf %40, %47 : vector<64x128xf32>
    %49 = vector.extract_strided_slice %42 {offsets = [0, 1, 0], sizes = [8, 8, 8], strides = [1, 1, 1]} : vector<8x10x8xbf16> to vector<8x8x8xbf16>
    %50 = vector.shape_cast %49 : vector<8x8x8xbf16> to vector<64x8xbf16>
    %c2_50 = arith.constant 2 : index
    %c1_51 = arith.constant 1 : index
    %c0_52 = arith.constant 0 : index
    %c0_53 = arith.constant 0 : index
    %51 = vector.load %arg3[%c2_50, %c1_51, %c0_52, %c0_53] : memref<5x3x8x128xbf16, #tpu.memory_space<vmem>>, vector<1x1x8x128xbf16>
    %52 = vector.shape_cast %51 : vector<1x1x8x128xbf16> to vector<8x128xbf16>
    %cst_54 = arith.constant dense<0.000000e+00> : vector<64x128xf32>
    %53 = tpu.matmul %50, %52, %cst_54 {dimension_numbers = #tpu.dot_dimension_numbers<[1], [0], [0], [1], [0, 0, 1, 1], [], []>} : vector<64x8xbf16>, vector<8x128xbf16>, vector<64x128xf32> -> vector<64x128xf32>
    %54 = arith.addf %48, %53 : vector<64x128xf32>
    %55 = vector.extract_strided_slice %42 {offsets = [0, 2, 0], sizes = [8, 8, 8], strides = [1, 1, 1]} : vector<8x10x8xbf16> to vector<8x8x8xbf16>
    %56 = vector.shape_cast %55 : vector<8x8x8xbf16> to vector<64x8xbf16>
    %c2_55 = arith.constant 2 : index
    %c2_56 = arith.constant 2 : index
    %c0_57 = arith.constant 0 : index
    %c0_58 = arith.constant 0 : index
    %57 = vector.load %arg3[%c2_55, %c2_56, %c0_57, %c0_58] : memref<5x3x8x128xbf16, #tpu.memory_space<vmem>>, vector<1x1x8x128xbf16>
    %58 = vector.shape_cast %57 : vector<1x1x8x128xbf16> to vector<8x128xbf16>
    %cst_59 = arith.constant dense<0.000000e+00> : vector<64x128xf32>
    %59 = tpu.matmul %56, %58, %cst_59 {dimension_numbers = #tpu.dot_dimension_numbers<[1], [0], [0], [1], [0, 0, 1, 1], [], []>} : vector<64x8xbf16>, vector<8x128xbf16>, vector<64x128xf32> -> vector<64x128xf32>
    %60 = arith.addf %54, %59 : vector<64x128xf32>
    %c0_60 = arith.constant 0 : index
    %c0_61 = arith.constant 0 : index
    %c1_62 = arith.constant 1 : index
    %c1_63 = arith.constant 1 : index
    %c0_64 = arith.constant 0 : index
    %c0_65 = arith.constant 0 : index
    %61 = vector.load %arg2[%c0_60, %c0_61, %c1_62, %c1_63, %c0_64, %c0_65] : memref<1x1x10x2x10x8xbf16, #tpu.memory_space<vmem>>, vector<1x1x8x1x10x8xbf16>
    %62 = vector.shape_cast %61 : vector<1x1x8x1x10x8xbf16> to vector<8x10x8xbf16>
    %63 = vector.extract_strided_slice %62 {offsets = [0, 0, 0], sizes = [8, 8, 8], strides = [1, 1, 1]} : vector<8x10x8xbf16> to vector<8x8x8xbf16>
    %64 = vector.shape_cast %63 : vector<8x8x8xbf16> to vector<64x8xbf16>
    %c3 = arith.constant 3 : index
    %c0_66 = arith.constant 0 : index
    %c0_67 = arith.constant 0 : index
    %c0_68 = arith.constant 0 : index
    %65 = vector.load %arg3[%c3, %c0_66, %c0_67, %c0_68] : memref<5x3x8x128xbf16, #tpu.memory_space<vmem>>, vector<1x1x8x128xbf16>
    %66 = vector.shape_cast %65 : vector<1x1x8x128xbf16> to vector<8x128xbf16>
    %cst_69 = arith.constant dense<0.000000e+00> : vector<64x128xf32>
    %67 = tpu.matmul %64, %66, %cst_69 {dimension_numbers = #tpu.dot_dimension_numbers<[1], [0], [0], [1], [0, 0, 1, 1], [], []>} : vector<64x8xbf16>, vector<8x128xbf16>, vector<64x128xf32> -> vector<64x128xf32>
    %68 = arith.addf %60, %67 : vector<64x128xf32>
    %69 = vector.extract_strided_slice %62 {offsets = [0, 1, 0], sizes = [8, 8, 8], strides = [1, 1, 1]} : vector<8x10x8xbf16> to vector<8x8x8xbf16>
    %70 = vector.shape_cast %69 : vector<8x8x8xbf16> to vector<64x8xbf16>
    %c3_70 = arith.constant 3 : index
    %c1_71 = arith.constant 1 : index
    %c0_72 = arith.constant 0 : index
    %c0_73 = arith.constant 0 : index
    %71 = vector.load %arg3[%c3_70, %c1_71, %c0_72, %c0_73] : memref<5x3x8x128xbf16, #tpu.memory_space<vmem>>, vector<1x1x8x128xbf16>
    %72 = vector.shape_cast %71 : vector<1x1x8x128xbf16> to vector<8x128xbf16>
    %cst_74 = arith.constant dense<0.000000e+00> : vector<64x128xf32>
    %73 = tpu.matmul %70, %72, %cst_74 {dimension_numbers = #tpu.dot_dimension_numbers<[1], [0], [0], [1], [0, 0, 1, 1], [], []>} : vector<64x8xbf16>, vector<8x128xbf16>, vector<64x128xf32> -> vector<64x128xf32>
    %74 = arith.addf %68, %73 : vector<64x128xf32>
    %75 = vector.extract_strided_slice %62 {offsets = [0, 2, 0], sizes = [8, 8, 8], strides = [1, 1, 1]} : vector<8x10x8xbf16> to vector<8x8x8xbf16>
    %76 = vector.shape_cast %75 : vector<8x8x8xbf16> to vector<64x8xbf16>
    %c3_75 = arith.constant 3 : index
    %c2_76 = arith.constant 2 : index
    %c0_77 = arith.constant 0 : index
    %c0_78 = arith.constant 0 : index
    %77 = vector.load %arg3[%c3_75, %c2_76, %c0_77, %c0_78] : memref<5x3x8x128xbf16, #tpu.memory_space<vmem>>, vector<1x1x8x128xbf16>
    %78 = vector.shape_cast %77 : vector<1x1x8x128xbf16> to vector<8x128xbf16>
    %cst_79 = arith.constant dense<0.000000e+00> : vector<64x128xf32>
    %79 = tpu.matmul %76, %78, %cst_79 {dimension_numbers = #tpu.dot_dimension_numbers<[1], [0], [0], [1], [0, 0, 1, 1], [], []>} : vector<64x8xbf16>, vector<8x128xbf16>, vector<64x128xf32> -> vector<64x128xf32>
    %80 = arith.addf %74, %79 : vector<64x128xf32>
    %c0_80 = arith.constant 0 : index
    %c0_81 = arith.constant 0 : index
    %c2_82 = arith.constant 2 : index
    %c0_83 = arith.constant 0 : index
    %c0_84 = arith.constant 0 : index
    %c0_85 = arith.constant 0 : index
    %81 = vector.load %arg2[%c0_80, %c0_81, %c2_82, %c0_83, %c0_84, %c0_85] : memref<1x1x10x2x10x8xbf16, #tpu.memory_space<vmem>>, vector<1x1x8x1x10x8xbf16>
    %82 = vector.shape_cast %81 : vector<1x1x8x1x10x8xbf16> to vector<8x10x8xbf16>
    %83 = vector.extract_strided_slice %82 {offsets = [0, 0, 0], sizes = [8, 8, 8], strides = [1, 1, 1]} : vector<8x10x8xbf16> to vector<8x8x8xbf16>
    %84 = vector.shape_cast %83 : vector<8x8x8xbf16> to vector<64x8xbf16>
    %c4 = arith.constant 4 : index
    %c0_86 = arith.constant 0 : index
    %c0_87 = arith.constant 0 : index
    %c0_88 = arith.constant 0 : index
    %85 = vector.load %arg3[%c4, %c0_86, %c0_87, %c0_88] : memref<5x3x8x128xbf16, #tpu.memory_space<vmem>>, vector<1x1x8x128xbf16>
    %86 = vector.shape_cast %85 : vector<1x1x8x128xbf16> to vector<8x128xbf16>
    %cst_89 = arith.constant dense<0.000000e+00> : vector<64x128xf32>
    %87 = tpu.matmul %84, %86, %cst_89 {dimension_numbers = #tpu.dot_dimension_numbers<[1], [0], [0], [1], [0, 0, 1, 1], [], []>} : vector<64x8xbf16>, vector<8x128xbf16>, vector<64x128xf32> -> vector<64x128xf32>
    %88 = arith.addf %80, %87 : vector<64x128xf32>
    %89 = vector.extract_strided_slice %82 {offsets = [0, 1, 0], sizes = [8, 8, 8], strides = [1, 1, 1]} : vector<8x10x8xbf16> to vector<8x8x8xbf16>
    %90 = vector.shape_cast %89 : vector<8x8x8xbf16> to vector<64x8xbf16>
    %c4_90 = arith.constant 4 : index
    %c1_91 = arith.constant 1 : index
    %c0_92 = arith.constant 0 : index
    %c0_93 = arith.constant 0 : index
    %91 = vector.load %arg3[%c4_90, %c1_91, %c0_92, %c0_93] : memref<5x3x8x128xbf16, #tpu.memory_space<vmem>>, vector<1x1x8x128xbf16>
    %92 = vector.shape_cast %91 : vector<1x1x8x128xbf16> to vector<8x128xbf16>
    %cst_94 = arith.constant dense<0.000000e+00> : vector<64x128xf32>
    %93 = tpu.matmul %90, %92, %cst_94 {dimension_numbers = #tpu.dot_dimension_numbers<[1], [0], [0], [1], [0, 0, 1, 1], [], []>} : vector<64x8xbf16>, vector<8x128xbf16>, vector<64x128xf32> -> vector<64x128xf32>
    %94 = arith.addf %88, %93 : vector<64x128xf32>
    %95 = vector.extract_strided_slice %82 {offsets = [0, 2, 0], sizes = [8, 8, 8], strides = [1, 1, 1]} : vector<8x10x8xbf16> to vector<8x8x8xbf16>
    %96 = vector.shape_cast %95 : vector<8x8x8xbf16> to vector<64x8xbf16>
    %c4_95 = arith.constant 4 : index
    %c2_96 = arith.constant 2 : index
    %c0_97 = arith.constant 0 : index
    %c0_98 = arith.constant 0 : index
    %97 = vector.load %arg3[%c4_95, %c2_96, %c0_97, %c0_98] : memref<5x3x8x128xbf16, #tpu.memory_space<vmem>>, vector<1x1x8x128xbf16>
    %98 = vector.shape_cast %97 : vector<1x1x8x128xbf16> to vector<8x128xbf16>
    %cst_99 = arith.constant dense<0.000000e+00> : vector<64x128xf32>
    %99 = tpu.matmul %96, %98, %cst_99 {dimension_numbers = #tpu.dot_dimension_numbers<[1], [0], [0], [1], [0, 0, 1, 1], [], []>} : vector<64x8xbf16>, vector<8x128xbf16>, vector<64x128xf32> -> vector<64x128xf32>
    %100 = arith.addf %94, %99 : vector<64x128xf32>
    %c0_100 = arith.constant 0 : index
    %c0_101 = arith.constant 0 : index
    %101 = vector.load %arg4[%c0_100, %c0_101] : memref<1x128xf32, #tpu.memory_space<vmem>>, vector<1x128xf32>
    %102 = vector.broadcast %101 : vector<1x128xf32> to vector<64x128xf32>
    %103 = arith.addf %100, %102 : vector<64x128xf32>
    %cst_102 = arith.constant 0.000000e+00 : f32
    %104 = vector.broadcast %cst_102 : f32 to vector<64x128xf32>
    %105 = arith.cmpf ogt, %103, %104 : vector<64x128xf32>
    %cst_103 = arith.constant 2.000000e-01 : f32
    %106 = vector.broadcast %cst_103 : f32 to vector<64x128xf32>
    %107 = arith.mulf %106, %103 : vector<64x128xf32>
    %108 = arith.select %105, %103, %107 : vector<64x128xi1>, vector<64x128xf32>
    %109 = vector.shape_cast %108 : vector<64x128xf32> to vector<8x8x128xf32>
    %110 = arith.truncf %109 : vector<8x8x128xf32> to vector<8x8x128xbf16>
    %c0_104 = arith.constant 0 : index
    %c0_105 = arith.constant 0 : index
    %c0_106 = arith.constant 0 : index
    %c0_107 = arith.constant 0 : index
    %111 = vector.load %arg5[%c0_104, %c0_105, %c0_106, %c0_107] : memref<1x8x8x128xbf16, #tpu.memory_space<vmem>>, vector<1x8x8x128xbf16>
    %112 = vector.shape_cast %111 : vector<1x8x8x128xbf16> to vector<8x8x128xbf16>
    %113 = vector.shape_cast %110 : vector<8x8x128xbf16> to vector<1x8x8x128xbf16>
    tpu.vector_store %arg5[%c0_104, %c0_105, %c0_106, %c0_107], %113 {strides = array<i32>} : memref<1x8x8x128xbf16, #tpu.memory_space<vmem>>, vector<1x8x8x128xbf16>,
    return
  }
  func.func @transform_0(%arg0: i32, %arg1: i32) -> (i32, i32, i32, i32, i32, i32) {
    %c0_i32 = arith.constant 0 : i32
    %c0_i32_0 = arith.constant 0 : i32
    %c0_i32_1 = arith.constant 0 : i32
    %c0_i32_2 = arith.constant 0 : i32
    %c0_i32_3 = arith.constant 0 : i32
    return %arg0, %arg1, %c0_i32, %c0_i32_0, %c0_i32_1, %c0_i32_2 : i32, i32, i32, i32, i32, i32
  }
  func.func @transform_1(%arg0: i32, %arg1: i32) -> (i32, i32, i32, i32) {
    %c0_i32 = arith.constant 0 : i32
    %c0_i32_0 = arith.constant 0 : i32
    %c0_i32_1 = arith.constant 0 : i32
    %c0_i32_2 = arith.constant 0 : i32
    %c0_i32_3 = arith.constant 0 : i32
    return %c0_i32, %c0_i32_0, %c0_i32_1, %c0_i32_2 : i32, i32, i32, i32
  }
  func.func @transform_2(%arg0: i32, %arg1: i32) -> (i32, i32) {
    %c0_i32 = arith.constant 0 : i32
    %c0_i32_0 = arith.constant 0 : i32
    %c0_i32_1 = arith.constant 0 : i32
    return %c0_i32, %c0_i32_0 : i32, i32
  }
  func.func @transform_3(%arg0: i32, %arg1: i32) -> (i32, i32, i32, i32) {
    %c0_i32 = arith.constant 0 : i32
    %c0_i32_0 = arith.constant 0 : i32
    %c0_i32_1 = arith.constant 0 : i32
    return %arg0, %arg1, %c0_i32, %c0_i32_0 : i32, i32, i32, i32
  }
}

module attributes {stable_mosaic.version = 11 : i64} {
  func.func @kernel(%arg0: i32, %arg1: i32, %arg2: memref<1x1x6x2x6x16xbf16, #tpu.memory_space<vmem>>, %arg3: memref<5x3x16x128xbf16, #tpu.memory_space<vmem>>, %arg4: memref<1x128xf32, #tpu.memory_space<vmem>>, %arg5: memref<1x4x4x128xbf16, #tpu.memory_space<vmem>>) attributes {dimension_semantics = [#tpu.dimension_semantics<parallel>, #tpu.dimension_semantics<parallel>], iteration_bounds = array<i64: 2, 1>, scalar_prefetch = 0 : i64, scratch_operands = 0 : i64, tpu.core_type = #tpu.core_type<tc>, window_params = [{transform_indices = @transform_0, window_bounds = array<i64: 1, 1, 6, 2, 6, 16>}, {pipeline_mode = #tpu.pipeline_mode<synchronous>, transform_indices = @transform_1, window_bounds = array<i64: 5, 3, 16, 128>}, {pipeline_mode = #tpu.pipeline_mode<synchronous>, transform_indices = @transform_2, window_bounds = array<i64: 1, 128>}, {transform_indices = @transform_3, window_bounds = array<i64: 1, 4, 4, 128>}]} {
    %cst = arith.constant 0.000000e+00 : f32
    %0 = vector.broadcast %cst : f32 to vector<16x128xf32>
    %c0 = arith.constant 0 : index
    %c0_0 = arith.constant 0 : index
    %c0_1 = arith.constant 0 : index
    %c0_2 = arith.constant 0 : index
    %c0_3 = arith.constant 0 : index
    %c0_4 = arith.constant 0 : index
    %1 = vector.load %arg2[%c0, %c0_0, %c0_1, %c0_2, %c0_3, %c0_4] : memref<1x1x6x2x6x16xbf16, #tpu.memory_space<vmem>>, vector<1x1x4x1x6x16xbf16>
    %2 = vector.shape_cast %1 : vector<1x1x4x1x6x16xbf16> to vector<4x6x16xbf16>
    %3 = vector.extract_strided_slice %2 {offsets = [0, 0, 0], sizes = [4, 4, 16], strides = [1, 1, 1]} : vector<4x6x16xbf16> to vector<4x4x16xbf16>
    %4 = vector.shape_cast %3 : vector<4x4x16xbf16> to vector<16x16xbf16>
    %c0_5 = arith.constant 0 : index
    %c0_6 = arith.constant 0 : index
    %c0_7 = arith.constant 0 : index
    %c0_8 = arith.constant 0 : index
    %5 = vector.load %arg3[%c0_5, %c0_6, %c0_7, %c0_8] : memref<5x3x16x128xbf16, #tpu.memory_space<vmem>>, vector<1x1x16x128xbf16>
    %6 = vector.shape_cast %5 : vector<1x1x16x128xbf16> to vector<16x128xbf16>
    %cst_9 = arith.constant dense<0.000000e+00> : vector<16x128xf32>
    %7 = tpu.matmul %4, %6, %cst_9 {dimension_numbers = #tpu.dot_dimension_numbers<[1], [0], [0], [1], [0, 0, 1, 1], [], []>} : vector<16x16xbf16>, vector<16x128xbf16>, vector<16x128xf32> -> vector<16x128xf32>
    %8 = arith.addf %0, %7 : vector<16x128xf32>
    %9 = vector.extract_strided_slice %2 {offsets = [0, 1, 0], sizes = [4, 4, 16], strides = [1, 1, 1]} : vector<4x6x16xbf16> to vector<4x4x16xbf16>
    %10 = vector.shape_cast %9 : vector<4x4x16xbf16> to vector<16x16xbf16>
    %c0_10 = arith.constant 0 : index
    %c1 = arith.constant 1 : index
    %c0_11 = arith.constant 0 : index
    %c0_12 = arith.constant 0 : index
    %11 = vector.load %arg3[%c0_10, %c1, %c0_11, %c0_12] : memref<5x3x16x128xbf16, #tpu.memory_space<vmem>>, vector<1x1x16x128xbf16>
    %12 = vector.shape_cast %11 : vector<1x1x16x128xbf16> to vector<16x128xbf16>
    %cst_13 = arith.constant dense<0.000000e+00> : vector<16x128xf32>
    %13 = tpu.matmul %10, %12, %cst_13 {dimension_numbers = #tpu.dot_dimension_numbers<[1], [0], [0], [1], [0, 0, 1, 1], [], []>} : vector<16x16xbf16>, vector<16x128xbf16>, vector<16x128xf32> -> vector<16x128xf32>
    %14 = arith.addf %8, %13 : vector<16x128xf32>
    %15 = vector.extract_strided_slice %2 {offsets = [0, 2, 0], sizes = [4, 4, 16], strides = [1, 1, 1]} : vector<4x6x16xbf16> to vector<4x4x16xbf16>
    %16 = vector.shape_cast %15 : vector<4x4x16xbf16> to vector<16x16xbf16>
    %c0_14 = arith.constant 0 : index
    %c2 = arith.constant 2 : index
    %c0_15 = arith.constant 0 : index
    %c0_16 = arith.constant 0 : index
    %17 = vector.load %arg3[%c0_14, %c2, %c0_15, %c0_16] : memref<5x3x16x128xbf16, #tpu.memory_space<vmem>>, vector<1x1x16x128xbf16>
    %18 = vector.shape_cast %17 : vector<1x1x16x128xbf16> to vector<16x128xbf16>
    %cst_17 = arith.constant dense<0.000000e+00> : vector<16x128xf32>
    %19 = tpu.matmul %16, %18, %cst_17 {dimension_numbers = #tpu.dot_dimension_numbers<[1], [0], [0], [1], [0, 0, 1, 1], [], []>} : vector<16x16xbf16>, vector<16x128xbf16>, vector<16x128xf32> -> vector<16x128xf32>
    %20 = arith.addf %14, %19 : vector<16x128xf32>
    %c0_18 = arith.constant 0 : index
    %c0_19 = arith.constant 0 : index
    %c0_20 = arith.constant 0 : index
    %c1_21 = arith.constant 1 : index
    %c0_22 = arith.constant 0 : index
    %c0_23 = arith.constant 0 : index
    %21 = vector.load %arg2[%c0_18, %c0_19, %c0_20, %c1_21, %c0_22, %c0_23] : memref<1x1x6x2x6x16xbf16, #tpu.memory_space<vmem>>, vector<1x1x4x1x6x16xbf16>
    %22 = vector.shape_cast %21 : vector<1x1x4x1x6x16xbf16> to vector<4x6x16xbf16>
    %23 = vector.extract_strided_slice %22 {offsets = [0, 0, 0], sizes = [4, 4, 16], strides = [1, 1, 1]} : vector<4x6x16xbf16> to vector<4x4x16xbf16>
    %24 = vector.shape_cast %23 : vector<4x4x16xbf16> to vector<16x16xbf16>
    %c1_24 = arith.constant 1 : index
    %c0_25 = arith.constant 0 : index
    %c0_26 = arith.constant 0 : index
    %c0_27 = arith.constant 0 : index
    %25 = vector.load %arg3[%c1_24, %c0_25, %c0_26, %c0_27] : memref<5x3x16x128xbf16, #tpu.memory_space<vmem>>, vector<1x1x16x128xbf16>
    %26 = vector.shape_cast %25 : vector<1x1x16x128xbf16> to vector<16x128xbf16>
    %cst_28 = arith.constant dense<0.000000e+00> : vector<16x128xf32>
    %27 = tpu.matmul %24, %26, %cst_28 {dimension_numbers = #tpu.dot_dimension_numbers<[1], [0], [0], [1], [0, 0, 1, 1], [], []>} : vector<16x16xbf16>, vector<16x128xbf16>, vector<16x128xf32> -> vector<16x128xf32>
    %28 = arith.addf %20, %27 : vector<16x128xf32>
    %29 = vector.extract_strided_slice %22 {offsets = [0, 1, 0], sizes = [4, 4, 16], strides = [1, 1, 1]} : vector<4x6x16xbf16> to vector<4x4x16xbf16>
    %30 = vector.shape_cast %29 : vector<4x4x16xbf16> to vector<16x16xbf16>
    %c1_29 = arith.constant 1 : index
    %c1_30 = arith.constant 1 : index
    %c0_31 = arith.constant 0 : index
    %c0_32 = arith.constant 0 : index
    %31 = vector.load %arg3[%c1_29, %c1_30, %c0_31, %c0_32] : memref<5x3x16x128xbf16, #tpu.memory_space<vmem>>, vector<1x1x16x128xbf16>
    %32 = vector.shape_cast %31 : vector<1x1x16x128xbf16> to vector<16x128xbf16>
    %cst_33 = arith.constant dense<0.000000e+00> : vector<16x128xf32>
    %33 = tpu.matmul %30, %32, %cst_33 {dimension_numbers = #tpu.dot_dimension_numbers<[1], [0], [0], [1], [0, 0, 1, 1], [], []>} : vector<16x16xbf16>, vector<16x128xbf16>, vector<16x128xf32> -> vector<16x128xf32>
    %34 = arith.addf %28, %33 : vector<16x128xf32>
    %35 = vector.extract_strided_slice %22 {offsets = [0, 2, 0], sizes = [4, 4, 16], strides = [1, 1, 1]} : vector<4x6x16xbf16> to vector<4x4x16xbf16>
    %36 = vector.shape_cast %35 : vector<4x4x16xbf16> to vector<16x16xbf16>
    %c1_34 = arith.constant 1 : index
    %c2_35 = arith.constant 2 : index
    %c0_36 = arith.constant 0 : index
    %c0_37 = arith.constant 0 : index
    %37 = vector.load %arg3[%c1_34, %c2_35, %c0_36, %c0_37] : memref<5x3x16x128xbf16, #tpu.memory_space<vmem>>, vector<1x1x16x128xbf16>
    %38 = vector.shape_cast %37 : vector<1x1x16x128xbf16> to vector<16x128xbf16>
    %cst_38 = arith.constant dense<0.000000e+00> : vector<16x128xf32>
    %39 = tpu.matmul %36, %38, %cst_38 {dimension_numbers = #tpu.dot_dimension_numbers<[1], [0], [0], [1], [0, 0, 1, 1], [], []>} : vector<16x16xbf16>, vector<16x128xbf16>, vector<16x128xf32> -> vector<16x128xf32>
    %40 = arith.addf %34, %39 : vector<16x128xf32>
    %c0_39 = arith.constant 0 : index
    %c0_40 = arith.constant 0 : index
    %c1_41 = arith.constant 1 : index
    %c0_42 = arith.constant 0 : index
    %c0_43 = arith.constant 0 : index
    %c0_44 = arith.constant 0 : index
    %41 = vector.load %arg2[%c0_39, %c0_40, %c1_41, %c0_42, %c0_43, %c0_44] : memref<1x1x6x2x6x16xbf16, #tpu.memory_space<vmem>>, vector<1x1x4x1x6x16xbf16>
    %42 = vector.shape_cast %41 : vector<1x1x4x1x6x16xbf16> to vector<4x6x16xbf16>
    %43 = vector.extract_strided_slice %42 {offsets = [0, 0, 0], sizes = [4, 4, 16], strides = [1, 1, 1]} : vector<4x6x16xbf16> to vector<4x4x16xbf16>
    %44 = vector.shape_cast %43 : vector<4x4x16xbf16> to vector<16x16xbf16>
    %c2_45 = arith.constant 2 : index
    %c0_46 = arith.constant 0 : index
    %c0_47 = arith.constant 0 : index
    %c0_48 = arith.constant 0 : index
    %45 = vector.load %arg3[%c2_45, %c0_46, %c0_47, %c0_48] : memref<5x3x16x128xbf16, #tpu.memory_space<vmem>>, vector<1x1x16x128xbf16>
    %46 = vector.shape_cast %45 : vector<1x1x16x128xbf16> to vector<16x128xbf16>
    %cst_49 = arith.constant dense<0.000000e+00> : vector<16x128xf32>
    %47 = tpu.matmul %44, %46, %cst_49 {dimension_numbers = #tpu.dot_dimension_numbers<[1], [0], [0], [1], [0, 0, 1, 1], [], []>} : vector<16x16xbf16>, vector<16x128xbf16>, vector<16x128xf32> -> vector<16x128xf32>
    %48 = arith.addf %40, %47 : vector<16x128xf32>
    %49 = vector.extract_strided_slice %42 {offsets = [0, 1, 0], sizes = [4, 4, 16], strides = [1, 1, 1]} : vector<4x6x16xbf16> to vector<4x4x16xbf16>
    %50 = vector.shape_cast %49 : vector<4x4x16xbf16> to vector<16x16xbf16>
    %c2_50 = arith.constant 2 : index
    %c1_51 = arith.constant 1 : index
    %c0_52 = arith.constant 0 : index
    %c0_53 = arith.constant 0 : index
    %51 = vector.load %arg3[%c2_50, %c1_51, %c0_52, %c0_53] : memref<5x3x16x128xbf16, #tpu.memory_space<vmem>>, vector<1x1x16x128xbf16>
    %52 = vector.shape_cast %51 : vector<1x1x16x128xbf16> to vector<16x128xbf16>
    %cst_54 = arith.constant dense<0.000000e+00> : vector<16x128xf32>
    %53 = tpu.matmul %50, %52, %cst_54 {dimension_numbers = #tpu.dot_dimension_numbers<[1], [0], [0], [1], [0, 0, 1, 1], [], []>} : vector<16x16xbf16>, vector<16x128xbf16>, vector<16x128xf32> -> vector<16x128xf32>
    %54 = arith.addf %48, %53 : vector<16x128xf32>
    %55 = vector.extract_strided_slice %42 {offsets = [0, 2, 0], sizes = [4, 4, 16], strides = [1, 1, 1]} : vector<4x6x16xbf16> to vector<4x4x16xbf16>
    %56 = vector.shape_cast %55 : vector<4x4x16xbf16> to vector<16x16xbf16>
    %c2_55 = arith.constant 2 : index
    %c2_56 = arith.constant 2 : index
    %c0_57 = arith.constant 0 : index
    %c0_58 = arith.constant 0 : index
    %57 = vector.load %arg3[%c2_55, %c2_56, %c0_57, %c0_58] : memref<5x3x16x128xbf16, #tpu.memory_space<vmem>>, vector<1x1x16x128xbf16>
    %58 = vector.shape_cast %57 : vector<1x1x16x128xbf16> to vector<16x128xbf16>
    %cst_59 = arith.constant dense<0.000000e+00> : vector<16x128xf32>
    %59 = tpu.matmul %56, %58, %cst_59 {dimension_numbers = #tpu.dot_dimension_numbers<[1], [0], [0], [1], [0, 0, 1, 1], [], []>} : vector<16x16xbf16>, vector<16x128xbf16>, vector<16x128xf32> -> vector<16x128xf32>
    %60 = arith.addf %54, %59 : vector<16x128xf32>
    %c0_60 = arith.constant 0 : index
    %c0_61 = arith.constant 0 : index
    %c1_62 = arith.constant 1 : index
    %c1_63 = arith.constant 1 : index
    %c0_64 = arith.constant 0 : index
    %c0_65 = arith.constant 0 : index
    %61 = vector.load %arg2[%c0_60, %c0_61, %c1_62, %c1_63, %c0_64, %c0_65] : memref<1x1x6x2x6x16xbf16, #tpu.memory_space<vmem>>, vector<1x1x4x1x6x16xbf16>
    %62 = vector.shape_cast %61 : vector<1x1x4x1x6x16xbf16> to vector<4x6x16xbf16>
    %63 = vector.extract_strided_slice %62 {offsets = [0, 0, 0], sizes = [4, 4, 16], strides = [1, 1, 1]} : vector<4x6x16xbf16> to vector<4x4x16xbf16>
    %64 = vector.shape_cast %63 : vector<4x4x16xbf16> to vector<16x16xbf16>
    %c3 = arith.constant 3 : index
    %c0_66 = arith.constant 0 : index
    %c0_67 = arith.constant 0 : index
    %c0_68 = arith.constant 0 : index
    %65 = vector.load %arg3[%c3, %c0_66, %c0_67, %c0_68] : memref<5x3x16x128xbf16, #tpu.memory_space<vmem>>, vector<1x1x16x128xbf16>
    %66 = vector.shape_cast %65 : vector<1x1x16x128xbf16> to vector<16x128xbf16>
    %cst_69 = arith.constant dense<0.000000e+00> : vector<16x128xf32>
    %67 = tpu.matmul %64, %66, %cst_69 {dimension_numbers = #tpu.dot_dimension_numbers<[1], [0], [0], [1], [0, 0, 1, 1], [], []>} : vector<16x16xbf16>, vector<16x128xbf16>, vector<16x128xf32> -> vector<16x128xf32>
    %68 = arith.addf %60, %67 : vector<16x128xf32>
    %69 = vector.extract_strided_slice %62 {offsets = [0, 1, 0], sizes = [4, 4, 16], strides = [1, 1, 1]} : vector<4x6x16xbf16> to vector<4x4x16xbf16>
    %70 = vector.shape_cast %69 : vector<4x4x16xbf16> to vector<16x16xbf16>
    %c3_70 = arith.constant 3 : index
    %c1_71 = arith.constant 1 : index
    %c0_72 = arith.constant 0 : index
    %c0_73 = arith.constant 0 : index
    %71 = vector.load %arg3[%c3_70, %c1_71, %c0_72, %c0_73] : memref<5x3x16x128xbf16, #tpu.memory_space<vmem>>, vector<1x1x16x128xbf16>
    %72 = vector.shape_cast %71 : vector<1x1x16x128xbf16> to vector<16x128xbf16>
    %cst_74 = arith.constant dense<0.000000e+00> : vector<16x128xf32>
    %73 = tpu.matmul %70, %72, %cst_74 {dimension_numbers = #tpu.dot_dimension_numbers<[1], [0], [0], [1], [0, 0, 1, 1], [], []>} : vector<16x16xbf16>, vector<16x128xbf16>, vector<16x128xf32> -> vector<16x128xf32>
    %74 = arith.addf %68, %73 : vector<16x128xf32>
    %75 = vector.extract_strided_slice %62 {offsets = [0, 2, 0], sizes = [4, 4, 16], strides = [1, 1, 1]} : vector<4x6x16xbf16> to vector<4x4x16xbf16>
    %76 = vector.shape_cast %75 : vector<4x4x16xbf16> to vector<16x16xbf16>
    %c3_75 = arith.constant 3 : index
    %c2_76 = arith.constant 2 : index
    %c0_77 = arith.constant 0 : index
    %c0_78 = arith.constant 0 : index
    %77 = vector.load %arg3[%c3_75, %c2_76, %c0_77, %c0_78] : memref<5x3x16x128xbf16, #tpu.memory_space<vmem>>, vector<1x1x16x128xbf16>
    %78 = vector.shape_cast %77 : vector<1x1x16x128xbf16> to vector<16x128xbf16>
    %cst_79 = arith.constant dense<0.000000e+00> : vector<16x128xf32>
    %79 = tpu.matmul %76, %78, %cst_79 {dimension_numbers = #tpu.dot_dimension_numbers<[1], [0], [0], [1], [0, 0, 1, 1], [], []>} : vector<16x16xbf16>, vector<16x128xbf16>, vector<16x128xf32> -> vector<16x128xf32>
    %80 = arith.addf %74, %79 : vector<16x128xf32>
    %c0_80 = arith.constant 0 : index
    %c0_81 = arith.constant 0 : index
    %c2_82 = arith.constant 2 : index
    %c0_83 = arith.constant 0 : index
    %c0_84 = arith.constant 0 : index
    %c0_85 = arith.constant 0 : index
    %81 = vector.load %arg2[%c0_80, %c0_81, %c2_82, %c0_83, %c0_84, %c0_85] : memref<1x1x6x2x6x16xbf16, #tpu.memory_space<vmem>>, vector<1x1x4x1x6x16xbf16>
    %82 = vector.shape_cast %81 : vector<1x1x4x1x6x16xbf16> to vector<4x6x16xbf16>
    %83 = vector.extract_strided_slice %82 {offsets = [0, 0, 0], sizes = [4, 4, 16], strides = [1, 1, 1]} : vector<4x6x16xbf16> to vector<4x4x16xbf16>
    %84 = vector.shape_cast %83 : vector<4x4x16xbf16> to vector<16x16xbf16>
    %c4 = arith.constant 4 : index
    %c0_86 = arith.constant 0 : index
    %c0_87 = arith.constant 0 : index
    %c0_88 = arith.constant 0 : index
    %85 = vector.load %arg3[%c4, %c0_86, %c0_87, %c0_88] : memref<5x3x16x128xbf16, #tpu.memory_space<vmem>>, vector<1x1x16x128xbf16>
    %86 = vector.shape_cast %85 : vector<1x1x16x128xbf16> to vector<16x128xbf16>
    %cst_89 = arith.constant dense<0.000000e+00> : vector<16x128xf32>
    %87 = tpu.matmul %84, %86, %cst_89 {dimension_numbers = #tpu.dot_dimension_numbers<[1], [0], [0], [1], [0, 0, 1, 1], [], []>} : vector<16x16xbf16>, vector<16x128xbf16>, vector<16x128xf32> -> vector<16x128xf32>
    %88 = arith.addf %80, %87 : vector<16x128xf32>
    %89 = vector.extract_strided_slice %82 {offsets = [0, 1, 0], sizes = [4, 4, 16], strides = [1, 1, 1]} : vector<4x6x16xbf16> to vector<4x4x16xbf16>
    %90 = vector.shape_cast %89 : vector<4x4x16xbf16> to vector<16x16xbf16>
    %c4_90 = arith.constant 4 : index
    %c1_91 = arith.constant 1 : index
    %c0_92 = arith.constant 0 : index
    %c0_93 = arith.constant 0 : index
    %91 = vector.load %arg3[%c4_90, %c1_91, %c0_92, %c0_93] : memref<5x3x16x128xbf16, #tpu.memory_space<vmem>>, vector<1x1x16x128xbf16>
    %92 = vector.shape_cast %91 : vector<1x1x16x128xbf16> to vector<16x128xbf16>
    %cst_94 = arith.constant dense<0.000000e+00> : vector<16x128xf32>
    %93 = tpu.matmul %90, %92, %cst_94 {dimension_numbers = #tpu.dot_dimension_numbers<[1], [0], [0], [1], [0, 0, 1, 1], [], []>} : vector<16x16xbf16>, vector<16x128xbf16>, vector<16x128xf32> -> vector<16x128xf32>
    %94 = arith.addf %88, %93 : vector<16x128xf32>
    %95 = vector.extract_strided_slice %82 {offsets = [0, 2, 0], sizes = [4, 4, 16], strides = [1, 1, 1]} : vector<4x6x16xbf16> to vector<4x4x16xbf16>
    %96 = vector.shape_cast %95 : vector<4x4x16xbf16> to vector<16x16xbf16>
    %c4_95 = arith.constant 4 : index
    %c2_96 = arith.constant 2 : index
    %c0_97 = arith.constant 0 : index
    %c0_98 = arith.constant 0 : index
    %97 = vector.load %arg3[%c4_95, %c2_96, %c0_97, %c0_98] : memref<5x3x16x128xbf16, #tpu.memory_space<vmem>>, vector<1x1x16x128xbf16>
    %98 = vector.shape_cast %97 : vector<1x1x16x128xbf16> to vector<16x128xbf16>
    %cst_99 = arith.constant dense<0.000000e+00> : vector<16x128xf32>
    %99 = tpu.matmul %96, %98, %cst_99 {dimension_numbers = #tpu.dot_dimension_numbers<[1], [0], [0], [1], [0, 0, 1, 1], [], []>} : vector<16x16xbf16>, vector<16x128xbf16>, vector<16x128xf32> -> vector<16x128xf32>
    %100 = arith.addf %94, %99 : vector<16x128xf32>
    %c0_100 = arith.constant 0 : index
    %c0_101 = arith.constant 0 : index
    %101 = vector.load %arg4[%c0_100, %c0_101] : memref<1x128xf32, #tpu.memory_space<vmem>>, vector<1x128xf32>
    %102 = vector.broadcast %101 : vector<1x128xf32> to vector<16x128xf32>
    %103 = arith.addf %100, %102 : vector<16x128xf32>
    %cst_102 = arith.constant 0.000000e+00 : f32
    %104 = vector.broadcast %cst_102 : f32 to vector<16x128xf32>
    %105 = arith.cmpf ogt, %103, %104 : vector<16x128xf32>
    %cst_103 = arith.constant 2.000000e-01 : f32
    %106 = vector.broadcast %cst_103 : f32 to vector<16x128xf32>
    %107 = arith.mulf %106, %103 : vector<16x128xf32>
    %108 = arith.select %105, %103, %107 : vector<16x128xi1>, vector<16x128xf32>
    %109 = vector.shape_cast %108 : vector<16x128xf32> to vector<4x4x128xf32>
    %110 = arith.truncf %109 : vector<4x4x128xf32> to vector<4x4x128xbf16>
    %c0_104 = arith.constant 0 : index
    %c0_105 = arith.constant 0 : index
    %c0_106 = arith.constant 0 : index
    %c0_107 = arith.constant 0 : index
    %111 = vector.load %arg5[%c0_104, %c0_105, %c0_106, %c0_107] : memref<1x4x4x128xbf16, #tpu.memory_space<vmem>>, vector<1x4x4x128xbf16>
    %112 = vector.shape_cast %111 : vector<1x4x4x128xbf16> to vector<4x4x128xbf16>
    %113 = vector.shape_cast %110 : vector<4x4x128xbf16> to vector<1x4x4x128xbf16>
    tpu.vector_store %arg5[%c0_104, %c0_105, %c0_106, %c0_107], %113 {strides = array<i32>} : memref<1x4x4x128xbf16, #tpu.memory_space<vmem>>, vector<1x4x4x128xbf16>,
    return
  }
  func.func @transform_0(%arg0: i32, %arg1: i32) -> (i32, i32, i32, i32, i32, i32) {
    %c0_i32 = arith.constant 0 : i32
    %c0_i32_0 = arith.constant 0 : i32
    %c0_i32_1 = arith.constant 0 : i32
    %c0_i32_2 = arith.constant 0 : i32
    %c0_i32_3 = arith.constant 0 : i32
    return %arg0, %arg1, %c0_i32, %c0_i32_0, %c0_i32_1, %c0_i32_2 : i32, i32, i32, i32, i32, i32
  }
  func.func @transform_1(%arg0: i32, %arg1: i32) -> (i32, i32, i32, i32) {
    %c0_i32 = arith.constant 0 : i32
    %c0_i32_0 = arith.constant 0 : i32
    %c0_i32_1 = arith.constant 0 : i32
    %c0_i32_2 = arith.constant 0 : i32
    %c0_i32_3 = arith.constant 0 : i32
    return %c0_i32, %c0_i32_0, %c0_i32_1, %c0_i32_2 : i32, i32, i32, i32
  }
  func.func @transform_2(%arg0: i32, %arg1: i32) -> (i32, i32) {
    %c0_i32 = arith.constant 0 : i32
    %c0_i32_0 = arith.constant 0 : i32
    %c0_i32_1 = arith.constant 0 : i32
    return %c0_i32, %c0_i32_0 : i32, i32
  }
  func.func @transform_3(%arg0: i32, %arg1: i32) -> (i32, i32, i32, i32) {
    %c0_i32 = arith.constant 0 : i32
    %c0_i32_0 = arith.constant 0 : i32
    %c0_i32_1 = arith.constant 0 : i32
    return %arg0, %arg1, %c0_i32, %c0_i32_0 : i32, i32, i32, i32
  }
}

module attributes {stable_mosaic.version = 11 : i64} {
  func.func @kernel(%arg0: i32, %arg1: i32, %arg2: memref<1x1x4x2x4x32xbf16, #tpu.memory_space<vmem>>, %arg3: memref<5x3x32x128xbf16, #tpu.memory_space<vmem>>, %arg4: memref<1x128xf32, #tpu.memory_space<vmem>>, %arg5: memref<1x2x2x128xbf16, #tpu.memory_space<vmem>>) attributes {dimension_semantics = [#tpu.dimension_semantics<parallel>, #tpu.dimension_semantics<parallel>], iteration_bounds = array<i64: 2, 1>, scalar_prefetch = 0 : i64, scratch_operands = 0 : i64, tpu.core_type = #tpu.core_type<tc>, window_params = [{transform_indices = @transform_0, window_bounds = array<i64: 1, 1, 4, 2, 4, 32>}, {pipeline_mode = #tpu.pipeline_mode<synchronous>, transform_indices = @transform_1, window_bounds = array<i64: 5, 3, 32, 128>}, {pipeline_mode = #tpu.pipeline_mode<synchronous>, transform_indices = @transform_2, window_bounds = array<i64: 1, 128>}, {transform_indices = @transform_3, window_bounds = array<i64: 1, 2, 2, 128>}]} {
    %cst = arith.constant 0.000000e+00 : f32
    %0 = vector.broadcast %cst : f32 to vector<4x128xf32>
    %c0 = arith.constant 0 : index
    %c0_0 = arith.constant 0 : index
    %c0_1 = arith.constant 0 : index
    %c0_2 = arith.constant 0 : index
    %c0_3 = arith.constant 0 : index
    %c0_4 = arith.constant 0 : index
    %1 = vector.load %arg2[%c0, %c0_0, %c0_1, %c0_2, %c0_3, %c0_4] : memref<1x1x4x2x4x32xbf16, #tpu.memory_space<vmem>>, vector<1x1x2x1x4x32xbf16>
    %2 = vector.shape_cast %1 : vector<1x1x2x1x4x32xbf16> to vector<2x4x32xbf16>
    %3 = vector.extract_strided_slice %2 {offsets = [0, 0, 0], sizes = [2, 2, 32], strides = [1, 1, 1]} : vector<2x4x32xbf16> to vector<2x2x32xbf16>
    %4 = vector.shape_cast %3 : vector<2x2x32xbf16> to vector<4x32xbf16>
    %c0_5 = arith.constant 0 : index
    %c0_6 = arith.constant 0 : index
    %c0_7 = arith.constant 0 : index
    %c0_8 = arith.constant 0 : index
    %5 = vector.load %arg3[%c0_5, %c0_6, %c0_7, %c0_8] : memref<5x3x32x128xbf16, #tpu.memory_space<vmem>>, vector<1x1x32x128xbf16>
    %6 = vector.shape_cast %5 : vector<1x1x32x128xbf16> to vector<32x128xbf16>
    %cst_9 = arith.constant dense<0.000000e+00> : vector<4x128xf32>
    %7 = tpu.matmul %4, %6, %cst_9 {dimension_numbers = #tpu.dot_dimension_numbers<[1], [0], [0], [1], [0, 0, 1, 1], [], []>} : vector<4x32xbf16>, vector<32x128xbf16>, vector<4x128xf32> -> vector<4x128xf32>
    %8 = arith.addf %0, %7 : vector<4x128xf32>
    %9 = vector.extract_strided_slice %2 {offsets = [0, 1, 0], sizes = [2, 2, 32], strides = [1, 1, 1]} : vector<2x4x32xbf16> to vector<2x2x32xbf16>
    %10 = vector.shape_cast %9 : vector<2x2x32xbf16> to vector<4x32xbf16>
    %c0_10 = arith.constant 0 : index
    %c1 = arith.constant 1 : index
    %c0_11 = arith.constant 0 : index
    %c0_12 = arith.constant 0 : index
    %11 = vector.load %arg3[%c0_10, %c1, %c0_11, %c0_12] : memref<5x3x32x128xbf16, #tpu.memory_space<vmem>>, vector<1x1x32x128xbf16>
    %12 = vector.shape_cast %11 : vector<1x1x32x128xbf16> to vector<32x128xbf16>
    %cst_13 = arith.constant dense<0.000000e+00> : vector<4x128xf32>
    %13 = tpu.matmul %10, %12, %cst_13 {dimension_numbers = #tpu.dot_dimension_numbers<[1], [0], [0], [1], [0, 0, 1, 1], [], []>} : vector<4x32xbf16>, vector<32x128xbf16>, vector<4x128xf32> -> vector<4x128xf32>
    %14 = arith.addf %8, %13 : vector<4x128xf32>
    %15 = vector.extract_strided_slice %2 {offsets = [0, 2, 0], sizes = [2, 2, 32], strides = [1, 1, 1]} : vector<2x4x32xbf16> to vector<2x2x32xbf16>
    %16 = vector.shape_cast %15 : vector<2x2x32xbf16> to vector<4x32xbf16>
    %c0_14 = arith.constant 0 : index
    %c2 = arith.constant 2 : index
    %c0_15 = arith.constant 0 : index
    %c0_16 = arith.constant 0 : index
    %17 = vector.load %arg3[%c0_14, %c2, %c0_15, %c0_16] : memref<5x3x32x128xbf16, #tpu.memory_space<vmem>>, vector<1x1x32x128xbf16>
    %18 = vector.shape_cast %17 : vector<1x1x32x128xbf16> to vector<32x128xbf16>
    %cst_17 = arith.constant dense<0.000000e+00> : vector<4x128xf32>
    %19 = tpu.matmul %16, %18, %cst_17 {dimension_numbers = #tpu.dot_dimension_numbers<[1], [0], [0], [1], [0, 0, 1, 1], [], []>} : vector<4x32xbf16>, vector<32x128xbf16>, vector<4x128xf32> -> vector<4x128xf32>
    %20 = arith.addf %14, %19 : vector<4x128xf32>
    %c0_18 = arith.constant 0 : index
    %c0_19 = arith.constant 0 : index
    %c0_20 = arith.constant 0 : index
    %c1_21 = arith.constant 1 : index
    %c0_22 = arith.constant 0 : index
    %c0_23 = arith.constant 0 : index
    %21 = vector.load %arg2[%c0_18, %c0_19, %c0_20, %c1_21, %c0_22, %c0_23] : memref<1x1x4x2x4x32xbf16, #tpu.memory_space<vmem>>, vector<1x1x2x1x4x32xbf16>
    %22 = vector.shape_cast %21 : vector<1x1x2x1x4x32xbf16> to vector<2x4x32xbf16>
    %23 = vector.extract_strided_slice %22 {offsets = [0, 0, 0], sizes = [2, 2, 32], strides = [1, 1, 1]} : vector<2x4x32xbf16> to vector<2x2x32xbf16>
    %24 = vector.shape_cast %23 : vector<2x2x32xbf16> to vector<4x32xbf16>
    %c1_24 = arith.constant 1 : index
    %c0_25 = arith.constant 0 : index
    %c0_26 = arith.constant 0 : index
    %c0_27 = arith.constant 0 : index
    %25 = vector.load %arg3[%c1_24, %c0_25, %c0_26, %c0_27] : memref<5x3x32x128xbf16, #tpu.memory_space<vmem>>, vector<1x1x32x128xbf16>
    %26 = vector.shape_cast %25 : vector<1x1x32x128xbf16> to vector<32x128xbf16>
    %cst_28 = arith.constant dense<0.000000e+00> : vector<4x128xf32>
    %27 = tpu.matmul %24, %26, %cst_28 {dimension_numbers = #tpu.dot_dimension_numbers<[1], [0], [0], [1], [0, 0, 1, 1], [], []>} : vector<4x32xbf16>, vector<32x128xbf16>, vector<4x128xf32> -> vector<4x128xf32>
    %28 = arith.addf %20, %27 : vector<4x128xf32>
    %29 = vector.extract_strided_slice %22 {offsets = [0, 1, 0], sizes = [2, 2, 32], strides = [1, 1, 1]} : vector<2x4x32xbf16> to vector<2x2x32xbf16>
    %30 = vector.shape_cast %29 : vector<2x2x32xbf16> to vector<4x32xbf16>
    %c1_29 = arith.constant 1 : index
    %c1_30 = arith.constant 1 : index
    %c0_31 = arith.constant 0 : index
    %c0_32 = arith.constant 0 : index
    %31 = vector.load %arg3[%c1_29, %c1_30, %c0_31, %c0_32] : memref<5x3x32x128xbf16, #tpu.memory_space<vmem>>, vector<1x1x32x128xbf16>
    %32 = vector.shape_cast %31 : vector<1x1x32x128xbf16> to vector<32x128xbf16>
    %cst_33 = arith.constant dense<0.000000e+00> : vector<4x128xf32>
    %33 = tpu.matmul %30, %32, %cst_33 {dimension_numbers = #tpu.dot_dimension_numbers<[1], [0], [0], [1], [0, 0, 1, 1], [], []>} : vector<4x32xbf16>, vector<32x128xbf16>, vector<4x128xf32> -> vector<4x128xf32>
    %34 = arith.addf %28, %33 : vector<4x128xf32>
    %35 = vector.extract_strided_slice %22 {offsets = [0, 2, 0], sizes = [2, 2, 32], strides = [1, 1, 1]} : vector<2x4x32xbf16> to vector<2x2x32xbf16>
    %36 = vector.shape_cast %35 : vector<2x2x32xbf16> to vector<4x32xbf16>
    %c1_34 = arith.constant 1 : index
    %c2_35 = arith.constant 2 : index
    %c0_36 = arith.constant 0 : index
    %c0_37 = arith.constant 0 : index
    %37 = vector.load %arg3[%c1_34, %c2_35, %c0_36, %c0_37] : memref<5x3x32x128xbf16, #tpu.memory_space<vmem>>, vector<1x1x32x128xbf16>
    %38 = vector.shape_cast %37 : vector<1x1x32x128xbf16> to vector<32x128xbf16>
    %cst_38 = arith.constant dense<0.000000e+00> : vector<4x128xf32>
    %39 = tpu.matmul %36, %38, %cst_38 {dimension_numbers = #tpu.dot_dimension_numbers<[1], [0], [0], [1], [0, 0, 1, 1], [], []>} : vector<4x32xbf16>, vector<32x128xbf16>, vector<4x128xf32> -> vector<4x128xf32>
    %40 = arith.addf %34, %39 : vector<4x128xf32>
    %c0_39 = arith.constant 0 : index
    %c0_40 = arith.constant 0 : index
    %c1_41 = arith.constant 1 : index
    %c0_42 = arith.constant 0 : index
    %c0_43 = arith.constant 0 : index
    %c0_44 = arith.constant 0 : index
    %41 = vector.load %arg2[%c0_39, %c0_40, %c1_41, %c0_42, %c0_43, %c0_44] : memref<1x1x4x2x4x32xbf16, #tpu.memory_space<vmem>>, vector<1x1x2x1x4x32xbf16>
    %42 = vector.shape_cast %41 : vector<1x1x2x1x4x32xbf16> to vector<2x4x32xbf16>
    %43 = vector.extract_strided_slice %42 {offsets = [0, 0, 0], sizes = [2, 2, 32], strides = [1, 1, 1]} : vector<2x4x32xbf16> to vector<2x2x32xbf16>
    %44 = vector.shape_cast %43 : vector<2x2x32xbf16> to vector<4x32xbf16>
    %c2_45 = arith.constant 2 : index
    %c0_46 = arith.constant 0 : index
    %c0_47 = arith.constant 0 : index
    %c0_48 = arith.constant 0 : index
    %45 = vector.load %arg3[%c2_45, %c0_46, %c0_47, %c0_48] : memref<5x3x32x128xbf16, #tpu.memory_space<vmem>>, vector<1x1x32x128xbf16>
    %46 = vector.shape_cast %45 : vector<1x1x32x128xbf16> to vector<32x128xbf16>
    %cst_49 = arith.constant dense<0.000000e+00> : vector<4x128xf32>
    %47 = tpu.matmul %44, %46, %cst_49 {dimension_numbers = #tpu.dot_dimension_numbers<[1], [0], [0], [1], [0, 0, 1, 1], [], []>} : vector<4x32xbf16>, vector<32x128xbf16>, vector<4x128xf32> -> vector<4x128xf32>
    %48 = arith.addf %40, %47 : vector<4x128xf32>
    %49 = vector.extract_strided_slice %42 {offsets = [0, 1, 0], sizes = [2, 2, 32], strides = [1, 1, 1]} : vector<2x4x32xbf16> to vector<2x2x32xbf16>
    %50 = vector.shape_cast %49 : vector<2x2x32xbf16> to vector<4x32xbf16>
    %c2_50 = arith.constant 2 : index
    %c1_51 = arith.constant 1 : index
    %c0_52 = arith.constant 0 : index
    %c0_53 = arith.constant 0 : index
    %51 = vector.load %arg3[%c2_50, %c1_51, %c0_52, %c0_53] : memref<5x3x32x128xbf16, #tpu.memory_space<vmem>>, vector<1x1x32x128xbf16>
    %52 = vector.shape_cast %51 : vector<1x1x32x128xbf16> to vector<32x128xbf16>
    %cst_54 = arith.constant dense<0.000000e+00> : vector<4x128xf32>
    %53 = tpu.matmul %50, %52, %cst_54 {dimension_numbers = #tpu.dot_dimension_numbers<[1], [0], [0], [1], [0, 0, 1, 1], [], []>} : vector<4x32xbf16>, vector<32x128xbf16>, vector<4x128xf32> -> vector<4x128xf32>
    %54 = arith.addf %48, %53 : vector<4x128xf32>
    %55 = vector.extract_strided_slice %42 {offsets = [0, 2, 0], sizes = [2, 2, 32], strides = [1, 1, 1]} : vector<2x4x32xbf16> to vector<2x2x32xbf16>
    %56 = vector.shape_cast %55 : vector<2x2x32xbf16> to vector<4x32xbf16>
    %c2_55 = arith.constant 2 : index
    %c2_56 = arith.constant 2 : index
    %c0_57 = arith.constant 0 : index
    %c0_58 = arith.constant 0 : index
    %57 = vector.load %arg3[%c2_55, %c2_56, %c0_57, %c0_58] : memref<5x3x32x128xbf16, #tpu.memory_space<vmem>>, vector<1x1x32x128xbf16>
    %58 = vector.shape_cast %57 : vector<1x1x32x128xbf16> to vector<32x128xbf16>
    %cst_59 = arith.constant dense<0.000000e+00> : vector<4x128xf32>
    %59 = tpu.matmul %56, %58, %cst_59 {dimension_numbers = #tpu.dot_dimension_numbers<[1], [0], [0], [1], [0, 0, 1, 1], [], []>} : vector<4x32xbf16>, vector<32x128xbf16>, vector<4x128xf32> -> vector<4x128xf32>
    %60 = arith.addf %54, %59 : vector<4x128xf32>
    %c0_60 = arith.constant 0 : index
    %c0_61 = arith.constant 0 : index
    %c1_62 = arith.constant 1 : index
    %c1_63 = arith.constant 1 : index
    %c0_64 = arith.constant 0 : index
    %c0_65 = arith.constant 0 : index
    %61 = vector.load %arg2[%c0_60, %c0_61, %c1_62, %c1_63, %c0_64, %c0_65] : memref<1x1x4x2x4x32xbf16, #tpu.memory_space<vmem>>, vector<1x1x2x1x4x32xbf16>
    %62 = vector.shape_cast %61 : vector<1x1x2x1x4x32xbf16> to vector<2x4x32xbf16>
    %63 = vector.extract_strided_slice %62 {offsets = [0, 0, 0], sizes = [2, 2, 32], strides = [1, 1, 1]} : vector<2x4x32xbf16> to vector<2x2x32xbf16>
    %64 = vector.shape_cast %63 : vector<2x2x32xbf16> to vector<4x32xbf16>
    %c3 = arith.constant 3 : index
    %c0_66 = arith.constant 0 : index
    %c0_67 = arith.constant 0 : index
    %c0_68 = arith.constant 0 : index
    %65 = vector.load %arg3[%c3, %c0_66, %c0_67, %c0_68] : memref<5x3x32x128xbf16, #tpu.memory_space<vmem>>, vector<1x1x32x128xbf16>
    %66 = vector.shape_cast %65 : vector<1x1x32x128xbf16> to vector<32x128xbf16>
    %cst_69 = arith.constant dense<0.000000e+00> : vector<4x128xf32>
    %67 = tpu.matmul %64, %66, %cst_69 {dimension_numbers = #tpu.dot_dimension_numbers<[1], [0], [0], [1], [0, 0, 1, 1], [], []>} : vector<4x32xbf16>, vector<32x128xbf16>, vector<4x128xf32> -> vector<4x128xf32>
    %68 = arith.addf %60, %67 : vector<4x128xf32>
    %69 = vector.extract_strided_slice %62 {offsets = [0, 1, 0], sizes = [2, 2, 32], strides = [1, 1, 1]} : vector<2x4x32xbf16> to vector<2x2x32xbf16>
    %70 = vector.shape_cast %69 : vector<2x2x32xbf16> to vector<4x32xbf16>
    %c3_70 = arith.constant 3 : index
    %c1_71 = arith.constant 1 : index
    %c0_72 = arith.constant 0 : index
    %c0_73 = arith.constant 0 : index
    %71 = vector.load %arg3[%c3_70, %c1_71, %c0_72, %c0_73] : memref<5x3x32x128xbf16, #tpu.memory_space<vmem>>, vector<1x1x32x128xbf16>
    %72 = vector.shape_cast %71 : vector<1x1x32x128xbf16> to vector<32x128xbf16>
    %cst_74 = arith.constant dense<0.000000e+00> : vector<4x128xf32>
    %73 = tpu.matmul %70, %72, %cst_74 {dimension_numbers = #tpu.dot_dimension_numbers<[1], [0], [0], [1], [0, 0, 1, 1], [], []>} : vector<4x32xbf16>, vector<32x128xbf16>, vector<4x128xf32> -> vector<4x128xf32>
    %74 = arith.addf %68, %73 : vector<4x128xf32>
    %75 = vector.extract_strided_slice %62 {offsets = [0, 2, 0], sizes = [2, 2, 32], strides = [1, 1, 1]} : vector<2x4x32xbf16> to vector<2x2x32xbf16>
    %76 = vector.shape_cast %75 : vector<2x2x32xbf16> to vector<4x32xbf16>
    %c3_75 = arith.constant 3 : index
    %c2_76 = arith.constant 2 : index
    %c0_77 = arith.constant 0 : index
    %c0_78 = arith.constant 0 : index
    %77 = vector.load %arg3[%c3_75, %c2_76, %c0_77, %c0_78] : memref<5x3x32x128xbf16, #tpu.memory_space<vmem>>, vector<1x1x32x128xbf16>
    %78 = vector.shape_cast %77 : vector<1x1x32x128xbf16> to vector<32x128xbf16>
    %cst_79 = arith.constant dense<0.000000e+00> : vector<4x128xf32>
    %79 = tpu.matmul %76, %78, %cst_79 {dimension_numbers = #tpu.dot_dimension_numbers<[1], [0], [0], [1], [0, 0, 1, 1], [], []>} : vector<4x32xbf16>, vector<32x128xbf16>, vector<4x128xf32> -> vector<4x128xf32>
    %80 = arith.addf %74, %79 : vector<4x128xf32>
    %c0_80 = arith.constant 0 : index
    %c0_81 = arith.constant 0 : index
    %c2_82 = arith.constant 2 : index
    %c0_83 = arith.constant 0 : index
    %c0_84 = arith.constant 0 : index
    %c0_85 = arith.constant 0 : index
    %81 = vector.load %arg2[%c0_80, %c0_81, %c2_82, %c0_83, %c0_84, %c0_85] : memref<1x1x4x2x4x32xbf16, #tpu.memory_space<vmem>>, vector<1x1x2x1x4x32xbf16>
    %82 = vector.shape_cast %81 : vector<1x1x2x1x4x32xbf16> to vector<2x4x32xbf16>
    %83 = vector.extract_strided_slice %82 {offsets = [0, 0, 0], sizes = [2, 2, 32], strides = [1, 1, 1]} : vector<2x4x32xbf16> to vector<2x2x32xbf16>
    %84 = vector.shape_cast %83 : vector<2x2x32xbf16> to vector<4x32xbf16>
    %c4 = arith.constant 4 : index
    %c0_86 = arith.constant 0 : index
    %c0_87 = arith.constant 0 : index
    %c0_88 = arith.constant 0 : index
    %85 = vector.load %arg3[%c4, %c0_86, %c0_87, %c0_88] : memref<5x3x32x128xbf16, #tpu.memory_space<vmem>>, vector<1x1x32x128xbf16>
    %86 = vector.shape_cast %85 : vector<1x1x32x128xbf16> to vector<32x128xbf16>
    %cst_89 = arith.constant dense<0.000000e+00> : vector<4x128xf32>
    %87 = tpu.matmul %84, %86, %cst_89 {dimension_numbers = #tpu.dot_dimension_numbers<[1], [0], [0], [1], [0, 0, 1, 1], [], []>} : vector<4x32xbf16>, vector<32x128xbf16>, vector<4x128xf32> -> vector<4x128xf32>
    %88 = arith.addf %80, %87 : vector<4x128xf32>
    %89 = vector.extract_strided_slice %82 {offsets = [0, 1, 0], sizes = [2, 2, 32], strides = [1, 1, 1]} : vector<2x4x32xbf16> to vector<2x2x32xbf16>
    %90 = vector.shape_cast %89 : vector<2x2x32xbf16> to vector<4x32xbf16>
    %c4_90 = arith.constant 4 : index
    %c1_91 = arith.constant 1 : index
    %c0_92 = arith.constant 0 : index
    %c0_93 = arith.constant 0 : index
    %91 = vector.load %arg3[%c4_90, %c1_91, %c0_92, %c0_93] : memref<5x3x32x128xbf16, #tpu.memory_space<vmem>>, vector<1x1x32x128xbf16>
    %92 = vector.shape_cast %91 : vector<1x1x32x128xbf16> to vector<32x128xbf16>
    %cst_94 = arith.constant dense<0.000000e+00> : vector<4x128xf32>
    %93 = tpu.matmul %90, %92, %cst_94 {dimension_numbers = #tpu.dot_dimension_numbers<[1], [0], [0], [1], [0, 0, 1, 1], [], []>} : vector<4x32xbf16>, vector<32x128xbf16>, vector<4x128xf32> -> vector<4x128xf32>
    %94 = arith.addf %88, %93 : vector<4x128xf32>
    %95 = vector.extract_strided_slice %82 {offsets = [0, 2, 0], sizes = [2, 2, 32], strides = [1, 1, 1]} : vector<2x4x32xbf16> to vector<2x2x32xbf16>
    %96 = vector.shape_cast %95 : vector<2x2x32xbf16> to vector<4x32xbf16>
    %c4_95 = arith.constant 4 : index
    %c2_96 = arith.constant 2 : index
    %c0_97 = arith.constant 0 : index
    %c0_98 = arith.constant 0 : index
    %97 = vector.load %arg3[%c4_95, %c2_96, %c0_97, %c0_98] : memref<5x3x32x128xbf16, #tpu.memory_space<vmem>>, vector<1x1x32x128xbf16>
    %98 = vector.shape_cast %97 : vector<1x1x32x128xbf16> to vector<32x128xbf16>
    %cst_99 = arith.constant dense<0.000000e+00> : vector<4x128xf32>
    %99 = tpu.matmul %96, %98, %cst_99 {dimension_numbers = #tpu.dot_dimension_numbers<[1], [0], [0], [1], [0, 0, 1, 1], [], []>} : vector<4x32xbf16>, vector<32x128xbf16>, vector<4x128xf32> -> vector<4x128xf32>
    %100 = arith.addf %94, %99 : vector<4x128xf32>
    %c0_100 = arith.constant 0 : index
    %c0_101 = arith.constant 0 : index
    %101 = vector.load %arg4[%c0_100, %c0_101] : memref<1x128xf32, #tpu.memory_space<vmem>>, vector<1x128xf32>
    %102 = vector.broadcast %101 : vector<1x128xf32> to vector<4x128xf32>
    %103 = arith.addf %100, %102 : vector<4x128xf32>
    %cst_102 = arith.constant 0.000000e+00 : f32
    %104 = vector.broadcast %cst_102 : f32 to vector<4x128xf32>
    %105 = arith.cmpf ogt, %103, %104 : vector<4x128xf32>
    %cst_103 = arith.constant 2.000000e-01 : f32
    %106 = vector.broadcast %cst_103 : f32 to vector<4x128xf32>
    %107 = arith.mulf %106, %103 : vector<4x128xf32>
    %108 = arith.select %105, %103, %107 : vector<4x128xi1>, vector<4x128xf32>
    %109 = vector.shape_cast %108 : vector<4x128xf32> to vector<2x2x128xf32>
    %110 = arith.truncf %109 : vector<2x2x128xf32> to vector<2x2x128xbf16>
    %c0_104 = arith.constant 0 : index
    %c0_105 = arith.constant 0 : index
    %c0_106 = arith.constant 0 : index
    %c0_107 = arith.constant 0 : index
    %111 = vector.load %arg5[%c0_104, %c0_105, %c0_106, %c0_107] : memref<1x2x2x128xbf16, #tpu.memory_space<vmem>>, vector<1x2x2x128xbf16>
    %112 = vector.shape_cast %111 : vector<1x2x2x128xbf16> to vector<2x2x128xbf16>
    %113 = vector.shape_cast %110 : vector<2x2x128xbf16> to vector<1x2x2x128xbf16>
    tpu.vector_store %arg5[%c0_104, %c0_105, %c0_106, %c0_107], %113 {strides = array<i32>} : memref<1x2x2x128xbf16, #tpu.memory_space<vmem>>, vector<1x2x2x128xbf16>,
    return
  }
  func.func @transform_0(%arg0: i32, %arg1: i32) -> (i32, i32, i32, i32, i32, i32) {
    %c0_i32 = arith.constant 0 : i32
    %c0_i32_0 = arith.constant 0 : i32
    %c0_i32_1 = arith.constant 0 : i32
    %c0_i32_2 = arith.constant 0 : i32
    %c0_i32_3 = arith.constant 0 : i32
    return %arg0, %arg1, %c0_i32, %c0_i32_0, %c0_i32_1, %c0_i32_2 : i32, i32, i32, i32, i32, i32
  }
  func.func @transform_1(%arg0: i32, %arg1: i32) -> (i32, i32, i32, i32) {
    %c0_i32 = arith.constant 0 : i32
    %c0_i32_0 = arith.constant 0 : i32
    %c0_i32_1 = arith.constant 0 : i32
    %c0_i32_2 = arith.constant 0 : i32
    %c0_i32_3 = arith.constant 0 : i32
    return %c0_i32, %c0_i32_0, %c0_i32_1, %c0_i32_2 : i32, i32, i32, i32
  }
  func.func @transform_2(%arg0: i32, %arg1: i32) -> (i32, i32) {
    %c0_i32 = arith.constant 0 : i32
    %c0_i32_0 = arith.constant 0 : i32
    %c0_i32_1 = arith.constant 0 : i32
    return %c0_i32, %c0_i32_0 : i32, i32
  }
  func.func @transform_3(%arg0: i32, %arg1: i32) -> (i32, i32, i32, i32) {
    %c0_i32 = arith.constant 0 : i32
    %c0_i32_0 = arith.constant 0 : i32
    %c0_i32_1 = arith.constant 0 : i32
    return %arg0, %arg1, %c0_i32, %c0_i32_0 : i32, i32, i32, i32
  }
}

module attributes {stable_mosaic.version = 11 : i64} {
  func.func @kernel(%arg0: i32, %arg1: i32, %arg2: memref<1x1x3x2x3x64xbf16, #tpu.memory_space<vmem>>, %arg3: memref<5x3x64x128xbf16, #tpu.memory_space<vmem>>, %arg4: memref<1x128xf32, #tpu.memory_space<vmem>>, %arg5: memref<1x1x1x128xf32, #tpu.memory_space<vmem>>) attributes {dimension_semantics = [#tpu.dimension_semantics<parallel>, #tpu.dimension_semantics<parallel>], iteration_bounds = array<i64: 2, 1>, scalar_prefetch = 0 : i64, scratch_operands = 0 : i64, tpu.core_type = #tpu.core_type<tc>, window_params = [{transform_indices = @transform_0, window_bounds = array<i64: 1, 1, 3, 2, 3, 64>}, {pipeline_mode = #tpu.pipeline_mode<synchronous>, transform_indices = @transform_1, window_bounds = array<i64: 5, 3, 64, 128>}, {pipeline_mode = #tpu.pipeline_mode<synchronous>, transform_indices = @transform_2, window_bounds = array<i64: 1, 128>}, {transform_indices = @transform_3, window_bounds = array<i64: 1, 1, 1, 128>}]} {
    %cst = arith.constant 0.000000e+00 : f32
    %0 = vector.broadcast %cst : f32 to vector<1x128xf32>
    %c0 = arith.constant 0 : index
    %c0_0 = arith.constant 0 : index
    %c0_1 = arith.constant 0 : index
    %c0_2 = arith.constant 0 : index
    %c0_3 = arith.constant 0 : index
    %c0_4 = arith.constant 0 : index
    %1 = vector.load %arg2[%c0, %c0_0, %c0_1, %c0_2, %c0_3, %c0_4] : memref<1x1x3x2x3x64xbf16, #tpu.memory_space<vmem>>, vector<1x1x1x1x3x64xbf16>
    %2 = vector.shape_cast %1 : vector<1x1x1x1x3x64xbf16> to vector<1x3x64xbf16>
    %3 = vector.extract_strided_slice %2 {offsets = [0, 0, 0], sizes = [1, 1, 64], strides = [1, 1, 1]} : vector<1x3x64xbf16> to vector<1x1x64xbf16>
    %4 = vector.shape_cast %3 : vector<1x1x64xbf16> to vector<1x64xbf16>
    %c0_5 = arith.constant 0 : index
    %c0_6 = arith.constant 0 : index
    %c0_7 = arith.constant 0 : index
    %c0_8 = arith.constant 0 : index
    %5 = vector.load %arg3[%c0_5, %c0_6, %c0_7, %c0_8] : memref<5x3x64x128xbf16, #tpu.memory_space<vmem>>, vector<1x1x64x128xbf16>
    %6 = vector.shape_cast %5 : vector<1x1x64x128xbf16> to vector<64x128xbf16>
    %cst_9 = arith.constant dense<0.000000e+00> : vector<1x128xf32>
    %7 = tpu.matmul %4, %6, %cst_9 {dimension_numbers = #tpu.dot_dimension_numbers<[1], [0], [0], [1], [0, 0, 1, 1], [], []>} : vector<1x64xbf16>, vector<64x128xbf16>, vector<1x128xf32> -> vector<1x128xf32>
    %8 = arith.addf %0, %7 : vector<1x128xf32>
    %9 = vector.extract_strided_slice %2 {offsets = [0, 1, 0], sizes = [1, 1, 64], strides = [1, 1, 1]} : vector<1x3x64xbf16> to vector<1x1x64xbf16>
    %10 = vector.shape_cast %9 : vector<1x1x64xbf16> to vector<1x64xbf16>
    %c0_10 = arith.constant 0 : index
    %c1 = arith.constant 1 : index
    %c0_11 = arith.constant 0 : index
    %c0_12 = arith.constant 0 : index
    %11 = vector.load %arg3[%c0_10, %c1, %c0_11, %c0_12] : memref<5x3x64x128xbf16, #tpu.memory_space<vmem>>, vector<1x1x64x128xbf16>
    %12 = vector.shape_cast %11 : vector<1x1x64x128xbf16> to vector<64x128xbf16>
    %cst_13 = arith.constant dense<0.000000e+00> : vector<1x128xf32>
    %13 = tpu.matmul %10, %12, %cst_13 {dimension_numbers = #tpu.dot_dimension_numbers<[1], [0], [0], [1], [0, 0, 1, 1], [], []>} : vector<1x64xbf16>, vector<64x128xbf16>, vector<1x128xf32> -> vector<1x128xf32>
    %14 = arith.addf %8, %13 : vector<1x128xf32>
    %15 = vector.extract_strided_slice %2 {offsets = [0, 2, 0], sizes = [1, 1, 64], strides = [1, 1, 1]} : vector<1x3x64xbf16> to vector<1x1x64xbf16>
    %16 = vector.shape_cast %15 : vector<1x1x64xbf16> to vector<1x64xbf16>
    %c0_14 = arith.constant 0 : index
    %c2 = arith.constant 2 : index
    %c0_15 = arith.constant 0 : index
    %c0_16 = arith.constant 0 : index
    %17 = vector.load %arg3[%c0_14, %c2, %c0_15, %c0_16] : memref<5x3x64x128xbf16, #tpu.memory_space<vmem>>, vector<1x1x64x128xbf16>
    %18 = vector.shape_cast %17 : vector<1x1x64x128xbf16> to vector<64x128xbf16>
    %cst_17 = arith.constant dense<0.000000e+00> : vector<1x128xf32>
    %19 = tpu.matmul %16, %18, %cst_17 {dimension_numbers = #tpu.dot_dimension_numbers<[1], [0], [0], [1], [0, 0, 1, 1], [], []>} : vector<1x64xbf16>, vector<64x128xbf16>, vector<1x128xf32> -> vector<1x128xf32>
    %20 = arith.addf %14, %19 : vector<1x128xf32>
    %c0_18 = arith.constant 0 : index
    %c0_19 = arith.constant 0 : index
    %c0_20 = arith.constant 0 : index
    %c1_21 = arith.constant 1 : index
    %c0_22 = arith.constant 0 : index
    %c0_23 = arith.constant 0 : index
    %21 = vector.load %arg2[%c0_18, %c0_19, %c0_20, %c1_21, %c0_22, %c0_23] : memref<1x1x3x2x3x64xbf16, #tpu.memory_space<vmem>>, vector<1x1x1x1x3x64xbf16>
    %22 = vector.shape_cast %21 : vector<1x1x1x1x3x64xbf16> to vector<1x3x64xbf16>
    %23 = vector.extract_strided_slice %22 {offsets = [0, 0, 0], sizes = [1, 1, 64], strides = [1, 1, 1]} : vector<1x3x64xbf16> to vector<1x1x64xbf16>
    %24 = vector.shape_cast %23 : vector<1x1x64xbf16> to vector<1x64xbf16>
    %c1_24 = arith.constant 1 : index
    %c0_25 = arith.constant 0 : index
    %c0_26 = arith.constant 0 : index
    %c0_27 = arith.constant 0 : index
    %25 = vector.load %arg3[%c1_24, %c0_25, %c0_26, %c0_27] : memref<5x3x64x128xbf16, #tpu.memory_space<vmem>>, vector<1x1x64x128xbf16>
    %26 = vector.shape_cast %25 : vector<1x1x64x128xbf16> to vector<64x128xbf16>
    %cst_28 = arith.constant dense<0.000000e+00> : vector<1x128xf32>
    %27 = tpu.matmul %24, %26, %cst_28 {dimension_numbers = #tpu.dot_dimension_numbers<[1], [0], [0], [1], [0, 0, 1, 1], [], []>} : vector<1x64xbf16>, vector<64x128xbf16>, vector<1x128xf32> -> vector<1x128xf32>
    %28 = arith.addf %20, %27 : vector<1x128xf32>
    %29 = vector.extract_strided_slice %22 {offsets = [0, 1, 0], sizes = [1, 1, 64], strides = [1, 1, 1]} : vector<1x3x64xbf16> to vector<1x1x64xbf16>
    %30 = vector.shape_cast %29 : vector<1x1x64xbf16> to vector<1x64xbf16>
    %c1_29 = arith.constant 1 : index
    %c1_30 = arith.constant 1 : index
    %c0_31 = arith.constant 0 : index
    %c0_32 = arith.constant 0 : index
    %31 = vector.load %arg3[%c1_29, %c1_30, %c0_31, %c0_32] : memref<5x3x64x128xbf16, #tpu.memory_space<vmem>>, vector<1x1x64x128xbf16>
    %32 = vector.shape_cast %31 : vector<1x1x64x128xbf16> to vector<64x128xbf16>
    %cst_33 = arith.constant dense<0.000000e+00> : vector<1x128xf32>
    %33 = tpu.matmul %30, %32, %cst_33 {dimension_numbers = #tpu.dot_dimension_numbers<[1], [0], [0], [1], [0, 0, 1, 1], [], []>} : vector<1x64xbf16>, vector<64x128xbf16>, vector<1x128xf32> -> vector<1x128xf32>
    %34 = arith.addf %28, %33 : vector<1x128xf32>
    %35 = vector.extract_strided_slice %22 {offsets = [0, 2, 0], sizes = [1, 1, 64], strides = [1, 1, 1]} : vector<1x3x64xbf16> to vector<1x1x64xbf16>
    %36 = vector.shape_cast %35 : vector<1x1x64xbf16> to vector<1x64xbf16>
    %c1_34 = arith.constant 1 : index
    %c2_35 = arith.constant 2 : index
    %c0_36 = arith.constant 0 : index
    %c0_37 = arith.constant 0 : index
    %37 = vector.load %arg3[%c1_34, %c2_35, %c0_36, %c0_37] : memref<5x3x64x128xbf16, #tpu.memory_space<vmem>>, vector<1x1x64x128xbf16>
    %38 = vector.shape_cast %37 : vector<1x1x64x128xbf16> to vector<64x128xbf16>
    %cst_38 = arith.constant dense<0.000000e+00> : vector<1x128xf32>
    %39 = tpu.matmul %36, %38, %cst_38 {dimension_numbers = #tpu.dot_dimension_numbers<[1], [0], [0], [1], [0, 0, 1, 1], [], []>} : vector<1x64xbf16>, vector<64x128xbf16>, vector<1x128xf32> -> vector<1x128xf32>
    %40 = arith.addf %34, %39 : vector<1x128xf32>
    %c0_39 = arith.constant 0 : index
    %c0_40 = arith.constant 0 : index
    %c1_41 = arith.constant 1 : index
    %c0_42 = arith.constant 0 : index
    %c0_43 = arith.constant 0 : index
    %c0_44 = arith.constant 0 : index
    %41 = vector.load %arg2[%c0_39, %c0_40, %c1_41, %c0_42, %c0_43, %c0_44] : memref<1x1x3x2x3x64xbf16, #tpu.memory_space<vmem>>, vector<1x1x1x1x3x64xbf16>
    %42 = vector.shape_cast %41 : vector<1x1x1x1x3x64xbf16> to vector<1x3x64xbf16>
    %43 = vector.extract_strided_slice %42 {offsets = [0, 0, 0], sizes = [1, 1, 64], strides = [1, 1, 1]} : vector<1x3x64xbf16> to vector<1x1x64xbf16>
    %44 = vector.shape_cast %43 : vector<1x1x64xbf16> to vector<1x64xbf16>
    %c2_45 = arith.constant 2 : index
    %c0_46 = arith.constant 0 : index
    %c0_47 = arith.constant 0 : index
    %c0_48 = arith.constant 0 : index
    %45 = vector.load %arg3[%c2_45, %c0_46, %c0_47, %c0_48] : memref<5x3x64x128xbf16, #tpu.memory_space<vmem>>, vector<1x1x64x128xbf16>
    %46 = vector.shape_cast %45 : vector<1x1x64x128xbf16> to vector<64x128xbf16>
    %cst_49 = arith.constant dense<0.000000e+00> : vector<1x128xf32>
    %47 = tpu.matmul %44, %46, %cst_49 {dimension_numbers = #tpu.dot_dimension_numbers<[1], [0], [0], [1], [0, 0, 1, 1], [], []>} : vector<1x64xbf16>, vector<64x128xbf16>, vector<1x128xf32> -> vector<1x128xf32>
    %48 = arith.addf %40, %47 : vector<1x128xf32>
    %49 = vector.extract_strided_slice %42 {offsets = [0, 1, 0], sizes = [1, 1, 64], strides = [1, 1, 1]} : vector<1x3x64xbf16> to vector<1x1x64xbf16>
    %50 = vector.shape_cast %49 : vector<1x1x64xbf16> to vector<1x64xbf16>
    %c2_50 = arith.constant 2 : index
    %c1_51 = arith.constant 1 : index
    %c0_52 = arith.constant 0 : index
    %c0_53 = arith.constant 0 : index
    %51 = vector.load %arg3[%c2_50, %c1_51, %c0_52, %c0_53] : memref<5x3x64x128xbf16, #tpu.memory_space<vmem>>, vector<1x1x64x128xbf16>
    %52 = vector.shape_cast %51 : vector<1x1x64x128xbf16> to vector<64x128xbf16>
    %cst_54 = arith.constant dense<0.000000e+00> : vector<1x128xf32>
    %53 = tpu.matmul %50, %52, %cst_54 {dimension_numbers = #tpu.dot_dimension_numbers<[1], [0], [0], [1], [0, 0, 1, 1], [], []>} : vector<1x64xbf16>, vector<64x128xbf16>, vector<1x128xf32> -> vector<1x128xf32>
    %54 = arith.addf %48, %53 : vector<1x128xf32>
    %55 = vector.extract_strided_slice %42 {offsets = [0, 2, 0], sizes = [1, 1, 64], strides = [1, 1, 1]} : vector<1x3x64xbf16> to vector<1x1x64xbf16>
    %56 = vector.shape_cast %55 : vector<1x1x64xbf16> to vector<1x64xbf16>
    %c2_55 = arith.constant 2 : index
    %c2_56 = arith.constant 2 : index
    %c0_57 = arith.constant 0 : index
    %c0_58 = arith.constant 0 : index
    %57 = vector.load %arg3[%c2_55, %c2_56, %c0_57, %c0_58] : memref<5x3x64x128xbf16, #tpu.memory_space<vmem>>, vector<1x1x64x128xbf16>
    %58 = vector.shape_cast %57 : vector<1x1x64x128xbf16> to vector<64x128xbf16>
    %cst_59 = arith.constant dense<0.000000e+00> : vector<1x128xf32>
    %59 = tpu.matmul %56, %58, %cst_59 {dimension_numbers = #tpu.dot_dimension_numbers<[1], [0], [0], [1], [0, 0, 1, 1], [], []>} : vector<1x64xbf16>, vector<64x128xbf16>, vector<1x128xf32> -> vector<1x128xf32>
    %60 = arith.addf %54, %59 : vector<1x128xf32>
    %c0_60 = arith.constant 0 : index
    %c0_61 = arith.constant 0 : index
    %c1_62 = arith.constant 1 : index
    %c1_63 = arith.constant 1 : index
    %c0_64 = arith.constant 0 : index
    %c0_65 = arith.constant 0 : index
    %61 = vector.load %arg2[%c0_60, %c0_61, %c1_62, %c1_63, %c0_64, %c0_65] : memref<1x1x3x2x3x64xbf16, #tpu.memory_space<vmem>>, vector<1x1x1x1x3x64xbf16>
    %62 = vector.shape_cast %61 : vector<1x1x1x1x3x64xbf16> to vector<1x3x64xbf16>
    %63 = vector.extract_strided_slice %62 {offsets = [0, 0, 0], sizes = [1, 1, 64], strides = [1, 1, 1]} : vector<1x3x64xbf16> to vector<1x1x64xbf16>
    %64 = vector.shape_cast %63 : vector<1x1x64xbf16> to vector<1x64xbf16>
    %c3 = arith.constant 3 : index
    %c0_66 = arith.constant 0 : index
    %c0_67 = arith.constant 0 : index
    %c0_68 = arith.constant 0 : index
    %65 = vector.load %arg3[%c3, %c0_66, %c0_67, %c0_68] : memref<5x3x64x128xbf16, #tpu.memory_space<vmem>>, vector<1x1x64x128xbf16>
    %66 = vector.shape_cast %65 : vector<1x1x64x128xbf16> to vector<64x128xbf16>
    %cst_69 = arith.constant dense<0.000000e+00> : vector<1x128xf32>
    %67 = tpu.matmul %64, %66, %cst_69 {dimension_numbers = #tpu.dot_dimension_numbers<[1], [0], [0], [1], [0, 0, 1, 1], [], []>} : vector<1x64xbf16>, vector<64x128xbf16>, vector<1x128xf32> -> vector<1x128xf32>
    %68 = arith.addf %60, %67 : vector<1x128xf32>
    %69 = vector.extract_strided_slice %62 {offsets = [0, 1, 0], sizes = [1, 1, 64], strides = [1, 1, 1]} : vector<1x3x64xbf16> to vector<1x1x64xbf16>
    %70 = vector.shape_cast %69 : vector<1x1x64xbf16> to vector<1x64xbf16>
    %c3_70 = arith.constant 3 : index
    %c1_71 = arith.constant 1 : index
    %c0_72 = arith.constant 0 : index
    %c0_73 = arith.constant 0 : index
    %71 = vector.load %arg3[%c3_70, %c1_71, %c0_72, %c0_73] : memref<5x3x64x128xbf16, #tpu.memory_space<vmem>>, vector<1x1x64x128xbf16>
    %72 = vector.shape_cast %71 : vector<1x1x64x128xbf16> to vector<64x128xbf16>
    %cst_74 = arith.constant dense<0.000000e+00> : vector<1x128xf32>
    %73 = tpu.matmul %70, %72, %cst_74 {dimension_numbers = #tpu.dot_dimension_numbers<[1], [0], [0], [1], [0, 0, 1, 1], [], []>} : vector<1x64xbf16>, vector<64x128xbf16>, vector<1x128xf32> -> vector<1x128xf32>
    %74 = arith.addf %68, %73 : vector<1x128xf32>
    %75 = vector.extract_strided_slice %62 {offsets = [0, 2, 0], sizes = [1, 1, 64], strides = [1, 1, 1]} : vector<1x3x64xbf16> to vector<1x1x64xbf16>
    %76 = vector.shape_cast %75 : vector<1x1x64xbf16> to vector<1x64xbf16>
    %c3_75 = arith.constant 3 : index
    %c2_76 = arith.constant 2 : index
    %c0_77 = arith.constant 0 : index
    %c0_78 = arith.constant 0 : index
    %77 = vector.load %arg3[%c3_75, %c2_76, %c0_77, %c0_78] : memref<5x3x64x128xbf16, #tpu.memory_space<vmem>>, vector<1x1x64x128xbf16>
    %78 = vector.shape_cast %77 : vector<1x1x64x128xbf16> to vector<64x128xbf16>
    %cst_79 = arith.constant dense<0.000000e+00> : vector<1x128xf32>
    %79 = tpu.matmul %76, %78, %cst_79 {dimension_numbers = #tpu.dot_dimension_numbers<[1], [0], [0], [1], [0, 0, 1, 1], [], []>} : vector<1x64xbf16>, vector<64x128xbf16>, vector<1x128xf32> -> vector<1x128xf32>
    %80 = arith.addf %74, %79 : vector<1x128xf32>
    %c0_80 = arith.constant 0 : index
    %c0_81 = arith.constant 0 : index
    %c2_82 = arith.constant 2 : index
    %c0_83 = arith.constant 0 : index
    %c0_84 = arith.constant 0 : index
    %c0_85 = arith.constant 0 : index
    %81 = vector.load %arg2[%c0_80, %c0_81, %c2_82, %c0_83, %c0_84, %c0_85] : memref<1x1x3x2x3x64xbf16, #tpu.memory_space<vmem>>, vector<1x1x1x1x3x64xbf16>
    %82 = vector.shape_cast %81 : vector<1x1x1x1x3x64xbf16> to vector<1x3x64xbf16>
    %83 = vector.extract_strided_slice %82 {offsets = [0, 0, 0], sizes = [1, 1, 64], strides = [1, 1, 1]} : vector<1x3x64xbf16> to vector<1x1x64xbf16>
    %84 = vector.shape_cast %83 : vector<1x1x64xbf16> to vector<1x64xbf16>
    %c4 = arith.constant 4 : index
    %c0_86 = arith.constant 0 : index
    %c0_87 = arith.constant 0 : index
    %c0_88 = arith.constant 0 : index
    %85 = vector.load %arg3[%c4, %c0_86, %c0_87, %c0_88] : memref<5x3x64x128xbf16, #tpu.memory_space<vmem>>, vector<1x1x64x128xbf16>
    %86 = vector.shape_cast %85 : vector<1x1x64x128xbf16> to vector<64x128xbf16>
    %cst_89 = arith.constant dense<0.000000e+00> : vector<1x128xf32>
    %87 = tpu.matmul %84, %86, %cst_89 {dimension_numbers = #tpu.dot_dimension_numbers<[1], [0], [0], [1], [0, 0, 1, 1], [], []>} : vector<1x64xbf16>, vector<64x128xbf16>, vector<1x128xf32> -> vector<1x128xf32>
    %88 = arith.addf %80, %87 : vector<1x128xf32>
    %89 = vector.extract_strided_slice %82 {offsets = [0, 1, 0], sizes = [1, 1, 64], strides = [1, 1, 1]} : vector<1x3x64xbf16> to vector<1x1x64xbf16>
    %90 = vector.shape_cast %89 : vector<1x1x64xbf16> to vector<1x64xbf16>
    %c4_90 = arith.constant 4 : index
    %c1_91 = arith.constant 1 : index
    %c0_92 = arith.constant 0 : index
    %c0_93 = arith.constant 0 : index
    %91 = vector.load %arg3[%c4_90, %c1_91, %c0_92, %c0_93] : memref<5x3x64x128xbf16, #tpu.memory_space<vmem>>, vector<1x1x64x128xbf16>
    %92 = vector.shape_cast %91 : vector<1x1x64x128xbf16> to vector<64x128xbf16>
    %cst_94 = arith.constant dense<0.000000e+00> : vector<1x128xf32>
    %93 = tpu.matmul %90, %92, %cst_94 {dimension_numbers = #tpu.dot_dimension_numbers<[1], [0], [0], [1], [0, 0, 1, 1], [], []>} : vector<1x64xbf16>, vector<64x128xbf16>, vector<1x128xf32> -> vector<1x128xf32>
    %94 = arith.addf %88, %93 : vector<1x128xf32>
    %95 = vector.extract_strided_slice %82 {offsets = [0, 2, 0], sizes = [1, 1, 64], strides = [1, 1, 1]} : vector<1x3x64xbf16> to vector<1x1x64xbf16>
    %96 = vector.shape_cast %95 : vector<1x1x64xbf16> to vector<1x64xbf16>
    %c4_95 = arith.constant 4 : index
    %c2_96 = arith.constant 2 : index
    %c0_97 = arith.constant 0 : index
    %c0_98 = arith.constant 0 : index
    %97 = vector.load %arg3[%c4_95, %c2_96, %c0_97, %c0_98] : memref<5x3x64x128xbf16, #tpu.memory_space<vmem>>, vector<1x1x64x128xbf16>
    %98 = vector.shape_cast %97 : vector<1x1x64x128xbf16> to vector<64x128xbf16>
    %cst_99 = arith.constant dense<0.000000e+00> : vector<1x128xf32>
    %99 = tpu.matmul %96, %98, %cst_99 {dimension_numbers = #tpu.dot_dimension_numbers<[1], [0], [0], [1], [0, 0, 1, 1], [], []>} : vector<1x64xbf16>, vector<64x128xbf16>, vector<1x128xf32> -> vector<1x128xf32>
    %100 = arith.addf %94, %99 : vector<1x128xf32>
    %c0_100 = arith.constant 0 : index
    %c0_101 = arith.constant 0 : index
    %101 = vector.load %arg4[%c0_100, %c0_101] : memref<1x128xf32, #tpu.memory_space<vmem>>, vector<1x128xf32>
    %102 = arith.addf %100, %101 : vector<1x128xf32>
    %cst_102 = arith.constant 0.000000e+00 : f32
    %103 = vector.broadcast %cst_102 : f32 to vector<1x128xf32>
    %104 = arith.cmpf ogt, %102, %103 : vector<1x128xf32>
    %cst_103 = arith.constant 2.000000e-01 : f32
    %105 = vector.broadcast %cst_103 : f32 to vector<1x128xf32>
    %106 = arith.mulf %105, %102 : vector<1x128xf32>
    %107 = arith.select %104, %102, %106 : vector<1x128xi1>, vector<1x128xf32>
    %108 = vector.shape_cast %107 : vector<1x128xf32> to vector<1x1x128xf32>
    %c0_104 = arith.constant 0 : index
    %c0_105 = arith.constant 0 : index
    %c0_106 = arith.constant 0 : index
    %c0_107 = arith.constant 0 : index
    %109 = vector.load %arg5[%c0_104, %c0_105, %c0_106, %c0_107] : memref<1x1x1x128xf32, #tpu.memory_space<vmem>>, vector<1x1x1x128xf32>
    %110 = vector.shape_cast %109 : vector<1x1x1x128xf32> to vector<1x1x128xf32>
    %111 = vector.shape_cast %108 : vector<1x1x128xf32> to vector<1x1x1x128xf32>
    tpu.vector_store %arg5[%c0_104, %c0_105, %c0_106, %c0_107], %111 {strides = array<i32>} : memref<1x1x1x128xf32, #tpu.memory_space<vmem>>, vector<1x1x1x128xf32>,
    return
  }
  func.func @transform_0(%arg0: i32, %arg1: i32) -> (i32, i32, i32, i32, i32, i32) {
    %c0_i32 = arith.constant 0 : i32
    %c0_i32_0 = arith.constant 0 : i32
    %c0_i32_1 = arith.constant 0 : i32
    %c0_i32_2 = arith.constant 0 : i32
    %c0_i32_3 = arith.constant 0 : i32
    return %arg0, %arg1, %c0_i32, %c0_i32_0, %c0_i32_1, %c0_i32_2 : i32, i32, i32, i32, i32, i32
  }
  func.func @transform_1(%arg0: i32, %arg1: i32) -> (i32, i32, i32, i32) {
    %c0_i32 = arith.constant 0 : i32
    %c0_i32_0 = arith.constant 0 : i32
    %c0_i32_1 = arith.constant 0 : i32
    %c0_i32_2 = arith.constant 0 : i32
    %c0_i32_3 = arith.constant 0 : i32
    return %c0_i32, %c0_i32_0, %c0_i32_1, %c0_i32_2 : i32, i32, i32, i32
  }
  func.func @transform_2(%arg0: i32, %arg1: i32) -> (i32, i32) {
    %c0_i32 = arith.constant 0 : i32
    %c0_i32_0 = arith.constant 0 : i32
    %c0_i32_1 = arith.constant 0 : i32
    return %c0_i32, %c0_i32_0 : i32, i32
  }
  func.func @transform_3(%arg0: i32, %arg1: i32) -> (i32, i32, i32, i32) {
    %c0_i32 = arith.constant 0 : i32
    %c0_i32_0 = arith.constant 0 : i32
    %c0_i32_1 = arith.constant 0 : i32
    return %arg0, %arg1, %c0_i32, %c0_i32_0 : i32, i32, i32, i32
  }
}

</mosaic_0001>

<llo_original>
// kernel: dis_conv_module_forward.5
$region0: #{dis_conv_module_forward.5}
  #allocation0 [shape = 'u32[]', space=smem, size = 0x4, offset = 0x4, fixed_abs, tag = 'smem constant byte address 0x4 - core index']
  #allocation1 [shape = 'u32[144,128]{1,0:T(1,128)}', space=vmem, size = 0x12000, scoped, tag = 'internal scratch']
  %s0 = inlined_call_operand.vmem [shape: bf16[2,1,6,2,6,16], index: 0, kind: input, shape index: {}]
  %s1 = inlined_call_operand.vmem [shape: bf16[5,3,16,128], index: 1, kind: input, shape index: {}]
  %s2 = inlined_call_operand.vmem [shape: f32[1,128], index: 2, kind: input, shape index: {}]
  %s3 = inlined_call_operand.vmem [shape: bf16[2,4,4,128], index: 3, kind: output, shape index: {}]
  %s4 = sld [smem:[#allocation0]]
  $region45: #{dis_conv_module_forward.5} parent=0
    _
  %s6 = ssub.s32 1, %s4
  %s7 = scalar_select 0, %s6, %s4
  loop: start=0, step=1, limit=4
  $region2: #{dis_conv_module_forward.5} parent=0 // loop_pre_header
    _
  $region3: #{dis_conv_module_forward.5} parent=0 // loop_header
    %s9 = sphi 0, %s13
    %p10 = scmp.ge.s32.totalorder %s9, 4
    %s16 = sphi 0, %s28
    %s17 = sphi 0, %s24
    %s18 = sphi 0, %s16
    %s19 = sphi 0, %s17
    %s20 = sphi 0, %s18
    %s21 = sphi 0, %s19
    %s33 = sphi 0, %s35
    %s36 = sphi 0, %s33
    %s37 = sphi 0, %s36
    %s53 = sphi 0, %s37
    %s57 = sphi 0, %s57
    %s59 = sphi 0, %s57
    %s60 = sphi 0, %s59
    %s74 = sphi 0, %s60
    %s78 = sphi 0, %s78
    %s80 = sphi 0, %s78
    %s81 = sphi 0, %s80
    %s95 = sphi 0, %s81
    %s103 = sphi 0, %s105
    %s106 = sphi 0, %s103
    %s107 = sphi 0, %s106
    %s123 = sphi 0, %s107
  $region4: #{dis_conv_module_forward.5} parent=0 // loop_header_branch
    %12 = sbr.rel (%p10) target = $region8
  $region5: #{dis_conv_module_forward.5} parent=0 // loop_body
    %s14 = ssub.s32 %s9, 1
    %s15 = ssub.s32 %s9, 2
    %s22 = sadd.s32 1, %s17
    %p23 = scmp.ge.s32.totalorder %s22, 1
    %s24 = scalar_select %p23, 0, %s22
    %s25 = sadd.s32 1, %s16
    %s26 = scalar_select %p23, %s25, %s16
    %p27 = scmp.ge.s32.totalorder %s26, 2
    %s28 = scalar_select %p27, 0, %s26
    %s29 = ssub.s32 %s16, %s28
    %s30 = ssub.s32 %s17, %s24
    %s31 = sor.u32 %s29, %s30
    %p32 = scmp.eq.s32.totalorder %s31, 0
    %s34 = sadd.s32 %s33, 1
    %s35 = scalar_select %p32, %s33, %s34
    %p38 = pneg %p32
    %p39 = scmp.eq.s32.totalorder %s9, 1
    %p40 = por %p38, %p39
    %p41 = scmp.ne.s32.totalorder %s33, %s36
    %p42 = scmp.eq.s32.totalorder %s9, 0
    %p43 = por %p41, %p42
    %p44 = scmp.ne.s32.totalorder %s33, %s36
    %p45 = scmp.eq.s32.totalorder %s14, 1
    %p46 = por %p44, %p45
    %p47 = scmp.ne.s32.totalorder %s36, %s37
    %p48 = scmp.eq.s32.totalorder %s14, 0
    %p49 = por %p47, %p48
    %p50 = scmp.ne.s32.totalorder %s36, %s37
    %p51 = scmp.eq.s32.totalorder %s15, 1
    %p52 = por %p50, %p51
    %p54 = scmp.ne.s32.totalorder %s37, %s53
    %p55 = scmp.eq.s32.totalorder %s15, 0
    %p56 = por %p54, %p55
    %s58 = sadd.s32 %s57, 1
    %p61 = scmp.eq.s32.totalorder %s9, 1
    %p62 = scmp.ne.s32.totalorder %s57, %s59
    %p63 = scmp.eq.s32.totalorder %s9, 0
    %p64 = por %p62, %p63
    %p65 = scmp.ne.s32.totalorder %s57, %s59
    %p66 = scmp.eq.s32.totalorder %s14, 1
    %p67 = por %p65, %p66
    %p68 = scmp.ne.s32.totalorder %s59, %s60
    %p69 = scmp.eq.s32.totalorder %s14, 0
    %p70 = por %p68, %p69
    %p71 = scmp.ne.s32.totalorder %s59, %s60
    %p72 = scmp.eq.s32.totalorder %s15, 1
    %p73 = por %p71, %p72
    %p75 = scmp.ne.s32.totalorder %s60, %s74
    %p76 = scmp.eq.s32.totalorder %s15, 0
    %p77 = por %p75, %p76
    %s79 = sadd.s32 %s78, 1
    %p82 = scmp.eq.s32.totalorder %s9, 1
    %p83 = scmp.ne.s32.totalorder %s78, %s80
    %p84 = scmp.eq.s32.totalorder %s9, 0
    %p85 = por %p83, %p84
    %p86 = scmp.ne.s32.totalorder %s78, %s80
    %p87 = scmp.eq.s32.totalorder %s14, 1
    %p88 = por %p86, %p87
    %p89 = scmp.ne.s32.totalorder %s80, %s81
    %p90 = scmp.eq.s32.totalorder %s14, 0
    %p91 = por %p89, %p90
    %p92 = scmp.ne.s32.totalorder %s80, %s81
    %p93 = scmp.eq.s32.totalorder %s15, 1
    %p94 = por %p92, %p93
    %p96 = scmp.ne.s32.totalorder %s81, %s95
    %p97 = scmp.eq.s32.totalorder %s15, 0
    %p98 = por %p96, %p97
    %s99 = ssub.s32 %s16, %s28
    %s100 = ssub.s32 %s17, %s24
    %s101 = sor.u32 %s99, %s100
    %p102 = scmp.eq.s32.totalorder %s101, 0
    %s104 = sadd.s32 %s103, 1
    %s105 = scalar_select %p102, %s103, %s104
    %p108 = pneg %p102
    %p109 = scmp.eq.s32.totalorder %s9, 1
    %p110 = por %p108, %p109
    %p111 = scmp.ne.s32.totalorder %s103, %s106
    %p112 = scmp.eq.s32.totalorder %s9, 0
    %p113 = por %p111, %p112
    %p114 = scmp.ne.s32.totalorder %s103, %s106
    %p115 = scmp.eq.s32.totalorder %s14, 1
    %p116 = por %p114, %p115
    %p117 = scmp.ne.s32.totalorder %s106, %s107
    %p118 = scmp.eq.s32.totalorder %s14, 0
    %p119 = por %p117, %p118
    %p120 = scmp.ne.s32.totalorder %s106, %s107
    %p121 = scmp.eq.s32.totalorder %s15, 1
    %p122 = por %p120, %p121
    %p124 = scmp.ne.s32.totalorder %s107, %s123
    %p125 = scmp.eq.s32.totalorder %s15, 0
    %p126 = por %p124, %p125
    %p127 = scmp.le.s32.totalorder 1, %s9
    %p128 = scmp.lt.s32.totalorder %s9, 3
    %p129 = pnand %p127, %p128
    %p130 = pneg %p129
    // Predicated region
    $region9: #{dis_conv_module_forward.5} parent=5 // pred_check
      _
    $region10: #{dis_conv_module_forward.5} parent=5 // pred_check_branch
      %132 = sbr.rel (%p129) target = $region12
    $region11: #{dis_conv_module_forward.5} parent=5 // pred_region
      %s133 = ssub.s32 %s9, 1
      // Predicated region
      $region13: #{dis_conv_module_forward.5} parent=11 // pred_check
        %p134 = pneg %p70
      $region14: #{dis_conv_module_forward.5} parent=11 // pred_check_branch
        %136 = sbr.rel (%p134) target = $region16
      $region15: #{dis_conv_module_forward.5} parent=11 // pred_region
        _
      $region16: #{dis_conv_module_forward.5} parent=11 // pred_fallthru
        _
      // Predicated region
      $region17: #{dis_conv_module_forward.5} parent=11 // pred_check
        %p137 = pneg %p91
      $region18: #{dis_conv_module_forward.5} parent=11 // pred_check_branch
        %139 = sbr.rel (%p137) target = $region20
      $region19: #{dis_conv_module_forward.5} parent=11 // pred_region
        _
      $region20: #{dis_conv_module_forward.5} parent=11 // pred_fallthru
        _
    $region12: #{dis_conv_module_forward.5} parent=5 // pred_fallthru
      _
    %p140 = scmp.lt.s32.totalorder %s9, 2
    // Predicated region
    $region21: #{dis_conv_module_forward.5} parent=5 // pred_check
      %p141 = pneg %p140
    $region22: #{dis_conv_module_forward.5} parent=5 // pred_check_branch
      %143 = sbr.rel (%p141) target = $region24
    $region23: #{dis_conv_module_forward.5} parent=5 // pred_region
      // Predicated region
      $region25: #{dis_conv_module_forward.5} parent=23 // pred_check
        %p144 = pneg %p43
      $region26: #{dis_conv_module_forward.5} parent=23 // pred_check_branch
        %146 = sbr.rel (%p144) target = $region28
      $region27: #{dis_conv_module_forward.5} parent=23 // pred_region
        %p147 = scmp.lt.s32.totalorder %s16, 1
        %s148 = scalar_select %p147, %s16, 1
        %p149 = scmp.lt.s32.totalorder %s17, 0
        %s150 = scalar_select %p149, %s17, 0
        %s151 = smul.addr %s150, 12
        %s152 = smul.addr %s148, 12
        %s153 = sadd.s32 %s151, %s152
        %s154 = smul.addr %s153, 4
        %s155 = scalar_lea.vmem %s0, %s154
      $region28: #{dis_conv_module_forward.5} parent=23 // pred_fallthru
        _
    $region24: #{dis_conv_module_forward.5} parent=5 // pred_fallthru
      _
    %p156 = scmp.le.s32.totalorder 1, %s9
    %p157 = scmp.lt.s32.totalorder %s9, 3
    %p158 = pnand %p156, %p157
    %p159 = pneg %p158
    // Predicated region
    $region29: #{dis_conv_module_forward.5} parent=5 // pred_check
      _
    $region30: #{dis_conv_module_forward.5} parent=5 // pred_check_branch
      %161 = sbr.rel (%p158) target = $region32
    $region31: #{dis_conv_module_forward.5} parent=5 // pred_region
      %s162 = ssub.s32 %s9, 1
      %p163 = scmp.lt.s32.totalorder %s18, 1
      %s164 = scalar_select %p163, %s18, 1
      %p165 = scmp.lt.s32.totalorder %s19, 0
      %s166 = scalar_select %p165, %s19, 0
      %s167 = smul.addr %s166, 12
      %s168 = smul.addr %s164, 12
      %s169 = sadd.s32 %s167, %s168
      %s170 = smul.addr %s169, 4
      %s171 = scalar_lea.vmem %s0, %s170
      %p172 = pneg %p49
      %p173 = pneg %p46
      %p174 = pneg %p70
      %p175 = pneg %p67
      %p176 = pneg %p91
      %p177 = pneg %p88
      %p178 = pneg %p119
      %p179 = pneg %p116
      %s180 = smul.u32 4, %s19
      %p181 = scmp.lt.s32.totalorder %s18, 1
      %s182 = scalar_select %p181, %s18, 1
      %p183 = scmp.lt.s32.totalorder %s180, 3
      %s184 = scalar_select %p183, %s180, 3
      %s185 = smul.addr %s182, 4
      %s186 = sadd.s32 %s184, %s185
      %s187 = smul.addr %s186, 2
      %s188 = scalar_lea.vmem %s3, %s187
      %p189 = scmp.lt.s32.totalorder %s18, 1
      %s190 = scalar_select %p189, %s18, 1
      %p191 = scmp.lt.s32.totalorder %s19, 0
      %s192 = scalar_select %p191, %s19, 0
      %s193 = smul.addr %s192, 12
      %s194 = smul.addr %s190, 12
      %s195 = sadd.s32 %s193, %s194
      %s196 = smul.addr %s195, 4
      %s197 = scalar_lea.vmem %s0, %s196
      %s198 = smul.u32 4, %s19
      %p199 = scmp.lt.s32.totalorder %s18, 1
      %s200 = scalar_select %p199, %s18, 1
      %p201 = scmp.lt.s32.totalorder %s198, 3
      %s202 = scalar_select %p201, %s198, 3
      %s203 = smul.addr %s200, 4
      %s204 = sadd.s32 %s202, %s203
      %s205 = smul.addr %s204, 2
      %s206 = scalar_lea.vmem %s3, %s205
      %s207 = smul.u32 4, %s19
      %v209 = vld [vmem:[%s197] sm:$0x7]
      %v210 = vld [vmem:[%s197 + $0x8] sm:$0x7]
      %v211 = vld [vmem:[%s197 + $0x10] sm:$0x7]
      %v212 = vld [vmem:[%s197 + $0x18] sm:$0x7]
      %v213 = vld [vmem:[%s1] sm:$0xf]
      %v214 = vld [vmem:[%s1 + $0x4] sm:$0xf]
      %v220 = vunpack.c.l.s4 1983009808
      %v221 = vunpack.c.0.s8 %v220
      %v222 = vlaneseq
      %v223 = vshrl.u32 %v222, 7
      %v224 = vsub.s32 %v221, %v223
      %v225 = vrot.slane %v209, %v224
      %v226 = vcombine.high %v225, %v225
      %v228 = vunpack.c.l.s4 1983009808
      %v229 = vunpack.c.0.s8 %v228
      %v230 = vlaneseq
      %v231 = vshrl.u32 %v230, 7
      %v232 = vsub.s32 %v229, %v231
      %v233 = vrot.slane %v210, %v232
      %v234 = vcombine.high %v233, %v233
      %v236 = vunpack.c.l.s4 1983009808
      %v237 = vunpack.c.0.s8 %v236
      %v238 = vlaneseq
      %v239 = vshrl.u32 %v238, 7
      %v240 = vsub.s32 %v237, %v239
      %v241 = vrot.slane %v211, %v240
      %v242 = vcombine.high %v241, %v241
      %v244 = vunpack.c.l.s4 1983009808
      %v245 = vunpack.c.0.s8 %v244
      %v246 = vlaneseq
      %v247 = vshrl.u32 %v246, 7
      %v248 = vsub.s32 %v245, %v247
      %v249 = vrot.slane %v212, %v248
      %v250 = vcombine.high %v249, %v249
      %vm251 = vsmask.f32 1280
      %vm252 = vsmask.f32 3336
      %vm253 = vmor %vm251, %vm252
      %vm254 = vsmask.f32 5392
      %vm255 = vmor %vm253, %vm254
      %vm256 = vsmask.f32 7448
      %vm257 = vmor %vm255, %vm256
      %v259 = vshrl.u32 %v225, 16
      %v261 = vrot.slane %v259, 6
      %v262 = vshll.u32 %v225, 16
      %v264 = vrot.slane %v262, 7
      %v265 = vor.u32 %v261, %v264
      %v266 = vrot.slane %v265, 2
      %v268 = vshll.u32 %v226, 16
      %v270 = vrot.slane %v268, 7
      %v271 = vsel %vm257, %v266, %v270
      %v273 = vshrl.u32 %v233, 16
      %v275 = vrot.slane %v273, 6
      %v276 = vshll.u32 %v233, 16
      %v278 = vrot.slane %v276, 7
      %v279 = vor.u32 %v275, %v278
      %v280 = vrot.slane %v279, 2
      %v282 = vshll.u32 %v234, 16
      %v284 = vrot.slane %v282, 7
      %v285 = vsel %vm257, %v280, %v284
      %v287 = vshrl.u32 %v241, 16
      %v289 = vrot.slane %v287, 6
      %v290 = vshll.u32 %v241, 16
      %v292 = vrot.slane %v290, 7
      %v293 = vor.u32 %v289, %v292
      %v294 = vrot.slane %v293, 2
      %v296 = vshll.u32 %v242, 16
      %v298 = vrot.slane %v296, 7
      %v299 = vsel %vm257, %v294, %v298
      %v301 = vshrl.u32 %v249, 16
      %v303 = vrot.slane %v301, 6
      %v304 = vshll.u32 %v249, 16
      %v306 = vrot.slane %v304, 7
      %v307 = vor.u32 %v303, %v306
      %v308 = vrot.slane %v307, 2
      %v310 = vshll.u32 %v250, 16
      %v312 = vrot.slane %v310, 7
      %v313 = vsel %vm257, %v308, %v312
      %s314 = scalar_lea.vmem %s1, 8
      %v315 = vld [vmem:[%s314] sm:$0xf]
      %v316 = vld [vmem:[%s314 + $0x4] sm:$0xf]
      %v317 = vcombine.low %v271, %v285
      %v318 = vcombine.low %v299, %v313
      %v320 = vunpack.c.l.s4 1983009808
      %v321 = vunpack.c.0.s8 %v320
      %v322 = vlaneseq
      %v323 = vshrl.u32 %v322, 7
      %v324 = vsub.s32 %v321, %v323
      %v325 = vrot.slane %v317, %v324
      %v327 = vunpack.c.l.s4 1983009808
      %v328 = vunpack.c.0.s8 %v327
      %v329 = vlaneseq
      %v330 = vshrl.u32 %v329, 7
      %v331 = vsub.s32 %v328, %v330
      %v332 = vrot.slane %v318, %v331
      %v333 = vcombine.low %v325, %v332
      %v336 = vunpack.c.l.b16 %v315
      %v337 = vunpack.c.l.b16 %v316
      %v338 = vpack.c.b16 %v337, %v336
      %vm340 = vcmask 130048
      %v342 = vsel %vm340, %v333, 0
      %344 = vmatprep.subr.bf16.mxu0 0
      %345 = vmatpush1.bf16.msra.mxu0 %v338
      %346 = vmatprep.subr.bf16.mxu0 0
      %347 = vmatpush1.bf16.msra.mxu0 0
      %348 = vmatprep.subr.bf16.mxu0 0
      %349 = vmatpush1.bf16.msra.mxu0 0
      %350 = vmatprep.subr.bf16.mxu0 0
      %351 = vmatpush1.bf16.msra.mxu0 0
      %352 = vmatprep.subr.bf16.mxu0 0
      %353 = vmatpush1.bf16.msra.mxu0 0
      %354 = vmatprep.subr.bf16.mxu0 0
      %355 = vmatpush1.bf16.msra.mxu0 0
      %356 = vmatprep.subr.bf16.mxu0 0
      %357 = vmatpush1.bf16.msra.mxu0 0
      %358 = vmatprep.subr.bf16.mxu0 0
      %359 = vmatpush1.bf16.msra.mxu0 0
      %360 = vmatprep.subr.bf16.mxu0 0
      %361 = vmatpush1.bf16.msra.mxu0 0
      %362 = vmatprep.subr.bf16.mxu0 0
      %363 = vmatpush1.bf16.msra.mxu0 0
      %364 = vmatprep.subr.bf16.mxu0 0
      %365 = vmatpush1.bf16.msra.mxu0 0
      %366 = vmatprep.subr.bf16.mxu0 0
      %367 = vmatpush1.bf16.msra.mxu0 0
      %368 = vmatprep.subr.bf16.mxu0 0
      %369 = vmatpush1.bf16.msra.mxu0 0
      %370 = vmatprep.subr.bf16.mxu0 0
      %371 = vmatpush1.bf16.msra.mxu0 0
      %372 = vmatprep.subr.bf16.mxu0 0
      %373 = vmatpush1.bf16.msra.mxu0 0
      %374 = vmatprep.subr.bf16.mxu0 0
      %375 = vmatpush1.bf16.msra.mxu0 0
      %376 = vmatprep.mubr.bf16.mxu0 0
      %377 = vmatmul.mubr.bf16.gmra.mrb[0].mxu0 %v342
      %v378 = vpop.f32.mrb[0].mxu0
      %v379 = vadd.f32 0.0, %v378
      %v380 = vpop.f32.mrb[0].mxu0
      %v381 = vpop.f32.mrb[0].mxu0
      %v382 = vadd.f32 0.0, %v381
      %v383 = vpop.f32.mrb[0].mxu0
      %384 = vdwg.mxu0
      %v385 = vcombine.low %v209, %v210
      %v386 = vcombine.low %v211, %v212
      %v388 = vunpack.c.l.s4 1983009808
      %v389 = vunpack.c.0.s8 %v388
      %v390 = vlaneseq
      %v391 = vshrl.u32 %v390, 7
      %v392 = vsub.s32 %v389, %v391
      %v393 = vrot.slane %v385, %v392
      %v395 = vunpack.c.l.s4 1983009808
      %v396 = vunpack.c.0.s8 %v395
      %v397 = vlaneseq
      %v398 = vshrl.u32 %v397, 7
      %v399 = vsub.s32 %v396, %v398
      %v400 = vrot.slane %v386, %v399
      %v401 = vcombine.low %v393, %v400
      %v404 = vunpack.c.l.b16 %v213
      %v405 = vunpack.c.l.b16 %v214
      %v406 = vpack.c.b16 %v405, %v404
      %v409 = vsel %vm340, %v401, 0
      %411 = vmatprep.subr.bf16.mxu0 0
      %412 = vmatpush1.bf16.msra.mxu0 %v406
      %413 = vmatprep.subr.bf16.mxu0 0
      %414 = vmatpush1.bf16.msra.mxu0 0
      %415 = vmatprep.subr.bf16.mxu0 0
      %416 = vmatpush1.bf16.msra.mxu0 0
      %417 = vmatprep.subr.bf16.mxu0 0
      %418 = vmatpush1.bf16.msra.mxu0 0
      %419 = vmatprep.subr.bf16.mxu0 0
      %420 = vmatpush1.bf16.msra.mxu0 0
      %421 = vmatprep.subr.bf16.mxu0 0
      %422 = vmatpush1.bf16.msra.mxu0 0
      %423 = vmatprep.subr.bf16.mxu0 0
      %424 = vmatpush1.bf16.msra.mxu0 0
      %425 = vmatprep.subr.bf16.mxu0 0
      %426 = vmatpush1.bf16.msra.mxu0 0
      %427 = vmatprep.subr.bf16.mxu0 0
      %428 = vmatpush1.bf16.msra.mxu0 0
      %429 = vmatprep.subr.bf16.mxu0 0
      %430 = vmatpush1.bf16.msra.mxu0 0
      %431 = vmatprep.subr.bf16.mxu0 0
      %432 = vmatpush1.bf16.msra.mxu0 0
      %433 = vmatprep.subr.bf16.mxu0 0
      %434 = vmatpush1.bf16.msra.mxu0 0
      %435 = vmatprep.subr.bf16.mxu0 0
      %436 = vmatpush1.bf16.msra.mxu0 0
      %437 = vmatprep.subr.bf16.mxu0 0
      %438 = vmatpush1.bf16.msra.mxu0 0
      %439 = vmatprep.subr.bf16.mxu0 0
      %440 = vmatpush1.bf16.msra.mxu0 0
      %441 = vmatprep.subr.bf16.mxu0 0
      %442 = vmatpush1.bf16.msra.mxu0 0
      %443 = vmatprep.mubr.bf16.mxu0 0
      %444 = vmatmul.mubr.bf16.gmra.mrb[0].mxu0 %v409
      %v445 = vpop.f32.mrb[0].mxu0
      %v446 = vadd.f32 %v379, %v445
      %v447 = vpop.f32.mrb[0].mxu0
      %v448 = vpop.f32.mrb[0].mxu0
      %v449 = vadd.f32 %v382, %v448
      %v450 = vpop.f32.mrb[0].mxu0
      %451 = vdwg.mxu0
      %vm452 = vcmask 1040384
      %vm453 = vcmask 1042434
      %vm454 = vmor %vm452, %vm453
      %vm455 = vcmask 1044484
      %vm456 = vmor %vm454, %vm455
      %vm457 = vcmask 1046534
      %vm458 = vmor %vm456, %vm457
      %v459 = vrot.slane %v225, 7
      %v460 = vrot.slane %v459, 2
      %v461 = vrot.slane %v226, 7
      %v462 = vsel %vm458, %v460, %v461
      %v463 = vrot.slane %v233, 7
      %v464 = vrot.slane %v463, 2
      %v465 = vrot.slane %v234, 7
      %v466 = vsel %vm458, %v464, %v465
      %v467 = vrot.slane %v241, 7
      %v468 = vrot.slane %v467, 2
      %v469 = vrot.slane %v242, 7
      %v470 = vsel %vm458, %v468, %v469
      %v471 = vrot.slane %v249, 7
      %v472 = vrot.slane %v471, 2
      %v473 = vrot.slane %v250, 7
      %v474 = vsel %vm458, %v472, %v473
      %s475 = scalar_lea.vmem %s1, 16
      %v476 = vld [vmem:[%s475] sm:$0xf]
      %v477 = vld [vmem:[%s475 + $0x4] sm:$0xf]
      %v478 = vcombine.low %v462, %v466
      %v479 = vcombine.low %v470, %v474
      %v481 = vunpack.c.l.s4 1983009808
      %v482 = vunpack.c.0.s8 %v481
      %v483 = vlaneseq
      %v484 = vshrl.u32 %v483, 7
      %v485 = vsub.s32 %v482, %v484
      %v486 = vrot.slane %v478, %v485
      %v488 = vunpack.c.l.s4 1983009808
      %v489 = vunpack.c.0.s8 %v488
      %v490 = vlaneseq
      %v491 = vshrl.u32 %v490, 7
      %v492 = vsub.s32 %v489, %v491
      %v493 = vrot.slane %v479, %v492
      %v494 = vcombine.low %v486, %v493
      %v497 = vunpack.c.l.b16 %v476
      %v498 = vunpack.c.l.b16 %v477
      %v499 = vpack.c.b16 %v498, %v497
      %v502 = vsel %vm340, %v494, 0
      %504 = vmatprep.subr.bf16.mxu0 0
      %505 = vmatpush1.bf16.msra.mxu0 %v499
      %506 = vmatprep.subr.bf16.mxu0 0
      %507 = vmatpush1.bf16.msra.mxu0 0
      %508 = vmatprep.subr.bf16.mxu0 0
      %509 = vmatpush1.bf16.msra.mxu0 0
      %510 = vmatprep.subr.bf16.mxu0 0
      %511 = vmatpush1.bf16.msra.mxu0 0
      %512 = vmatprep.subr.bf16.mxu0 0
      %513 = vmatpush1.bf16.msra.mxu0 0
      %514 = vmatprep.subr.bf16.mxu0 0
      %515 = vmatpush1.bf16.msra.mxu0 0
      %516 = vmatprep.subr.bf16.mxu0 0
      %517 = vmatpush1.bf16.msra.mxu0 0
      %518 = vmatprep.subr.bf16.mxu0 0
      %519 = vmatpush1.bf16.msra.mxu0 0
      %520 = vmatprep.subr.bf16.mxu0 0
      %521 = vmatpush1.bf16.msra.mxu0 0
      %522 = vmatprep.subr.bf16.mxu0 0
      %523 = vmatpush1.bf16.msra.mxu0 0
      %524 = vmatprep.subr.bf16.mxu0 0
      %525 = vmatpush1.bf16.msra.mxu0 0
      %526 = vmatprep.subr.bf16.mxu0 0
      %527 = vmatpush1.bf16.msra.mxu0 0
      %528 = vmatprep.subr.bf16.mxu0 0
      %529 = vmatpush1.bf16.msra.mxu0 0
      %530 = vmatprep.subr.bf16.mxu0 0
      %531 = vmatpush1.bf16.msra.mxu0 0
      %532 = vmatprep.subr.bf16.mxu0 0
      %533 = vmatpush1.bf16.msra.mxu0 0
      %534 = vmatprep.subr.bf16.mxu0 0
      %535 = vmatpush1.bf16.msra.mxu0 0
      %536 = vmatprep.mubr.bf16.mxu0 0
      %537 = vmatmul.mubr.bf16.gmra.mrb[0].mxu0 %v502
      %v538 = vpop.f32.mrb[0].mxu0
      %v539 = vadd.f32 0.0, %v538
      %v540 = vpop.f32.mrb[0].mxu0
      %v541 = vpop.f32.mrb[0].mxu0
      %v542 = vadd.f32 0.0, %v541
      %v543 = vpop.f32.mrb[0].mxu0
      %544 = vdwg.mxu0
      %v545 = vadd.f32 %v446, %v539
      %v546 = vadd.f32 %v449, %v542
      %s547 = scalar_lea.vmem %s197, 4
      %v548 = vld [vmem:[%s547] sm:$0x7]
      %v549 = vld [vmem:[%s547 + $0x8] sm:$0x7]
      %v550 = vld [vmem:[%s547 + $0x10] sm:$0x7]
      %v551 = vld [vmem:[%s547 + $0x18] sm:$0x7]
      %s552 = scalar_lea.vmem %s1, 24
      %v553 = vld [vmem:[%s552] sm:$0xf]
      %v554 = vld [vmem:[%s552 + $0x4] sm:$0xf]
      %v559 = vcombine.low %v548, %v549
      %v560 = vcombine.low %v550, %v551
      %v562 = vunpack.c.l.s4 1983009808
      %v563 = vunpack.c.0.s8 %v562
      %v564 = vlaneseq
      %v565 = vshrl.u32 %v564, 7
      %v566 = vsub.s32 %v563, %v565
      %v567 = vrot.slane %v559, %v566
      %v569 = vunpack.c.l.s4 1983009808
      %v570 = vunpack.c.0.s8 %v569
      %v571 = vlaneseq
      %v572 = vshrl.u32 %v571, 7
      %v573 = vsub.s32 %v570, %v572
      %v574 = vrot.slane %v560, %v573
      %v575 = vcombine.low %v567, %v574
      %v578 = vunpack.c.l.b16 %v553
      %v579 = vunpack.c.l.b16 %v554
      %v580 = vpack.c.b16 %v579, %v578
      %v583 = vsel %vm340, %v575, 0
      %585 = vmatprep.subr.bf16.mxu0 0
      %586 = vmatpush1.bf16.msra.mxu0 %v580
      %587 = vmatprep.subr.bf16.mxu0 0
      %588 = vmatpush1.bf16.msra.mxu0 0
      %589 = vmatprep.subr.bf16.mxu0 0
      %590 = vmatpush1.bf16.msra.mxu0 0
      %591 = vmatprep.subr.bf16.mxu0 0
      %592 = vmatpush1.bf16.msra.mxu0 0
      %593 = vmatprep.subr.bf16.mxu0 0
      %594 = vmatpush1.bf16.msra.mxu0 0
      %595 = vmatprep.subr.bf16.mxu0 0
      %596 = vmatpush1.bf16.msra.mxu0 0
      %597 = vmatprep.subr.bf16.mxu0 0
      %598 = vmatpush1.bf16.msra.mxu0 0
      %599 = vmatprep.subr.bf16.mxu0 0
      %600 = vmatpush1.bf16.msra.mxu0 0
      %601 = vmatprep.subr.bf16.mxu0 0
      %602 = vmatpush1.bf16.msra.mxu0 0
      %603 = vmatprep.subr.bf16.mxu0 0
      %604 = vmatpush1.bf16.msra.mxu0 0
      %605 = vmatprep.subr.bf16.mxu0 0
      %606 = vmatpush1.bf16.msra.mxu0 0
      %607 = vmatprep.subr.bf16.mxu0 0
      %608 = vmatpush1.bf16.msra.mxu0 0
      %609 = vmatprep.subr.bf16.mxu0 0
      %610 = vmatpush1.bf16.msra.mxu0 0
      %611 = vmatprep.subr.bf16.mxu0 0
      %612 = vmatpush1.bf16.msra.mxu0 0
      %613 = vmatprep.subr.bf16.mxu0 0
      %614 = vmatpush1.bf16.msra.mxu0 0
      %615 = vmatprep.subr.bf16.mxu0 0
      %616 = vmatpush1.bf16.msra.mxu0 0
      %617 = vmatprep.mubr.bf16.mxu0 0
      %618 = vmatmul.mubr.bf16.gmra.mrb[0].mxu0 %v583
      %v619 = vpop.f32.mrb[0].mxu0
      %v620 = vadd.f32 0.0, %v619
      %v621 = vpop.f32.mrb[0].mxu0
      %v622 = vpop.f32.mrb[0].mxu0
      %v623 = vadd.f32 0.0, %v622
      %v624 = vpop.f32.mrb[0].mxu0
      %625 = vdwg.mxu0
      %v626 = vadd.f32 %v545, %v620
      %v627 = vadd.f32 %v546, %v623
      %v629 = vunpack.c.l.s4 1983009808
      %v630 = vunpack.c.0.s8 %v629
      %v631 = vlaneseq
      %v632 = vshrl.u32 %v631, 7
      %v633 = vsub.s32 %v630, %v632
      %v634 = vrot.slane %v548, %v633
      %v635 = vcombine.high %v634, %v634
      %v637 = vunpack.c.l.s4 1983009808
      %v638 = vunpack.c.0.s8 %v637
      %v639 = vlaneseq
      %v640 = vshrl.u32 %v639, 7
      %v641 = vsub.s32 %v638, %v640
      %v642 = vrot.slane %v549, %v641
      %v643 = vcombine.high %v642, %v642
      %v645 = vunpack.c.l.s4 1983009808
      %v646 = vunpack.c.0.s8 %v645
      %v647 = vlaneseq
      %v648 = vshrl.u32 %v647, 7
      %v649 = vsub.s32 %v646, %v648
      %v650 = vrot.slane %v550, %v649
      %v651 = vcombine.high %v650, %v650
      %v653 = vunpack.c.l.s4 1983009808
      %v654 = vunpack.c.0.s8 %v653
      %v655 = vlaneseq
      %v656 = vshrl.u32 %v655, 7
      %v657 = vsub.s32 %v654, %v656
      %v658 = vrot.slane %v551, %v657
      %v659 = vcombine.high %v658, %v658
      %v661 = vshrl.u32 %v634, 16
      %v663 = vrot.slane %v661, 6
      %v664 = vshll.u32 %v634, 16
      %v666 = vrot.slane %v664, 7
      %v667 = vor.u32 %v663, %v666
      %v668 = vrot.slane %v667, 2
      %v670 = vshll.u32 %v635, 16
      %v672 = vrot.slane %v670, 7
      %v673 = vsel %vm257, %v668, %v672
      %v675 = vshrl.u32 %v642, 16
      %v677 = vrot.slane %v675, 6
      %v678 = vshll.u32 %v642, 16
      %v680 = vrot.slane %v678, 7
      %v681 = vor.u32 %v677, %v680
      %v682 = vrot.slane %v681, 2
      %v684 = vshll.u32 %v643, 16
      %v686 = vrot.slane %v684, 7
      %v687 = vsel %vm257, %v682, %v686
      %v689 = vshrl.u32 %v650, 16
      %v691 = vrot.slane %v689, 6
      %v692 = vshll.u32 %v650, 16
      %v694 = vrot.slane %v692, 7
      %v695 = vor.u32 %v691, %v694
      %v696 = vrot.slane %v695, 2
      %v698 = vshll.u32 %v651, 16
      %v700 = vrot.slane %v698, 7
      %v701 = vsel %vm257, %v696, %v700
      %v703 = vshrl.u32 %v658, 16
      %v705 = vrot.slane %v703, 6
      %v706 = vshll.u32 %v658, 16
      %v708 = vrot.slane %v706, 7
      %v709 = vor.u32 %v705, %v708
      %v710 = vrot.slane %v709, 2
      %v712 = vshll.u32 %v659, 16
      %v714 = vrot.slane %v712, 7
      %v715 = vsel %vm257, %v710, %v714
      %s716 = scalar_lea.vmem %s1, 32
      %v717 = vld [vmem:[%s716] sm:$0xf]
      %v718 = vld [vmem:[%s716 + $0x4] sm:$0xf]
      %v719 = vcombine.low %v673, %v687
      %v720 = vcombine.low %v701, %v715
      %v722 = vunpack.c.l.s4 1983009808
      %v723 = vunpack.c.0.s8 %v722
      %v724 = vlaneseq
      %v725 = vshrl.u32 %v724, 7
      %v726 = vsub.s32 %v723, %v725
      %v727 = vrot.slane %v719, %v726
      %v729 = vunpack.c.l.s4 1983009808
      %v730 = vunpack.c.0.s8 %v729
      %v731 = vlaneseq
      %v732 = vshrl.u32 %v731, 7
      %v733 = vsub.s32 %v730, %v732
      %v734 = vrot.slane %v720, %v733
      %v735 = vcombine.low %v727, %v734
      %v738 = vunpack.c.l.b16 %v717
      %v739 = vunpack.c.l.b16 %v718
      %v740 = vpack.c.b16 %v739, %v738
      %v743 = vsel %vm340, %v735, 0
      %745 = vmatprep.subr.bf16.mxu0 0
      %746 = vmatpush1.bf16.msra.mxu0 %v740
      %747 = vmatprep.subr.bf16.mxu0 0
      %748 = vmatpush1.bf16.msra.mxu0 0
      %749 = vmatprep.subr.bf16.mxu0 0
      %750 = vmatpush1.bf16.msra.mxu0 0
      %751 = vmatprep.subr.bf16.mxu0 0
      %752 = vmatpush1.bf16.msra.mxu0 0
      %753 = vmatprep.subr.bf16.mxu0 0
      %754 = vmatpush1.bf16.msra.mxu0 0
      %755 = vmatprep.subr.bf16.mxu0 0
      %756 = vmatpush1.bf16.msra.mxu0 0
      %757 = vmatprep.subr.bf16.mxu0 0
      %758 = vmatpush1.bf16.msra.mxu0 0
      %759 = vmatprep.subr.bf16.mxu0 0
      %760 = vmatpush1.bf16.msra.mxu0 0
      %761 = vmatprep.subr.bf16.mxu0 0
      %762 = vmatpush1.bf16.msra.mxu0 0
      %763 = vmatprep.subr.bf16.mxu0 0
      %764 = vmatpush1.bf16.msra.mxu0 0
      %765 = vmatprep.subr.bf16.mxu0 0
      %766 = vmatpush1.bf16.msra.mxu0 0
      %767 = vmatprep.subr.bf16.mxu0 0
      %768 = vmatpush1.bf16.msra.mxu0 0
      %769 = vmatprep.subr.bf16.mxu0 0
      %770 = vmatpush1.bf16.msra.mxu0 0
      %771 = vmatprep.subr.bf16.mxu0 0
      %772 = vmatpush1.bf16.msra.mxu0 0
      %773 = vmatprep.subr.bf16.mxu0 0
      %774 = vmatpush1.bf16.msra.mxu0 0
      %775 = vmatprep.subr.bf16.mxu0 0
      %776 = vmatpush1.bf16.msra.mxu0 0
      %777 = vmatprep.mubr.bf16.mxu0 0
      %778 = vmatmul.mubr.bf16.gmra.mrb[0].mxu0 %v743
      %v779 = vpop.f32.mrb[0].mxu0
      %v780 = vadd.f32 0.0, %v779
      %v781 = vpop.f32.mrb[0].mxu0
      %v782 = vpop.f32.mrb[0].mxu0
      %v783 = vadd.f32 0.0, %v782
      %v784 = vpop.f32.mrb[0].mxu0
      %785 = vdwg.mxu0
      %v786 = vadd.f32 %v626, %v780
      %v787 = vadd.f32 %v627, %v783
      %v788 = vrot.slane %v634, 7
      %v789 = vrot.slane %v788, 2
      %v790 = vrot.slane %v635, 7
      %v791 = vsel %vm458, %v789, %v790
      %v792 = vrot.slane %v642, 7
      %v793 = vrot.slane %v792, 2
      %v794 = vrot.slane %v643, 7
      %v795 = vsel %vm458, %v793, %v794
      %v796 = vrot.slane %v650, 7
      %v797 = vrot.slane %v796, 2
      %v798 = vrot.slane %v651, 7
      %v799 = vsel %vm458, %v797, %v798
      %v800 = vrot.slane %v658, 7
      %v801 = vrot.slane %v800, 2
      %v802 = vrot.slane %v659, 7
      %v803 = vsel %vm458, %v801, %v802
      %s804 = scalar_lea.vmem %s1, 40
      %v805 = vld [vmem:[%s804] sm:$0xf]
      %v806 = vld [vmem:[%s804 + $0x4] sm:$0xf]
      %v807 = vcombine.low %v791, %v795
      %v808 = vcombine.low %v799, %v803
      %v810 = vunpack.c.l.s4 1983009808
      %v811 = vunpack.c.0.s8 %v810
      %v812 = vlaneseq
      %v813 = vshrl.u32 %v812, 7
      %v814 = vsub.s32 %v811, %v813
      %v815 = vrot.slane %v807, %v814
      %v817 = vunpack.c.l.s4 1983009808
      %v818 = vunpack.c.0.s8 %v817
      %v819 = vlaneseq
      %v820 = vshrl.u32 %v819, 7
      %v821 = vsub.s32 %v818, %v820
      %v822 = vrot.slane %v808, %v821
      %v823 = vcombine.low %v815, %v822
      %v826 = vunpack.c.l.b16 %v805
      %v827 = vunpack.c.l.b16 %v806
      %v828 = vpack.c.b16 %v827, %v826
      %v831 = vsel %vm340, %v823, 0
      %833 = vmatprep.subr.bf16.mxu0 0
      %834 = vmatpush1.bf16.msra.mxu0 %v828
      %835 = vmatprep.subr.bf16.mxu0 0
      %836 = vmatpush1.bf16.msra.mxu0 0
      %837 = vmatprep.subr.bf16.mxu0 0
      %838 = vmatpush1.bf16.msra.mxu0 0
      %839 = vmatprep.subr.bf16.mxu0 0
      %840 = vmatpush1.bf16.msra.mxu0 0
      %841 = vmatprep.subr.bf16.mxu0 0
      %842 = vmatpush1.bf16.msra.mxu0 0
      %843 = vmatprep.subr.bf16.mxu0 0
      %844 = vmatpush1.bf16.msra.mxu0 0
      %845 = vmatprep.subr.bf16.mxu0 0
      %846 = vmatpush1.bf16.msra.mxu0 0
      %847 = vmatprep.subr.bf16.mxu0 0
      %848 = vmatpush1.bf16.msra.mxu0 0
      %849 = vmatprep.subr.bf16.mxu0 0
      %850 = vmatpush1.bf16.msra.mxu0 0
      %851 = vmatprep.subr.bf16.mxu0 0
      %852 = vmatpush1.bf16.msra.mxu0 0
      %853 = vmatprep.subr.bf16.mxu0 0
      %854 = vmatpush1.bf16.msra.mxu0 0
      %855 = vmatprep.subr.bf16.mxu0 0
      %856 = vmatpush1.bf16.msra.mxu0 0
      %857 = vmatprep.subr.bf16.mxu0 0
      %858 = vmatpush1.bf16.msra.mxu0 0
      %859 = vmatprep.subr.bf16.mxu0 0
      %860 = vmatpush1.bf16.msra.mxu0 0
      %861 = vmatprep.subr.bf16.mxu0 0
      %862 = vmatpush1.bf16.msra.mxu0 0
      %863 = vmatprep.subr.bf16.mxu0 0
      %864 = vmatpush1.bf16.msra.mxu0 0
      %865 = vmatprep.mubr.bf16.mxu0 0
      %866 = vmatmul.mubr.bf16.gmra.mrb[0].mxu0 %v831
      %v867 = vpop.f32.mrb[0].mxu0
      %v868 = vadd.f32 0.0, %v867
      %v869 = vpop.f32.mrb[0].mxu0
      %v870 = vpop.f32.mrb[0].mxu0
      %v871 = vadd.f32 0.0, %v870
      %v872 = vpop.f32.mrb[0].mxu0
      %873 = vdwg.mxu0
      %v874 = vadd.f32 %v786, %v868
      %v875 = vadd.f32 %v787, %v871
      %s876 = scalar_lea.vmem %s197, 8
      %v877 = vld [vmem:[%s876] sm:$0x7]
      %v878 = vld [vmem:[%s876 + $0x8] sm:$0x7]
      %v879 = vld [vmem:[%s876 + $0x10] sm:$0x7]
      %v880 = vld [vmem:[%s876 + $0x18] sm:$0x7]
      %s881 = scalar_lea.vmem %s1, 48
      %v882 = vld [vmem:[%s881] sm:$0xf]
      %v883 = vld [vmem:[%s881 + $0x4] sm:$0xf]
      %v888 = vcombine.low %v877, %v878
      %v889 = vcombine.low %v879, %v880
      %v891 = vunpack.c.l.s4 1983009808
      %v892 = vunpack.c.0.s8 %v891
      %v893 = vlaneseq
      %v894 = vshrl.u32 %v893, 7
      %v895 = vsub.s32 %v892, %v894
      %v896 = vrot.slane %v888, %v895
      %v898 = vunpack.c.l.s4 1983009808
      %v899 = vunpack.c.0.s8 %v898
      %v900 = vlaneseq
      %v901 = vshrl.u32 %v900, 7
      %v902 = vsub.s32 %v899, %v901
      %v903 = vrot.slane %v889, %v902
      %v904 = vcombine.low %v896, %v903
      %v907 = vunpack.c.l.b16 %v882
      %v908 = vunpack.c.l.b16 %v883
      %v909 = vpack.c.b16 %v908, %v907
      %v912 = vsel %vm340, %v904, 0
      %914 = vmatprep.subr.bf16.mxu0 0
      %915 = vmatpush1.bf16.msra.mxu0 %v909
      %916 = vmatprep.subr.bf16.mxu0 0
      %917 = vmatpush1.bf16.msra.mxu0 0
      %918 = vmatprep.subr.bf16.mxu0 0
      %919 = vmatpush1.bf16.msra.mxu0 0
      %920 = vmatprep.subr.bf16.mxu0 0
      %921 = vmatpush1.bf16.msra.mxu0 0
      %922 = vmatprep.subr.bf16.mxu0 0
      %923 = vmatpush1.bf16.msra.mxu0 0
      %924 = vmatprep.subr.bf16.mxu0 0
      %925 = vmatpush1.bf16.msra.mxu0 0
      %926 = vmatprep.subr.bf16.mxu0 0
      %927 = vmatpush1.bf16.msra.mxu0 0
      %928 = vmatprep.subr.bf16.mxu0 0
      %929 = vmatpush1.bf16.msra.mxu0 0
      %930 = vmatprep.subr.bf16.mxu0 0
      %931 = vmatpush1.bf16.msra.mxu0 0
      %932 = vmatprep.subr.bf16.mxu0 0
      %933 = vmatpush1.bf16.msra.mxu0 0
      %934 = vmatprep.subr.bf16.mxu0 0
      %935 = vmatpush1.bf16.msra.mxu0 0
      %936 = vmatprep.subr.bf16.mxu0 0
      %937 = vmatpush1.bf16.msra.mxu0 0
      %938 = vmatprep.subr.bf16.mxu0 0
      %939 = vmatpush1.bf16.msra.mxu0 0
      %940 = vmatprep.subr.bf16.mxu0 0
      %941 = vmatpush1.bf16.msra.mxu0 0
      %942 = vmatprep.subr.bf16.mxu0 0
      %943 = vmatpush1.bf16.msra.mxu0 0
      %944 = vmatprep.subr.bf16.mxu0 0
      %945 = vmatpush1.bf16.msra.mxu0 0
      %946 = vmatprep.mubr.bf16.mxu0 0
      %947 = vmatmul.mubr.bf16.gmra.mrb[0].mxu0 %v912
      %v948 = vpop.f32.mrb[0].mxu0
      %v949 = vadd.f32 0.0, %v948
      %v950 = vpop.f32.mrb[0].mxu0
      %v951 = vpop.f32.mrb[0].mxu0
      %v952 = vadd.f32 0.0, %v951
      %v953 = vpop.f32.mrb[0].mxu0
      %954 = vdwg.mxu0
      %v955 = vadd.f32 %v874, %v949
      %v956 = vadd.f32 %v875, %v952
      %v958 = vunpack.c.l.s4 1983009808
      %v959 = vunpack.c.0.s8 %v958
      %v960 = vlaneseq
      %v961 = vshrl.u32 %v960, 7
      %v962 = vsub.s32 %v959, %v961
      %v963 = vrot.slane %v877, %v962
      %v964 = vcombine.high %v963, %v963
      %v966 = vunpack.c.l.s4 1983009808
      %v967 = vunpack.c.0.s8 %v966
      %v968 = vlaneseq
      %v969 = vshrl.u32 %v968, 7
      %v970 = vsub.s32 %v967, %v969
      %v971 = vrot.slane %v878, %v970
      %v972 = vcombine.high %v971, %v971
      %v974 = vunpack.c.l.s4 1983009808
      %v975 = vunpack.c.0.s8 %v974
      %v976 = vlaneseq
      %v977 = vshrl.u32 %v976, 7
      %v978 = vsub.s32 %v975, %v977
      %v979 = vrot.slane %v879, %v978
      %v980 = vcombine.high %v979, %v979
      %v982 = vunpack.c.l.s4 1983009808
      %v983 = vunpack.c.0.s8 %v982
      %v984 = vlaneseq
      %v985 = vshrl.u32 %v984, 7
      %v986 = vsub.s32 %v983, %v985
      %v987 = vrot.slane %v880, %v986
      %v988 = vcombine.high %v987, %v987
      %v990 = vshrl.u32 %v963, 16
      %v992 = vrot.slane %v990, 6
      %v993 = vshll.u32 %v963, 16
      %v995 = vrot.slane %v993, 7
      %v996 = vor.u32 %v992, %v995
      %v997 = vrot.slane %v996, 2
      %v999 = vshll.u32 %v964, 16
      %v1001 = vrot.slane %v999, 7
      %v1002 = vsel %vm257, %v997, %v1001
      %v1004 = vshrl.u32 %v971, 16
      %v1006 = vrot.slane %v1004, 6
      %v1007 = vshll.u32 %v971, 16
      %v1009 = vrot.slane %v1007, 7
      %v1010 = vor.u32 %v1006, %v1009
      %v1011 = vrot.slane %v1010, 2
      %v1013 = vshll.u32 %v972, 16
      %v1015 = vrot.slane %v1013, 7
      %v1016 = vsel %vm257, %v1011, %v1015
      %v1018 = vshrl.u32 %v979, 16
      %v1020 = vrot.slane %v1018, 6
      %v1021 = vshll.u32 %v979, 16
      %v1023 = vrot.slane %v1021, 7
      %v1024 = vor.u32 %v1020, %v1023
      %v1025 = vrot.slane %v1024, 2
      %v1027 = vshll.u32 %v980, 16
      %v1029 = vrot.slane %v1027, 7
      %v1030 = vsel %vm257, %v1025, %v1029
      %v1032 = vshrl.u32 %v987, 16
      %v1034 = vrot.slane %v1032, 6
      %v1035 = vshll.u32 %v987, 16
      %v1037 = vrot.slane %v1035, 7
      %v1038 = vor.u32 %v1034, %v1037
      %v1039 = vrot.slane %v1038, 2
      %v1041 = vshll.u32 %v988, 16
      %v1043 = vrot.slane %v1041, 7
      %v1044 = vsel %vm257, %v1039, %v1043
      %s1045 = scalar_lea.vmem %s1, 56
      %v1046 = vld [vmem:[%s1045] sm:$0xf]
      %v1047 = vld [vmem:[%s1045 + $0x4] sm:$0xf]
      %v1048 = vcombine.low %v1002, %v1016
      %v1049 = vcombine.low %v1030, %v1044
      %v1051 = vunpack.c.l.s4 1983009808
      %v1052 = vunpack.c.0.s8 %v1051
      %v1053 = vlaneseq
      %v1054 = vshrl.u32 %v1053, 7
      %v1055 = vsub.s32 %v1052, %v1054
      %v1056 = vrot.slane %v1048, %v1055
      %v1058 = vunpack.c.l.s4 1983009808
      %v1059 = vunpack.c.0.s8 %v1058
      %v1060 = vlaneseq
      %v1061 = vshrl.u32 %v1060, 7
      %v1062 = vsub.s32 %v1059, %v1061
      %v1063 = vrot.slane %v1049, %v1062
      %v1064 = vcombine.low %v1056, %v1063
      %v1067 = vunpack.c.l.b16 %v1046
      %v1068 = vunpack.c.l.b16 %v1047
      %v1069 = vpack.c.b16 %v1068, %v1067
      %v1072 = vsel %vm340, %v1064, 0
      %1074 = vmatprep.subr.bf16.mxu0 0
      %1075 = vmatpush1.bf16.msra.mxu0 %v1069
      %1076 = vmatprep.subr.bf16.mxu0 0
      %1077 = vmatpush1.bf16.msra.mxu0 0
      %1078 = vmatprep.subr.bf16.mxu0 0
      %1079 = vmatpush1.bf16.msra.mxu0 0
      %1080 = vmatprep.subr.bf16.mxu0 0
      %1081 = vmatpush1.bf16.msra.mxu0 0
      %1082 = vmatprep.subr.bf16.mxu0 0
      %1083 = vmatpush1.bf16.msra.mxu0 0
      %1084 = vmatprep.subr.bf16.mxu0 0
      %1085 = vmatpush1.bf16.msra.mxu0 0
      %1086 = vmatprep.subr.bf16.mxu0 0
      %1087 = vmatpush1.bf16.msra.mxu0 0
      %1088 = vmatprep.subr.bf16.mxu0 0
      %1089 = vmatpush1.bf16.msra.mxu0 0
      %1090 = vmatprep.subr.bf16.mxu0 0
      %1091 = vmatpush1.bf16.msra.mxu0 0
      %1092 = vmatprep.subr.bf16.mxu0 0
      %1093 = vmatpush1.bf16.msra.mxu0 0
      %1094 = vmatprep.subr.bf16.mxu0 0
      %1095 = vmatpush1.bf16.msra.mxu0 0
      %1096 = vmatprep.subr.bf16.mxu0 0
      %1097 = vmatpush1.bf16.msra.mxu0 0
      %1098 = vmatprep.subr.bf16.mxu0 0
      %1099 = vmatpush1.bf16.msra.mxu0 0
      %1100 = vmatprep.subr.bf16.mxu0 0
      %1101 = vmatpush1.bf16.msra.mxu0 0
      %1102 = vmatprep.subr.bf16.mxu0 0
      %1103 = vmatpush1.bf16.msra.mxu0 0
      %1104 = vmatprep.subr.bf16.mxu0 0
      %1105 = vmatpush1.bf16.msra.mxu0 0
      %1106 = vmatprep.mubr.bf16.mxu0 0
      %1107 = vmatmul.mubr.bf16.gmra.mrb[0].mxu0 %v1072
      %v1108 = vpop.f32.mrb[0].mxu0
      %v1109 = vadd.f32 0.0, %v1108
      %v1110 = vpop.f32.mrb[0].mxu0
      %v1111 = vpop.f32.mrb[0].mxu0
      %v1112 = vadd.f32 0.0, %v1111
      %v1113 = vpop.f32.mrb[0].mxu0
      %1114 = vdwg.mxu0
      %v1115 = vadd.f32 %v955, %v1109
      %v1116 = vadd.f32 %v956, %v1112
      %v1117 = vrot.slane %v963, 7
      %v1118 = vrot.slane %v1117, 2
      %v1119 = vrot.slane %v964, 7
      %v1120 = vsel %vm458, %v1118, %v1119
      %v1121 = vrot.slane %v971, 7
      %v1122 = vrot.slane %v1121, 2
      %v1123 = vrot.slane %v972, 7
      %v1124 = vsel %vm458, %v1122, %v1123
      %v1125 = vrot.slane %v979, 7
      %v1126 = vrot.slane %v1125, 2
      %v1127 = vrot.slane %v980, 7
      %v1128 = vsel %vm458, %v1126, %v1127
      %v1129 = vrot.slane %v987, 7
      %v1130 = vrot.slane %v1129, 2
      %v1131 = vrot.slane %v988, 7
      %v1132 = vsel %vm458, %v1130, %v1131
      %s1133 = scalar_lea.vmem %s1, 64
      %v1134 = vld [vmem:[%s1133] sm:$0xf]
      %v1135 = vld [vmem:[%s1133 + $0x4] sm:$0xf]
      %v1136 = vcombine.low %v1120, %v1124
      %v1137 = vcombine.low %v1128, %v1132
      %v1139 = vunpack.c.l.s4 1983009808
      %v1140 = vunpack.c.0.s8 %v1139
      %v1141 = vlaneseq
      %v1142 = vshrl.u32 %v1141, 7
      %v1143 = vsub.s32 %v1140, %v1142
      %v1144 = vrot.slane %v1136, %v1143
      %v1146 = vunpack.c.l.s4 1983009808
      %v1147 = vunpack.c.0.s8 %v1146
      %v1148 = vlaneseq
      %v1149 = vshrl.u32 %v1148, 7
      %v1150 = vsub.s32 %v1147, %v1149
      %v1151 = vrot.slane %v1137, %v1150
      %v1152 = vcombine.low %v1144, %v1151
      %v1155 = vunpack.c.l.b16 %v1134
      %v1156 = vunpack.c.l.b16 %v1135
      %v1157 = vpack.c.b16 %v1156, %v1155
      %v1160 = vsel %vm340, %v1152, 0
      %1162 = vmatprep.subr.bf16.mxu0 0
      %1163 = vmatpush1.bf16.msra.mxu0 %v1157
      %1164 = vmatprep.subr.bf16.mxu0 0
      %1165 = vmatpush1.bf16.msra.mxu0 0
      %1166 = vmatprep.subr.bf16.mxu0 0
      %1167 = vmatpush1.bf16.msra.mxu0 0
      %1168 = vmatprep.subr.bf16.mxu0 0
      %1169 = vmatpush1.bf16.msra.mxu0 0
      %1170 = vmatprep.subr.bf16.mxu0 0
      %1171 = vmatpush1.bf16.msra.mxu0 0
      %1172 = vmatprep.subr.bf16.mxu0 0
      %1173 = vmatpush1.bf16.msra.mxu0 0
      %1174 = vmatprep.subr.bf16.mxu0 0
      %1175 = vmatpush1.bf16.msra.mxu0 0
      %1176 = vmatprep.subr.bf16.mxu0 0
      %1177 = vmatpush1.bf16.msra.mxu0 0
      %1178 = vmatprep.subr.bf16.mxu0 0
      %1179 = vmatpush1.bf16.msra.mxu0 0
      %1180 = vmatprep.subr.bf16.mxu0 0
      %1181 = vmatpush1.bf16.msra.mxu0 0
      %1182 = vmatprep.subr.bf16.mxu0 0
      %1183 = vmatpush1.bf16.msra.mxu0 0
      %1184 = vmatprep.subr.bf16.mxu0 0
      %1185 = vmatpush1.bf16.msra.mxu0 0
      %1186 = vmatprep.subr.bf16.mxu0 0
      %1187 = vmatpush1.bf16.msra.mxu0 0
      %1188 = vmatprep.subr.bf16.mxu0 0
      %1189 = vmatpush1.bf16.msra.mxu0 0
      %1190 = vmatprep.subr.bf16.mxu0 0
      %1191 = vmatpush1.bf16.msra.mxu0 0
      %1192 = vmatprep.subr.bf16.mxu0 0
      %1193 = vmatpush1.bf16.msra.mxu0 0
      %1194 = vmatprep.mubr.bf16.mxu0 0
      %1195 = vmatmul.mubr.bf16.gmra.mrb[0].mxu0 %v1160
      %v1196 = vpop.f32.mrb[0].mxu0
      %v1197 = vadd.f32 0.0, %v1196
      %v1198 = vpop.f32.mrb[0].mxu0
      %v1199 = vpop.f32.mrb[0].mxu0
      %v1200 = vadd.f32 0.0, %v1199
      %v1201 = vpop.f32.mrb[0].mxu0
      %1202 = vdwg.mxu0
      %v1203 = vadd.f32 %v1115, %v1197
      %v1204 = vadd.f32 %v1116, %v1200
      %s1205 = scalar_lea.vmem %s197, 12
      %v1206 = vld [vmem:[%s1205] sm:$0x7]
      %v1207 = vld [vmem:[%s1205 + $0x8] sm:$0x7]
      %v1208 = vld [vmem:[%s1205 + $0x10] sm:$0x7]
      %v1209 = vld [vmem:[%s1205 + $0x18] sm:$0x7]
      %s1210 = scalar_lea.vmem %s1, 72
      %v1211 = vld [vmem:[%s1210] sm:$0xf]
      %v1212 = vld [vmem:[%s1210 + $0x4] sm:$0xf]
      %v1217 = vcombine.low %v1206, %v1207
      %v1218 = vcombine.low %v1208, %v1209
      %v1220 = vunpack.c.l.s4 1983009808
      %v1221 = vunpack.c.0.s8 %v1220
      %v1222 = vlaneseq
      %v1223 = vshrl.u32 %v1222, 7
      %v1224 = vsub.s32 %v1221, %v1223
      %v1225 = vrot.slane %v1217, %v1224
      %v1227 = vunpack.c.l.s4 1983009808
      %v1228 = vunpack.c.0.s8 %v1227
      %v1229 = vlaneseq
      %v1230 = vshrl.u32 %v1229, 7
      %v1231 = vsub.s32 %v1228, %v1230
      %v1232 = vrot.slane %v1218, %v1231
      %v1233 = vcombine.low %v1225, %v1232
      %v1236 = vunpack.c.l.b16 %v1211
      %v1237 = vunpack.c.l.b16 %v1212
      %v1238 = vpack.c.b16 %v1237, %v1236
      %v1241 = vsel %vm340, %v1233, 0
      %1243 = vmatprep.subr.bf16.mxu0 0
      %1244 = vmatpush1.bf16.msra.mxu0 %v1238
      %1245 = vmatprep.subr.bf16.mxu0 0
      %1246 = vmatpush1.bf16.msra.mxu0 0
      %1247 = vmatprep.subr.bf16.mxu0 0
      %1248 = vmatpush1.bf16.msra.mxu0 0
      %1249 = vmatprep.subr.bf16.mxu0 0
      %1250 = vmatpush1.bf16.msra.mxu0 0
      %1251 = vmatprep.subr.bf16.mxu0 0
      %1252 = vmatpush1.bf16.msra.mxu0 0
      %1253 = vmatprep.subr.bf16.mxu0 0
      %1254 = vmatpush1.bf16.msra.mxu0 0
      %1255 = vmatprep.subr.bf16.mxu0 0
      %1256 = vmatpush1.bf16.msra.mxu0 0
      %1257 = vmatprep.subr.bf16.mxu0 0
      %1258 = vmatpush1.bf16.msra.mxu0 0
      %1259 = vmatprep.subr.bf16.mxu0 0
      %1260 = vmatpush1.bf16.msra.mxu0 0
      %1261 = vmatprep.subr.bf16.mxu0 0
      %1262 = vmatpush1.bf16.msra.mxu0 0
      %1263 = vmatprep.subr.bf16.mxu0 0
      %1264 = vmatpush1.bf16.msra.mxu0 0
      %1265 = vmatprep.subr.bf16.mxu0 0
      %1266 = vmatpush1.bf16.msra.mxu0 0
      %1267 = vmatprep.subr.bf16.mxu0 0
      %1268 = vmatpush1.bf16.msra.mxu0 0
      %1269 = vmatprep.subr.bf16.mxu0 0
      %1270 = vmatpush1.bf16.msra.mxu0 0
      %1271 = vmatprep.subr.bf16.mxu0 0
      %1272 = vmatpush1.bf16.msra.mxu0 0
      %1273 = vmatprep.subr.bf16.mxu0 0
      %1274 = vmatpush1.bf16.msra.mxu0 0
      %1275 = vmatprep.mubr.bf16.mxu0 0
      %1276 = vmatmul.mubr.bf16.gmra.mrb[0].mxu0 %v1241
      %v1277 = vpop.f32.mrb[0].mxu0
      %v1278 = vadd.f32 0.0, %v1277
      %v1279 = vpop.f32.mrb[0].mxu0
      %v1280 = vpop.f32.mrb[0].mxu0
      %v1281 = vadd.f32 0.0, %v1280
      %v1282 = vpop.f32.mrb[0].mxu0
      %1283 = vdwg.mxu0
      %v1284 = vadd.f32 %v1203, %v1278
      %v1285 = vadd.f32 %v1204, %v1281
      %v1287 = vunpack.c.l.s4 1983009808
      %v1288 = vunpack.c.0.s8 %v1287
      %v1289 = vlaneseq
      %v1290 = vshrl.u32 %v1289, 7
      %v1291 = vsub.s32 %v1288, %v1290
      %v1292 = vrot.slane %v1206, %v1291
      %v1293 = vcombine.high %v1292, %v1292
      %v1295 = vunpack.c.l.s4 1983009808
      %v1296 = vunpack.c.0.s8 %v1295
      %v1297 = vlaneseq
      %v1298 = vshrl.u32 %v1297, 7
      %v1299 = vsub.s32 %v1296, %v1298
      %v1300 = vrot.slane %v1207, %v1299
      %v1301 = vcombine.high %v1300, %v1300
      %v1303 = vunpack.c.l.s4 1983009808
      %v1304 = vunpack.c.0.s8 %v1303
      %v1305 = vlaneseq
      %v1306 = vshrl.u32 %v1305, 7
      %v1307 = vsub.s32 %v1304, %v1306
      %v1308 = vrot.slane %v1208, %v1307
      %v1309 = vcombine.high %v1308, %v1308
      %v1311 = vunpack.c.l.s4 1983009808
      %v1312 = vunpack.c.0.s8 %v1311
      %v1313 = vlaneseq
      %v1314 = vshrl.u32 %v1313, 7
      %v1315 = vsub.s32 %v1312, %v1314
      %v1316 = vrot.slane %v1209, %v1315
      %v1317 = vcombine.high %v1316, %v1316
      %v1319 = vshrl.u32 %v1292, 16
      %v1321 = vrot.slane %v1319, 6
      %v1322 = vshll.u32 %v1292, 16
      %v1324 = vrot.slane %v1322, 7
      %v1325 = vor.u32 %v1321, %v1324
      %v1326 = vrot.slane %v1325, 2
      %v1328 = vshll.u32 %v1293, 16
      %v1330 = vrot.slane %v1328, 7
      %v1331 = vsel %vm257, %v1326, %v1330
      %v1333 = vshrl.u32 %v1300, 16
      %v1335 = vrot.slane %v1333, 6
      %v1336 = vshll.u32 %v1300, 16
      %v1338 = vrot.slane %v1336, 7
      %v1339 = vor.u32 %v1335, %v1338
      %v1340 = vrot.slane %v1339, 2
      %v1342 = vshll.u32 %v1301, 16
      %v1344 = vrot.slane %v1342, 7
      %v1345 = vsel %vm257, %v1340, %v1344
      %v1347 = vshrl.u32 %v1308, 16
      %v1349 = vrot.slane %v1347, 6
      %v1350 = vshll.u32 %v1308, 16
      %v1352 = vrot.slane %v1350, 7
      %v1353 = vor.u32 %v1349, %v1352
      %v1354 = vrot.slane %v1353, 2
      %v1356 = vshll.u32 %v1309, 16
      %v1358 = vrot.slane %v1356, 7
      %v1359 = vsel %vm257, %v1354, %v1358
      %v1361 = vshrl.u32 %v1316, 16
      %v1363 = vrot.slane %v1361, 6
      %v1364 = vshll.u32 %v1316, 16
      %v1366 = vrot.slane %v1364, 7
      %v1367 = vor.u32 %v1363, %v1366
      %v1368 = vrot.slane %v1367, 2
      %v1370 = vshll.u32 %v1317, 16
      %v1372 = vrot.slane %v1370, 7
      %v1373 = vsel %vm257, %v1368, %v1372
      %s1374 = scalar_lea.vmem %s1, 80
      %v1375 = vld [vmem:[%s1374] sm:$0xf]
      %v1376 = vld [vmem:[%s1374 + $0x4] sm:$0xf]
      %v1377 = vcombine.low %v1331, %v1345
      %v1378 = vcombine.low %v1359, %v1373
      %v1380 = vunpack.c.l.s4 1983009808
      %v1381 = vunpack.c.0.s8 %v1380
      %v1382 = vlaneseq
      %v1383 = vshrl.u32 %v1382, 7
      %v1384 = vsub.s32 %v1381, %v1383
      %v1385 = vrot.slane %v1377, %v1384
      %v1387 = vunpack.c.l.s4 1983009808
      %v1388 = vunpack.c.0.s8 %v1387
      %v1389 = vlaneseq
      %v1390 = vshrl.u32 %v1389, 7
      %v1391 = vsub.s32 %v1388, %v1390
      %v1392 = vrot.slane %v1378, %v1391
      %v1393 = vcombine.low %v1385, %v1392
      %v1396 = vunpack.c.l.b16 %v1375
      %v1397 = vunpack.c.l.b16 %v1376
      %v1398 = vpack.c.b16 %v1397, %v1396
      %v1401 = vsel %vm340, %v1393, 0
      %1403 = vmatprep.subr.bf16.mxu0 0
      %1404 = vmatpush1.bf16.msra.mxu0 %v1398
      %1405 = vmatprep.subr.bf16.mxu0 0
      %1406 = vmatpush1.bf16.msra.mxu0 0
      %1407 = vmatprep.subr.bf16.mxu0 0
      %1408 = vmatpush1.bf16.msra.mxu0 0
      %1409 = vmatprep.subr.bf16.mxu0 0
      %1410 = vmatpush1.bf16.msra.mxu0 0
      %1411 = vmatprep.subr.bf16.mxu0 0
      %1412 = vmatpush1.bf16.msra.mxu0 0
      %1413 = vmatprep.subr.bf16.mxu0 0
      %1414 = vmatpush1.bf16.msra.mxu0 0
      %1415 = vmatprep.subr.bf16.mxu0 0
      %1416 = vmatpush1.bf16.msra.mxu0 0
      %1417 = vmatprep.subr.bf16.mxu0 0
      %1418 = vmatpush1.bf16.msra.mxu0 0
      %1419 = vmatprep.subr.bf16.mxu0 0
      %1420 = vmatpush1.bf16.msra.mxu0 0
      %1421 = vmatprep.subr.bf16.mxu0 0
      %1422 = vmatpush1.bf16.msra.mxu0 0
      %1423 = vmatprep.subr.bf16.mxu0 0
      %1424 = vmatpush1.bf16.msra.mxu0 0
      %1425 = vmatprep.subr.bf16.mxu0 0
      %1426 = vmatpush1.bf16.msra.mxu0 0
      %1427 = vmatprep.subr.bf16.mxu0 0
      %1428 = vmatpush1.bf16.msra.mxu0 0
      %1429 = vmatprep.subr.bf16.mxu0 0
      %1430 = vmatpush1.bf16.msra.mxu0 0
      %1431 = vmatprep.subr.bf16.mxu0 0
      %1432 = vmatpush1.bf16.msra.mxu0 0
      %1433 = vmatprep.subr.bf16.mxu0 0
      %1434 = vmatpush1.bf16.msra.mxu0 0
      %1435 = vmatprep.mubr.bf16.mxu0 0
      %1436 = vmatmul.mubr.bf16.gmra.mrb[0].mxu0 %v1401
      %v1437 = vpop.f32.mrb[0].mxu0
      %v1438 = vadd.f32 0.0, %v1437
      %v1439 = vpop.f32.mrb[0].mxu0
      %v1440 = vpop.f32.mrb[0].mxu0
      %v1441 = vadd.f32 0.0, %v1440
      %v1442 = vpop.f32.mrb[0].mxu0
      %1443 = vdwg.mxu0
      %v1444 = vadd.f32 %v1284, %v1438
      %v1445 = vadd.f32 %v1285, %v1441
      %v1446 = vrot.slane %v1292, 7
      %v1447 = vrot.slane %v1446, 2
      %v1448 = vrot.slane %v1293, 7
      %v1449 = vsel %vm458, %v1447, %v1448
      %v1450 = vrot.slane %v1300, 7
      %v1451 = vrot.slane %v1450, 2
      %v1452 = vrot.slane %v1301, 7
      %v1453 = vsel %vm458, %v1451, %v1452
      %v1454 = vrot.slane %v1308, 7
      %v1455 = vrot.slane %v1454, 2
      %v1456 = vrot.slane %v1309, 7
      %v1457 = vsel %vm458, %v1455, %v1456
      %v1458 = vrot.slane %v1316, 7
      %v1459 = vrot.slane %v1458, 2
      %v1460 = vrot.slane %v1317, 7
      %v1461 = vsel %vm458, %v1459, %v1460
      %s1462 = scalar_lea.vmem %s1, 88
      %v1463 = vld [vmem:[%s1462] sm:$0xf]
      %v1464 = vld [vmem:[%s1462 + $0x4] sm:$0xf]
      %v1465 = vcombine.low %v1449, %v1453
      %v1466 = vcombine.low %v1457, %v1461
      %v1468 = vunpack.c.l.s4 1983009808
      %v1469 = vunpack.c.0.s8 %v1468
      %v1470 = vlaneseq
      %v1471 = vshrl.u32 %v1470, 7
      %v1472 = vsub.s32 %v1469, %v1471
      %v1473 = vrot.slane %v1465, %v1472
      %v1475 = vunpack.c.l.s4 1983009808
      %v1476 = vunpack.c.0.s8 %v1475
      %v1477 = vlaneseq
      %v1478 = vshrl.u32 %v1477, 7
      %v1479 = vsub.s32 %v1476, %v1478
      %v1480 = vrot.slane %v1466, %v1479
      %v1481 = vcombine.low %v1473, %v1480
      %v1484 = vunpack.c.l.b16 %v1463
      %v1485 = vunpack.c.l.b16 %v1464
      %v1486 = vpack.c.b16 %v1485, %v1484
      %v1489 = vsel %vm340, %v1481, 0
      %1491 = vmatprep.subr.bf16.mxu0 0
      %1492 = vmatpush1.bf16.msra.mxu0 %v1486
      %1493 = vmatprep.subr.bf16.mxu0 0
      %1494 = vmatpush1.bf16.msra.mxu0 0
      %1495 = vmatprep.subr.bf16.mxu0 0
      %1496 = vmatpush1.bf16.msra.mxu0 0
      %1497 = vmatprep.subr.bf16.mxu0 0
      %1498 = vmatpush1.bf16.msra.mxu0 0
      %1499 = vmatprep.subr.bf16.mxu0 0
      %1500 = vmatpush1.bf16.msra.mxu0 0
      %1501 = vmatprep.subr.bf16.mxu0 0
      %1502 = vmatpush1.bf16.msra.mxu0 0
      %1503 = vmatprep.subr.bf16.mxu0 0
      %1504 = vmatpush1.bf16.msra.mxu0 0
      %1505 = vmatprep.subr.bf16.mxu0 0
      %1506 = vmatpush1.bf16.msra.mxu0 0
      %1507 = vmatprep.subr.bf16.mxu0 0
      %1508 = vmatpush1.bf16.msra.mxu0 0
      %1509 = vmatprep.subr.bf16.mxu0 0
      %1510 = vmatpush1.bf16.msra.mxu0 0
      %1511 = vmatprep.subr.bf16.mxu0 0
      %1512 = vmatpush1.bf16.msra.mxu0 0
      %1513 = vmatprep.subr.bf16.mxu0 0
      %1514 = vmatpush1.bf16.msra.mxu0 0
      %1515 = vmatprep.subr.bf16.mxu0 0
      %1516 = vmatpush1.bf16.msra.mxu0 0
      %1517 = vmatprep.subr.bf16.mxu0 0
      %1518 = vmatpush1.bf16.msra.mxu0 0
      %1519 = vmatprep.subr.bf16.mxu0 0
      %1520 = vmatpush1.bf16.msra.mxu0 0
      %1521 = vmatprep.subr.bf16.mxu0 0
      %1522 = vmatpush1.bf16.msra.mxu0 0
      %1523 = vmatprep.mubr.bf16.mxu0 0
      %1524 = vmatmul.mubr.bf16.gmra.mrb[0].mxu0 %v1489
      %v1525 = vpop.f32.mrb[0].mxu0
      %v1526 = vadd.f32 0.0, %v1525
      %v1527 = vpop.f32.mrb[0].mxu0
      %v1528 = vpop.f32.mrb[0].mxu0
      %v1529 = vadd.f32 0.0, %v1528
      %v1530 = vpop.f32.mrb[0].mxu0
      %1531 = vdwg.mxu0
      %v1532 = vadd.f32 %v1444, %v1526
      %v1533 = vadd.f32 %v1445, %v1529
      %s1534 = scalar_lea.vmem %s197, 16
      %v1535 = vld [vmem:[%s1534] sm:$0x7]
      %v1536 = vld [vmem:[%s1534 + $0x8] sm:$0x7]
      %v1537 = vld [vmem:[%s1534 + $0x10] sm:$0x7]
      %v1538 = vld [vmem:[%s1534 + $0x18] sm:$0x7]
      %s1539 = scalar_lea.vmem %s1, 96
      %v1540 = vld [vmem:[%s1539] sm:$0xf]
      %v1541 = vld [vmem:[%s1539 + $0x4] sm:$0xf]
      %v1546 = vcombine.low %v1535, %v1536
      %v1547 = vcombine.low %v1537, %v1538
      %v1549 = vunpack.c.l.s4 1983009808
      %v1550 = vunpack.c.0.s8 %v1549
      %v1551 = vlaneseq
      %v1552 = vshrl.u32 %v1551, 7
      %v1553 = vsub.s32 %v1550, %v1552
      %v1554 = vrot.slane %v1546, %v1553
      %v1556 = vunpack.c.l.s4 1983009808
      %v1557 = vunpack.c.0.s8 %v1556
      %v1558 = vlaneseq
      %v1559 = vshrl.u32 %v1558, 7
      %v1560 = vsub.s32 %v1557, %v1559
      %v1561 = vrot.slane %v1547, %v1560
      %v1562 = vcombine.low %v1554, %v1561
      %v1565 = vunpack.c.l.b16 %v1540
      %v1566 = vunpack.c.l.b16 %v1541
      %v1567 = vpack.c.b16 %v1566, %v1565
      %v1570 = vsel %vm340, %v1562, 0
      %1572 = vmatprep.subr.bf16.mxu0 0
      %1573 = vmatpush1.bf16.msra.mxu0 %v1567
      %1574 = vmatprep.subr.bf16.mxu0 0
      %1575 = vmatpush1.bf16.msra.mxu0 0
      %1576 = vmatprep.subr.bf16.mxu0 0
      %1577 = vmatpush1.bf16.msra.mxu0 0
      %1578 = vmatprep.subr.bf16.mxu0 0
      %1579 = vmatpush1.bf16.msra.mxu0 0
      %1580 = vmatprep.subr.bf16.mxu0 0
      %1581 = vmatpush1.bf16.msra.mxu0 0
      %1582 = vmatprep.subr.bf16.mxu0 0
      %1583 = vmatpush1.bf16.msra.mxu0 0
      %1584 = vmatprep.subr.bf16.mxu0 0
      %1585 = vmatpush1.bf16.msra.mxu0 0
      %1586 = vmatprep.subr.bf16.mxu0 0
      %1587 = vmatpush1.bf16.msra.mxu0 0
      %1588 = vmatprep.subr.bf16.mxu0 0
      %1589 = vmatpush1.bf16.msra.mxu0 0
      %1590 = vmatprep.subr.bf16.mxu0 0
      %1591 = vmatpush1.bf16.msra.mxu0 0
      %1592 = vmatprep.subr.bf16.mxu0 0
      %1593 = vmatpush1.bf16.msra.mxu0 0
      %1594 = vmatprep.subr.bf16.mxu0 0
      %1595 = vmatpush1.bf16.msra.mxu0 0
      %1596 = vmatprep.subr.bf16.mxu0 0
      %1597 = vmatpush1.bf16.msra.mxu0 0
      %1598 = vmatprep.subr.bf16.mxu0 0
      %1599 = vmatpush1.bf16.msra.mxu0 0
      %1600 = vmatprep.subr.bf16.mxu0 0
      %1601 = vmatpush1.bf16.msra.mxu0 0
      %1602 = vmatprep.subr.bf16.mxu0 0
      %1603 = vmatpush1.bf16.msra.mxu0 0
      %1604 = vmatprep.mubr.bf16.mxu0 0
      %1605 = vmatmul.mubr.bf16.gmra.mrb[0].mxu0 %v1570
      %v1606 = vpop.f32.mrb[0].mxu0
      %v1607 = vadd.f32 0.0, %v1606
      %v1608 = vpop.f32.mrb[0].mxu0
      %v1609 = vpop.f32.mrb[0].mxu0
      %v1610 = vadd.f32 0.0, %v1609
      %v1611 = vpop.f32.mrb[0].mxu0
      %1612 = vdwg.mxu0
      %v1613 = vadd.f32 %v1532, %v1607
      %v1614 = vadd.f32 %v1533, %v1610
      %v1616 = vunpack.c.l.s4 1983009808
      %v1617 = vunpack.c.0.s8 %v1616
      %v1618 = vlaneseq
      %v1619 = vshrl.u32 %v1618, 7
      %v1620 = vsub.s32 %v1617, %v1619
      %v1621 = vrot.slane %v1535, %v1620
      %v1622 = vcombine.high %v1621, %v1621
      %v1624 = vunpack.c.l.s4 1983009808
      %v1625 = vunpack.c.0.s8 %v1624
      %v1626 = vlaneseq
      %v1627 = vshrl.u32 %v1626, 7
      %v1628 = vsub.s32 %v1625, %v1627
      %v1629 = vrot.slane %v1536, %v1628
      %v1630 = vcombine.high %v1629, %v1629
      %v1632 = vunpack.c.l.s4 1983009808
      %v1633 = vunpack.c.0.s8 %v1632
      %v1634 = vlaneseq
      %v1635 = vshrl.u32 %v1634, 7
      %v1636 = vsub.s32 %v1633, %v1635
      %v1637 = vrot.slane %v1537, %v1636
      %v1638 = vcombine.high %v1637, %v1637
      %v1640 = vunpack.c.l.s4 1983009808
      %v1641 = vunpack.c.0.s8 %v1640
      %v1642 = vlaneseq
      %v1643 = vshrl.u32 %v1642, 7
      %v1644 = vsub.s32 %v1641, %v1643
      %v1645 = vrot.slane %v1538, %v1644
      %v1646 = vcombine.high %v1645, %v1645
      %v1648 = vshrl.u32 %v1621, 16
      %v1650 = vrot.slane %v1648, 6
      %v1651 = vshll.u32 %v1621, 16
      %v1653 = vrot.slane %v1651, 7
      %v1654 = vor.u32 %v1650, %v1653
      %v1655 = vrot.slane %v1654, 2
      %v1657 = vshll.u32 %v1622, 16
      %v1659 = vrot.slane %v1657, 7
      %v1660 = vsel %vm257, %v1655, %v1659
      %v1662 = vshrl.u32 %v1629, 16
      %v1664 = vrot.slane %v1662, 6
      %v1665 = vshll.u32 %v1629, 16
      %v1667 = vrot.slane %v1665, 7
      %v1668 = vor.u32 %v1664, %v1667
      %v1669 = vrot.slane %v1668, 2
      %v1671 = vshll.u32 %v1630, 16
      %v1673 = vrot.slane %v1671, 7
      %v1674 = vsel %vm257, %v1669, %v1673
      %v1676 = vshrl.u32 %v1637, 16
      %v1678 = vrot.slane %v1676, 6
      %v1679 = vshll.u32 %v1637, 16
      %v1681 = vrot.slane %v1679, 7
      %v1682 = vor.u32 %v1678, %v1681
      %v1683 = vrot.slane %v1682, 2
      %v1685 = vshll.u32 %v1638, 16
      %v1687 = vrot.slane %v1685, 7
      %v1688 = vsel %vm257, %v1683, %v1687
      %v1690 = vshrl.u32 %v1645, 16
      %v1692 = vrot.slane %v1690, 6
      %v1693 = vshll.u32 %v1645, 16
      %v1695 = vrot.slane %v1693, 7
      %v1696 = vor.u32 %v1692, %v1695
      %v1697 = vrot.slane %v1696, 2
      %v1699 = vshll.u32 %v1646, 16
      %v1701 = vrot.slane %v1699, 7
      %v1702 = vsel %vm257, %v1697, %v1701
      %s1703 = scalar_lea.vmem %s1, 104
      %v1704 = vld [vmem:[%s1703] sm:$0xf]
      %v1705 = vld [vmem:[%s1703 + $0x4] sm:$0xf]
      %v1706 = vcombine.low %v1660, %v1674
      %v1707 = vcombine.low %v1688, %v1702
      %v1709 = vunpack.c.l.s4 1983009808
      %v1710 = vunpack.c.0.s8 %v1709
      %v1711 = vlaneseq
      %v1712 = vshrl.u32 %v1711, 7
      %v1713 = vsub.s32 %v1710, %v1712
      %v1714 = vrot.slane %v1706, %v1713
      %v1716 = vunpack.c.l.s4 1983009808
      %v1717 = vunpack.c.0.s8 %v1716
      %v1718 = vlaneseq
      %v1719 = vshrl.u32 %v1718, 7
      %v1720 = vsub.s32 %v1717, %v1719
      %v1721 = vrot.slane %v1707, %v1720
      %v1722 = vcombine.low %v1714, %v1721
      %v1725 = vunpack.c.l.b16 %v1704
      %v1726 = vunpack.c.l.b16 %v1705
      %v1727 = vpack.c.b16 %v1726, %v1725
      %v1730 = vsel %vm340, %v1722, 0
      %1732 = vmatprep.subr.bf16.mxu0 0
      %1733 = vmatpush1.bf16.msra.mxu0 %v1727
      %1734 = vmatprep.subr.bf16.mxu0 0
      %1735 = vmatpush1.bf16.msra.mxu0 0
      %1736 = vmatprep.subr.bf16.mxu0 0
      %1737 = vmatpush1.bf16.msra.mxu0 0
      %1738 = vmatprep.subr.bf16.mxu0 0
      %1739 = vmatpush1.bf16.msra.mxu0 0
      %1740 = vmatprep.subr.bf16.mxu0 0
      %1741 = vmatpush1.bf16.msra.mxu0 0
      %1742 = vmatprep.subr.bf16.mxu0 0
      %1743 = vmatpush1.bf16.msra.mxu0 0
      %1744 = vmatprep.subr.bf16.mxu0 0
      %1745 = vmatpush1.bf16.msra.mxu0 0
      %1746 = vmatprep.subr.bf16.mxu0 0
      %1747 = vmatpush1.bf16.msra.mxu0 0
      %1748 = vmatprep.subr.bf16.mxu0 0
      %1749 = vmatpush1.bf16.msra.mxu0 0
      %1750 = vmatprep.subr.bf16.mxu0 0
      %1751 = vmatpush1.bf16.msra.mxu0 0
      %1752 = vmatprep.subr.bf16.mxu0 0
      %1753 = vmatpush1.bf16.msra.mxu0 0
      %1754 = vmatprep.subr.bf16.mxu0 0
      %1755 = vmatpush1.bf16.msra.mxu0 0
      %1756 = vmatprep.subr.bf16.mxu0 0
      %1757 = vmatpush1.bf16.msra.mxu0 0
      %1758 = vmatprep.subr.bf16.mxu0 0
      %1759 = vmatpush1.bf16.msra.mxu0 0
      %1760 = vmatprep.subr.bf16.mxu0 0
      %1761 = vmatpush1.bf16.msra.mxu0 0
      %1762 = vmatprep.subr.bf16.mxu0 0
      %1763 = vmatpush1.bf16.msra.mxu0 0
      %1764 = vmatprep.mubr.bf16.mxu0 0
      %1765 = vmatmul.mubr.bf16.gmra.mrb[0].mxu0 %v1730
      %v1766 = vpop.f32.mrb[0].mxu0
      %v1767 = vadd.f32 0.0, %v1766
      %v1768 = vpop.f32.mrb[0].mxu0
      %v1769 = vpop.f32.mrb[0].mxu0
      %v1770 = vadd.f32 0.0, %v1769
      %v1771 = vpop.f32.mrb[0].mxu0
      %1772 = vdwg.mxu0
      %v1773 = vadd.f32 %v1613, %v1767
      %v1774 = vadd.f32 %v1614, %v1770
      %v1775 = vrot.slane %v1621, 7
      %v1776 = vrot.slane %v1775, 2
      %v1777 = vrot.slane %v1622, 7
      %v1778 = vsel %vm458, %v1776, %v1777
      %v1779 = vrot.slane %v1629, 7
      %v1780 = vrot.slane %v1779, 2
      %v1781 = vrot.slane %v1630, 7
      %v1782 = vsel %vm458, %v1780, %v1781
      %v1783 = vrot.slane %v1637, 7
      %v1784 = vrot.slane %v1783, 2
      %v1785 = vrot.slane %v1638, 7
      %v1786 = vsel %vm458, %v1784, %v1785
      %v1787 = vrot.slane %v1645, 7
      %v1788 = vrot.slane %v1787, 2
      %v1789 = vrot.slane %v1646, 7
      %v1790 = vsel %vm458, %v1788, %v1789
      %s1791 = scalar_lea.vmem %s1, 112
      %v1792 = vld [vmem:[%s1791] sm:$0xf]
      %v1793 = vld [vmem:[%s1791 + $0x4] sm:$0xf]
      %v1794 = vcombine.low %v1778, %v1782
      %v1795 = vcombine.low %v1786, %v1790
      %v1797 = vunpack.c.l.s4 1983009808
      %v1798 = vunpack.c.0.s8 %v1797
      %v1799 = vlaneseq
      %v1800 = vshrl.u32 %v1799, 7
      %v1801 = vsub.s32 %v1798, %v1800
      %v1802 = vrot.slane %v1794, %v1801
      %v1804 = vunpack.c.l.s4 1983009808
      %v1805 = vunpack.c.0.s8 %v1804
      %v1806 = vlaneseq
      %v1807 = vshrl.u32 %v1806, 7
      %v1808 = vsub.s32 %v1805, %v1807
      %v1809 = vrot.slane %v1795, %v1808
      %v1810 = vcombine.low %v1802, %v1809
      %v1813 = vunpack.c.l.b16 %v1792
      %v1814 = vunpack.c.l.b16 %v1793
      %v1815 = vpack.c.b16 %v1814, %v1813
      %v1818 = vsel %vm340, %v1810, 0
      %1820 = vmatprep.subr.bf16.mxu0 0
      %1821 = vmatpush1.bf16.msra.mxu0 %v1815
      %1822 = vmatprep.subr.bf16.mxu0 0
      %1823 = vmatpush1.bf16.msra.mxu0 0
      %1824 = vmatprep.subr.bf16.mxu0 0
      %1825 = vmatpush1.bf16.msra.mxu0 0
      %1826 = vmatprep.subr.bf16.mxu0 0
      %1827 = vmatpush1.bf16.msra.mxu0 0
      %1828 = vmatprep.subr.bf16.mxu0 0
      %1829 = vmatpush1.bf16.msra.mxu0 0
      %1830 = vmatprep.subr.bf16.mxu0 0
      %1831 = vmatpush1.bf16.msra.mxu0 0
      %1832 = vmatprep.subr.bf16.mxu0 0
      %1833 = vmatpush1.bf16.msra.mxu0 0
      %1834 = vmatprep.subr.bf16.mxu0 0
      %1835 = vmatpush1.bf16.msra.mxu0 0
      %1836 = vmatprep.subr.bf16.mxu0 0
      %1837 = vmatpush1.bf16.msra.mxu0 0
      %1838 = vmatprep.subr.bf16.mxu0 0
      %1839 = vmatpush1.bf16.msra.mxu0 0
      %1840 = vmatprep.subr.bf16.mxu0 0
      %1841 = vmatpush1.bf16.msra.mxu0 0
      %1842 = vmatprep.subr.bf16.mxu0 0
      %1843 = vmatpush1.bf16.msra.mxu0 0
      %1844 = vmatprep.subr.bf16.mxu0 0
      %1845 = vmatpush1.bf16.msra.mxu0 0
      %1846 = vmatprep.subr.bf16.mxu0 0
      %1847 = vmatpush1.bf16.msra.mxu0 0
      %1848 = vmatprep.subr.bf16.mxu0 0
      %1849 = vmatpush1.bf16.msra.mxu0 0
      %1850 = vmatprep.subr.bf16.mxu0 0
      %1851 = vmatpush1.bf16.msra.mxu0 0
      %1852 = vmatprep.mubr.bf16.mxu0 0
      %1853 = vmatmul.mubr.bf16.gmra.mrb[0].mxu0 %v1818
      %v1854 = vpop.f32.mrb[0].mxu0
      %v1855 = vadd.f32 0.0, %v1854
      %v1856 = vpop.f32.mrb[0].mxu0
      %v1857 = vpop.f32.mrb[0].mxu0
      %v1858 = vadd.f32 0.0, %v1857
      %v1859 = vpop.f32.mrb[0].mxu0
      %1860 = vdwg.mxu0
      %v1861 = vadd.f32 %v1773, %v1855
      %v1862 = vadd.f32 %v1774, %v1858
      %v1863 = vld [vmem:[%s2] sm:$0x1]
      %v1865 = vlaneseq
      %v1866 = vshrl.u32 %v1865, 7
      %v1867 = vsub.s32 0, %v1866
      %v1868 = vrot.slane %v1863, %v1867
      %v1870 = vadd.f32 %v1861, %v1868
      %v1871 = vadd.f32 %v1862, %v1868
      %vm1872 = vcmp.gt.f32.partialorder %v1870, 0.0
      %vm1873 = vcmp.gt.f32.partialorder %v1871, 0.0
      %v1874 = vmul.f32 %v1870, 0.2
      %v1875 = vmul.f32 %v1871, 0.2
      %v1876 = vsel %vm1872, %v1870, %v1874
      %v1877 = vsel %vm1873, %v1871, %v1875
      %v1880 = vcombine.high %v1876, %v1876
      %v1881 = vcombine.high %v1877, %v1877
      %v1884 = vpack.c.bf16 %v1876, %v1876
      %v1885 = vpack.c.bf16 %v1880, %v1880
      %v1886 = vpack.c.bf16 %v1877, %v1877
      %v1887 = vpack.c.bf16 %v1881, %v1881
      %1888 = vst [vmem:[%s206] sm:$0x3] %v1884
      %1889 = vst [vmem:[%s206 + $0x2] sm:$0x3] %v1885
      %1890 = vst [vmem:[%s206 + $0x4] sm:$0x3] %v1886
      %1891 = vst [vmem:[%s206 + $0x6] sm:$0x3] %v1887
      %s1892 = smul.u32 4, %s19
      %p1893 = scmp.lt.s32.totalorder %s18, 1
      %s1894 = scalar_select %p1893, %s18, 1
      %p1895 = scmp.lt.s32.totalorder %s1892, 3
      %s1896 = scalar_select %p1895, %s1892, 3
      %s1897 = smul.addr %s1894, 4
      %s1898 = sadd.s32 %s1896, %s1897
      %s1899 = smul.addr %s1898, 2
      %s1900 = scalar_lea.vmem %s3, %s1899
      // Predicated region
      $region33: #{dis_conv_module_forward.5} parent=31 // pred_check
        %p1901 = pneg %p116
      $region34: #{dis_conv_module_forward.5} parent=31 // pred_check_branch
        %1903 = sbr.rel (%p1901) target = $region36
      $region35: #{dis_conv_module_forward.5} parent=31 // pred_region
        %s1904 = smul.u32 4, %s19
      $region36: #{dis_conv_module_forward.5} parent=31 // pred_fallthru
        _
    $region32: #{dis_conv_module_forward.5} parent=5 // pred_fallthru
      _
    %p1905 = scmp.le.s32.totalorder 2, %s9
    // Predicated region
    $region37: #{dis_conv_module_forward.5} parent=5 // pred_check
      %p1906 = pneg %p1905
    $region38: #{dis_conv_module_forward.5} parent=5 // pred_check_branch
      %1908 = sbr.rel (%p1906) target = $region40
    $region39: #{dis_conv_module_forward.5} parent=5 // pred_region
      %s1909 = ssub.s32 %s9, 2
      // Predicated region
      $region41: #{dis_conv_module_forward.5} parent=39 // pred_check
        %p1910 = pneg %p122
      $region42: #{dis_conv_module_forward.5} parent=39 // pred_check_branch
        %1912 = sbr.rel (%p1910) target = $region44
      $region43: #{dis_conv_module_forward.5} parent=39 // pred_region
        %s1913 = smul.u32 4, %s21
        %p1914 = scmp.lt.s32.totalorder %s20, 1
        %s1915 = scalar_select %p1914, %s20, 1
        %p1916 = scmp.lt.s32.totalorder %s1913, 3
        %s1917 = scalar_select %p1916, %s1913, 3
        %s1918 = smul.addr %s1915, 4
        %s1919 = sadd.s32 %s1917, %s1918
        %s1920 = smul.addr %s1919, 2
        %s1921 = scalar_lea.vmem %s3, %s1920
      $region44: #{dis_conv_module_forward.5} parent=39 // pred_fallthru
        _
    $region40: #{dis_conv_module_forward.5} parent=5 // pred_fallthru
      _
  $region6: #{dis_conv_module_forward.5} parent=0 // loop_footer
    %s13 = sadd.s32 1, %s9
  $region7: #{dis_conv_module_forward.5} parent=0 // loop_footer_branch
    %8 = sbr.rel target = $region3
  $region8: #{dis_conv_module_forward.5} parent=0 // loop_exit
    _

// kernel: dis_conv_module_forward.6
$region0: #{dis_conv_module_forward.6}
  #allocation0 [shape = 'u32[]', space=smem, size = 0x4, offset = 0x4, fixed_abs, tag = 'smem constant byte address 0x4 - core index']
  #allocation1 [shape = 'u32[144,128]{1,0:T(1,128)}', space=vmem, size = 0x12000, scoped, tag = 'internal scratch']
  %s0 = inlined_call_operand.vmem [shape: bf16[2,1,4,2,4,32], index: 0, kind: input, shape index: {}]
  %s1 = inlined_call_operand.vmem [shape: bf16[5,3,32,128], index: 1, kind: input, shape index: {}]
  %s2 = inlined_call_operand.vmem [shape: f32[1,128], index: 2, kind: input, shape index: {}]
  %s3 = inlined_call_operand.vmem [shape: bf16[2,2,2,128], index: 3, kind: output, shape index: {}]
  %s4 = sld [smem:[#allocation0]]
  $region45: #{dis_conv_module_forward.6} parent=0
    _
  %s6 = ssub.s32 1, %s4
  %s7 = scalar_select 0, %s6, %s4
  loop: start=0, step=1, limit=4
  $region2: #{dis_conv_module_forward.6} parent=0 // loop_pre_header
    _
  $region3: #{dis_conv_module_forward.6} parent=0 // loop_header
    %s9 = sphi 0, %s13
    %p10 = scmp.ge.s32.totalorder %s9, 4
    %s16 = sphi 0, %s28
    %s17 = sphi 0, %s24
    %s18 = sphi 0, %s16
    %s19 = sphi 0, %s17
    %s20 = sphi 0, %s18
    %s21 = sphi 0, %s19
    %s33 = sphi 0, %s35
    %s36 = sphi 0, %s33
    %s37 = sphi 0, %s36
    %s53 = sphi 0, %s37
    %s57 = sphi 0, %s57
    %s59 = sphi 0, %s57
    %s60 = sphi 0, %s59
    %s74 = sphi 0, %s60
    %s78 = sphi 0, %s78
    %s80 = sphi 0, %s78
    %s81 = sphi 0, %s80
    %s95 = sphi 0, %s81
    %s103 = sphi 0, %s105
    %s106 = sphi 0, %s103
    %s107 = sphi 0, %s106
    %s123 = sphi 0, %s107
  $region4: #{dis_conv_module_forward.6} parent=0 // loop_header_branch
    %12 = sbr.rel (%p10) target = $region8
  $region5: #{dis_conv_module_forward.6} parent=0 // loop_body
    %s14 = ssub.s32 %s9, 1
    %s15 = ssub.s32 %s9, 2
    %s22 = sadd.s32 1, %s17
    %p23 = scmp.ge.s32.totalorder %s22, 1
    %s24 = scalar_select %p23, 0, %s22
    %s25 = sadd.s32 1, %s16
    %s26 = scalar_select %p23, %s25, %s16
    %p27 = scmp.ge.s32.totalorder %s26, 2
    %s28 = scalar_select %p27, 0, %s26
    %s29 = ssub.s32 %s16, %s28
    %s30 = ssub.s32 %s17, %s24
    %s31 = sor.u32 %s29, %s30
    %p32 = scmp.eq.s32.totalorder %s31, 0
    %s34 = sadd.s32 %s33, 1
    %s35 = scalar_select %p32, %s33, %s34
    %p38 = pneg %p32
    %p39 = scmp.eq.s32.totalorder %s9, 1
    %p40 = por %p38, %p39
    %p41 = scmp.ne.s32.totalorder %s33, %s36
    %p42 = scmp.eq.s32.totalorder %s9, 0
    %p43 = por %p41, %p42
    %p44 = scmp.ne.s32.totalorder %s33, %s36
    %p45 = scmp.eq.s32.totalorder %s14, 1
    %p46 = por %p44, %p45
    %p47 = scmp.ne.s32.totalorder %s36, %s37
    %p48 = scmp.eq.s32.totalorder %s14, 0
    %p49 = por %p47, %p48
    %p50 = scmp.ne.s32.totalorder %s36, %s37
    %p51 = scmp.eq.s32.totalorder %s15, 1
    %p52 = por %p50, %p51
    %p54 = scmp.ne.s32.totalorder %s37, %s53
    %p55 = scmp.eq.s32.totalorder %s15, 0
    %p56 = por %p54, %p55
    %s58 = sadd.s32 %s57, 1
    %p61 = scmp.eq.s32.totalorder %s9, 1
    %p62 = scmp.ne.s32.totalorder %s57, %s59
    %p63 = scmp.eq.s32.totalorder %s9, 0
    %p64 = por %p62, %p63
    %p65 = scmp.ne.s32.totalorder %s57, %s59
    %p66 = scmp.eq.s32.totalorder %s14, 1
    %p67 = por %p65, %p66
    %p68 = scmp.ne.s32.totalorder %s59, %s60
    %p69 = scmp.eq.s32.totalorder %s14, 0
    %p70 = por %p68, %p69
    %p71 = scmp.ne.s32.totalorder %s59, %s60
    %p72 = scmp.eq.s32.totalorder %s15, 1
    %p73 = por %p71, %p72
    %p75 = scmp.ne.s32.totalorder %s60, %s74
    %p76 = scmp.eq.s32.totalorder %s15, 0
    %p77 = por %p75, %p76
    %s79 = sadd.s32 %s78, 1
    %p82 = scmp.eq.s32.totalorder %s9, 1
    %p83 = scmp.ne.s32.totalorder %s78, %s80
    %p84 = scmp.eq.s32.totalorder %s9, 0
    %p85 = por %p83, %p84
    %p86 = scmp.ne.s32.totalorder %s78, %s80
    %p87 = scmp.eq.s32.totalorder %s14, 1
    %p88 = por %p86, %p87
    %p89 = scmp.ne.s32.totalorder %s80, %s81
    %p90 = scmp.eq.s32.totalorder %s14, 0
    %p91 = por %p89, %p90
    %p92 = scmp.ne.s32.totalorder %s80, %s81
    %p93 = scmp.eq.s32.totalorder %s15, 1
    %p94 = por %p92, %p93
    %p96 = scmp.ne.s32.totalorder %s81, %s95
    %p97 = scmp.eq.s32.totalorder %s15, 0
    %p98 = por %p96, %p97
    %s99 = ssub.s32 %s16, %s28
    %s100 = ssub.s32 %s17, %s24
    %s101 = sor.u32 %s99, %s100
    %p102 = scmp.eq.s32.totalorder %s101, 0
    %s104 = sadd.s32 %s103, 1
    %s105 = scalar_select %p102, %s103, %s104
    %p108 = pneg %p102
    %p109 = scmp.eq.s32.totalorder %s9, 1
    %p110 = por %p108, %p109
    %p111 = scmp.ne.s32.totalorder %s103, %s106
    %p112 = scmp.eq.s32.totalorder %s9, 0
    %p113 = por %p111, %p112
    %p114 = scmp.ne.s32.totalorder %s103, %s106
    %p115 = scmp.eq.s32.totalorder %s14, 1
    %p116 = por %p114, %p115
    %p117 = scmp.ne.s32.totalorder %s106, %s107
    %p118 = scmp.eq.s32.totalorder %s14, 0
    %p119 = por %p117, %p118
    %p120 = scmp.ne.s32.totalorder %s106, %s107
    %p121 = scmp.eq.s32.totalorder %s15, 1
    %p122 = por %p120, %p121
    %p124 = scmp.ne.s32.totalorder %s107, %s123
    %p125 = scmp.eq.s32.totalorder %s15, 0
    %p126 = por %p124, %p125
    %p127 = scmp.le.s32.totalorder 1, %s9
    %p128 = scmp.lt.s32.totalorder %s9, 3
    %p129 = pnand %p127, %p128
    %p130 = pneg %p129
    // Predicated region
    $region9: #{dis_conv_module_forward.6} parent=5 // pred_check
      _
    $region10: #{dis_conv_module_forward.6} parent=5 // pred_check_branch
      %132 = sbr.rel (%p129) target = $region12
    $region11: #{dis_conv_module_forward.6} parent=5 // pred_region
      %s133 = ssub.s32 %s9, 1
      // Predicated region
      $region13: #{dis_conv_module_forward.6} parent=11 // pred_check
        %p134 = pneg %p70
      $region14: #{dis_conv_module_forward.6} parent=11 // pred_check_branch
        %136 = sbr.rel (%p134) target = $region16
      $region15: #{dis_conv_module_forward.6} parent=11 // pred_region
        _
      $region16: #{dis_conv_module_forward.6} parent=11 // pred_fallthru
        _
      // Predicated region
      $region17: #{dis_conv_module_forward.6} parent=11 // pred_check
        %p137 = pneg %p91
      $region18: #{dis_conv_module_forward.6} parent=11 // pred_check_branch
        %139 = sbr.rel (%p137) target = $region20
      $region19: #{dis_conv_module_forward.6} parent=11 // pred_region
        _
      $region20: #{dis_conv_module_forward.6} parent=11 // pred_fallthru
        _
    $region12: #{dis_conv_module_forward.6} parent=5 // pred_fallthru
      _
    %p140 = scmp.lt.s32.totalorder %s9, 2
    // Predicated region
    $region21: #{dis_conv_module_forward.6} parent=5 // pred_check
      %p141 = pneg %p140
    $region22: #{dis_conv_module_forward.6} parent=5 // pred_check_branch
      %143 = sbr.rel (%p141) target = $region24
    $region23: #{dis_conv_module_forward.6} parent=5 // pred_region
      // Predicated region
      $region25: #{dis_conv_module_forward.6} parent=23 // pred_check
        %p144 = pneg %p43
      $region26: #{dis_conv_module_forward.6} parent=23 // pred_check_branch
        %146 = sbr.rel (%p144) target = $region28
      $region27: #{dis_conv_module_forward.6} parent=23 // pred_region
        %p147 = scmp.lt.s32.totalorder %s16, 1
        %s148 = scalar_select %p147, %s16, 1
        %p149 = scmp.lt.s32.totalorder %s17, 0
        %s150 = scalar_select %p149, %s17, 0
        %s151 = smul.addr %s150, 8
        %s152 = smul.addr %s148, 8
        %s153 = sadd.s32 %s151, %s152
        %s154 = smul.addr %s153, 2
        %s155 = scalar_lea.vmem %s0, %s154
      $region28: #{dis_conv_module_forward.6} parent=23 // pred_fallthru
        _
    $region24: #{dis_conv_module_forward.6} parent=5 // pred_fallthru
      _
    %p156 = scmp.le.s32.totalorder 1, %s9
    %p157 = scmp.lt.s32.totalorder %s9, 3
    %p158 = pnand %p156, %p157
    %p159 = pneg %p158
    // Predicated region
    $region29: #{dis_conv_module_forward.6} parent=5 // pred_check
      _
    $region30: #{dis_conv_module_forward.6} parent=5 // pred_check_branch
      %161 = sbr.rel (%p158) target = $region32
    $region31: #{dis_conv_module_forward.6} parent=5 // pred_region
      %s162 = ssub.s32 %s9, 1
      %p163 = scmp.lt.s32.totalorder %s18, 1
      %s164 = scalar_select %p163, %s18, 1
      %p165 = scmp.lt.s32.totalorder %s19, 0
      %s166 = scalar_select %p165, %s19, 0
      %s167 = smul.addr %s166, 8
      %s168 = smul.addr %s164, 8
      %s169 = sadd.s32 %s167, %s168
      %s170 = smul.addr %s169, 2
      %s171 = scalar_lea.vmem %s0, %s170
      %p172 = pneg %p49
      %p173 = pneg %p46
      %p174 = pneg %p70
      %p175 = pneg %p67
      %p176 = pneg %p91
      %p177 = pneg %p88
      %p178 = pneg %p119
      %p179 = pneg %p116
      %s180 = smul.u32 2, %s19
      %p181 = scmp.lt.s32.totalorder %s18, 1
      %s182 = scalar_select %p181, %s18, 1
      %p183 = scmp.lt.s32.totalorder %s180, 1
      %s184 = scalar_select %p183, %s180, 1
      %s185 = smul.addr %s182, 2
      %s186 = sadd.s32 %s184, %s185
      %s187 = scalar_lea.vmem %s3, %s186
      %p188 = scmp.lt.s32.totalorder %s18, 1
      %s189 = scalar_select %p188, %s18, 1
      %p190 = scmp.lt.s32.totalorder %s19, 0
      %s191 = scalar_select %p190, %s19, 0
      %s192 = smul.addr %s191, 8
      %s193 = smul.addr %s189, 8
      %s194 = sadd.s32 %s192, %s193
      %s195 = smul.addr %s194, 2
      %s196 = scalar_lea.vmem %s0, %s195
      %s197 = smul.u32 2, %s19
      %p198 = scmp.lt.s32.totalorder %s18, 1
      %s199 = scalar_select %p198, %s18, 1
      %p200 = scmp.lt.s32.totalorder %s197, 1
      %s201 = scalar_select %p200, %s197, 1
      %s202 = smul.addr %s199, 2
      %s203 = sadd.s32 %s201, %s202
      %s204 = scalar_lea.vmem %s3, %s203
      %s205 = smul.u32 2, %s19
      %v207 = vld [vmem:[%s196] sm:$0x3]
      %v208 = vld [vmem:[%s196 + $0x4] sm:$0x3]
      %v209 = vld [vmem:[%s1] sm:$0xf]
      %v210 = vld [vmem:[%s1 + $0x4] sm:$0xf]
      %v211 = vld [vmem:[%s1 + $0x8] sm:$0xf]
      %v212 = vld [vmem:[%s1 + $0xc] sm:$0xf]
      %v216 = vunpack.c.l.s4 1966171168
      %v217 = vunpack.c.0.s8 %v216
      %v218 = vlaneseq
      %v219 = vshrl.u32 %v218, 7
      %v220 = vsub.s32 %v217, %v219
      %v221 = vrot.slane %v207, %v220
      %v222 = vcombine.high %v221, %v221
      %v224 = vunpack.c.l.s4 1966171168
      %v225 = vunpack.c.0.s8 %v224
      %v226 = vlaneseq
      %v227 = vshrl.u32 %v226, 7
      %v228 = vsub.s32 %v225, %v227
      %v229 = vrot.slane %v208, %v228
      %v230 = vcombine.high %v229, %v229
      %vm231 = vsmask.f32 256
      %vm232 = vsmask.f32 1284
      %vm233 = vmor %vm231, %vm232
      %vm234 = vsmask.f32 2312
      %vm235 = vmor %vm233, %vm234
      %vm236 = vsmask.f32 3340
      %vm237 = vmor %vm235, %vm236
      %vm238 = vsmask.f32 4368
      %vm239 = vmor %vm237, %vm238
      %vm240 = vsmask.f32 5396
      %vm241 = vmor %vm239, %vm240
      %vm242 = vsmask.f32 6424
      %vm243 = vmor %vm241, %vm242
      %vm244 = vsmask.f32 7452
      %vm245 = vmor %vm243, %vm244
      %v247 = vshrl.u32 %v221, 16
      %v249 = vrot.slane %v247, 7
      %v250 = vrot.slane %v249, 1
      %v252 = vshll.u32 %v222, 16
      %v254 = vsel %vm245, %v250, %v252
      %v256 = vshrl.u32 %v229, 16
      %v258 = vrot.slane %v256, 7
      %v259 = vrot.slane %v258, 1
      %v261 = vshll.u32 %v230, 16
      %v263 = vsel %vm245, %v259, %v261
      %s264 = scalar_lea.vmem %s1, 16
      %v265 = vld [vmem:[%s264] sm:$0xf]
      %v266 = vld [vmem:[%s264 + $0x4] sm:$0xf]
      %v267 = vld [vmem:[%s264 + $0x8] sm:$0xf]
      %v268 = vld [vmem:[%s264 + $0xc] sm:$0xf]
      %v269 = vcombine.low %v254, %v263
      %v271 = vunpack.c.l.s4 1966171168
      %v272 = vunpack.c.0.s8 %v271
      %v273 = vlaneseq
      %v274 = vshrl.u32 %v273, 7
      %v275 = vsub.s32 %v272, %v274
      %v276 = vrot.slane %v269, %v275
      %v278 = vunpack.c.l.s4 1966171168
      %v279 = vunpack.c.0.s8 %v278
      %v280 = vlaneseq
      %v281 = vshrl.u32 %v280, 7
      %v282 = vsub.s32 %v279, %v281
      %v283 = vrot.slane %v276, %v282
      %v288 = vunpack.c.l.b16 %v265
      %v289 = vunpack.c.l.b16 %v266
      %v290 = vunpack.c.l.b16 %v267
      %v291 = vunpack.c.l.b16 %v268
      %v292 = vpack.c.b16 %v289, %v288
      %v293 = vpack.c.b16 %v291, %v290
      %vm296 = vcmask 261120
      %v298 = vsel %vm296, %v283, 0
      %300 = vmatprep.subr.bf16.mxu0 0
      %301 = vmatpush1.bf16.msra.mxu0 %v292
      %302 = vmatprep.subr.bf16.mxu0 0
      %303 = vmatpush1.bf16.msra.mxu0 %v293
      %304 = vmatprep.subr.bf16.mxu0 0
      %305 = vmatpush1.bf16.msra.mxu0 0
      %306 = vmatprep.subr.bf16.mxu0 0
      %307 = vmatpush1.bf16.msra.mxu0 0
      %308 = vmatprep.subr.bf16.mxu0 0
      %309 = vmatpush1.bf16.msra.mxu0 0
      %310 = vmatprep.subr.bf16.mxu0 0
      %311 = vmatpush1.bf16.msra.mxu0 0
      %312 = vmatprep.subr.bf16.mxu0 0
      %313 = vmatpush1.bf16.msra.mxu0 0
      %314 = vmatprep.subr.bf16.mxu0 0
      %315 = vmatpush1.bf16.msra.mxu0 0
      %316 = vmatprep.subr.bf16.mxu0 0
      %317 = vmatpush1.bf16.msra.mxu0 0
      %318 = vmatprep.subr.bf16.mxu0 0
      %319 = vmatpush1.bf16.msra.mxu0 0
      %320 = vmatprep.subr.bf16.mxu0 0
      %321 = vmatpush1.bf16.msra.mxu0 0
      %322 = vmatprep.subr.bf16.mxu0 0
      %323 = vmatpush1.bf16.msra.mxu0 0
      %324 = vmatprep.subr.bf16.mxu0 0
      %325 = vmatpush1.bf16.msra.mxu0 0
      %326 = vmatprep.subr.bf16.mxu0 0
      %327 = vmatpush1.bf16.msra.mxu0 0
      %328 = vmatprep.subr.bf16.mxu0 0
      %329 = vmatpush1.bf16.msra.mxu0 0
      %330 = vmatprep.subr.bf16.mxu0 0
      %331 = vmatpush1.bf16.msra.mxu0 0
      %332 = vmatprep.mubr.bf16.mxu0 0
      %333 = vmatmul.mubr.bf16.gmra.mrb[0].mxu0 %v298
      %v334 = vpop.f32.mrb[0].mxu0
      %v335 = vadd.f32 0.0, %v334
      %v336 = vpop.f32.mrb[0].mxu0
      %v337 = vpop.f32.mrb[0].mxu0
      %v338 = vpop.f32.mrb[0].mxu0
      %339 = vdwg.mxu0
      %v340 = vcombine.low %v207, %v208
      %v342 = vunpack.c.l.s4 1966171168
      %v343 = vunpack.c.0.s8 %v342
      %v344 = vlaneseq
      %v345 = vshrl.u32 %v344, 7
      %v346 = vsub.s32 %v343, %v345
      %v347 = vrot.slane %v340, %v346
      %v349 = vunpack.c.l.s4 1966171168
      %v350 = vunpack.c.0.s8 %v349
      %v351 = vlaneseq
      %v352 = vshrl.u32 %v351, 7
      %v353 = vsub.s32 %v350, %v352
      %v354 = vrot.slane %v347, %v353
      %v359 = vunpack.c.l.b16 %v209
      %v360 = vunpack.c.l.b16 %v210
      %v361 = vunpack.c.l.b16 %v211
      %v362 = vunpack.c.l.b16 %v212
      %v363 = vpack.c.b16 %v360, %v359
      %v364 = vpack.c.b16 %v362, %v361
      %v368 = vsel %vm296, %v354, 0
      %370 = vmatprep.subr.bf16.mxu0 0
      %371 = vmatpush1.bf16.msra.mxu0 %v363
      %372 = vmatprep.subr.bf16.mxu0 0
      %373 = vmatpush1.bf16.msra.mxu0 %v364
      %374 = vmatprep.subr.bf16.mxu0 0
      %375 = vmatpush1.bf16.msra.mxu0 0
      %376 = vmatprep.subr.bf16.mxu0 0
      %377 = vmatpush1.bf16.msra.mxu0 0
      %378 = vmatprep.subr.bf16.mxu0 0
      %379 = vmatpush1.bf16.msra.mxu0 0
      %380 = vmatprep.subr.bf16.mxu0 0
      %381 = vmatpush1.bf16.msra.mxu0 0
      %382 = vmatprep.subr.bf16.mxu0 0
      %383 = vmatpush1.bf16.msra.mxu0 0
      %384 = vmatprep.subr.bf16.mxu0 0
      %385 = vmatpush1.bf16.msra.mxu0 0
      %386 = vmatprep.subr.bf16.mxu0 0
      %387 = vmatpush1.bf16.msra.mxu0 0
      %388 = vmatprep.subr.bf16.mxu0 0
      %389 = vmatpush1.bf16.msra.mxu0 0
      %390 = vmatprep.subr.bf16.mxu0 0
      %391 = vmatpush1.bf16.msra.mxu0 0
      %392 = vmatprep.subr.bf16.mxu0 0
      %393 = vmatpush1.bf16.msra.mxu0 0
      %394 = vmatprep.subr.bf16.mxu0 0
      %395 = vmatpush1.bf16.msra.mxu0 0
      %396 = vmatprep.subr.bf16.mxu0 0
      %397 = vmatpush1.bf16.msra.mxu0 0
      %398 = vmatprep.subr.bf16.mxu0 0
      %399 = vmatpush1.bf16.msra.mxu0 0
      %400 = vmatprep.subr.bf16.mxu0 0
      %401 = vmatpush1.bf16.msra.mxu0 0
      %402 = vmatprep.mubr.bf16.mxu0 0
      %403 = vmatmul.mubr.bf16.gmra.mrb[0].mxu0 %v368
      %v404 = vpop.f32.mrb[0].mxu0
      %v405 = vadd.f32 %v335, %v404
      %v406 = vpop.f32.mrb[0].mxu0
      %v407 = vpop.f32.mrb[0].mxu0
      %v408 = vpop.f32.mrb[0].mxu0
      %409 = vdwg.mxu0
      %s410 = scalar_lea.vmem %s1, 32
      %v411 = vld [vmem:[%s410] sm:$0xf]
      %v412 = vld [vmem:[%s410 + $0x4] sm:$0xf]
      %v413 = vld [vmem:[%s410 + $0x8] sm:$0xf]
      %v414 = vld [vmem:[%s410 + $0xc] sm:$0xf]
      %v415 = vcombine.low %v222, %v230
      %v417 = vunpack.c.l.s4 1966171168
      %v418 = vunpack.c.0.s8 %v417
      %v419 = vlaneseq
      %v420 = vshrl.u32 %v419, 7
      %v421 = vsub.s32 %v418, %v420
      %v422 = vrot.slane %v415, %v421
      %v424 = vunpack.c.l.s4 1966171168
      %v425 = vunpack.c.0.s8 %v424
      %v426 = vlaneseq
      %v427 = vshrl.u32 %v426, 7
      %v428 = vsub.s32 %v425, %v427
      %v429 = vrot.slane %v422, %v428
      %v434 = vunpack.c.l.b16 %v411
      %v435 = vunpack.c.l.b16 %v412
      %v436 = vunpack.c.l.b16 %v413
      %v437 = vunpack.c.l.b16 %v414
      %v438 = vpack.c.b16 %v435, %v434
      %v439 = vpack.c.b16 %v437, %v436
      %v443 = vsel %vm296, %v429, 0
      %445 = vmatprep.subr.bf16.mxu0 0
      %446 = vmatpush1.bf16.msra.mxu0 %v438
      %447 = vmatprep.subr.bf16.mxu0 0
      %448 = vmatpush1.bf16.msra.mxu0 %v439
      %449 = vmatprep.subr.bf16.mxu0 0
      %450 = vmatpush1.bf16.msra.mxu0 0
      %451 = vmatprep.subr.bf16.mxu0 0
      %452 = vmatpush1.bf16.msra.mxu0 0
      %453 = vmatprep.subr.bf16.mxu0 0
      %454 = vmatpush1.bf16.msra.mxu0 0
      %455 = vmatprep.subr.bf16.mxu0 0
      %456 = vmatpush1.bf16.msra.mxu0 0
      %457 = vmatprep.subr.bf16.mxu0 0
      %458 = vmatpush1.bf16.msra.mxu0 0
      %459 = vmatprep.subr.bf16.mxu0 0
      %460 = vmatpush1.bf16.msra.mxu0 0
      %461 = vmatprep.subr.bf16.mxu0 0
      %462 = vmatpush1.bf16.msra.mxu0 0
      %463 = vmatprep.subr.bf16.mxu0 0
      %464 = vmatpush1.bf16.msra.mxu0 0
      %465 = vmatprep.subr.bf16.mxu0 0
      %466 = vmatpush1.bf16.msra.mxu0 0
      %467 = vmatprep.subr.bf16.mxu0 0
      %468 = vmatpush1.bf16.msra.mxu0 0
      %469 = vmatprep.subr.bf16.mxu0 0
      %470 = vmatpush1.bf16.msra.mxu0 0
      %471 = vmatprep.subr.bf16.mxu0 0
      %472 = vmatpush1.bf16.msra.mxu0 0
      %473 = vmatprep.subr.bf16.mxu0 0
      %474 = vmatpush1.bf16.msra.mxu0 0
      %475 = vmatprep.subr.bf16.mxu0 0
      %476 = vmatpush1.bf16.msra.mxu0 0
      %477 = vmatprep.mubr.bf16.mxu0 0
      %478 = vmatmul.mubr.bf16.gmra.mrb[0].mxu0 %v443
      %v479 = vpop.f32.mrb[0].mxu0
      %v480 = vadd.f32 0.0, %v479
      %v481 = vpop.f32.mrb[0].mxu0
      %v482 = vpop.f32.mrb[0].mxu0
      %v483 = vpop.f32.mrb[0].mxu0
      %484 = vdwg.mxu0
      %v485 = vadd.f32 %v405, %v480
      %s486 = scalar_lea.vmem %s196, 2
      %v487 = vld [vmem:[%s486] sm:$0x3]
      %v488 = vld [vmem:[%s486 + $0x4] sm:$0x3]
      %s489 = scalar_lea.vmem %s1, 48
      %v490 = vld [vmem:[%s489] sm:$0xf]
      %v491 = vld [vmem:[%s489 + $0x4] sm:$0xf]
      %v492 = vld [vmem:[%s489 + $0x8] sm:$0xf]
      %v493 = vld [vmem:[%s489 + $0xc] sm:$0xf]
      %v496 = vcombine.low %v487, %v488
      %v498 = vunpack.c.l.s4 1966171168
      %v499 = vunpack.c.0.s8 %v498
      %v500 = vlaneseq
      %v501 = vshrl.u32 %v500, 7
      %v502 = vsub.s32 %v499, %v501
      %v503 = vrot.slane %v496, %v502
      %v505 = vunpack.c.l.s4 1966171168
      %v506 = vunpack.c.0.s8 %v505
      %v507 = vlaneseq
      %v508 = vshrl.u32 %v507, 7
      %v509 = vsub.s32 %v506, %v508
      %v510 = vrot.slane %v503, %v509
      %v515 = vunpack.c.l.b16 %v490
      %v516 = vunpack.c.l.b16 %v491
      %v517 = vunpack.c.l.b16 %v492
      %v518 = vunpack.c.l.b16 %v493
      %v519 = vpack.c.b16 %v516, %v515
      %v520 = vpack.c.b16 %v518, %v517
      %v524 = vsel %vm296, %v510, 0
      %526 = vmatprep.subr.bf16.mxu0 0
      %527 = vmatpush1.bf16.msra.mxu0 %v519
      %528 = vmatprep.subr.bf16.mxu0 0
      %529 = vmatpush1.bf16.msra.mxu0 %v520
      %530 = vmatprep.subr.bf16.mxu0 0
      %531 = vmatpush1.bf16.msra.mxu0 0
      %532 = vmatprep.subr.bf16.mxu0 0
      %533 = vmatpush1.bf16.msra.mxu0 0
      %534 = vmatprep.subr.bf16.mxu0 0
      %535 = vmatpush1.bf16.msra.mxu0 0
      %536 = vmatprep.subr.bf16.mxu0 0
      %537 = vmatpush1.bf16.msra.mxu0 0
      %538 = vmatprep.subr.bf16.mxu0 0
      %539 = vmatpush1.bf16.msra.mxu0 0
      %540 = vmatprep.subr.bf16.mxu0 0
      %541 = vmatpush1.bf16.msra.mxu0 0
      %542 = vmatprep.subr.bf16.mxu0 0
      %543 = vmatpush1.bf16.msra.mxu0 0
      %544 = vmatprep.subr.bf16.mxu0 0
      %545 = vmatpush1.bf16.msra.mxu0 0
      %546 = vmatprep.subr.bf16.mxu0 0
      %547 = vmatpush1.bf16.msra.mxu0 0
      %548 = vmatprep.subr.bf16.mxu0 0
      %549 = vmatpush1.bf16.msra.mxu0 0
      %550 = vmatprep.subr.bf16.mxu0 0
      %551 = vmatpush1.bf16.msra.mxu0 0
      %552 = vmatprep.subr.bf16.mxu0 0
      %553 = vmatpush1.bf16.msra.mxu0 0
      %554 = vmatprep.subr.bf16.mxu0 0
      %555 = vmatpush1.bf16.msra.mxu0 0
      %556 = vmatprep.subr.bf16.mxu0 0
      %557 = vmatpush1.bf16.msra.mxu0 0
      %558 = vmatprep.mubr.bf16.mxu0 0
      %559 = vmatmul.mubr.bf16.gmra.mrb[0].mxu0 %v524
      %v560 = vpop.f32.mrb[0].mxu0
      %v561 = vadd.f32 0.0, %v560
      %v562 = vpop.f32.mrb[0].mxu0
      %v563 = vpop.f32.mrb[0].mxu0
      %v564 = vpop.f32.mrb[0].mxu0
      %565 = vdwg.mxu0
      %v566 = vadd.f32 %v485, %v561
      %v568 = vunpack.c.l.s4 1966171168
      %v569 = vunpack.c.0.s8 %v568
      %v570 = vlaneseq
      %v571 = vshrl.u32 %v570, 7
      %v572 = vsub.s32 %v569, %v571
      %v573 = vrot.slane %v487, %v572
      %v574 = vcombine.high %v573, %v573
      %v576 = vunpack.c.l.s4 1966171168
      %v577 = vunpack.c.0.s8 %v576
      %v578 = vlaneseq
      %v579 = vshrl.u32 %v578, 7
      %v580 = vsub.s32 %v577, %v579
      %v581 = vrot.slane %v488, %v580
      %v582 = vcombine.high %v581, %v581
      %v584 = vshrl.u32 %v573, 16
      %v586 = vrot.slane %v584, 7
      %v587 = vrot.slane %v586, 1
      %v589 = vshll.u32 %v574, 16
      %v591 = vsel %vm245, %v587, %v589
      %v593 = vshrl.u32 %v581, 16
      %v595 = vrot.slane %v593, 7
      %v596 = vrot.slane %v595, 1
      %v598 = vshll.u32 %v582, 16
      %v600 = vsel %vm245, %v596, %v598
      %s601 = scalar_lea.vmem %s1, 64
      %v602 = vld [vmem:[%s601] sm:$0xf]
      %v603 = vld [vmem:[%s601 + $0x4] sm:$0xf]
      %v604 = vld [vmem:[%s601 + $0x8] sm:$0xf]
      %v605 = vld [vmem:[%s601 + $0xc] sm:$0xf]
      %v606 = vcombine.low %v591, %v600
      %v608 = vunpack.c.l.s4 1966171168
      %v609 = vunpack.c.0.s8 %v608
      %v610 = vlaneseq
      %v611 = vshrl.u32 %v610, 7
      %v612 = vsub.s32 %v609, %v611
      %v613 = vrot.slane %v606, %v612
      %v615 = vunpack.c.l.s4 1966171168
      %v616 = vunpack.c.0.s8 %v615
      %v617 = vlaneseq
      %v618 = vshrl.u32 %v617, 7
      %v619 = vsub.s32 %v616, %v618
      %v620 = vrot.slane %v613, %v619
      %v625 = vunpack.c.l.b16 %v602
      %v626 = vunpack.c.l.b16 %v603
      %v627 = vunpack.c.l.b16 %v604
      %v628 = vunpack.c.l.b16 %v605
      %v629 = vpack.c.b16 %v626, %v625
      %v630 = vpack.c.b16 %v628, %v627
      %v634 = vsel %vm296, %v620, 0
      %636 = vmatprep.subr.bf16.mxu0 0
      %637 = vmatpush1.bf16.msra.mxu0 %v629
      %638 = vmatprep.subr.bf16.mxu0 0
      %639 = vmatpush1.bf16.msra.mxu0 %v630
      %640 = vmatprep.subr.bf16.mxu0 0
      %641 = vmatpush1.bf16.msra.mxu0 0
      %642 = vmatprep.subr.bf16.mxu0 0
      %643 = vmatpush1.bf16.msra.mxu0 0
      %644 = vmatprep.subr.bf16.mxu0 0
      %645 = vmatpush1.bf16.msra.mxu0 0
      %646 = vmatprep.subr.bf16.mxu0 0
      %647 = vmatpush1.bf16.msra.mxu0 0
      %648 = vmatprep.subr.bf16.mxu0 0
      %649 = vmatpush1.bf16.msra.mxu0 0
      %650 = vmatprep.subr.bf16.mxu0 0
      %651 = vmatpush1.bf16.msra.mxu0 0
      %652 = vmatprep.subr.bf16.mxu0 0
      %653 = vmatpush1.bf16.msra.mxu0 0
      %654 = vmatprep.subr.bf16.mxu0 0
      %655 = vmatpush1.bf16.msra.mxu0 0
      %656 = vmatprep.subr.bf16.mxu0 0
      %657 = vmatpush1.bf16.msra.mxu0 0
      %658 = vmatprep.subr.bf16.mxu0 0
      %659 = vmatpush1.bf16.msra.mxu0 0
      %660 = vmatprep.subr.bf16.mxu0 0
      %661 = vmatpush1.bf16.msra.mxu0 0
      %662 = vmatprep.subr.bf16.mxu0 0
      %663 = vmatpush1.bf16.msra.mxu0 0
      %664 = vmatprep.subr.bf16.mxu0 0
      %665 = vmatpush1.bf16.msra.mxu0 0
      %666 = vmatprep.subr.bf16.mxu0 0
      %667 = vmatpush1.bf16.msra.mxu0 0
      %668 = vmatprep.mubr.bf16.mxu0 0
      %669 = vmatmul.mubr.bf16.gmra.mrb[0].mxu0 %v634
      %v670 = vpop.f32.mrb[0].mxu0
      %v671 = vadd.f32 0.0, %v670
      %v672 = vpop.f32.mrb[0].mxu0
      %v673 = vpop.f32.mrb[0].mxu0
      %v674 = vpop.f32.mrb[0].mxu0
      %675 = vdwg.mxu0
      %v676 = vadd.f32 %v566, %v671
      %s677 = scalar_lea.vmem %s1, 80
      %v678 = vld [vmem:[%s677] sm:$0xf]
      %v679 = vld [vmem:[%s677 + $0x4] sm:$0xf]
      %v680 = vld [vmem:[%s677 + $0x8] sm:$0xf]
      %v681 = vld [vmem:[%s677 + $0xc] sm:$0xf]
      %v682 = vcombine.low %v574, %v582
      %v684 = vunpack.c.l.s4 1966171168
      %v685 = vunpack.c.0.s8 %v684
      %v686 = vlaneseq
      %v687 = vshrl.u32 %v686, 7
      %v688 = vsub.s32 %v685, %v687
      %v689 = vrot.slane %v682, %v688
      %v691 = vunpack.c.l.s4 1966171168
      %v692 = vunpack.c.0.s8 %v691
      %v693 = vlaneseq
      %v694 = vshrl.u32 %v693, 7
      %v695 = vsub.s32 %v692, %v694
      %v696 = vrot.slane %v689, %v695
      %v701 = vunpack.c.l.b16 %v678
      %v702 = vunpack.c.l.b16 %v679
      %v703 = vunpack.c.l.b16 %v680
      %v704 = vunpack.c.l.b16 %v681
      %v705 = vpack.c.b16 %v702, %v701
      %v706 = vpack.c.b16 %v704, %v703
      %v710 = vsel %vm296, %v696, 0
      %712 = vmatprep.subr.bf16.mxu0 0
      %713 = vmatpush1.bf16.msra.mxu0 %v705
      %714 = vmatprep.subr.bf16.mxu0 0
      %715 = vmatpush1.bf16.msra.mxu0 %v706
      %716 = vmatprep.subr.bf16.mxu0 0
      %717 = vmatpush1.bf16.msra.mxu0 0
      %718 = vmatprep.subr.bf16.mxu0 0
      %719 = vmatpush1.bf16.msra.mxu0 0
      %720 = vmatprep.subr.bf16.mxu0 0
      %721 = vmatpush1.bf16.msra.mxu0 0
      %722 = vmatprep.subr.bf16.mxu0 0
      %723 = vmatpush1.bf16.msra.mxu0 0
      %724 = vmatprep.subr.bf16.mxu0 0
      %725 = vmatpush1.bf16.msra.mxu0 0
      %726 = vmatprep.subr.bf16.mxu0 0
      %727 = vmatpush1.bf16.msra.mxu0 0
      %728 = vmatprep.subr.bf16.mxu0 0
      %729 = vmatpush1.bf16.msra.mxu0 0
      %730 = vmatprep.subr.bf16.mxu0 0
      %731 = vmatpush1.bf16.msra.mxu0 0
      %732 = vmatprep.subr.bf16.mxu0 0
      %733 = vmatpush1.bf16.msra.mxu0 0
      %734 = vmatprep.subr.bf16.mxu0 0
      %735 = vmatpush1.bf16.msra.mxu0 0
      %736 = vmatprep.subr.bf16.mxu0 0
      %737 = vmatpush1.bf16.msra.mxu0 0
      %738 = vmatprep.subr.bf16.mxu0 0
      %739 = vmatpush1.bf16.msra.mxu0 0
      %740 = vmatprep.subr.bf16.mxu0 0
      %741 = vmatpush1.bf16.msra.mxu0 0
      %742 = vmatprep.subr.bf16.mxu0 0
      %743 = vmatpush1.bf16.msra.mxu0 0
      %744 = vmatprep.mubr.bf16.mxu0 0
      %745 = vmatmul.mubr.bf16.gmra.mrb[0].mxu0 %v710
      %v746 = vpop.f32.mrb[0].mxu0
      %v747 = vadd.f32 0.0, %v746
      %v748 = vpop.f32.mrb[0].mxu0
      %v749 = vpop.f32.mrb[0].mxu0
      %v750 = vpop.f32.mrb[0].mxu0
      %751 = vdwg.mxu0
      %v752 = vadd.f32 %v676, %v747
      %s753 = scalar_lea.vmem %s196, 4
      %v754 = vld [vmem:[%s753] sm:$0x3]
      %v755 = vld [vmem:[%s753 + $0x4] sm:$0x3]
      %s756 = scalar_lea.vmem %s1, 96
      %v757 = vld [vmem:[%s756] sm:$0xf]
      %v758 = vld [vmem:[%s756 + $0x4] sm:$0xf]
      %v759 = vld [vmem:[%s756 + $0x8] sm:$0xf]
      %v760 = vld [vmem:[%s756 + $0xc] sm:$0xf]
      %v763 = vcombine.low %v754, %v755
      %v765 = vunpack.c.l.s4 1966171168
      %v766 = vunpack.c.0.s8 %v765
      %v767 = vlaneseq
      %v768 = vshrl.u32 %v767, 7
      %v769 = vsub.s32 %v766, %v768
      %v770 = vrot.slane %v763, %v769
      %v772 = vunpack.c.l.s4 1966171168
      %v773 = vunpack.c.0.s8 %v772
      %v774 = vlaneseq
      %v775 = vshrl.u32 %v774, 7
      %v776 = vsub.s32 %v773, %v775
      %v777 = vrot.slane %v770, %v776
      %v782 = vunpack.c.l.b16 %v757
      %v783 = vunpack.c.l.b16 %v758
      %v784 = vunpack.c.l.b16 %v759
      %v785 = vunpack.c.l.b16 %v760
      %v786 = vpack.c.b16 %v783, %v782
      %v787 = vpack.c.b16 %v785, %v784
      %v791 = vsel %vm296, %v777, 0
      %793 = vmatprep.subr.bf16.mxu0 0
      %794 = vmatpush1.bf16.msra.mxu0 %v786
      %795 = vmatprep.subr.bf16.mxu0 0
      %796 = vmatpush1.bf16.msra.mxu0 %v787
      %797 = vmatprep.subr.bf16.mxu0 0
      %798 = vmatpush1.bf16.msra.mxu0 0
      %799 = vmatprep.subr.bf16.mxu0 0
      %800 = vmatpush1.bf16.msra.mxu0 0
      %801 = vmatprep.subr.bf16.mxu0 0
      %802 = vmatpush1.bf16.msra.mxu0 0
      %803 = vmatprep.subr.bf16.mxu0 0
      %804 = vmatpush1.bf16.msra.mxu0 0
      %805 = vmatprep.subr.bf16.mxu0 0
      %806 = vmatpush1.bf16.msra.mxu0 0
      %807 = vmatprep.subr.bf16.mxu0 0
      %808 = vmatpush1.bf16.msra.mxu0 0
      %809 = vmatprep.subr.bf16.mxu0 0
      %810 = vmatpush1.bf16.msra.mxu0 0
      %811 = vmatprep.subr.bf16.mxu0 0
      %812 = vmatpush1.bf16.msra.mxu0 0
      %813 = vmatprep.subr.bf16.mxu0 0
      %814 = vmatpush1.bf16.msra.mxu0 0
      %815 = vmatprep.subr.bf16.mxu0 0
      %816 = vmatpush1.bf16.msra.mxu0 0
      %817 = vmatprep.subr.bf16.mxu0 0
      %818 = vmatpush1.bf16.msra.mxu0 0
      %819 = vmatprep.subr.bf16.mxu0 0
      %820 = vmatpush1.bf16.msra.mxu0 0
      %821 = vmatprep.subr.bf16.mxu0 0
      %822 = vmatpush1.bf16.msra.mxu0 0
      %823 = vmatprep.subr.bf16.mxu0 0
      %824 = vmatpush1.bf16.msra.mxu0 0
      %825 = vmatprep.mubr.bf16.mxu0 0
      %826 = vmatmul.mubr.bf16.gmra.mrb[0].mxu0 %v791
      %v827 = vpop.f32.mrb[0].mxu0
      %v828 = vadd.f32 0.0, %v827
      %v829 = vpop.f32.mrb[0].mxu0
      %v830 = vpop.f32.mrb[0].mxu0
      %v831 = vpop.f32.mrb[0].mxu0
      %832 = vdwg.mxu0
      %v833 = vadd.f32 %v752, %v828
      %v835 = vunpack.c.l.s4 1966171168
      %v836 = vunpack.c.0.s8 %v835
      %v837 = vlaneseq
      %v838 = vshrl.u32 %v837, 7
      %v839 = vsub.s32 %v836, %v838
      %v840 = vrot.slane %v754, %v839
      %v841 = vcombine.high %v840, %v840
      %v843 = vunpack.c.l.s4 1966171168
      %v844 = vunpack.c.0.s8 %v843
      %v845 = vlaneseq
      %v846 = vshrl.u32 %v845, 7
      %v847 = vsub.s32 %v844, %v846
      %v848 = vrot.slane %v755, %v847
      %v849 = vcombine.high %v848, %v848
      %v851 = vshrl.u32 %v840, 16
      %v853 = vrot.slane %v851, 7
      %v854 = vrot.slane %v853, 1
      %v856 = vshll.u32 %v841, 16
      %v858 = vsel %vm245, %v854, %v856
      %v860 = vshrl.u32 %v848, 16
      %v862 = vrot.slane %v860, 7
      %v863 = vrot.slane %v862, 1
      %v865 = vshll.u32 %v849, 16
      %v867 = vsel %vm245, %v863, %v865
      %s868 = scalar_lea.vmem %s1, 112
      %v869 = vld [vmem:[%s868] sm:$0xf]
      %v870 = vld [vmem:[%s868 + $0x4] sm:$0xf]
      %v871 = vld [vmem:[%s868 + $0x8] sm:$0xf]
      %v872 = vld [vmem:[%s868 + $0xc] sm:$0xf]
      %v873 = vcombine.low %v858, %v867
      %v875 = vunpack.c.l.s4 1966171168
      %v876 = vunpack.c.0.s8 %v875
      %v877 = vlaneseq
      %v878 = vshrl.u32 %v877, 7
      %v879 = vsub.s32 %v876, %v878
      %v880 = vrot.slane %v873, %v879
      %v882 = vunpack.c.l.s4 1966171168
      %v883 = vunpack.c.0.s8 %v882
      %v884 = vlaneseq
      %v885 = vshrl.u32 %v884, 7
      %v886 = vsub.s32 %v883, %v885
      %v887 = vrot.slane %v880, %v886
      %v892 = vunpack.c.l.b16 %v869
      %v893 = vunpack.c.l.b16 %v870
      %v894 = vunpack.c.l.b16 %v871
      %v895 = vunpack.c.l.b16 %v872
      %v896 = vpack.c.b16 %v893, %v892
      %v897 = vpack.c.b16 %v895, %v894
      %v901 = vsel %vm296, %v887, 0
      %903 = vmatprep.subr.bf16.mxu0 0
      %904 = vmatpush1.bf16.msra.mxu0 %v896
      %905 = vmatprep.subr.bf16.mxu0 0
      %906 = vmatpush1.bf16.msra.mxu0 %v897
      %907 = vmatprep.subr.bf16.mxu0 0
      %908 = vmatpush1.bf16.msra.mxu0 0
      %909 = vmatprep.subr.bf16.mxu0 0
      %910 = vmatpush1.bf16.msra.mxu0 0
      %911 = vmatprep.subr.bf16.mxu0 0
      %912 = vmatpush1.bf16.msra.mxu0 0
      %913 = vmatprep.subr.bf16.mxu0 0
      %914 = vmatpush1.bf16.msra.mxu0 0
      %915 = vmatprep.subr.bf16.mxu0 0
      %916 = vmatpush1.bf16.msra.mxu0 0
      %917 = vmatprep.subr.bf16.mxu0 0
      %918 = vmatpush1.bf16.msra.mxu0 0
      %919 = vmatprep.subr.bf16.mxu0 0
      %920 = vmatpush1.bf16.msra.mxu0 0
      %921 = vmatprep.subr.bf16.mxu0 0
      %922 = vmatpush1.bf16.msra.mxu0 0
      %923 = vmatprep.subr.bf16.mxu0 0
      %924 = vmatpush1.bf16.msra.mxu0 0
      %925 = vmatprep.subr.bf16.mxu0 0
      %926 = vmatpush1.bf16.msra.mxu0 0
      %927 = vmatprep.subr.bf16.mxu0 0
      %928 = vmatpush1.bf16.msra.mxu0 0
      %929 = vmatprep.subr.bf16.mxu0 0
      %930 = vmatpush1.bf16.msra.mxu0 0
      %931 = vmatprep.subr.bf16.mxu0 0
      %932 = vmatpush1.bf16.msra.mxu0 0
      %933 = vmatprep.subr.bf16.mxu0 0
      %934 = vmatpush1.bf16.msra.mxu0 0
      %935 = vmatprep.mubr.bf16.mxu0 0
      %936 = vmatmul.mubr.bf16.gmra.mrb[0].mxu0 %v901
      %v937 = vpop.f32.mrb[0].mxu0
      %v938 = vadd.f32 0.0, %v937
      %v939 = vpop.f32.mrb[0].mxu0
      %v940 = vpop.f32.mrb[0].mxu0
      %v941 = vpop.f32.mrb[0].mxu0
      %942 = vdwg.mxu0
      %v943 = vadd.f32 %v833, %v938
      %s944 = scalar_lea.vmem %s1, 128
      %v945 = vld [vmem:[%s944] sm:$0xf]
      %v946 = vld [vmem:[%s944 + $0x4] sm:$0xf]
      %v947 = vld [vmem:[%s944 + $0x8] sm:$0xf]
      %v948 = vld [vmem:[%s944 + $0xc] sm:$0xf]
      %v949 = vcombine.low %v841, %v849
      %v951 = vunpack.c.l.s4 1966171168
      %v952 = vunpack.c.0.s8 %v951
      %v953 = vlaneseq
      %v954 = vshrl.u32 %v953, 7
      %v955 = vsub.s32 %v952, %v954
      %v956 = vrot.slane %v949, %v955
      %v958 = vunpack.c.l.s4 1966171168
      %v959 = vunpack.c.0.s8 %v958
      %v960 = vlaneseq
      %v961 = vshrl.u32 %v960, 7
      %v962 = vsub.s32 %v959, %v961
      %v963 = vrot.slane %v956, %v962
      %v968 = vunpack.c.l.b16 %v945
      %v969 = vunpack.c.l.b16 %v946
      %v970 = vunpack.c.l.b16 %v947
      %v971 = vunpack.c.l.b16 %v948
      %v972 = vpack.c.b16 %v969, %v968
      %v973 = vpack.c.b16 %v971, %v970
      %v977 = vsel %vm296, %v963, 0
      %979 = vmatprep.subr.bf16.mxu0 0
      %980 = vmatpush1.bf16.msra.mxu0 %v972
      %981 = vmatprep.subr.bf16.mxu0 0
      %982 = vmatpush1.bf16.msra.mxu0 %v973
      %983 = vmatprep.subr.bf16.mxu0 0
      %984 = vmatpush1.bf16.msra.mxu0 0
      %985 = vmatprep.subr.bf16.mxu0 0
      %986 = vmatpush1.bf16.msra.mxu0 0
      %987 = vmatprep.subr.bf16.mxu0 0
      %988 = vmatpush1.bf16.msra.mxu0 0
      %989 = vmatprep.subr.bf16.mxu0 0
      %990 = vmatpush1.bf16.msra.mxu0 0
      %991 = vmatprep.subr.bf16.mxu0 0
      %992 = vmatpush1.bf16.msra.mxu0 0
      %993 = vmatprep.subr.bf16.mxu0 0
      %994 = vmatpush1.bf16.msra.mxu0 0
      %995 = vmatprep.subr.bf16.mxu0 0
      %996 = vmatpush1.bf16.msra.mxu0 0
      %997 = vmatprep.subr.bf16.mxu0 0
      %998 = vmatpush1.bf16.msra.mxu0 0
      %999 = vmatprep.subr.bf16.mxu0 0
      %1000 = vmatpush1.bf16.msra.mxu0 0
      %1001 = vmatprep.subr.bf16.mxu0 0
      %1002 = vmatpush1.bf16.msra.mxu0 0
      %1003 = vmatprep.subr.bf16.mxu0 0
      %1004 = vmatpush1.bf16.msra.mxu0 0
      %1005 = vmatprep.subr.bf16.mxu0 0
      %1006 = vmatpush1.bf16.msra.mxu0 0
      %1007 = vmatprep.subr.bf16.mxu0 0
      %1008 = vmatpush1.bf16.msra.mxu0 0
      %1009 = vmatprep.subr.bf16.mxu0 0
      %1010 = vmatpush1.bf16.msra.mxu0 0
      %1011 = vmatprep.mubr.bf16.mxu0 0
      %1012 = vmatmul.mubr.bf16.gmra.mrb[0].mxu0 %v977
      %v1013 = vpop.f32.mrb[0].mxu0
      %v1014 = vadd.f32 0.0, %v1013
      %v1015 = vpop.f32.mrb[0].mxu0
      %v1016 = vpop.f32.mrb[0].mxu0
      %v1017 = vpop.f32.mrb[0].mxu0
      %1018 = vdwg.mxu0
      %v1019 = vadd.f32 %v943, %v1014
      %s1020 = scalar_lea.vmem %s196, 6
      %v1021 = vld [vmem:[%s1020] sm:$0x3]
      %v1022 = vld [vmem:[%s1020 + $0x4] sm:$0x3]
      %s1023 = scalar_lea.vmem %s1, 144
      %v1024 = vld [vmem:[%s1023] sm:$0xf]
      %v1025 = vld [vmem:[%s1023 + $0x4] sm:$0xf]
      %v1026 = vld [vmem:[%s1023 + $0x8] sm:$0xf]
      %v1027 = vld [vmem:[%s1023 + $0xc] sm:$0xf]
      %v1030 = vcombine.low %v1021, %v1022
      %v1032 = vunpack.c.l.s4 1966171168
      %v1033 = vunpack.c.0.s8 %v1032
      %v1034 = vlaneseq
      %v1035 = vshrl.u32 %v1034, 7
      %v1036 = vsub.s32 %v1033, %v1035
      %v1037 = vrot.slane %v1030, %v1036
      %v1039 = vunpack.c.l.s4 1966171168
      %v1040 = vunpack.c.0.s8 %v1039
      %v1041 = vlaneseq
      %v1042 = vshrl.u32 %v1041, 7
      %v1043 = vsub.s32 %v1040, %v1042
      %v1044 = vrot.slane %v1037, %v1043
      %v1049 = vunpack.c.l.b16 %v1024
      %v1050 = vunpack.c.l.b16 %v1025
      %v1051 = vunpack.c.l.b16 %v1026
      %v1052 = vunpack.c.l.b16 %v1027
      %v1053 = vpack.c.b16 %v1050, %v1049
      %v1054 = vpack.c.b16 %v1052, %v1051
      %v1058 = vsel %vm296, %v1044, 0
      %1060 = vmatprep.subr.bf16.mxu0 0
      %1061 = vmatpush1.bf16.msra.mxu0 %v1053
      %1062 = vmatprep.subr.bf16.mxu0 0
      %1063 = vmatpush1.bf16.msra.mxu0 %v1054
      %1064 = vmatprep.subr.bf16.mxu0 0
      %1065 = vmatpush1.bf16.msra.mxu0 0
      %1066 = vmatprep.subr.bf16.mxu0 0
      %1067 = vmatpush1.bf16.msra.mxu0 0
      %1068 = vmatprep.subr.bf16.mxu0 0
      %1069 = vmatpush1.bf16.msra.mxu0 0
      %1070 = vmatprep.subr.bf16.mxu0 0
      %1071 = vmatpush1.bf16.msra.mxu0 0
      %1072 = vmatprep.subr.bf16.mxu0 0
      %1073 = vmatpush1.bf16.msra.mxu0 0
      %1074 = vmatprep.subr.bf16.mxu0 0
      %1075 = vmatpush1.bf16.msra.mxu0 0
      %1076 = vmatprep.subr.bf16.mxu0 0
      %1077 = vmatpush1.bf16.msra.mxu0 0
      %1078 = vmatprep.subr.bf16.mxu0 0
      %1079 = vmatpush1.bf16.msra.mxu0 0
      %1080 = vmatprep.subr.bf16.mxu0 0
      %1081 = vmatpush1.bf16.msra.mxu0 0
      %1082 = vmatprep.subr.bf16.mxu0 0
      %1083 = vmatpush1.bf16.msra.mxu0 0
      %1084 = vmatprep.subr.bf16.mxu0 0
      %1085 = vmatpush1.bf16.msra.mxu0 0
      %1086 = vmatprep.subr.bf16.mxu0 0
      %1087 = vmatpush1.bf16.msra.mxu0 0
      %1088 = vmatprep.subr.bf16.mxu0 0
      %1089 = vmatpush1.bf16.msra.mxu0 0
      %1090 = vmatprep.subr.bf16.mxu0 0
      %1091 = vmatpush1.bf16.msra.mxu0 0
      %1092 = vmatprep.mubr.bf16.mxu0 0
      %1093 = vmatmul.mubr.bf16.gmra.mrb[0].mxu0 %v1058
      %v1094 = vpop.f32.mrb[0].mxu0
      %v1095 = vadd.f32 0.0, %v1094
      %v1096 = vpop.f32.mrb[0].mxu0
      %v1097 = vpop.f32.mrb[0].mxu0
      %v1098 = vpop.f32.mrb[0].mxu0
      %1099 = vdwg.mxu0
      %v1100 = vadd.f32 %v1019, %v1095
      %v1102 = vunpack.c.l.s4 1966171168
      %v1103 = vunpack.c.0.s8 %v1102
      %v1104 = vlaneseq
      %v1105 = vshrl.u32 %v1104, 7
      %v1106 = vsub.s32 %v1103, %v1105
      %v1107 = vrot.slane %v1021, %v1106
      %v1108 = vcombine.high %v1107, %v1107
      %v1110 = vunpack.c.l.s4 1966171168
      %v1111 = vunpack.c.0.s8 %v1110
      %v1112 = vlaneseq
      %v1113 = vshrl.u32 %v1112, 7
      %v1114 = vsub.s32 %v1111, %v1113
      %v1115 = vrot.slane %v1022, %v1114
      %v1116 = vcombine.high %v1115, %v1115
      %v1118 = vshrl.u32 %v1107, 16
      %v1120 = vrot.slane %v1118, 7
      %v1121 = vrot.slane %v1120, 1
      %v1123 = vshll.u32 %v1108, 16
      %v1125 = vsel %vm245, %v1121, %v1123
      %v1127 = vshrl.u32 %v1115, 16
      %v1129 = vrot.slane %v1127, 7
      %v1130 = vrot.slane %v1129, 1
      %v1132 = vshll.u32 %v1116, 16
      %v1134 = vsel %vm245, %v1130, %v1132
      %s1135 = scalar_lea.vmem %s1, 160
      %v1136 = vld [vmem:[%s1135] sm:$0xf]
      %v1137 = vld [vmem:[%s1135 + $0x4] sm:$0xf]
      %v1138 = vld [vmem:[%s1135 + $0x8] sm:$0xf]
      %v1139 = vld [vmem:[%s1135 + $0xc] sm:$0xf]
      %v1140 = vcombine.low %v1125, %v1134
      %v1142 = vunpack.c.l.s4 1966171168
      %v1143 = vunpack.c.0.s8 %v1142
      %v1144 = vlaneseq
      %v1145 = vshrl.u32 %v1144, 7
      %v1146 = vsub.s32 %v1143, %v1145
      %v1147 = vrot.slane %v1140, %v1146
      %v1149 = vunpack.c.l.s4 1966171168
      %v1150 = vunpack.c.0.s8 %v1149
      %v1151 = vlaneseq
      %v1152 = vshrl.u32 %v1151, 7
      %v1153 = vsub.s32 %v1150, %v1152
      %v1154 = vrot.slane %v1147, %v1153
      %v1159 = vunpack.c.l.b16 %v1136
      %v1160 = vunpack.c.l.b16 %v1137
      %v1161 = vunpack.c.l.b16 %v1138
      %v1162 = vunpack.c.l.b16 %v1139
      %v1163 = vpack.c.b16 %v1160, %v1159
      %v1164 = vpack.c.b16 %v1162, %v1161
      %v1168 = vsel %vm296, %v1154, 0
      %1170 = vmatprep.subr.bf16.mxu0 0
      %1171 = vmatpush1.bf16.msra.mxu0 %v1163
      %1172 = vmatprep.subr.bf16.mxu0 0
      %1173 = vmatpush1.bf16.msra.mxu0 %v1164
      %1174 = vmatprep.subr.bf16.mxu0 0
      %1175 = vmatpush1.bf16.msra.mxu0 0
      %1176 = vmatprep.subr.bf16.mxu0 0
      %1177 = vmatpush1.bf16.msra.mxu0 0
      %1178 = vmatprep.subr.bf16.mxu0 0
      %1179 = vmatpush1.bf16.msra.mxu0 0
      %1180 = vmatprep.subr.bf16.mxu0 0
      %1181 = vmatpush1.bf16.msra.mxu0 0
      %1182 = vmatprep.subr.bf16.mxu0 0
      %1183 = vmatpush1.bf16.msra.mxu0 0
      %1184 = vmatprep.subr.bf16.mxu0 0
      %1185 = vmatpush1.bf16.msra.mxu0 0
      %1186 = vmatprep.subr.bf16.mxu0 0
      %1187 = vmatpush1.bf16.msra.mxu0 0
      %1188 = vmatprep.subr.bf16.mxu0 0
      %1189 = vmatpush1.bf16.msra.mxu0 0
      %1190 = vmatprep.subr.bf16.mxu0 0
      %1191 = vmatpush1.bf16.msra.mxu0 0
      %1192 = vmatprep.subr.bf16.mxu0 0
      %1193 = vmatpush1.bf16.msra.mxu0 0
      %1194 = vmatprep.subr.bf16.mxu0 0
      %1195 = vmatpush1.bf16.msra.mxu0 0
      %1196 = vmatprep.subr.bf16.mxu0 0
      %1197 = vmatpush1.bf16.msra.mxu0 0
      %1198 = vmatprep.subr.bf16.mxu0 0
      %1199 = vmatpush1.bf16.msra.mxu0 0
      %1200 = vmatprep.subr.bf16.mxu0 0
      %1201 = vmatpush1.bf16.msra.mxu0 0
      %1202 = vmatprep.mubr.bf16.mxu0 0
      %1203 = vmatmul.mubr.bf16.gmra.mrb[0].mxu0 %v1168
      %v1204 = vpop.f32.mrb[0].mxu0
      %v1205 = vadd.f32 0.0, %v1204
      %v1206 = vpop.f32.mrb[0].mxu0
      %v1207 = vpop.f32.mrb[0].mxu0
      %v1208 = vpop.f32.mrb[0].mxu0
      %1209 = vdwg.mxu0
      %v1210 = vadd.f32 %v1100, %v1205
      %s1211 = scalar_lea.vmem %s1, 176
      %v1212 = vld [vmem:[%s1211] sm:$0xf]
      %v1213 = vld [vmem:[%s1211 + $0x4] sm:$0xf]
      %v1214 = vld [vmem:[%s1211 + $0x8] sm:$0xf]
      %v1215 = vld [vmem:[%s1211 + $0xc] sm:$0xf]
      %v1216 = vcombine.low %v1108, %v1116
      %v1218 = vunpack.c.l.s4 1966171168
      %v1219 = vunpack.c.0.s8 %v1218
      %v1220 = vlaneseq
      %v1221 = vshrl.u32 %v1220, 7
      %v1222 = vsub.s32 %v1219, %v1221
      %v1223 = vrot.slane %v1216, %v1222
      %v1225 = vunpack.c.l.s4 1966171168
      %v1226 = vunpack.c.0.s8 %v1225
      %v1227 = vlaneseq
      %v1228 = vshrl.u32 %v1227, 7
      %v1229 = vsub.s32 %v1226, %v1228
      %v1230 = vrot.slane %v1223, %v1229
      %v1235 = vunpack.c.l.b16 %v1212
      %v1236 = vunpack.c.l.b16 %v1213
      %v1237 = vunpack.c.l.b16 %v1214
      %v1238 = vunpack.c.l.b16 %v1215
      %v1239 = vpack.c.b16 %v1236, %v1235
      %v1240 = vpack.c.b16 %v1238, %v1237
      %v1244 = vsel %vm296, %v1230, 0
      %1246 = vmatprep.subr.bf16.mxu0 0
      %1247 = vmatpush1.bf16.msra.mxu0 %v1239
      %1248 = vmatprep.subr.bf16.mxu0 0
      %1249 = vmatpush1.bf16.msra.mxu0 %v1240
      %1250 = vmatprep.subr.bf16.mxu0 0
      %1251 = vmatpush1.bf16.msra.mxu0 0
      %1252 = vmatprep.subr.bf16.mxu0 0
      %1253 = vmatpush1.bf16.msra.mxu0 0
      %1254 = vmatprep.subr.bf16.mxu0 0
      %1255 = vmatpush1.bf16.msra.mxu0 0
      %1256 = vmatprep.subr.bf16.mxu0 0
      %1257 = vmatpush1.bf16.msra.mxu0 0
      %1258 = vmatprep.subr.bf16.mxu0 0
      %1259 = vmatpush1.bf16.msra.mxu0 0
      %1260 = vmatprep.subr.bf16.mxu0 0
      %1261 = vmatpush1.bf16.msra.mxu0 0
      %1262 = vmatprep.subr.bf16.mxu0 0
      %1263 = vmatpush1.bf16.msra.mxu0 0
      %1264 = vmatprep.subr.bf16.mxu0 0
      %1265 = vmatpush1.bf16.msra.mxu0 0
      %1266 = vmatprep.subr.bf16.mxu0 0
      %1267 = vmatpush1.bf16.msra.mxu0 0
      %1268 = vmatprep.subr.bf16.mxu0 0
      %1269 = vmatpush1.bf16.msra.mxu0 0
      %1270 = vmatprep.subr.bf16.mxu0 0
      %1271 = vmatpush1.bf16.msra.mxu0 0
      %1272 = vmatprep.subr.bf16.mxu0 0
      %1273 = vmatpush1.bf16.msra.mxu0 0
      %1274 = vmatprep.subr.bf16.mxu0 0
      %1275 = vmatpush1.bf16.msra.mxu0 0
      %1276 = vmatprep.subr.bf16.mxu0 0
      %1277 = vmatpush1.bf16.msra.mxu0 0
      %1278 = vmatprep.mubr.bf16.mxu0 0
      %1279 = vmatmul.mubr.bf16.gmra.mrb[0].mxu0 %v1244
      %v1280 = vpop.f32.mrb[0].mxu0
      %v1281 = vadd.f32 0.0, %v1280
      %v1282 = vpop.f32.mrb[0].mxu0
      %v1283 = vpop.f32.mrb[0].mxu0
      %v1284 = vpop.f32.mrb[0].mxu0
      %1285 = vdwg.mxu0
      %v1286 = vadd.f32 %v1210, %v1281
      %s1287 = scalar_lea.vmem %s196, 8
      %v1288 = vld [vmem:[%s1287] sm:$0x3]
      %v1289 = vld [vmem:[%s1287 + $0x4] sm:$0x3]
      %s1290 = scalar_lea.vmem %s1, 192
      %v1291 = vld [vmem:[%s1290] sm:$0xf]
      %v1292 = vld [vmem:[%s1290 + $0x4] sm:$0xf]
      %v1293 = vld [vmem:[%s1290 + $0x8] sm:$0xf]
      %v1294 = vld [vmem:[%s1290 + $0xc] sm:$0xf]
      %v1297 = vcombine.low %v1288, %v1289
      %v1299 = vunpack.c.l.s4 1966171168
      %v1300 = vunpack.c.0.s8 %v1299
      %v1301 = vlaneseq
      %v1302 = vshrl.u32 %v1301, 7
      %v1303 = vsub.s32 %v1300, %v1302
      %v1304 = vrot.slane %v1297, %v1303
      %v1306 = vunpack.c.l.s4 1966171168
      %v1307 = vunpack.c.0.s8 %v1306
      %v1308 = vlaneseq
      %v1309 = vshrl.u32 %v1308, 7
      %v1310 = vsub.s32 %v1307, %v1309
      %v1311 = vrot.slane %v1304, %v1310
      %v1316 = vunpack.c.l.b16 %v1291
      %v1317 = vunpack.c.l.b16 %v1292
      %v1318 = vunpack.c.l.b16 %v1293
      %v1319 = vunpack.c.l.b16 %v1294
      %v1320 = vpack.c.b16 %v1317, %v1316
      %v1321 = vpack.c.b16 %v1319, %v1318
      %v1325 = vsel %vm296, %v1311, 0
      %1327 = vmatprep.subr.bf16.mxu0 0
      %1328 = vmatpush1.bf16.msra.mxu0 %v1320
      %1329 = vmatprep.subr.bf16.mxu0 0
      %1330 = vmatpush1.bf16.msra.mxu0 %v1321
      %1331 = vmatprep.subr.bf16.mxu0 0
      %1332 = vmatpush1.bf16.msra.mxu0 0
      %1333 = vmatprep.subr.bf16.mxu0 0
      %1334 = vmatpush1.bf16.msra.mxu0 0
      %1335 = vmatprep.subr.bf16.mxu0 0
      %1336 = vmatpush1.bf16.msra.mxu0 0
      %1337 = vmatprep.subr.bf16.mxu0 0
      %1338 = vmatpush1.bf16.msra.mxu0 0
      %1339 = vmatprep.subr.bf16.mxu0 0
      %1340 = vmatpush1.bf16.msra.mxu0 0
      %1341 = vmatprep.subr.bf16.mxu0 0
      %1342 = vmatpush1.bf16.msra.mxu0 0
      %1343 = vmatprep.subr.bf16.mxu0 0
      %1344 = vmatpush1.bf16.msra.mxu0 0
      %1345 = vmatprep.subr.bf16.mxu0 0
      %1346 = vmatpush1.bf16.msra.mxu0 0
      %1347 = vmatprep.subr.bf16.mxu0 0
      %1348 = vmatpush1.bf16.msra.mxu0 0
      %1349 = vmatprep.subr.bf16.mxu0 0
      %1350 = vmatpush1.bf16.msra.mxu0 0
      %1351 = vmatprep.subr.bf16.mxu0 0
      %1352 = vmatpush1.bf16.msra.mxu0 0
      %1353 = vmatprep.subr.bf16.mxu0 0
      %1354 = vmatpush1.bf16.msra.mxu0 0
      %1355 = vmatprep.subr.bf16.mxu0 0
      %1356 = vmatpush1.bf16.msra.mxu0 0
      %1357 = vmatprep.subr.bf16.mxu0 0
      %1358 = vmatpush1.bf16.msra.mxu0 0
      %1359 = vmatprep.mubr.bf16.mxu0 0
      %1360 = vmatmul.mubr.bf16.gmra.mrb[0].mxu0 %v1325
      %v1361 = vpop.f32.mrb[0].mxu0
      %v1362 = vadd.f32 0.0, %v1361
      %v1363 = vpop.f32.mrb[0].mxu0
      %v1364 = vpop.f32.mrb[0].mxu0
      %v1365 = vpop.f32.mrb[0].mxu0
      %1366 = vdwg.mxu0
      %v1367 = vadd.f32 %v1286, %v1362
      %v1369 = vunpack.c.l.s4 1966171168
      %v1370 = vunpack.c.0.s8 %v1369
      %v1371 = vlaneseq
      %v1372 = vshrl.u32 %v1371, 7
      %v1373 = vsub.s32 %v1370, %v1372
      %v1374 = vrot.slane %v1288, %v1373
      %v1375 = vcombine.high %v1374, %v1374
      %v1377 = vunpack.c.l.s4 1966171168
      %v1378 = vunpack.c.0.s8 %v1377
      %v1379 = vlaneseq
      %v1380 = vshrl.u32 %v1379, 7
      %v1381 = vsub.s32 %v1378, %v1380
      %v1382 = vrot.slane %v1289, %v1381
      %v1383 = vcombine.high %v1382, %v1382
      %v1385 = vshrl.u32 %v1374, 16
      %v1387 = vrot.slane %v1385, 7
      %v1388 = vrot.slane %v1387, 1
      %v1390 = vshll.u32 %v1375, 16
      %v1392 = vsel %vm245, %v1388, %v1390
      %v1394 = vshrl.u32 %v1382, 16
      %v1396 = vrot.slane %v1394, 7
      %v1397 = vrot.slane %v1396, 1
      %v1399 = vshll.u32 %v1383, 16
      %v1401 = vsel %vm245, %v1397, %v1399
      %s1402 = scalar_lea.vmem %s1, 208
      %v1403 = vld [vmem:[%s1402] sm:$0xf]
      %v1404 = vld [vmem:[%s1402 + $0x4] sm:$0xf]
      %v1405 = vld [vmem:[%s1402 + $0x8] sm:$0xf]
      %v1406 = vld [vmem:[%s1402 + $0xc] sm:$0xf]
      %v1407 = vcombine.low %v1392, %v1401
      %v1409 = vunpack.c.l.s4 1966171168
      %v1410 = vunpack.c.0.s8 %v1409
      %v1411 = vlaneseq
      %v1412 = vshrl.u32 %v1411, 7
      %v1413 = vsub.s32 %v1410, %v1412
      %v1414 = vrot.slane %v1407, %v1413
      %v1416 = vunpack.c.l.s4 1966171168
      %v1417 = vunpack.c.0.s8 %v1416
      %v1418 = vlaneseq
      %v1419 = vshrl.u32 %v1418, 7
      %v1420 = vsub.s32 %v1417, %v1419
      %v1421 = vrot.slane %v1414, %v1420
      %v1426 = vunpack.c.l.b16 %v1403
      %v1427 = vunpack.c.l.b16 %v1404
      %v1428 = vunpack.c.l.b16 %v1405
      %v1429 = vunpack.c.l.b16 %v1406
      %v1430 = vpack.c.b16 %v1427, %v1426
      %v1431 = vpack.c.b16 %v1429, %v1428
      %v1435 = vsel %vm296, %v1421, 0
      %1437 = vmatprep.subr.bf16.mxu0 0
      %1438 = vmatpush1.bf16.msra.mxu0 %v1430
      %1439 = vmatprep.subr.bf16.mxu0 0
      %1440 = vmatpush1.bf16.msra.mxu0 %v1431
      %1441 = vmatprep.subr.bf16.mxu0 0
      %1442 = vmatpush1.bf16.msra.mxu0 0
      %1443 = vmatprep.subr.bf16.mxu0 0
      %1444 = vmatpush1.bf16.msra.mxu0 0
      %1445 = vmatprep.subr.bf16.mxu0 0
      %1446 = vmatpush1.bf16.msra.mxu0 0
      %1447 = vmatprep.subr.bf16.mxu0 0
      %1448 = vmatpush1.bf16.msra.mxu0 0
      %1449 = vmatprep.subr.bf16.mxu0 0
      %1450 = vmatpush1.bf16.msra.mxu0 0
      %1451 = vmatprep.subr.bf16.mxu0 0
      %1452 = vmatpush1.bf16.msra.mxu0 0
      %1453 = vmatprep.subr.bf16.mxu0 0
      %1454 = vmatpush1.bf16.msra.mxu0 0
      %1455 = vmatprep.subr.bf16.mxu0 0
      %1456 = vmatpush1.bf16.msra.mxu0 0
      %1457 = vmatprep.subr.bf16.mxu0 0
      %1458 = vmatpush1.bf16.msra.mxu0 0
      %1459 = vmatprep.subr.bf16.mxu0 0
      %1460 = vmatpush1.bf16.msra.mxu0 0
      %1461 = vmatprep.subr.bf16.mxu0 0
      %1462 = vmatpush1.bf16.msra.mxu0 0
      %1463 = vmatprep.subr.bf16.mxu0 0
      %1464 = vmatpush1.bf16.msra.mxu0 0
      %1465 = vmatprep.subr.bf16.mxu0 0
      %1466 = vmatpush1.bf16.msra.mxu0 0
      %1467 = vmatprep.subr.bf16.mxu0 0
      %1468 = vmatpush1.bf16.msra.mxu0 0
      %1469 = vmatprep.mubr.bf16.mxu0 0
      %1470 = vmatmul.mubr.bf16.gmra.mrb[0].mxu0 %v1435
      %v1471 = vpop.f32.mrb[0].mxu0
      %v1472 = vadd.f32 0.0, %v1471
      %v1473 = vpop.f32.mrb[0].mxu0
      %v1474 = vpop.f32.mrb[0].mxu0
      %v1475 = vpop.f32.mrb[0].mxu0
      %1476 = vdwg.mxu0
      %v1477 = vadd.f32 %v1367, %v1472
      %s1478 = scalar_lea.vmem %s1, 224
      %v1479 = vld [vmem:[%s1478] sm:$0xf]
      %v1480 = vld [vmem:[%s1478 + $0x4] sm:$0xf]
      %v1481 = vld [vmem:[%s1478 + $0x8] sm:$0xf]
      %v1482 = vld [vmem:[%s1478 + $0xc] sm:$0xf]
      %v1483 = vcombine.low %v1375, %v1383
      %v1485 = vunpack.c.l.s4 1966171168
      %v1486 = vunpack.c.0.s8 %v1485
      %v1487 = vlaneseq
      %v1488 = vshrl.u32 %v1487, 7
      %v1489 = vsub.s32 %v1486, %v1488
      %v1490 = vrot.slane %v1483, %v1489
      %v1492 = vunpack.c.l.s4 1966171168
      %v1493 = vunpack.c.0.s8 %v1492
      %v1494 = vlaneseq
      %v1495 = vshrl.u32 %v1494, 7
      %v1496 = vsub.s32 %v1493, %v1495
      %v1497 = vrot.slane %v1490, %v1496
      %v1502 = vunpack.c.l.b16 %v1479
      %v1503 = vunpack.c.l.b16 %v1480
      %v1504 = vunpack.c.l.b16 %v1481
      %v1505 = vunpack.c.l.b16 %v1482
      %v1506 = vpack.c.b16 %v1503, %v1502
      %v1507 = vpack.c.b16 %v1505, %v1504
      %v1511 = vsel %vm296, %v1497, 0
      %1513 = vmatprep.subr.bf16.mxu0 0
      %1514 = vmatpush1.bf16.msra.mxu0 %v1506
      %1515 = vmatprep.subr.bf16.mxu0 0
      %1516 = vmatpush1.bf16.msra.mxu0 %v1507
      %1517 = vmatprep.subr.bf16.mxu0 0
      %1518 = vmatpush1.bf16.msra.mxu0 0
      %1519 = vmatprep.subr.bf16.mxu0 0
      %1520 = vmatpush1.bf16.msra.mxu0 0
      %1521 = vmatprep.subr.bf16.mxu0 0
      %1522 = vmatpush1.bf16.msra.mxu0 0
      %1523 = vmatprep.subr.bf16.mxu0 0
      %1524 = vmatpush1.bf16.msra.mxu0 0
      %1525 = vmatprep.subr.bf16.mxu0 0
      %1526 = vmatpush1.bf16.msra.mxu0 0
      %1527 = vmatprep.subr.bf16.mxu0 0
      %1528 = vmatpush1.bf16.msra.mxu0 0
      %1529 = vmatprep.subr.bf16.mxu0 0
      %1530 = vmatpush1.bf16.msra.mxu0 0
      %1531 = vmatprep.subr.bf16.mxu0 0
      %1532 = vmatpush1.bf16.msra.mxu0 0
      %1533 = vmatprep.subr.bf16.mxu0 0
      %1534 = vmatpush1.bf16.msra.mxu0 0
      %1535 = vmatprep.subr.bf16.mxu0 0
      %1536 = vmatpush1.bf16.msra.mxu0 0
      %1537 = vmatprep.subr.bf16.mxu0 0
      %1538 = vmatpush1.bf16.msra.mxu0 0
      %1539 = vmatprep.subr.bf16.mxu0 0
      %1540 = vmatpush1.bf16.msra.mxu0 0
      %1541 = vmatprep.subr.bf16.mxu0 0
      %1542 = vmatpush1.bf16.msra.mxu0 0
      %1543 = vmatprep.subr.bf16.mxu0 0
      %1544 = vmatpush1.bf16.msra.mxu0 0
      %1545 = vmatprep.mubr.bf16.mxu0 0
      %1546 = vmatmul.mubr.bf16.gmra.mrb[0].mxu0 %v1511
      %v1547 = vpop.f32.mrb[0].mxu0
      %v1548 = vadd.f32 0.0, %v1547
      %v1549 = vpop.f32.mrb[0].mxu0
      %v1550 = vpop.f32.mrb[0].mxu0
      %v1551 = vpop.f32.mrb[0].mxu0
      %1552 = vdwg.mxu0
      %v1553 = vadd.f32 %v1477, %v1548
      %v1554 = vld [vmem:[%s2] sm:$0x1]
      %v1556 = vlaneseq
      %v1557 = vshrl.u32 %v1556, 7
      %v1558 = vsub.s32 0, %v1557
      %v1559 = vrot.slane %v1554, %v1558
      %v1561 = vadd.f32 %v1553, %v1559
      %vm1562 = vcmp.gt.f32.partialorder %v1561, 0.0
      %v1563 = vmul.f32 %v1561, 0.2
      %v1564 = vsel %vm1562, %v1561, %v1563
      %v1567 = vunpack.c.l.s4 1983009808
      %v1568 = vunpack.c.0.s8 %v1567
      %v1569 = vlaneseq
      %v1570 = vshrl.u32 %v1569, 7
      %v1571 = vsub.s32 %v1568, %v1570
      %v1572 = vrot.slane %v1564, %v1571
      %v1573 = vcombine.high %v1572, %v1572
      %v1576 = vpack.c.bf16 %v1572, %v1572
      %v1577 = vpack.c.bf16 %v1573, %v1573
      %1578 = vst [vmem:[%s204] sm:$0x1] %v1576
      %1579 = vst [vmem:[%s204 + $0x1] sm:$0x1] %v1577
      %s1580 = smul.u32 2, %s19
      %p1581 = scmp.lt.s32.totalorder %s18, 1
      %s1582 = scalar_select %p1581, %s18, 1
      %p1583 = scmp.lt.s32.totalorder %s1580, 1
      %s1584 = scalar_select %p1583, %s1580, 1
      %s1585 = smul.addr %s1582, 2
      %s1586 = sadd.s32 %s1584, %s1585
      %s1587 = scalar_lea.vmem %s3, %s1586
      // Predicated region
      $region33: #{dis_conv_module_forward.6} parent=31 // pred_check
        %p1588 = pneg %p116
      $region34: #{dis_conv_module_forward.6} parent=31 // pred_check_branch
        %1590 = sbr.rel (%p1588) target = $region36
      $region35: #{dis_conv_module_forward.6} parent=31 // pred_region
        %s1591 = smul.u32 2, %s19
      $region36: #{dis_conv_module_forward.6} parent=31 // pred_fallthru
        _
    $region32: #{dis_conv_module_forward.6} parent=5 // pred_fallthru
      _
    %p1592 = scmp.le.s32.totalorder 2, %s9
    // Predicated region
    $region37: #{dis_conv_module_forward.6} parent=5 // pred_check
      %p1593 = pneg %p1592
    $region38: #{dis_conv_module_forward.6} parent=5 // pred_check_branch
      %1595 = sbr.rel (%p1593) target = $region40
    $region39: #{dis_conv_module_forward.6} parent=5 // pred_region
      %s1596 = ssub.s32 %s9, 2
      // Predicated region
      $region41: #{dis_conv_module_forward.6} parent=39 // pred_check
        %p1597 = pneg %p122
      $region42: #{dis_conv_module_forward.6} parent=39 // pred_check_branch
        %1599 = sbr.rel (%p1597) target = $region44
      $region43: #{dis_conv_module_forward.6} parent=39 // pred_region
        %s1600 = smul.u32 2, %s21
        %p1601 = scmp.lt.s32.totalorder %s20, 1
        %s1602 = scalar_select %p1601, %s20, 1
        %p1603 = scmp.lt.s32.totalorder %s1600, 1
        %s1604 = scalar_select %p1603, %s1600, 1
        %s1605 = smul.addr %s1602, 2
        %s1606 = sadd.s32 %s1604, %s1605
        %s1607 = scalar_lea.vmem %s3, %s1606
      $region44: #{dis_conv_module_forward.6} parent=39 // pred_fallthru
        _
    $region40: #{dis_conv_module_forward.6} parent=5 // pred_fallthru
      _
  $region6: #{dis_conv_module_forward.6} parent=0 // loop_footer
    %s13 = sadd.s32 1, %s9
  $region7: #{dis_conv_module_forward.6} parent=0 // loop_footer_branch
    %8 = sbr.rel target = $region3
  $region8: #{dis_conv_module_forward.6} parent=0 // loop_exit
    _

// kernel: dis_conv_module_forward.4
$region0: #{dis_conv_module_forward.4}
  #allocation0 [shape = 'u32[]', space=smem, size = 0x4, offset = 0x4, fixed_abs, tag = 'smem constant byte address 0x4 - core index']
  #allocation1 [shape = 'u32[144,128]{1,0:T(1,128)}', space=vmem, size = 0x12000, scoped, tag = 'internal scratch']
  %s0 = inlined_call_operand.vmem [shape: bf16[2,1,10,2,10,8], index: 0, kind: input, shape index: {}]
  %s1 = inlined_call_operand.vmem [shape: bf16[5,3,8,128], index: 1, kind: input, shape index: {}]
  %s2 = inlined_call_operand.vmem [shape: f32[1,128], index: 2, kind: input, shape index: {}]
  %s3 = inlined_call_operand.vmem [shape: bf16[2,8,8,128], index: 3, kind: output, shape index: {}]
  %s4 = sld [smem:[#allocation0]]
  $region45: #{dis_conv_module_forward.4} parent=0
    _
  %s6 = ssub.s32 1, %s4
  %s7 = scalar_select 0, %s6, %s4
  loop: start=0, step=1, limit=4
  $region2: #{dis_conv_module_forward.4} parent=0 // loop_pre_header
    _
  $region3: #{dis_conv_module_forward.4} parent=0 // loop_header
    %s9 = sphi 0, %s13
    %p10 = scmp.ge.s32.totalorder %s9, 4
    %s16 = sphi 0, %s28
    %s17 = sphi 0, %s24
    %s18 = sphi 0, %s16
    %s19 = sphi 0, %s17
    %s20 = sphi 0, %s18
    %s21 = sphi 0, %s19
    %s33 = sphi 0, %s35
    %s36 = sphi 0, %s33
    %s37 = sphi 0, %s36
    %s53 = sphi 0, %s37
    %s57 = sphi 0, %s57
    %s59 = sphi 0, %s57
    %s60 = sphi 0, %s59
    %s74 = sphi 0, %s60
    %s78 = sphi 0, %s78
    %s80 = sphi 0, %s78
    %s81 = sphi 0, %s80
    %s95 = sphi 0, %s81
    %s103 = sphi 0, %s105
    %s106 = sphi 0, %s103
    %s107 = sphi 0, %s106
    %s123 = sphi 0, %s107
  $region4: #{dis_conv_module_forward.4} parent=0 // loop_header_branch
    %12 = sbr.rel (%p10) target = $region8
  $region5: #{dis_conv_module_forward.4} parent=0 // loop_body
    %s14 = ssub.s32 %s9, 1
    %s15 = ssub.s32 %s9, 2
    %s22 = sadd.s32 1, %s17
    %p23 = scmp.ge.s32.totalorder %s22, 1
    %s24 = scalar_select %p23, 0, %s22
    %s25 = sadd.s32 1, %s16
    %s26 = scalar_select %p23, %s25, %s16
    %p27 = scmp.ge.s32.totalorder %s26, 2
    %s28 = scalar_select %p27, 0, %s26
    %s29 = ssub.s32 %s16, %s28
    %s30 = ssub.s32 %s17, %s24
    %s31 = sor.u32 %s29, %s30
    %p32 = scmp.eq.s32.totalorder %s31, 0
    %s34 = sadd.s32 %s33, 1
    %s35 = scalar_select %p32, %s33, %s34
    %p38 = pneg %p32
    %p39 = scmp.eq.s32.totalorder %s9, 1
    %p40 = por %p38, %p39
    %p41 = scmp.ne.s32.totalorder %s33, %s36
    %p42 = scmp.eq.s32.totalorder %s9, 0
    %p43 = por %p41, %p42
    %p44 = scmp.ne.s32.totalorder %s33, %s36
    %p45 = scmp.eq.s32.totalorder %s14, 1
    %p46 = por %p44, %p45
    %p47 = scmp.ne.s32.totalorder %s36, %s37
    %p48 = scmp.eq.s32.totalorder %s14, 0
    %p49 = por %p47, %p48
    %p50 = scmp.ne.s32.totalorder %s36, %s37
    %p51 = scmp.eq.s32.totalorder %s15, 1
    %p52 = por %p50, %p51
    %p54 = scmp.ne.s32.totalorder %s37, %s53
    %p55 = scmp.eq.s32.totalorder %s15, 0
    %p56 = por %p54, %p55
    %s58 = sadd.s32 %s57, 1
    %p61 = scmp.eq.s32.totalorder %s9, 1
    %p62 = scmp.ne.s32.totalorder %s57, %s59
    %p63 = scmp.eq.s32.totalorder %s9, 0
    %p64 = por %p62, %p63
    %p65 = scmp.ne.s32.totalorder %s57, %s59
    %p66 = scmp.eq.s32.totalorder %s14, 1
    %p67 = por %p65, %p66
    %p68 = scmp.ne.s32.totalorder %s59, %s60
    %p69 = scmp.eq.s32.totalorder %s14, 0
    %p70 = por %p68, %p69
    %p71 = scmp.ne.s32.totalorder %s59, %s60
    %p72 = scmp.eq.s32.totalorder %s15, 1
    %p73 = por %p71, %p72
    %p75 = scmp.ne.s32.totalorder %s60, %s74
    %p76 = scmp.eq.s32.totalorder %s15, 0
    %p77 = por %p75, %p76
    %s79 = sadd.s32 %s78, 1
    %p82 = scmp.eq.s32.totalorder %s9, 1
    %p83 = scmp.ne.s32.totalorder %s78, %s80
    %p84 = scmp.eq.s32.totalorder %s9, 0
    %p85 = por %p83, %p84
    %p86 = scmp.ne.s32.totalorder %s78, %s80
    %p87 = scmp.eq.s32.totalorder %s14, 1
    %p88 = por %p86, %p87
    %p89 = scmp.ne.s32.totalorder %s80, %s81
    %p90 = scmp.eq.s32.totalorder %s14, 0
    %p91 = por %p89, %p90
    %p92 = scmp.ne.s32.totalorder %s80, %s81
    %p93 = scmp.eq.s32.totalorder %s15, 1
    %p94 = por %p92, %p93
    %p96 = scmp.ne.s32.totalorder %s81, %s95
    %p97 = scmp.eq.s32.totalorder %s15, 0
    %p98 = por %p96, %p97
    %s99 = ssub.s32 %s16, %s28
    %s100 = ssub.s32 %s17, %s24
    %s101 = sor.u32 %s99, %s100
    %p102 = scmp.eq.s32.totalorder %s101, 0
    %s104 = sadd.s32 %s103, 1
    %s105 = scalar_select %p102, %s103, %s104
    %p108 = pneg %p102
    %p109 = scmp.eq.s32.totalorder %s9, 1
    %p110 = por %p108, %p109
    %p111 = scmp.ne.s32.totalorder %s103, %s106
    %p112 = scmp.eq.s32.totalorder %s9, 0
    %p113 = por %p111, %p112
    %p114 = scmp.ne.s32.totalorder %s103, %s106
    %p115 = scmp.eq.s32.totalorder %s14, 1
    %p116 = por %p114, %p115
    %p117 = scmp.ne.s32.totalorder %s106, %s107
    %p118 = scmp.eq.s32.totalorder %s14, 0
    %p119 = por %p117, %p118
    %p120 = scmp.ne.s32.totalorder %s106, %s107
    %p121 = scmp.eq.s32.totalorder %s15, 1
    %p122 = por %p120, %p121
    %p124 = scmp.ne.s32.totalorder %s107, %s123
    %p125 = scmp.eq.s32.totalorder %s15, 0
    %p126 = por %p124, %p125
    %p127 = scmp.le.s32.totalorder 1, %s9
    %p128 = scmp.lt.s32.totalorder %s9, 3
    %p129 = pnand %p127, %p128
    %p130 = pneg %p129
    // Predicated region
    $region9: #{dis_conv_module_forward.4} parent=5 // pred_check
      _
    $region10: #{dis_conv_module_forward.4} parent=5 // pred_check_branch
      %132 = sbr.rel (%p129) target = $region12
    $region11: #{dis_conv_module_forward.4} parent=5 // pred_region
      %s133 = ssub.s32 %s9, 1
      // Predicated region
      $region13: #{dis_conv_module_forward.4} parent=11 // pred_check
        %p134 = pneg %p70
      $region14: #{dis_conv_module_forward.4} parent=11 // pred_check_branch
        %136 = sbr.rel (%p134) target = $region16
      $region15: #{dis_conv_module_forward.4} parent=11 // pred_region
        _
      $region16: #{dis_conv_module_forward.4} parent=11 // pred_fallthru
        _
      // Predicated region
      $region17: #{dis_conv_module_forward.4} parent=11 // pred_check
        %p137 = pneg %p91
      $region18: #{dis_conv_module_forward.4} parent=11 // pred_check_branch
        %139 = sbr.rel (%p137) target = $region20
      $region19: #{dis_conv_module_forward.4} parent=11 // pred_region
        _
      $region20: #{dis_conv_module_forward.4} parent=11 // pred_fallthru
        _
    $region12: #{dis_conv_module_forward.4} parent=5 // pred_fallthru
      _
    %p140 = scmp.lt.s32.totalorder %s9, 2
    // Predicated region
    $region21: #{dis_conv_module_forward.4} parent=5 // pred_check
      %p141 = pneg %p140
    $region22: #{dis_conv_module_forward.4} parent=5 // pred_check_branch
      %143 = sbr.rel (%p141) target = $region24
    $region23: #{dis_conv_module_forward.4} parent=5 // pred_region
      // Predicated region
      $region25: #{dis_conv_module_forward.4} parent=23 // pred_check
        %p144 = pneg %p43
      $region26: #{dis_conv_module_forward.4} parent=23 // pred_check_branch
        %146 = sbr.rel (%p144) target = $region28
      $region27: #{dis_conv_module_forward.4} parent=23 // pred_region
        %p147 = scmp.lt.s32.totalorder %s16, 1
        %s148 = scalar_select %p147, %s16, 1
        %p149 = scmp.lt.s32.totalorder %s17, 0
        %s150 = scalar_select %p149, %s17, 0
        %s151 = smul.addr %s150, 40
        %s152 = smul.addr %s148, 40
        %s153 = sadd.s32 %s151, %s152
        %s154 = smul.addr %s153, 4
        %s155 = scalar_lea.vmem %s0, %s154
      $region28: #{dis_conv_module_forward.4} parent=23 // pred_fallthru
        _
    $region24: #{dis_conv_module_forward.4} parent=5 // pred_fallthru
      _
    %p156 = scmp.le.s32.totalorder 1, %s9
    %p157 = scmp.lt.s32.totalorder %s9, 3
    %p158 = pnand %p156, %p157
    %p159 = pneg %p158
    // Predicated region
    $region29: #{dis_conv_module_forward.4} parent=5 // pred_check
      _
    $region30: #{dis_conv_module_forward.4} parent=5 // pred_check_branch
      %161 = sbr.rel (%p158) target = $region32
    $region31: #{dis_conv_module_forward.4} parent=5 // pred_region
      %s162 = ssub.s32 %s9, 1
      %p163 = scmp.lt.s32.totalorder %s18, 1
      %s164 = scalar_select %p163, %s18, 1
      %p165 = scmp.lt.s32.totalorder %s19, 0
      %s166 = scalar_select %p165, %s19, 0
      %s167 = smul.addr %s166, 40
      %s168 = smul.addr %s164, 40
      %s169 = sadd.s32 %s167, %s168
      %s170 = smul.addr %s169, 4
      %s171 = scalar_lea.vmem %s0, %s170
      %p172 = pneg %p49
      %p173 = pneg %p46
      %p174 = pneg %p70
      %p175 = pneg %p67
      %p176 = pneg %p91
      %p177 = pneg %p88
      %p178 = pneg %p119
      %p179 = pneg %p116
      %s180 = smul.u32 8, %s19
      %p181 = scmp.lt.s32.totalorder %s18, 1
      %s182 = scalar_select %p181, %s18, 1
      %p183 = scmp.lt.s32.totalorder %s180, 7
      %s184 = scalar_select %p183, %s180, 7
      %s185 = smul.addr %s182, 8
      %s186 = sadd.s32 %s184, %s185
      %s187 = smul.addr %s186, 4
      %s188 = scalar_lea.vmem %s3, %s187
      %p189 = scmp.lt.s32.totalorder %s18, 1
      %s190 = scalar_select %p189, %s18, 1
      %p191 = scmp.lt.s32.totalorder %s19, 0
      %s192 = scalar_select %p191, %s19, 0
      %s193 = smul.addr %s192, 40
      %s194 = smul.addr %s190, 40
      %s195 = sadd.s32 %s193, %s194
      %s196 = smul.addr %s195, 4
      %s197 = scalar_lea.vmem %s0, %s196
      %s198 = smul.u32 8, %s19
      %p199 = scmp.lt.s32.totalorder %s18, 1
      %s200 = scalar_select %p199, %s18, 1
      %p201 = scmp.lt.s32.totalorder %s198, 7
      %s202 = scalar_select %p201, %s198, 7
      %s203 = smul.addr %s200, 8
      %s204 = sadd.s32 %s202, %s203
      %s205 = smul.addr %s204, 4
      %s206 = scalar_lea.vmem %s3, %s205
      %s207 = smul.u32 8, %s19
      %v209 = vld [vmem:[%s197] sm:$0xf]
      %v210 = vld [vmem:[%s197 + $0x4] sm:$0x1]
      %v211 = vld [vmem:[%s197 + $0x10] sm:$0xf]
      %v212 = vld [vmem:[%s197 + $0x14] sm:$0x1]
      %v213 = vld [vmem:[%s197 + $0x20] sm:$0xf]
      %v214 = vld [vmem:[%s197 + $0x24] sm:$0x1]
      %v215 = vld [vmem:[%s197 + $0x30] sm:$0xf]
      %v216 = vld [vmem:[%s197 + $0x34] sm:$0x1]
      %v217 = vld [vmem:[%s197 + $0x40] sm:$0xf]
      %v218 = vld [vmem:[%s197 + $0x44] sm:$0x1]
      %v219 = vld [vmem:[%s197 + $0x50] sm:$0xf]
      %v220 = vld [vmem:[%s197 + $0x54] sm:$0x1]
      %v221 = vld [vmem:[%s197 + $0x60] sm:$0xf]
      %v222 = vld [vmem:[%s197 + $0x64] sm:$0x1]
      %v223 = vld [vmem:[%s197 + $0x70] sm:$0xf]
      %v224 = vld [vmem:[%s197 + $0x74] sm:$0x1]
      %v225 = vld [vmem:[%s1] sm:$0xf]
      %vm226 = vsmask.f32 3328
      %vm227 = vsmask.f32 7440
      %vm228 = vmor %vm226, %vm227
      %v230 = vshrl.u32 %v209, 16
      %v232 = vrot.slane %v230, 4
      %v233 = vshll.u32 %v209, 16
      %v235 = vrot.slane %v233, 5
      %v236 = vor.u32 %v232, %v235
      %v237 = vrot.slane %v236, 4
      %v239 = vshll.u32 %v210, 16
      %v241 = vrot.slane %v239, 5
      %v242 = vsel %vm228, %v237, %v241
      %v244 = vshrl.u32 %v211, 16
      %v246 = vrot.slane %v244, 4
      %v247 = vshll.u32 %v211, 16
      %v249 = vrot.slane %v247, 5
      %v250 = vor.u32 %v246, %v249
      %v251 = vrot.slane %v250, 4
      %v253 = vshll.u32 %v212, 16
      %v255 = vrot.slane %v253, 5
      %v256 = vsel %vm228, %v251, %v255
      %v258 = vshrl.u32 %v213, 16
      %v260 = vrot.slane %v258, 4
      %v261 = vshll.u32 %v213, 16
      %v263 = vrot.slane %v261, 5
      %v264 = vor.u32 %v260, %v263
      %v265 = vrot.slane %v264, 4
      %v267 = vshll.u32 %v214, 16
      %v269 = vrot.slane %v267, 5
      %v270 = vsel %vm228, %v265, %v269
      %v272 = vshrl.u32 %v215, 16
      %v274 = vrot.slane %v272, 4
      %v275 = vshll.u32 %v215, 16
      %v277 = vrot.slane %v275, 5
      %v278 = vor.u32 %v274, %v277
      %v279 = vrot.slane %v278, 4
      %v281 = vshll.u32 %v216, 16
      %v283 = vrot.slane %v281, 5
      %v284 = vsel %vm228, %v279, %v283
      %v286 = vshrl.u32 %v217, 16
      %v288 = vrot.slane %v286, 4
      %v289 = vshll.u32 %v217, 16
      %v291 = vrot.slane %v289, 5
      %v292 = vor.u32 %v288, %v291
      %v293 = vrot.slane %v292, 4
      %v295 = vshll.u32 %v218, 16
      %v297 = vrot.slane %v295, 5
      %v298 = vsel %vm228, %v293, %v297
      %v300 = vshrl.u32 %v219, 16
      %v302 = vrot.slane %v300, 4
      %v303 = vshll.u32 %v219, 16
      %v305 = vrot.slane %v303, 5
      %v306 = vor.u32 %v302, %v305
      %v307 = vrot.slane %v306, 4
      %v309 = vshll.u32 %v220, 16
      %v311 = vrot.slane %v309, 5
      %v312 = vsel %vm228, %v307, %v311
      %v314 = vshrl.u32 %v221, 16
      %v316 = vrot.slane %v314, 4
      %v317 = vshll.u32 %v221, 16
      %v319 = vrot.slane %v317, 5
      %v320 = vor.u32 %v316, %v319
      %v321 = vrot.slane %v320, 4
      %v323 = vshll.u32 %v222, 16
      %v325 = vrot.slane %v323, 5
      %v326 = vsel %vm228, %v321, %v325
      %v328 = vshrl.u32 %v223, 16
      %v330 = vrot.slane %v328, 4
      %v331 = vshll.u32 %v223, 16
      %v333 = vrot.slane %v331, 5
      %v334 = vor.u32 %v330, %v333
      %v335 = vrot.slane %v334, 4
      %v337 = vshll.u32 %v224, 16
      %v339 = vrot.slane %v337, 5
      %v340 = vsel %vm228, %v335, %v339
      %s341 = scalar_lea.vmem %s1, 4
      %v342 = vld [vmem:[%s341] sm:$0xf]
      %v343 = vunpack.c.l.b16 %v242
      %v344 = vunpack.c.l.b16 %v256
      %v345 = vunpack.c.l.b16 %v270
      %v346 = vunpack.c.l.b16 %v284
      %v347 = vunpack.c.l.b16 %v298
      %v348 = vunpack.c.l.b16 %v312
      %v349 = vunpack.c.l.b16 %v326
      %v350 = vunpack.c.l.b16 %v340
      %v351 = vpack.c.b16 %v344, %v343
      %v352 = vpack.c.b16 %v346, %v345
      %v353 = vpack.c.b16 %v348, %v347
      %v354 = vpack.c.b16 %v350, %v349
      %vm355 = vcmask 64512
      %v357 = vsel %vm355, %v351, 0
      %v360 = vsel %vm355, %v352, 0
      %v363 = vsel %vm355, %v353, 0
      %v366 = vsel %vm355, %v354, 0
      %vm368 = vcmask 1043456
      %v370 = vsel %vm368, %v342, 0
      %372 = vmatprep.subr.bf16.mxu0 0
      %373 = vmatpush1.bf16.msra.mxu0 %v370
      %374 = vmatprep.subr.bf16.mxu0 0
      %375 = vmatpush1.bf16.msra.mxu0 0
      %376 = vmatprep.subr.bf16.mxu0 0
      %377 = vmatpush1.bf16.msra.mxu0 0
      %378 = vmatprep.subr.bf16.mxu0 0
      %379 = vmatpush1.bf16.msra.mxu0 0
      %380 = vmatprep.subr.bf16.mxu0 0
      %381 = vmatpush1.bf16.msra.mxu0 0
      %382 = vmatprep.subr.bf16.mxu0 0
      %383 = vmatpush1.bf16.msra.mxu0 0
      %384 = vmatprep.subr.bf16.mxu0 0
      %385 = vmatpush1.bf16.msra.mxu0 0
      %386 = vmatprep.subr.bf16.mxu0 0
      %387 = vmatpush1.bf16.msra.mxu0 0
      %388 = vmatprep.subr.bf16.mxu0 0
      %389 = vmatpush1.bf16.msra.mxu0 0
      %390 = vmatprep.subr.bf16.mxu0 0
      %391 = vmatpush1.bf16.msra.mxu0 0
      %392 = vmatprep.subr.bf16.mxu0 0
      %393 = vmatpush1.bf16.msra.mxu0 0
      %394 = vmatprep.subr.bf16.mxu0 0
      %395 = vmatpush1.bf16.msra.mxu0 0
      %396 = vmatprep.subr.bf16.mxu0 0
      %397 = vmatpush1.bf16.msra.mxu0 0
      %398 = vmatprep.subr.bf16.mxu0 0
      %399 = vmatpush1.bf16.msra.mxu0 0
      %400 = vmatprep.subr.bf16.mxu0 0
      %401 = vmatpush1.bf16.msra.mxu0 0
      %402 = vmatprep.subr.bf16.mxu0 0
      %403 = vmatpush1.bf16.msra.mxu0 0
      %404 = vmatprep.mubr.bf16.mxu0 0
      %405 = vmatmul.mubr.bf16.gmra.mrb[0].mxu0 %v357
      %v406 = vpop.f32.mrb[0].mxu0
      %v407 = vadd.f32 0.0, %v406
      %v408 = vpop.f32.mrb[0].mxu0
      %v409 = vpop.f32.mrb[0].mxu0
      %v410 = vadd.f32 0.0, %v409
      %v411 = vpop.f32.mrb[0].mxu0
      %412 = vmatprep.mubr.bf16.mxu0 0
      %413 = vmatmul.mubr.bf16.gmra.mrb[0].mxu0 %v360
      %v414 = vpop.f32.mrb[0].mxu0
      %v415 = vadd.f32 0.0, %v414
      %v416 = vpop.f32.mrb[0].mxu0
      %v417 = vpop.f32.mrb[0].mxu0
      %v418 = vadd.f32 0.0, %v417
      %v419 = vpop.f32.mrb[0].mxu0
      %420 = vmatprep.mubr.bf16.mxu0 0
      %421 = vmatmul.mubr.bf16.gmra.mrb[0].mxu0 %v363
      %v422 = vpop.f32.mrb[0].mxu0
      %v423 = vadd.f32 0.0, %v422
      %v424 = vpop.f32.mrb[0].mxu0
      %v425 = vpop.f32.mrb[0].mxu0
      %v426 = vadd.f32 0.0, %v425
      %v427 = vpop.f32.mrb[0].mxu0
      %428 = vmatprep.mubr.bf16.mxu0 0
      %429 = vmatmul.mubr.bf16.gmra.mrb[0].mxu0 %v366
      %v430 = vpop.f32.mrb[0].mxu0
      %v431 = vadd.f32 0.0, %v430
      %v432 = vpop.f32.mrb[0].mxu0
      %v433 = vpop.f32.mrb[0].mxu0
      %v434 = vadd.f32 0.0, %v433
      %v435 = vpop.f32.mrb[0].mxu0
      %436 = vdwg.mxu0
      %v445 = vunpack.c.l.b16 %v209
      %v446 = vunpack.c.l.b16 %v211
      %v447 = vunpack.c.l.b16 %v213
      %v448 = vunpack.c.l.b16 %v215
      %v449 = vunpack.c.l.b16 %v217
      %v450 = vunpack.c.l.b16 %v219
      %v451 = vunpack.c.l.b16 %v221
      %v452 = vunpack.c.l.b16 %v223
      %v453 = vpack.c.b16 %v446, %v445
      %v454 = vpack.c.b16 %v448, %v447
      %v455 = vpack.c.b16 %v450, %v449
      %v456 = vpack.c.b16 %v452, %v451
      %v458 = vsel %vm355, %v453, 0
      %v461 = vsel %vm355, %v454, 0
      %v464 = vsel %vm355, %v455, 0
      %v467 = vsel %vm355, %v456, 0
      %v470 = vsel %vm368, %v225, 0
      %472 = vmatprep.subr.bf16.mxu0 0
      %473 = vmatpush1.bf16.msra.mxu0 %v470
      %474 = vmatprep.subr.bf16.mxu0 0
      %475 = vmatpush1.bf16.msra.mxu0 0
      %476 = vmatprep.subr.bf16.mxu0 0
      %477 = vmatpush1.bf16.msra.mxu0 0
      %478 = vmatprep.subr.bf16.mxu0 0
      %479 = vmatpush1.bf16.msra.mxu0 0
      %480 = vmatprep.subr.bf16.mxu0 0
      %481 = vmatpush1.bf16.msra.mxu0 0
      %482 = vmatprep.subr.bf16.mxu0 0
      %483 = vmatpush1.bf16.msra.mxu0 0
      %484 = vmatprep.subr.bf16.mxu0 0
      %485 = vmatpush1.bf16.msra.mxu0 0
      %486 = vmatprep.subr.bf16.mxu0 0
      %487 = vmatpush1.bf16.msra.mxu0 0
      %488 = vmatprep.subr.bf16.mxu0 0
      %489 = vmatpush1.bf16.msra.mxu0 0
      %490 = vmatprep.subr.bf16.mxu0 0
      %491 = vmatpush1.bf16.msra.mxu0 0
      %492 = vmatprep.subr.bf16.mxu0 0
      %493 = vmatpush1.bf16.msra.mxu0 0
      %494 = vmatprep.subr.bf16.mxu0 0
      %495 = vmatpush1.bf16.msra.mxu0 0
      %496 = vmatprep.subr.bf16.mxu0 0
      %497 = vmatpush1.bf16.msra.mxu0 0
      %498 = vmatprep.subr.bf16.mxu0 0
      %499 = vmatpush1.bf16.msra.mxu0 0
      %500 = vmatprep.subr.bf16.mxu0 0
      %501 = vmatpush1.bf16.msra.mxu0 0
      %502 = vmatprep.subr.bf16.mxu0 0
      %503 = vmatpush1.bf16.msra.mxu0 0
      %504 = vmatprep.mubr.bf16.mxu0 0
      %505 = vmatmul.mubr.bf16.gmra.mrb[0].mxu0 %v458
      %v506 = vpop.f32.mrb[0].mxu0
      %v507 = vadd.f32 %v407, %v506
      %v508 = vpop.f32.mrb[0].mxu0
      %v509 = vpop.f32.mrb[0].mxu0
      %v510 = vadd.f32 %v410, %v509
      %v511 = vpop.f32.mrb[0].mxu0
      %512 = vmatprep.mubr.bf16.mxu0 0
      %513 = vmatmul.mubr.bf16.gmra.mrb[0].mxu0 %v461
      %v514 = vpop.f32.mrb[0].mxu0
      %v515 = vadd.f32 %v415, %v514
      %v516 = vpop.f32.mrb[0].mxu0
      %v517 = vpop.f32.mrb[0].mxu0
      %v518 = vadd.f32 %v418, %v517
      %v519 = vpop.f32.mrb[0].mxu0
      %520 = vmatprep.mubr.bf16.mxu0 0
      %521 = vmatmul.mubr.bf16.gmra.mrb[0].mxu0 %v464
      %v522 = vpop.f32.mrb[0].mxu0
      %v523 = vadd.f32 %v423, %v522
      %v524 = vpop.f32.mrb[0].mxu0
      %v525 = vpop.f32.mrb[0].mxu0
      %v526 = vadd.f32 %v426, %v525
      %v527 = vpop.f32.mrb[0].mxu0
      %528 = vmatprep.mubr.bf16.mxu0 0
      %529 = vmatmul.mubr.bf16.gmra.mrb[0].mxu0 %v467
      %v530 = vpop.f32.mrb[0].mxu0
      %v531 = vadd.f32 %v431, %v530
      %v532 = vpop.f32.mrb[0].mxu0
      %v533 = vpop.f32.mrb[0].mxu0
      %v534 = vadd.f32 %v434, %v533
      %v535 = vpop.f32.mrb[0].mxu0
      %536 = vdwg.mxu0
      %vm545 = vcmask 1042432
      %vm546 = vcmask 1046532
      %vm547 = vmor %vm545, %vm546
      %v548 = vrot.slane %v209, 5
      %v549 = vrot.slane %v548, 4
      %v550 = vrot.slane %v210, 5
      %v551 = vsel %vm547, %v549, %v550
      %v552 = vrot.slane %v211, 5
      %v553 = vrot.slane %v552, 4
      %v554 = vrot.slane %v212, 5
      %v555 = vsel %vm547, %v553, %v554
      %v556 = vrot.slane %v213, 5
      %v557 = vrot.slane %v556, 4
      %v558 = vrot.slane %v214, 5
      %v559 = vsel %vm547, %v557, %v558
      %v560 = vrot.slane %v215, 5
      %v561 = vrot.slane %v560, 4
      %v562 = vrot.slane %v216, 5
      %v563 = vsel %vm547, %v561, %v562
      %v564 = vrot.slane %v217, 5
      %v565 = vrot.slane %v564, 4
      %v566 = vrot.slane %v218, 5
      %v567 = vsel %vm547, %v565, %v566
      %v568 = vrot.slane %v219, 5
      %v569 = vrot.slane %v568, 4
      %v570 = vrot.slane %v220, 5
      %v571 = vsel %vm547, %v569, %v570
      %v572 = vrot.slane %v221, 5
      %v573 = vrot.slane %v572, 4
      %v574 = vrot.slane %v222, 5
      %v575 = vsel %vm547, %v573, %v574
      %v576 = vrot.slane %v223, 5
      %v577 = vrot.slane %v576, 4
      %v578 = vrot.slane %v224, 5
      %v579 = vsel %vm547, %v577, %v578
      %s580 = scalar_lea.vmem %s1, 8
      %v581 = vld [vmem:[%s580] sm:$0xf]
      %v582 = vunpack.c.l.b16 %v551
      %v583 = vunpack.c.l.b16 %v555
      %v584 = vunpack.c.l.b16 %v559
      %v585 = vunpack.c.l.b16 %v563
      %v586 = vunpack.c.l.b16 %v567
      %v587 = vunpack.c.l.b16 %v571
      %v588 = vunpack.c.l.b16 %v575
      %v589 = vunpack.c.l.b16 %v579
      %v590 = vpack.c.b16 %v583, %v582
      %v591 = vpack.c.b16 %v585, %v584
      %v592 = vpack.c.b16 %v587, %v586
      %v593 = vpack.c.b16 %v589, %v588
      %v595 = vsel %vm355, %v590, 0
      %v598 = vsel %vm355, %v591, 0
      %v601 = vsel %vm355, %v592, 0
      %v604 = vsel %vm355, %v593, 0
      %v607 = vsel %vm368, %v581, 0
      %609 = vmatprep.subr.bf16.mxu0 0
      %610 = vmatpush1.bf16.msra.mxu0 %v607
      %611 = vmatprep.subr.bf16.mxu0 0
      %612 = vmatpush1.bf16.msra.mxu0 0
      %613 = vmatprep.subr.bf16.mxu0 0
      %614 = vmatpush1.bf16.msra.mxu0 0
      %615 = vmatprep.subr.bf16.mxu0 0
      %616 = vmatpush1.bf16.msra.mxu0 0
      %617 = vmatprep.subr.bf16.mxu0 0
      %618 = vmatpush1.bf16.msra.mxu0 0
      %619 = vmatprep.subr.bf16.mxu0 0
      %620 = vmatpush1.bf16.msra.mxu0 0
      %621 = vmatprep.subr.bf16.mxu0 0
      %622 = vmatpush1.bf16.msra.mxu0 0
      %623 = vmatprep.subr.bf16.mxu0 0
      %624 = vmatpush1.bf16.msra.mxu0 0
      %625 = vmatprep.subr.bf16.mxu0 0
      %626 = vmatpush1.bf16.msra.mxu0 0
      %627 = vmatprep.subr.bf16.mxu0 0
      %628 = vmatpush1.bf16.msra.mxu0 0
      %629 = vmatprep.subr.bf16.mxu0 0
      %630 = vmatpush1.bf16.msra.mxu0 0
      %631 = vmatprep.subr.bf16.mxu0 0
      %632 = vmatpush1.bf16.msra.mxu0 0
      %633 = vmatprep.subr.bf16.mxu0 0
      %634 = vmatpush1.bf16.msra.mxu0 0
      %635 = vmatprep.subr.bf16.mxu0 0
      %636 = vmatpush1.bf16.msra.mxu0 0
      %637 = vmatprep.subr.bf16.mxu0 0
      %638 = vmatpush1.bf16.msra.mxu0 0
      %639 = vmatprep.subr.bf16.mxu0 0
      %640 = vmatpush1.bf16.msra.mxu0 0
      %641 = vmatprep.mubr.bf16.mxu0 0
      %642 = vmatmul.mubr.bf16.gmra.mrb[0].mxu0 %v595
      %v643 = vpop.f32.mrb[0].mxu0
      %v644 = vadd.f32 0.0, %v643
      %v645 = vpop.f32.mrb[0].mxu0
      %v646 = vpop.f32.mrb[0].mxu0
      %v647 = vadd.f32 0.0, %v646
      %v648 = vpop.f32.mrb[0].mxu0
      %649 = vmatprep.mubr.bf16.mxu0 0
      %650 = vmatmul.mubr.bf16.gmra.mrb[0].mxu0 %v598
      %v651 = vpop.f32.mrb[0].mxu0
      %v652 = vadd.f32 0.0, %v651
      %v653 = vpop.f32.mrb[0].mxu0
      %v654 = vpop.f32.mrb[0].mxu0
      %v655 = vadd.f32 0.0, %v654
      %v656 = vpop.f32.mrb[0].mxu0
      %657 = vmatprep.mubr.bf16.mxu0 0
      %658 = vmatmul.mubr.bf16.gmra.mrb[0].mxu0 %v601
      %v659 = vpop.f32.mrb[0].mxu0
      %v660 = vadd.f32 0.0, %v659
      %v661 = vpop.f32.mrb[0].mxu0
      %v662 = vpop.f32.mrb[0].mxu0
      %v663 = vadd.f32 0.0, %v662
      %v664 = vpop.f32.mrb[0].mxu0
      %665 = vmatprep.mubr.bf16.mxu0 0
      %666 = vmatmul.mubr.bf16.gmra.mrb[0].mxu0 %v604
      %v667 = vpop.f32.mrb[0].mxu0
      %v668 = vadd.f32 0.0, %v667
      %v669 = vpop.f32.mrb[0].mxu0
      %v670 = vpop.f32.mrb[0].mxu0
      %v671 = vadd.f32 0.0, %v670
      %v672 = vpop.f32.mrb[0].mxu0
      %673 = vdwg.mxu0
      %v674 = vadd.f32 %v507, %v644
      %v675 = vadd.f32 %v510, %v647
      %v676 = vadd.f32 %v515, %v652
      %v677 = vadd.f32 %v518, %v655
      %v678 = vadd.f32 %v523, %v660
      %v679 = vadd.f32 %v526, %v663
      %v680 = vadd.f32 %v531, %v668
      %v681 = vadd.f32 %v534, %v671
      %s682 = scalar_lea.vmem %s197, 8
      %v683 = vld [vmem:[%s682] sm:$0xf]
      %v684 = vld [vmem:[%s682 + $0x4] sm:$0x1]
      %v685 = vld [vmem:[%s682 + $0x10] sm:$0xf]
      %v686 = vld [vmem:[%s682 + $0x14] sm:$0x1]
      %v687 = vld [vmem:[%s682 + $0x20] sm:$0xf]
      %v688 = vld [vmem:[%s682 + $0x24] sm:$0x1]
      %v689 = vld [vmem:[%s682 + $0x30] sm:$0xf]
      %v690 = vld [vmem:[%s682 + $0x34] sm:$0x1]
      %v691 = vld [vmem:[%s682 + $0x40] sm:$0xf]
      %v692 = vld [vmem:[%s682 + $0x44] sm:$0x1]
      %v693 = vld [vmem:[%s682 + $0x50] sm:$0xf]
      %v694 = vld [vmem:[%s682 + $0x54] sm:$0x1]
      %v695 = vld [vmem:[%s682 + $0x60] sm:$0xf]
      %v696 = vld [vmem:[%s682 + $0x64] sm:$0x1]
      %v697 = vld [vmem:[%s682 + $0x70] sm:$0xf]
      %v698 = vld [vmem:[%s682 + $0x74] sm:$0x1]
      %s699 = scalar_lea.vmem %s1, 12
      %v700 = vld [vmem:[%s699] sm:$0xf]
      %v709 = vunpack.c.l.b16 %v683
      %v710 = vunpack.c.l.b16 %v685
      %v711 = vunpack.c.l.b16 %v687
      %v712 = vunpack.c.l.b16 %v689
      %v713 = vunpack.c.l.b16 %v691
      %v714 = vunpack.c.l.b16 %v693
      %v715 = vunpack.c.l.b16 %v695
      %v716 = vunpack.c.l.b16 %v697
      %v717 = vpack.c.b16 %v710, %v709
      %v718 = vpack.c.b16 %v712, %v711
      %v719 = vpack.c.b16 %v714, %v713
      %v720 = vpack.c.b16 %v716, %v715
      %v722 = vsel %vm355, %v717, 0
      %v725 = vsel %vm355, %v718, 0
      %v728 = vsel %vm355, %v719, 0
      %v731 = vsel %vm355, %v720, 0
      %v734 = vsel %vm368, %v700, 0
      %736 = vmatprep.subr.bf16.mxu0 0
      %737 = vmatpush1.bf16.msra.mxu0 %v734
      %738 = vmatprep.subr.bf16.mxu0 0
      %739 = vmatpush1.bf16.msra.mxu0 0
      %740 = vmatprep.subr.bf16.mxu0 0
      %741 = vmatpush1.bf16.msra.mxu0 0
      %742 = vmatprep.subr.bf16.mxu0 0
      %743 = vmatpush1.bf16.msra.mxu0 0
      %744 = vmatprep.subr.bf16.mxu0 0
      %745 = vmatpush1.bf16.msra.mxu0 0
      %746 = vmatprep.subr.bf16.mxu0 0
      %747 = vmatpush1.bf16.msra.mxu0 0
      %748 = vmatprep.subr.bf16.mxu0 0
      %749 = vmatpush1.bf16.msra.mxu0 0
      %750 = vmatprep.subr.bf16.mxu0 0
      %751 = vmatpush1.bf16.msra.mxu0 0
      %752 = vmatprep.subr.bf16.mxu0 0
      %753 = vmatpush1.bf16.msra.mxu0 0
      %754 = vmatprep.subr.bf16.mxu0 0
      %755 = vmatpush1.bf16.msra.mxu0 0
      %756 = vmatprep.subr.bf16.mxu0 0
      %757 = vmatpush1.bf16.msra.mxu0 0
      %758 = vmatprep.subr.bf16.mxu0 0
      %759 = vmatpush1.bf16.msra.mxu0 0
      %760 = vmatprep.subr.bf16.mxu0 0
      %761 = vmatpush1.bf16.msra.mxu0 0
      %762 = vmatprep.subr.bf16.mxu0 0
      %763 = vmatpush1.bf16.msra.mxu0 0
      %764 = vmatprep.subr.bf16.mxu0 0
      %765 = vmatpush1.bf16.msra.mxu0 0
      %766 = vmatprep.subr.bf16.mxu0 0
      %767 = vmatpush1.bf16.msra.mxu0 0
      %768 = vmatprep.mubr.bf16.mxu0 0
      %769 = vmatmul.mubr.bf16.gmra.mrb[0].mxu0 %v722
      %v770 = vpop.f32.mrb[0].mxu0
      %v771 = vadd.f32 0.0, %v770
      %v772 = vpop.f32.mrb[0].mxu0
      %v773 = vpop.f32.mrb[0].mxu0
      %v774 = vadd.f32 0.0, %v773
      %v775 = vpop.f32.mrb[0].mxu0
      %776 = vmatprep.mubr.bf16.mxu0 0
      %777 = vmatmul.mubr.bf16.gmra.mrb[0].mxu0 %v725
      %v778 = vpop.f32.mrb[0].mxu0
      %v779 = vadd.f32 0.0, %v778
      %v780 = vpop.f32.mrb[0].mxu0
      %v781 = vpop.f32.mrb[0].mxu0
      %v782 = vadd.f32 0.0, %v781
      %v783 = vpop.f32.mrb[0].mxu0
      %784 = vmatprep.mubr.bf16.mxu0 0
      %785 = vmatmul.mubr.bf16.gmra.mrb[0].mxu0 %v728
      %v786 = vpop.f32.mrb[0].mxu0
      %v787 = vadd.f32 0.0, %v786
      %v788 = vpop.f32.mrb[0].mxu0
      %v789 = vpop.f32.mrb[0].mxu0
      %v790 = vadd.f32 0.0, %v789
      %v791 = vpop.f32.mrb[0].mxu0
      %792 = vmatprep.mubr.bf16.mxu0 0
      %793 = vmatmul.mubr.bf16.gmra.mrb[0].mxu0 %v731
      %v794 = vpop.f32.mrb[0].mxu0
      %v795 = vadd.f32 0.0, %v794
      %v796 = vpop.f32.mrb[0].mxu0
      %v797 = vpop.f32.mrb[0].mxu0
      %v798 = vadd.f32 0.0, %v797
      %v799 = vpop.f32.mrb[0].mxu0
      %800 = vdwg.mxu0
      %v801 = vadd.f32 %v674, %v771
      %v802 = vadd.f32 %v675, %v774
      %v803 = vadd.f32 %v676, %v779
      %v804 = vadd.f32 %v677, %v782
      %v805 = vadd.f32 %v678, %v787
      %v806 = vadd.f32 %v679, %v790
      %v807 = vadd.f32 %v680, %v795
      %v808 = vadd.f32 %v681, %v798
      %v810 = vshrl.u32 %v683, 16
      %v812 = vrot.slane %v810, 4
      %v813 = vshll.u32 %v683, 16
      %v815 = vrot.slane %v813, 5
      %v816 = vor.u32 %v812, %v815
      %v817 = vrot.slane %v816, 4
      %v819 = vshll.u32 %v684, 16
      %v821 = vrot.slane %v819, 5
      %v822 = vsel %vm228, %v817, %v821
      %v824 = vshrl.u32 %v685, 16
      %v826 = vrot.slane %v824, 4
      %v827 = vshll.u32 %v685, 16
      %v829 = vrot.slane %v827, 5
      %v830 = vor.u32 %v826, %v829
      %v831 = vrot.slane %v830, 4
      %v833 = vshll.u32 %v686, 16
      %v835 = vrot.slane %v833, 5
      %v836 = vsel %vm228, %v831, %v835
      %v838 = vshrl.u32 %v687, 16
      %v840 = vrot.slane %v838, 4
      %v841 = vshll.u32 %v687, 16
      %v843 = vrot.slane %v841, 5
      %v844 = vor.u32 %v840, %v843
      %v845 = vrot.slane %v844, 4
      %v847 = vshll.u32 %v688, 16
      %v849 = vrot.slane %v847, 5
      %v850 = vsel %vm228, %v845, %v849
      %v852 = vshrl.u32 %v689, 16
      %v854 = vrot.slane %v852, 4
      %v855 = vshll.u32 %v689, 16
      %v857 = vrot.slane %v855, 5
      %v858 = vor.u32 %v854, %v857
      %v859 = vrot.slane %v858, 4
      %v861 = vshll.u32 %v690, 16
      %v863 = vrot.slane %v861, 5
      %v864 = vsel %vm228, %v859, %v863
      %v866 = vshrl.u32 %v691, 16
      %v868 = vrot.slane %v866, 4
      %v869 = vshll.u32 %v691, 16
      %v871 = vrot.slane %v869, 5
      %v872 = vor.u32 %v868, %v871
      %v873 = vrot.slane %v872, 4
      %v875 = vshll.u32 %v692, 16
      %v877 = vrot.slane %v875, 5
      %v878 = vsel %vm228, %v873, %v877
      %v880 = vshrl.u32 %v693, 16
      %v882 = vrot.slane %v880, 4
      %v883 = vshll.u32 %v693, 16
      %v885 = vrot.slane %v883, 5
      %v886 = vor.u32 %v882, %v885
      %v887 = vrot.slane %v886, 4
      %v889 = vshll.u32 %v694, 16
      %v891 = vrot.slane %v889, 5
      %v892 = vsel %vm228, %v887, %v891
      %v894 = vshrl.u32 %v695, 16
      %v896 = vrot.slane %v894, 4
      %v897 = vshll.u32 %v695, 16
      %v899 = vrot.slane %v897, 5
      %v900 = vor.u32 %v896, %v899
      %v901 = vrot.slane %v900, 4
      %v903 = vshll.u32 %v696, 16
      %v905 = vrot.slane %v903, 5
      %v906 = vsel %vm228, %v901, %v905
      %v908 = vshrl.u32 %v697, 16
      %v910 = vrot.slane %v908, 4
      %v911 = vshll.u32 %v697, 16
      %v913 = vrot.slane %v911, 5
      %v914 = vor.u32 %v910, %v913
      %v915 = vrot.slane %v914, 4
      %v917 = vshll.u32 %v698, 16
      %v919 = vrot.slane %v917, 5
      %v920 = vsel %vm228, %v915, %v919
      %s921 = scalar_lea.vmem %s1, 16
      %v922 = vld [vmem:[%s921] sm:$0xf]
      %v923 = vunpack.c.l.b16 %v822
      %v924 = vunpack.c.l.b16 %v836
      %v925 = vunpack.c.l.b16 %v850
      %v926 = vunpack.c.l.b16 %v864
      %v927 = vunpack.c.l.b16 %v878
      %v928 = vunpack.c.l.b16 %v892
      %v929 = vunpack.c.l.b16 %v906
      %v930 = vunpack.c.l.b16 %v920
      %v931 = vpack.c.b16 %v924, %v923
      %v932 = vpack.c.b16 %v926, %v925
      %v933 = vpack.c.b16 %v928, %v927
      %v934 = vpack.c.b16 %v930, %v929
      %v936 = vsel %vm355, %v931, 0
      %v939 = vsel %vm355, %v932, 0
      %v942 = vsel %vm355, %v933, 0
      %v945 = vsel %vm355, %v934, 0
      %v948 = vsel %vm368, %v922, 0
      %950 = vmatprep.subr.bf16.mxu0 0
      %951 = vmatpush1.bf16.msra.mxu0 %v948
      %952 = vmatprep.subr.bf16.mxu0 0
      %953 = vmatpush1.bf16.msra.mxu0 0
      %954 = vmatprep.subr.bf16.mxu0 0
      %955 = vmatpush1.bf16.msra.mxu0 0
      %956 = vmatprep.subr.bf16.mxu0 0
      %957 = vmatpush1.bf16.msra.mxu0 0
      %958 = vmatprep.subr.bf16.mxu0 0
      %959 = vmatpush1.bf16.msra.mxu0 0
      %960 = vmatprep.subr.bf16.mxu0 0
      %961 = vmatpush1.bf16.msra.mxu0 0
      %962 = vmatprep.subr.bf16.mxu0 0
      %963 = vmatpush1.bf16.msra.mxu0 0
      %964 = vmatprep.subr.bf16.mxu0 0
      %965 = vmatpush1.bf16.msra.mxu0 0
      %966 = vmatprep.subr.bf16.mxu0 0
      %967 = vmatpush1.bf16.msra.mxu0 0
      %968 = vmatprep.subr.bf16.mxu0 0
      %969 = vmatpush1.bf16.msra.mxu0 0
      %970 = vmatprep.subr.bf16.mxu0 0
      %971 = vmatpush1.bf16.msra.mxu0 0
      %972 = vmatprep.subr.bf16.mxu0 0
      %973 = vmatpush1.bf16.msra.mxu0 0
      %974 = vmatprep.subr.bf16.mxu0 0
      %975 = vmatpush1.bf16.msra.mxu0 0
      %976 = vmatprep.subr.bf16.mxu0 0
      %977 = vmatpush1.bf16.msra.mxu0 0
      %978 = vmatprep.subr.bf16.mxu0 0
      %979 = vmatpush1.bf16.msra.mxu0 0
      %980 = vmatprep.subr.bf16.mxu0 0
      %981 = vmatpush1.bf16.msra.mxu0 0
      %982 = vmatprep.mubr.bf16.mxu0 0
      %983 = vmatmul.mubr.bf16.gmra.mrb[0].mxu0 %v936
      %v984 = vpop.f32.mrb[0].mxu0
      %v985 = vadd.f32 0.0, %v984
      %v986 = vpop.f32.mrb[0].mxu0
      %v987 = vpop.f32.mrb[0].mxu0
      %v988 = vadd.f32 0.0, %v987
      %v989 = vpop.f32.mrb[0].mxu0
      %990 = vmatprep.mubr.bf16.mxu0 0
      %991 = vmatmul.mubr.bf16.gmra.mrb[0].mxu0 %v939
      %v992 = vpop.f32.mrb[0].mxu0
      %v993 = vadd.f32 0.0, %v992
      %v994 = vpop.f32.mrb[0].mxu0
      %v995 = vpop.f32.mrb[0].mxu0
      %v996 = vadd.f32 0.0, %v995
      %v997 = vpop.f32.mrb[0].mxu0
      %998 = vmatprep.mubr.bf16.mxu0 0
      %999 = vmatmul.mubr.bf16.gmra.mrb[0].mxu0 %v942
      %v1000 = vpop.f32.mrb[0].mxu0
      %v1001 = vadd.f32 0.0, %v1000
      %v1002 = vpop.f32.mrb[0].mxu0
      %v1003 = vpop.f32.mrb[0].mxu0
      %v1004 = vadd.f32 0.0, %v1003
      %v1005 = vpop.f32.mrb[0].mxu0
      %1006 = vmatprep.mubr.bf16.mxu0 0
      %1007 = vmatmul.mubr.bf16.gmra.mrb[0].mxu0 %v945
      %v1008 = vpop.f32.mrb[0].mxu0
      %v1009 = vadd.f32 0.0, %v1008
      %v1010 = vpop.f32.mrb[0].mxu0
      %v1011 = vpop.f32.mrb[0].mxu0
      %v1012 = vadd.f32 0.0, %v1011
      %v1013 = vpop.f32.mrb[0].mxu0
      %1014 = vdwg.mxu0
      %v1015 = vadd.f32 %v801, %v985
      %v1016 = vadd.f32 %v802, %v988
      %v1017 = vadd.f32 %v803, %v993
      %v1018 = vadd.f32 %v804, %v996
      %v1019 = vadd.f32 %v805, %v1001
      %v1020 = vadd.f32 %v806, %v1004
      %v1021 = vadd.f32 %v807, %v1009
      %v1022 = vadd.f32 %v808, %v1012
      %v1031 = vrot.slane %v683, 5
      %v1032 = vrot.slane %v1031, 4
      %v1033 = vrot.slane %v684, 5
      %v1034 = vsel %vm547, %v1032, %v1033
      %v1035 = vrot.slane %v685, 5
      %v1036 = vrot.slane %v1035, 4
      %v1037 = vrot.slane %v686, 5
      %v1038 = vsel %vm547, %v1036, %v1037
      %v1039 = vrot.slane %v687, 5
      %v1040 = vrot.slane %v1039, 4
      %v1041 = vrot.slane %v688, 5
      %v1042 = vsel %vm547, %v1040, %v1041
      %v1043 = vrot.slane %v689, 5
      %v1044 = vrot.slane %v1043, 4
      %v1045 = vrot.slane %v690, 5
      %v1046 = vsel %vm547, %v1044, %v1045
      %v1047 = vrot.slane %v691, 5
      %v1048 = vrot.slane %v1047, 4
      %v1049 = vrot.slane %v692, 5
      %v1050 = vsel %vm547, %v1048, %v1049
      %v1051 = vrot.slane %v693, 5
      %v1052 = vrot.slane %v1051, 4
      %v1053 = vrot.slane %v694, 5
      %v1054 = vsel %vm547, %v1052, %v1053
      %v1055 = vrot.slane %v695, 5
      %v1056 = vrot.slane %v1055, 4
      %v1057 = vrot.slane %v696, 5
      %v1058 = vsel %vm547, %v1056, %v1057
      %v1059 = vrot.slane %v697, 5
      %v1060 = vrot.slane %v1059, 4
      %v1061 = vrot.slane %v698, 5
      %v1062 = vsel %vm547, %v1060, %v1061
      %s1063 = scalar_lea.vmem %s1, 20
      %v1064 = vld [vmem:[%s1063] sm:$0xf]
      %v1065 = vunpack.c.l.b16 %v1034
      %v1066 = vunpack.c.l.b16 %v1038
      %v1067 = vunpack.c.l.b16 %v1042
      %v1068 = vunpack.c.l.b16 %v1046
      %v1069 = vunpack.c.l.b16 %v1050
      %v1070 = vunpack.c.l.b16 %v1054
      %v1071 = vunpack.c.l.b16 %v1058
      %v1072 = vunpack.c.l.b16 %v1062
      %v1073 = vpack.c.b16 %v1066, %v1065
      %v1074 = vpack.c.b16 %v1068, %v1067
      %v1075 = vpack.c.b16 %v1070, %v1069
      %v1076 = vpack.c.b16 %v1072, %v1071
      %v1078 = vsel %vm355, %v1073, 0
      %v1081 = vsel %vm355, %v1074, 0
      %v1084 = vsel %vm355, %v1075, 0
      %v1087 = vsel %vm355, %v1076, 0
      %v1090 = vsel %vm368, %v1064, 0
      %1092 = vmatprep.subr.bf16.mxu0 0
      %1093 = vmatpush1.bf16.msra.mxu0 %v1090
      %1094 = vmatprep.subr.bf16.mxu0 0
      %1095 = vmatpush1.bf16.msra.mxu0 0
      %1096 = vmatprep.subr.bf16.mxu0 0
      %1097 = vmatpush1.bf16.msra.mxu0 0
      %1098 = vmatprep.subr.bf16.mxu0 0
      %1099 = vmatpush1.bf16.msra.mxu0 0
      %1100 = vmatprep.subr.bf16.mxu0 0
      %1101 = vmatpush1.bf16.msra.mxu0 0
      %1102 = vmatprep.subr.bf16.mxu0 0
      %1103 = vmatpush1.bf16.msra.mxu0 0
      %1104 = vmatprep.subr.bf16.mxu0 0
      %1105 = vmatpush1.bf16.msra.mxu0 0
      %1106 = vmatprep.subr.bf16.mxu0 0
      %1107 = vmatpush1.bf16.msra.mxu0 0
      %1108 = vmatprep.subr.bf16.mxu0 0
      %1109 = vmatpush1.bf16.msra.mxu0 0
      %1110 = vmatprep.subr.bf16.mxu0 0
      %1111 = vmatpush1.bf16.msra.mxu0 0
      %1112 = vmatprep.subr.bf16.mxu0 0
      %1113 = vmatpush1.bf16.msra.mxu0 0
      %1114 = vmatprep.subr.bf16.mxu0 0
      %1115 = vmatpush1.bf16.msra.mxu0 0
      %1116 = vmatprep.subr.bf16.mxu0 0
      %1117 = vmatpush1.bf16.msra.mxu0 0
      %1118 = vmatprep.subr.bf16.mxu0 0
      %1119 = vmatpush1.bf16.msra.mxu0 0
      %1120 = vmatprep.subr.bf16.mxu0 0
      %1121 = vmatpush1.bf16.msra.mxu0 0
      %1122 = vmatprep.subr.bf16.mxu0 0
      %1123 = vmatpush1.bf16.msra.mxu0 0
      %1124 = vmatprep.mubr.bf16.mxu0 0
      %1125 = vmatmul.mubr.bf16.gmra.mrb[0].mxu0 %v1078
      %v1126 = vpop.f32.mrb[0].mxu0
      %v1127 = vadd.f32 0.0, %v1126
      %v1128 = vpop.f32.mrb[0].mxu0
      %v1129 = vpop.f32.mrb[0].mxu0
      %v1130 = vadd.f32 0.0, %v1129
      %v1131 = vpop.f32.mrb[0].mxu0
      %1132 = vmatprep.mubr.bf16.mxu0 0
      %1133 = vmatmul.mubr.bf16.gmra.mrb[0].mxu0 %v1081
      %v1134 = vpop.f32.mrb[0].mxu0
      %v1135 = vadd.f32 0.0, %v1134
      %v1136 = vpop.f32.mrb[0].mxu0
      %v1137 = vpop.f32.mrb[0].mxu0
      %v1138 = vadd.f32 0.0, %v1137
      %v1139 = vpop.f32.mrb[0].mxu0
      %1140 = vmatprep.mubr.bf16.mxu0 0
      %1141 = vmatmul.mubr.bf16.gmra.mrb[0].mxu0 %v1084
      %v1142 = vpop.f32.mrb[0].mxu0
      %v1143 = vadd.f32 0.0, %v1142
      %v1144 = vpop.f32.mrb[0].mxu0
      %v1145 = vpop.f32.mrb[0].mxu0
      %v1146 = vadd.f32 0.0, %v1145
      %v1147 = vpop.f32.mrb[0].mxu0
      %1148 = vmatprep.mubr.bf16.mxu0 0
      %1149 = vmatmul.mubr.bf16.gmra.mrb[0].mxu0 %v1087
      %v1150 = vpop.f32.mrb[0].mxu0
      %v1151 = vadd.f32 0.0, %v1150
      %v1152 = vpop.f32.mrb[0].mxu0
      %v1153 = vpop.f32.mrb[0].mxu0
      %v1154 = vadd.f32 0.0, %v1153
      %v1155 = vpop.f32.mrb[0].mxu0
      %1156 = vdwg.mxu0
      %v1157 = vadd.f32 %v1015, %v1127
      %v1158 = vadd.f32 %v1016, %v1130
      %v1159 = vadd.f32 %v1017, %v1135
      %v1160 = vadd.f32 %v1018, %v1138
      %v1161 = vadd.f32 %v1019, %v1143
      %v1162 = vadd.f32 %v1020, %v1146
      %v1163 = vadd.f32 %v1021, %v1151
      %v1164 = vadd.f32 %v1022, %v1154
      %s1165 = scalar_lea.vmem %s197, 16
      %v1166 = vld [vmem:[%s1165] sm:$0xf]
      %v1167 = vld [vmem:[%s1165 + $0x4] sm:$0x1]
      %v1168 = vld [vmem:[%s1165 + $0x10] sm:$0xf]
      %v1169 = vld [vmem:[%s1165 + $0x14] sm:$0x1]
      %v1170 = vld [vmem:[%s1165 + $0x20] sm:$0xf]
      %v1171 = vld [vmem:[%s1165 + $0x24] sm:$0x1]
      %v1172 = vld [vmem:[%s1165 + $0x30] sm:$0xf]
      %v1173 = vld [vmem:[%s1165 + $0x34] sm:$0x1]
      %v1174 = vld [vmem:[%s1165 + $0x40] sm:$0xf]
      %v1175 = vld [vmem:[%s1165 + $0x44] sm:$0x1]
      %v1176 = vld [vmem:[%s1165 + $0x50] sm:$0xf]
      %v1177 = vld [vmem:[%s1165 + $0x54] sm:$0x1]
      %v1178 = vld [vmem:[%s1165 + $0x60] sm:$0xf]
      %v1179 = vld [vmem:[%s1165 + $0x64] sm:$0x1]
      %v1180 = vld [vmem:[%s1165 + $0x70] sm:$0xf]
      %v1181 = vld [vmem:[%s1165 + $0x74] sm:$0x1]
      %s1182 = scalar_lea.vmem %s1, 24
      %v1183 = vld [vmem:[%s1182] sm:$0xf]
      %v1192 = vunpack.c.l.b16 %v1166
      %v1193 = vunpack.c.l.b16 %v1168
      %v1194 = vunpack.c.l.b16 %v1170
      %v1195 = vunpack.c.l.b16 %v1172
      %v1196 = vunpack.c.l.b16 %v1174
      %v1197 = vunpack.c.l.b16 %v1176
      %v1198 = vunpack.c.l.b16 %v1178
      %v1199 = vunpack.c.l.b16 %v1180
      %v1200 = vpack.c.b16 %v1193, %v1192
      %v1201 = vpack.c.b16 %v1195, %v1194
      %v1202 = vpack.c.b16 %v1197, %v1196
      %v1203 = vpack.c.b16 %v1199, %v1198
      %v1205 = vsel %vm355, %v1200, 0
      %v1208 = vsel %vm355, %v1201, 0
      %v1211 = vsel %vm355, %v1202, 0
      %v1214 = vsel %vm355, %v1203, 0
      %v1217 = vsel %vm368, %v1183, 0
      %1219 = vmatprep.subr.bf16.mxu0 0
      %1220 = vmatpush1.bf16.msra.mxu0 %v1217
      %1221 = vmatprep.subr.bf16.mxu0 0
      %1222 = vmatpush1.bf16.msra.mxu0 0
      %1223 = vmatprep.subr.bf16.mxu0 0
      %1224 = vmatpush1.bf16.msra.mxu0 0
      %1225 = vmatprep.subr.bf16.mxu0 0
      %1226 = vmatpush1.bf16.msra.mxu0 0
      %1227 = vmatprep.subr.bf16.mxu0 0
      %1228 = vmatpush1.bf16.msra.mxu0 0
      %1229 = vmatprep.subr.bf16.mxu0 0
      %1230 = vmatpush1.bf16.msra.mxu0 0
      %1231 = vmatprep.subr.bf16.mxu0 0
      %1232 = vmatpush1.bf16.msra.mxu0 0
      %1233 = vmatprep.subr.bf16.mxu0 0
      %1234 = vmatpush1.bf16.msra.mxu0 0
      %1235 = vmatprep.subr.bf16.mxu0 0
      %1236 = vmatpush1.bf16.msra.mxu0 0
      %1237 = vmatprep.subr.bf16.mxu0 0
      %1238 = vmatpush1.bf16.msra.mxu0 0
      %1239 = vmatprep.subr.bf16.mxu0 0
      %1240 = vmatpush1.bf16.msra.mxu0 0
      %1241 = vmatprep.subr.bf16.mxu0 0
      %1242 = vmatpush1.bf16.msra.mxu0 0
      %1243 = vmatprep.subr.bf16.mxu0 0
      %1244 = vmatpush1.bf16.msra.mxu0 0
      %1245 = vmatprep.subr.bf16.mxu0 0
      %1246 = vmatpush1.bf16.msra.mxu0 0
      %1247 = vmatprep.subr.bf16.mxu0 0
      %1248 = vmatpush1.bf16.msra.mxu0 0
      %1249 = vmatprep.subr.bf16.mxu0 0
      %1250 = vmatpush1.bf16.msra.mxu0 0
      %1251 = vmatprep.mubr.bf16.mxu0 0
      %1252 = vmatmul.mubr.bf16.gmra.mrb[0].mxu0 %v1205
      %v1253 = vpop.f32.mrb[0].mxu0
      %v1254 = vadd.f32 0.0, %v1253
      %v1255 = vpop.f32.mrb[0].mxu0
      %v1256 = vpop.f32.mrb[0].mxu0
      %v1257 = vadd.f32 0.0, %v1256
      %v1258 = vpop.f32.mrb[0].mxu0
      %1259 = vmatprep.mubr.bf16.mxu0 0
      %1260 = vmatmul.mubr.bf16.gmra.mrb[0].mxu0 %v1208
      %v1261 = vpop.f32.mrb[0].mxu0
      %v1262 = vadd.f32 0.0, %v1261
      %v1263 = vpop.f32.mrb[0].mxu0
      %v1264 = vpop.f32.mrb[0].mxu0
      %v1265 = vadd.f32 0.0, %v1264
      %v1266 = vpop.f32.mrb[0].mxu0
      %1267 = vmatprep.mubr.bf16.mxu0 0
      %1268 = vmatmul.mubr.bf16.gmra.mrb[0].mxu0 %v1211
      %v1269 = vpop.f32.mrb[0].mxu0
      %v1270 = vadd.f32 0.0, %v1269
      %v1271 = vpop.f32.mrb[0].mxu0
      %v1272 = vpop.f32.mrb[0].mxu0
      %v1273 = vadd.f32 0.0, %v1272
      %v1274 = vpop.f32.mrb[0].mxu0
      %1275 = vmatprep.mubr.bf16.mxu0 0
      %1276 = vmatmul.mubr.bf16.gmra.mrb[0].mxu0 %v1214
      %v1277 = vpop.f32.mrb[0].mxu0
      %v1278 = vadd.f32 0.0, %v1277
      %v1279 = vpop.f32.mrb[0].mxu0
      %v1280 = vpop.f32.mrb[0].mxu0
      %v1281 = vadd.f32 0.0, %v1280
      %v1282 = vpop.f32.mrb[0].mxu0
      %1283 = vdwg.mxu0
      %v1284 = vadd.f32 %v1157, %v1254
      %v1285 = vadd.f32 %v1158, %v1257
      %v1286 = vadd.f32 %v1159, %v1262
      %v1287 = vadd.f32 %v1160, %v1265
      %v1288 = vadd.f32 %v1161, %v1270
      %v1289 = vadd.f32 %v1162, %v1273
      %v1290 = vadd.f32 %v1163, %v1278
      %v1291 = vadd.f32 %v1164, %v1281
      %v1293 = vshrl.u32 %v1166, 16
      %v1295 = vrot.slane %v1293, 4
      %v1296 = vshll.u32 %v1166, 16
      %v1298 = vrot.slane %v1296, 5
      %v1299 = vor.u32 %v1295, %v1298
      %v1300 = vrot.slane %v1299, 4
      %v1302 = vshll.u32 %v1167, 16
      %v1304 = vrot.slane %v1302, 5
      %v1305 = vsel %vm228, %v1300, %v1304
      %v1307 = vshrl.u32 %v1168, 16
      %v1309 = vrot.slane %v1307, 4
      %v1310 = vshll.u32 %v1168, 16
      %v1312 = vrot.slane %v1310, 5
      %v1313 = vor.u32 %v1309, %v1312
      %v1314 = vrot.slane %v1313, 4
      %v1316 = vshll.u32 %v1169, 16
      %v1318 = vrot.slane %v1316, 5
      %v1319 = vsel %vm228, %v1314, %v1318
      %v1321 = vshrl.u32 %v1170, 16
      %v1323 = vrot.slane %v1321, 4
      %v1324 = vshll.u32 %v1170, 16
      %v1326 = vrot.slane %v1324, 5
      %v1327 = vor.u32 %v1323, %v1326
      %v1328 = vrot.slane %v1327, 4
      %v1330 = vshll.u32 %v1171, 16
      %v1332 = vrot.slane %v1330, 5
      %v1333 = vsel %vm228, %v1328, %v1332
      %v1335 = vshrl.u32 %v1172, 16
      %v1337 = vrot.slane %v1335, 4
      %v1338 = vshll.u32 %v1172, 16
      %v1340 = vrot.slane %v1338, 5
      %v1341 = vor.u32 %v1337, %v1340
      %v1342 = vrot.slane %v1341, 4
      %v1344 = vshll.u32 %v1173, 16
      %v1346 = vrot.slane %v1344, 5
      %v1347 = vsel %vm228, %v1342, %v1346
      %v1349 = vshrl.u32 %v1174, 16
      %v1351 = vrot.slane %v1349, 4
      %v1352 = vshll.u32 %v1174, 16
      %v1354 = vrot.slane %v1352, 5
      %v1355 = vor.u32 %v1351, %v1354
      %v1356 = vrot.slane %v1355, 4
      %v1358 = vshll.u32 %v1175, 16
      %v1360 = vrot.slane %v1358, 5
      %v1361 = vsel %vm228, %v1356, %v1360
      %v1363 = vshrl.u32 %v1176, 16
      %v1365 = vrot.slane %v1363, 4
      %v1366 = vshll.u32 %v1176, 16
      %v1368 = vrot.slane %v1366, 5
      %v1369 = vor.u32 %v1365, %v1368
      %v1370 = vrot.slane %v1369, 4
      %v1372 = vshll.u32 %v1177, 16
      %v1374 = vrot.slane %v1372, 5
      %v1375 = vsel %vm228, %v1370, %v1374
      %v1377 = vshrl.u32 %v1178, 16
      %v1379 = vrot.slane %v1377, 4
      %v1380 = vshll.u32 %v1178, 16
      %v1382 = vrot.slane %v1380, 5
      %v1383 = vor.u32 %v1379, %v1382
      %v1384 = vrot.slane %v1383, 4
      %v1386 = vshll.u32 %v1179, 16
      %v1388 = vrot.slane %v1386, 5
      %v1389 = vsel %vm228, %v1384, %v1388
      %v1391 = vshrl.u32 %v1180, 16
      %v1393 = vrot.slane %v1391, 4
      %v1394 = vshll.u32 %v1180, 16
      %v1396 = vrot.slane %v1394, 5
      %v1397 = vor.u32 %v1393, %v1396
      %v1398 = vrot.slane %v1397, 4
      %v1400 = vshll.u32 %v1181, 16
      %v1402 = vrot.slane %v1400, 5
      %v1403 = vsel %vm228, %v1398, %v1402
      %s1404 = scalar_lea.vmem %s1, 28
      %v1405 = vld [vmem:[%s1404] sm:$0xf]
      %v1406 = vunpack.c.l.b16 %v1305
      %v1407 = vunpack.c.l.b16 %v1319
      %v1408 = vunpack.c.l.b16 %v1333
      %v1409 = vunpack.c.l.b16 %v1347
      %v1410 = vunpack.c.l.b16 %v1361
      %v1411 = vunpack.c.l.b16 %v1375
      %v1412 = vunpack.c.l.b16 %v1389
      %v1413 = vunpack.c.l.b16 %v1403
      %v1414 = vpack.c.b16 %v1407, %v1406
      %v1415 = vpack.c.b16 %v1409, %v1408
      %v1416 = vpack.c.b16 %v1411, %v1410
      %v1417 = vpack.c.b16 %v1413, %v1412
      %v1419 = vsel %vm355, %v1414, 0
      %v1422 = vsel %vm355, %v1415, 0
      %v1425 = vsel %vm355, %v1416, 0
      %v1428 = vsel %vm355, %v1417, 0
      %v1431 = vsel %vm368, %v1405, 0
      %1433 = vmatprep.subr.bf16.mxu0 0
      %1434 = vmatpush1.bf16.msra.mxu0 %v1431
      %1435 = vmatprep.subr.bf16.mxu0 0
      %1436 = vmatpush1.bf16.msra.mxu0 0
      %1437 = vmatprep.subr.bf16.mxu0 0
      %1438 = vmatpush1.bf16.msra.mxu0 0
      %1439 = vmatprep.subr.bf16.mxu0 0
      %1440 = vmatpush1.bf16.msra.mxu0 0
      %1441 = vmatprep.subr.bf16.mxu0 0
      %1442 = vmatpush1.bf16.msra.mxu0 0
      %1443 = vmatprep.subr.bf16.mxu0 0
      %1444 = vmatpush1.bf16.msra.mxu0 0
      %1445 = vmatprep.subr.bf16.mxu0 0
      %1446 = vmatpush1.bf16.msra.mxu0 0
      %1447 = vmatprep.subr.bf16.mxu0 0
      %1448 = vmatpush1.bf16.msra.mxu0 0
      %1449 = vmatprep.subr.bf16.mxu0 0
      %1450 = vmatpush1.bf16.msra.mxu0 0
      %1451 = vmatprep.subr.bf16.mxu0 0
      %1452 = vmatpush1.bf16.msra.mxu0 0
      %1453 = vmatprep.subr.bf16.mxu0 0
      %1454 = vmatpush1.bf16.msra.mxu0 0
      %1455 = vmatprep.subr.bf16.mxu0 0
      %1456 = vmatpush1.bf16.msra.mxu0 0
      %1457 = vmatprep.subr.bf16.mxu0 0
      %1458 = vmatpush1.bf16.msra.mxu0 0
      %1459 = vmatprep.subr.bf16.mxu0 0
      %1460 = vmatpush1.bf16.msra.mxu0 0
      %1461 = vmatprep.subr.bf16.mxu0 0
      %1462 = vmatpush1.bf16.msra.mxu0 0
      %1463 = vmatprep.subr.bf16.mxu0 0
      %1464 = vmatpush1.bf16.msra.mxu0 0
      %1465 = vmatprep.mubr.bf16.mxu0 0
      %1466 = vmatmul.mubr.bf16.gmra.mrb[0].mxu0 %v1419
      %v1467 = vpop.f32.mrb[0].mxu0
      %v1468 = vadd.f32 0.0, %v1467
      %v1469 = vpop.f32.mrb[0].mxu0
      %v1470 = vpop.f32.mrb[0].mxu0
      %v1471 = vadd.f32 0.0, %v1470
      %v1472 = vpop.f32.mrb[0].mxu0
      %1473 = vmatprep.mubr.bf16.mxu0 0
      %1474 = vmatmul.mubr.bf16.gmra.mrb[0].mxu0 %v1422
      %v1475 = vpop.f32.mrb[0].mxu0
      %v1476 = vadd.f32 0.0, %v1475
      %v1477 = vpop.f32.mrb[0].mxu0
      %v1478 = vpop.f32.mrb[0].mxu0
      %v1479 = vadd.f32 0.0, %v1478
      %v1480 = vpop.f32.mrb[0].mxu0
      %1481 = vmatprep.mubr.bf16.mxu0 0
      %1482 = vmatmul.mubr.bf16.gmra.mrb[0].mxu0 %v1425
      %v1483 = vpop.f32.mrb[0].mxu0
      %v1484 = vadd.f32 0.0, %v1483
      %v1485 = vpop.f32.mrb[0].mxu0
      %v1486 = vpop.f32.mrb[0].mxu0
      %v1487 = vadd.f32 0.0, %v1486
      %v1488 = vpop.f32.mrb[0].mxu0
      %1489 = vmatprep.mubr.bf16.mxu0 0
      %1490 = vmatmul.mubr.bf16.gmra.mrb[0].mxu0 %v1428
      %v1491 = vpop.f32.mrb[0].mxu0
      %v1492 = vadd.f32 0.0, %v1491
      %v1493 = vpop.f32.mrb[0].mxu0
      %v1494 = vpop.f32.mrb[0].mxu0
      %v1495 = vadd.f32 0.0, %v1494
      %v1496 = vpop.f32.mrb[0].mxu0
      %1497 = vdwg.mxu0
      %v1498 = vadd.f32 %v1284, %v1468
      %v1499 = vadd.f32 %v1285, %v1471
      %v1500 = vadd.f32 %v1286, %v1476
      %v1501 = vadd.f32 %v1287, %v1479
      %v1502 = vadd.f32 %v1288, %v1484
      %v1503 = vadd.f32 %v1289, %v1487
      %v1504 = vadd.f32 %v1290, %v1492
      %v1505 = vadd.f32 %v1291, %v1495
      %v1514 = vrot.slane %v1166, 5
      %v1515 = vrot.slane %v1514, 4
      %v1516 = vrot.slane %v1167, 5
      %v1517 = vsel %vm547, %v1515, %v1516
      %v1518 = vrot.slane %v1168, 5
      %v1519 = vrot.slane %v1518, 4
      %v1520 = vrot.slane %v1169, 5
      %v1521 = vsel %vm547, %v1519, %v1520
      %v1522 = vrot.slane %v1170, 5
      %v1523 = vrot.slane %v1522, 4
      %v1524 = vrot.slane %v1171, 5
      %v1525 = vsel %vm547, %v1523, %v1524
      %v1526 = vrot.slane %v1172, 5
      %v1527 = vrot.slane %v1526, 4
      %v1528 = vrot.slane %v1173, 5
      %v1529 = vsel %vm547, %v1527, %v1528
      %v1530 = vrot.slane %v1174, 5
      %v1531 = vrot.slane %v1530, 4
      %v1532 = vrot.slane %v1175, 5
      %v1533 = vsel %vm547, %v1531, %v1532
      %v1534 = vrot.slane %v1176, 5
      %v1535 = vrot.slane %v1534, 4
      %v1536 = vrot.slane %v1177, 5
      %v1537 = vsel %vm547, %v1535, %v1536
      %v1538 = vrot.slane %v1178, 5
      %v1539 = vrot.slane %v1538, 4
      %v1540 = vrot.slane %v1179, 5
      %v1541 = vsel %vm547, %v1539, %v1540
      %v1542 = vrot.slane %v1180, 5
      %v1543 = vrot.slane %v1542, 4
      %v1544 = vrot.slane %v1181, 5
      %v1545 = vsel %vm547, %v1543, %v1544
      %s1546 = scalar_lea.vmem %s1, 32
      %v1547 = vld [vmem:[%s1546] sm:$0xf]
      %v1548 = vunpack.c.l.b16 %v1517
      %v1549 = vunpack.c.l.b16 %v1521
      %v1550 = vunpack.c.l.b16 %v1525
      %v1551 = vunpack.c.l.b16 %v1529
      %v1552 = vunpack.c.l.b16 %v1533
      %v1553 = vunpack.c.l.b16 %v1537
      %v1554 = vunpack.c.l.b16 %v1541
      %v1555 = vunpack.c.l.b16 %v1545
      %v1556 = vpack.c.b16 %v1549, %v1548
      %v1557 = vpack.c.b16 %v1551, %v1550
      %v1558 = vpack.c.b16 %v1553, %v1552
      %v1559 = vpack.c.b16 %v1555, %v1554
      %v1561 = vsel %vm355, %v1556, 0
      %v1564 = vsel %vm355, %v1557, 0
      %v1567 = vsel %vm355, %v1558, 0
      %v1570 = vsel %vm355, %v1559, 0
      %v1573 = vsel %vm368, %v1547, 0
      %1575 = vmatprep.subr.bf16.mxu0 0
      %1576 = vmatpush1.bf16.msra.mxu0 %v1573
      %1577 = vmatprep.subr.bf16.mxu0 0
      %1578 = vmatpush1.bf16.msra.mxu0 0
      %1579 = vmatprep.subr.bf16.mxu0 0
      %1580 = vmatpush1.bf16.msra.mxu0 0
      %1581 = vmatprep.subr.bf16.mxu0 0
      %1582 = vmatpush1.bf16.msra.mxu0 0
      %1583 = vmatprep.subr.bf16.mxu0 0
      %1584 = vmatpush1.bf16.msra.mxu0 0
      %1585 = vmatprep.subr.bf16.mxu0 0
      %1586 = vmatpush1.bf16.msra.mxu0 0
      %1587 = vmatprep.subr.bf16.mxu0 0
      %1588 = vmatpush1.bf16.msra.mxu0 0
      %1589 = vmatprep.subr.bf16.mxu0 0
      %1590 = vmatpush1.bf16.msra.mxu0 0
      %1591 = vmatprep.subr.bf16.mxu0 0
      %1592 = vmatpush1.bf16.msra.mxu0 0
      %1593 = vmatprep.subr.bf16.mxu0 0
      %1594 = vmatpush1.bf16.msra.mxu0 0
      %1595 = vmatprep.subr.bf16.mxu0 0
      %1596 = vmatpush1.bf16.msra.mxu0 0
      %1597 = vmatprep.subr.bf16.mxu0 0
      %1598 = vmatpush1.bf16.msra.mxu0 0
      %1599 = vmatprep.subr.bf16.mxu0 0
      %1600 = vmatpush1.bf16.msra.mxu0 0
      %1601 = vmatprep.subr.bf16.mxu0 0
      %1602 = vmatpush1.bf16.msra.mxu0 0
      %1603 = vmatprep.subr.bf16.mxu0 0
      %1604 = vmatpush1.bf16.msra.mxu0 0
      %1605 = vmatprep.subr.bf16.mxu0 0
      %1606 = vmatpush1.bf16.msra.mxu0 0
      %1607 = vmatprep.mubr.bf16.mxu0 0
      %1608 = vmatmul.mubr.bf16.gmra.mrb[0].mxu0 %v1561
      %v1609 = vpop.f32.mrb[0].mxu0
      %v1610 = vadd.f32 0.0, %v1609
      %v1611 = vpop.f32.mrb[0].mxu0
      %v1612 = vpop.f32.mrb[0].mxu0
      %v1613 = vadd.f32 0.0, %v1612
      %v1614 = vpop.f32.mrb[0].mxu0
      %1615 = vmatprep.mubr.bf16.mxu0 0
      %1616 = vmatmul.mubr.bf16.gmra.mrb[0].mxu0 %v1564
      %v1617 = vpop.f32.mrb[0].mxu0
      %v1618 = vadd.f32 0.0, %v1617
      %v1619 = vpop.f32.mrb[0].mxu0
      %v1620 = vpop.f32.mrb[0].mxu0
      %v1621 = vadd.f32 0.0, %v1620
      %v1622 = vpop.f32.mrb[0].mxu0
      %1623 = vmatprep.mubr.bf16.mxu0 0
      %1624 = vmatmul.mubr.bf16.gmra.mrb[0].mxu0 %v1567
      %v1625 = vpop.f32.mrb[0].mxu0
      %v1626 = vadd.f32 0.0, %v1625
      %v1627 = vpop.f32.mrb[0].mxu0
      %v1628 = vpop.f32.mrb[0].mxu0
      %v1629 = vadd.f32 0.0, %v1628
      %v1630 = vpop.f32.mrb[0].mxu0
      %1631 = vmatprep.mubr.bf16.mxu0 0
      %1632 = vmatmul.mubr.bf16.gmra.mrb[0].mxu0 %v1570
      %v1633 = vpop.f32.mrb[0].mxu0
      %v1634 = vadd.f32 0.0, %v1633
      %v1635 = vpop.f32.mrb[0].mxu0
      %v1636 = vpop.f32.mrb[0].mxu0
      %v1637 = vadd.f32 0.0, %v1636
      %v1638 = vpop.f32.mrb[0].mxu0
      %1639 = vdwg.mxu0
      %v1640 = vadd.f32 %v1498, %v1610
      %v1641 = vadd.f32 %v1499, %v1613
      %v1642 = vadd.f32 %v1500, %v1618
      %v1643 = vadd.f32 %v1501, %v1621
      %v1644 = vadd.f32 %v1502, %v1626
      %v1645 = vadd.f32 %v1503, %v1629
      %v1646 = vadd.f32 %v1504, %v1634
      %v1647 = vadd.f32 %v1505, %v1637
      %s1648 = scalar_lea.vmem %s197, 24
      %v1649 = vld [vmem:[%s1648] sm:$0xf]
      %v1650 = vld [vmem:[%s1648 + $0x4] sm:$0x1]
      %v1651 = vld [vmem:[%s1648 + $0x10] sm:$0xf]
      %v1652 = vld [vmem:[%s1648 + $0x14] sm:$0x1]
      %v1653 = vld [vmem:[%s1648 + $0x20] sm:$0xf]
      %v1654 = vld [vmem:[%s1648 + $0x24] sm:$0x1]
      %v1655 = vld [vmem:[%s1648 + $0x30] sm:$0xf]
      %v1656 = vld [vmem:[%s1648 + $0x34] sm:$0x1]
      %v1657 = vld [vmem:[%s1648 + $0x40] sm:$0xf]
      %v1658 = vld [vmem:[%s1648 + $0x44] sm:$0x1]
      %v1659 = vld [vmem:[%s1648 + $0x50] sm:$0xf]
      %v1660 = vld [vmem:[%s1648 + $0x54] sm:$0x1]
      %v1661 = vld [vmem:[%s1648 + $0x60] sm:$0xf]
      %v1662 = vld [vmem:[%s1648 + $0x64] sm:$0x1]
      %v1663 = vld [vmem:[%s1648 + $0x70] sm:$0xf]
      %v1664 = vld [vmem:[%s1648 + $0x74] sm:$0x1]
      %s1665 = scalar_lea.vmem %s1, 36
      %v1666 = vld [vmem:[%s1665] sm:$0xf]
      %v1675 = vunpack.c.l.b16 %v1649
      %v1676 = vunpack.c.l.b16 %v1651
      %v1677 = vunpack.c.l.b16 %v1653
      %v1678 = vunpack.c.l.b16 %v1655
      %v1679 = vunpack.c.l.b16 %v1657
      %v1680 = vunpack.c.l.b16 %v1659
      %v1681 = vunpack.c.l.b16 %v1661
      %v1682 = vunpack.c.l.b16 %v1663
      %v1683 = vpack.c.b16 %v1676, %v1675
      %v1684 = vpack.c.b16 %v1678, %v1677
      %v1685 = vpack.c.b16 %v1680, %v1679
      %v1686 = vpack.c.b16 %v1682, %v1681
      %v1688 = vsel %vm355, %v1683, 0
      %v1691 = vsel %vm355, %v1684, 0
      %v1694 = vsel %vm355, %v1685, 0
      %v1697 = vsel %vm355, %v1686, 0
      %v1700 = vsel %vm368, %v1666, 0
      %1702 = vmatprep.subr.bf16.mxu0 0
      %1703 = vmatpush1.bf16.msra.mxu0 %v1700
      %1704 = vmatprep.subr.bf16.mxu0 0
      %1705 = vmatpush1.bf16.msra.mxu0 0
      %1706 = vmatprep.subr.bf16.mxu0 0
      %1707 = vmatpush1.bf16.msra.mxu0 0
      %1708 = vmatprep.subr.bf16.mxu0 0
      %1709 = vmatpush1.bf16.msra.mxu0 0
      %1710 = vmatprep.subr.bf16.mxu0 0
      %1711 = vmatpush1.bf16.msra.mxu0 0
      %1712 = vmatprep.subr.bf16.mxu0 0
      %1713 = vmatpush1.bf16.msra.mxu0 0
      %1714 = vmatprep.subr.bf16.mxu0 0
      %1715 = vmatpush1.bf16.msra.mxu0 0
      %1716 = vmatprep.subr.bf16.mxu0 0
      %1717 = vmatpush1.bf16.msra.mxu0 0
      %1718 = vmatprep.subr.bf16.mxu0 0
      %1719 = vmatpush1.bf16.msra.mxu0 0
      %1720 = vmatprep.subr.bf16.mxu0 0
      %1721 = vmatpush1.bf16.msra.mxu0 0
      %1722 = vmatprep.subr.bf16.mxu0 0
      %1723 = vmatpush1.bf16.msra.mxu0 0
      %1724 = vmatprep.subr.bf16.mxu0 0
      %1725 = vmatpush1.bf16.msra.mxu0 0
      %1726 = vmatprep.subr.bf16.mxu0 0
      %1727 = vmatpush1.bf16.msra.mxu0 0
      %1728 = vmatprep.subr.bf16.mxu0 0
      %1729 = vmatpush1.bf16.msra.mxu0 0
      %1730 = vmatprep.subr.bf16.mxu0 0
      %1731 = vmatpush1.bf16.msra.mxu0 0
      %1732 = vmatprep.subr.bf16.mxu0 0
      %1733 = vmatpush1.bf16.msra.mxu0 0
      %1734 = vmatprep.mubr.bf16.mxu0 0
      %1735 = vmatmul.mubr.bf16.gmra.mrb[0].mxu0 %v1688
      %v1736 = vpop.f32.mrb[0].mxu0
      %v1737 = vadd.f32 0.0, %v1736
      %v1738 = vpop.f32.mrb[0].mxu0
      %v1739 = vpop.f32.mrb[0].mxu0
      %v1740 = vadd.f32 0.0, %v1739
      %v1741 = vpop.f32.mrb[0].mxu0
      %1742 = vmatprep.mubr.bf16.mxu0 0
      %1743 = vmatmul.mubr.bf16.gmra.mrb[0].mxu0 %v1691
      %v1744 = vpop.f32.mrb[0].mxu0
      %v1745 = vadd.f32 0.0, %v1744
      %v1746 = vpop.f32.mrb[0].mxu0
      %v1747 = vpop.f32.mrb[0].mxu0
      %v1748 = vadd.f32 0.0, %v1747
      %v1749 = vpop.f32.mrb[0].mxu0
      %1750 = vmatprep.mubr.bf16.mxu0 0
      %1751 = vmatmul.mubr.bf16.gmra.mrb[0].mxu0 %v1694
      %v1752 = vpop.f32.mrb[0].mxu0
      %v1753 = vadd.f32 0.0, %v1752
      %v1754 = vpop.f32.mrb[0].mxu0
      %v1755 = vpop.f32.mrb[0].mxu0
      %v1756 = vadd.f32 0.0, %v1755
      %v1757 = vpop.f32.mrb[0].mxu0
      %1758 = vmatprep.mubr.bf16.mxu0 0
      %1759 = vmatmul.mubr.bf16.gmra.mrb[0].mxu0 %v1697
      %v1760 = vpop.f32.mrb[0].mxu0
      %v1761 = vadd.f32 0.0, %v1760
      %v1762 = vpop.f32.mrb[0].mxu0
      %v1763 = vpop.f32.mrb[0].mxu0
      %v1764 = vadd.f32 0.0, %v1763
      %v1765 = vpop.f32.mrb[0].mxu0
      %1766 = vdwg.mxu0
      %v1767 = vadd.f32 %v1640, %v1737
      %v1768 = vadd.f32 %v1641, %v1740
      %v1769 = vadd.f32 %v1642, %v1745
      %v1770 = vadd.f32 %v1643, %v1748
      %v1771 = vadd.f32 %v1644, %v1753
      %v1772 = vadd.f32 %v1645, %v1756
      %v1773 = vadd.f32 %v1646, %v1761
      %v1774 = vadd.f32 %v1647, %v1764
      %v1776 = vshrl.u32 %v1649, 16
      %v1778 = vrot.slane %v1776, 4
      %v1779 = vshll.u32 %v1649, 16
      %v1781 = vrot.slane %v1779, 5
      %v1782 = vor.u32 %v1778, %v1781
      %v1783 = vrot.slane %v1782, 4
      %v1785 = vshll.u32 %v1650, 16
      %v1787 = vrot.slane %v1785, 5
      %v1788 = vsel %vm228, %v1783, %v1787
      %v1790 = vshrl.u32 %v1651, 16
      %v1792 = vrot.slane %v1790, 4
      %v1793 = vshll.u32 %v1651, 16
      %v1795 = vrot.slane %v1793, 5
      %v1796 = vor.u32 %v1792, %v1795
      %v1797 = vrot.slane %v1796, 4
      %v1799 = vshll.u32 %v1652, 16
      %v1801 = vrot.slane %v1799, 5
      %v1802 = vsel %vm228, %v1797, %v1801
      %v1804 = vshrl.u32 %v1653, 16
      %v1806 = vrot.slane %v1804, 4
      %v1807 = vshll.u32 %v1653, 16
      %v1809 = vrot.slane %v1807, 5
      %v1810 = vor.u32 %v1806, %v1809
      %v1811 = vrot.slane %v1810, 4
      %v1813 = vshll.u32 %v1654, 16
      %v1815 = vrot.slane %v1813, 5
      %v1816 = vsel %vm228, %v1811, %v1815
      %v1818 = vshrl.u32 %v1655, 16
      %v1820 = vrot.slane %v1818, 4
      %v1821 = vshll.u32 %v1655, 16
      %v1823 = vrot.slane %v1821, 5
      %v1824 = vor.u32 %v1820, %v1823
      %v1825 = vrot.slane %v1824, 4
      %v1827 = vshll.u32 %v1656, 16
      %v1829 = vrot.slane %v1827, 5
      %v1830 = vsel %vm228, %v1825, %v1829
      %v1832 = vshrl.u32 %v1657, 16
      %v1834 = vrot.slane %v1832, 4
      %v1835 = vshll.u32 %v1657, 16
      %v1837 = vrot.slane %v1835, 5
      %v1838 = vor.u32 %v1834, %v1837
      %v1839 = vrot.slane %v1838, 4
      %v1841 = vshll.u32 %v1658, 16
      %v1843 = vrot.slane %v1841, 5
      %v1844 = vsel %vm228, %v1839, %v1843
      %v1846 = vshrl.u32 %v1659, 16
      %v1848 = vrot.slane %v1846, 4
      %v1849 = vshll.u32 %v1659, 16
      %v1851 = vrot.slane %v1849, 5
      %v1852 = vor.u32 %v1848, %v1851
      %v1853 = vrot.slane %v1852, 4
      %v1855 = vshll.u32 %v1660, 16
      %v1857 = vrot.slane %v1855, 5
      %v1858 = vsel %vm228, %v1853, %v1857
      %v1860 = vshrl.u32 %v1661, 16
      %v1862 = vrot.slane %v1860, 4
      %v1863 = vshll.u32 %v1661, 16
      %v1865 = vrot.slane %v1863, 5
      %v1866 = vor.u32 %v1862, %v1865
      %v1867 = vrot.slane %v1866, 4
      %v1869 = vshll.u32 %v1662, 16
      %v1871 = vrot.slane %v1869, 5
      %v1872 = vsel %vm228, %v1867, %v1871
      %v1874 = vshrl.u32 %v1663, 16
      %v1876 = vrot.slane %v1874, 4
      %v1877 = vshll.u32 %v1663, 16
      %v1879 = vrot.slane %v1877, 5
      %v1880 = vor.u32 %v1876, %v1879
      %v1881 = vrot.slane %v1880, 4
      %v1883 = vshll.u32 %v1664, 16
      %v1885 = vrot.slane %v1883, 5
      %v1886 = vsel %vm228, %v1881, %v1885
      %s1887 = scalar_lea.vmem %s1, 40
      %v1888 = vld [vmem:[%s1887] sm:$0xf]
      %v1889 = vunpack.c.l.b16 %v1788
      %v1890 = vunpack.c.l.b16 %v1802
      %v1891 = vunpack.c.l.b16 %v1816
      %v1892 = vunpack.c.l.b16 %v1830
      %v1893 = vunpack.c.l.b16 %v1844
      %v1894 = vunpack.c.l.b16 %v1858
      %v1895 = vunpack.c.l.b16 %v1872
      %v1896 = vunpack.c.l.b16 %v1886
      %v1897 = vpack.c.b16 %v1890, %v1889
      %v1898 = vpack.c.b16 %v1892, %v1891
      %v1899 = vpack.c.b16 %v1894, %v1893
      %v1900 = vpack.c.b16 %v1896, %v1895
      %v1902 = vsel %vm355, %v1897, 0
      %v1905 = vsel %vm355, %v1898, 0
      %v1908 = vsel %vm355, %v1899, 0
      %v1911 = vsel %vm355, %v1900, 0
      %v1914 = vsel %vm368, %v1888, 0
      %1916 = vmatprep.subr.bf16.mxu0 0
      %1917 = vmatpush1.bf16.msra.mxu0 %v1914
      %1918 = vmatprep.subr.bf16.mxu0 0
      %1919 = vmatpush1.bf16.msra.mxu0 0
      %1920 = vmatprep.subr.bf16.mxu0 0
      %1921 = vmatpush1.bf16.msra.mxu0 0
      %1922 = vmatprep.subr.bf16.mxu0 0
      %1923 = vmatpush1.bf16.msra.mxu0 0
      %1924 = vmatprep.subr.bf16.mxu0 0
      %1925 = vmatpush1.bf16.msra.mxu0 0
      %1926 = vmatprep.subr.bf16.mxu0 0
      %1927 = vmatpush1.bf16.msra.mxu0 0
      %1928 = vmatprep.subr.bf16.mxu0 0
      %1929 = vmatpush1.bf16.msra.mxu0 0
      %1930 = vmatprep.subr.bf16.mxu0 0
      %1931 = vmatpush1.bf16.msra.mxu0 0
      %1932 = vmatprep.subr.bf16.mxu0 0
      %1933 = vmatpush1.bf16.msra.mxu0 0
      %1934 = vmatprep.subr.bf16.mxu0 0
      %1935 = vmatpush1.bf16.msra.mxu0 0
      %1936 = vmatprep.subr.bf16.mxu0 0
      %1937 = vmatpush1.bf16.msra.mxu0 0
      %1938 = vmatprep.subr.bf16.mxu0 0
      %1939 = vmatpush1.bf16.msra.mxu0 0
      %1940 = vmatprep.subr.bf16.mxu0 0
      %1941 = vmatpush1.bf16.msra.mxu0 0
      %1942 = vmatprep.subr.bf16.mxu0 0
      %1943 = vmatpush1.bf16.msra.mxu0 0
      %1944 = vmatprep.subr.bf16.mxu0 0
      %1945 = vmatpush1.bf16.msra.mxu0 0
      %1946 = vmatprep.subr.bf16.mxu0 0
      %1947 = vmatpush1.bf16.msra.mxu0 0
      %1948 = vmatprep.mubr.bf16.mxu0 0
      %1949 = vmatmul.mubr.bf16.gmra.mrb[0].mxu0 %v1902
      %v1950 = vpop.f32.mrb[0].mxu0
      %v1951 = vadd.f32 0.0, %v1950
      %v1952 = vpop.f32.mrb[0].mxu0
      %v1953 = vpop.f32.mrb[0].mxu0
      %v1954 = vadd.f32 0.0, %v1953
      %v1955 = vpop.f32.mrb[0].mxu0
      %1956 = vmatprep.mubr.bf16.mxu0 0
      %1957 = vmatmul.mubr.bf16.gmra.mrb[0].mxu0 %v1905
      %v1958 = vpop.f32.mrb[0].mxu0
      %v1959 = vadd.f32 0.0, %v1958
      %v1960 = vpop.f32.mrb[0].mxu0
      %v1961 = vpop.f32.mrb[0].mxu0
      %v1962 = vadd.f32 0.0, %v1961
      %v1963 = vpop.f32.mrb[0].mxu0
      %1964 = vmatprep.mubr.bf16.mxu0 0
      %1965 = vmatmul.mubr.bf16.gmra.mrb[0].mxu0 %v1908
      %v1966 = vpop.f32.mrb[0].mxu0
      %v1967 = vadd.f32 0.0, %v1966
      %v1968 = vpop.f32.mrb[0].mxu0
      %v1969 = vpop.f32.mrb[0].mxu0
      %v1970 = vadd.f32 0.0, %v1969
      %v1971 = vpop.f32.mrb[0].mxu0
      %1972 = vmatprep.mubr.bf16.mxu0 0
      %1973 = vmatmul.mubr.bf16.gmra.mrb[0].mxu0 %v1911
      %v1974 = vpop.f32.mrb[0].mxu0
      %v1975 = vadd.f32 0.0, %v1974
      %v1976 = vpop.f32.mrb[0].mxu0
      %v1977 = vpop.f32.mrb[0].mxu0
      %v1978 = vadd.f32 0.0, %v1977
      %v1979 = vpop.f32.mrb[0].mxu0
      %1980 = vdwg.mxu0
      %v1981 = vadd.f32 %v1767, %v1951
      %v1982 = vadd.f32 %v1768, %v1954
      %v1983 = vadd.f32 %v1769, %v1959
      %v1984 = vadd.f32 %v1770, %v1962
      %v1985 = vadd.f32 %v1771, %v1967
      %v1986 = vadd.f32 %v1772, %v1970
      %v1987 = vadd.f32 %v1773, %v1975
      %v1988 = vadd.f32 %v1774, %v1978
      %v1997 = vrot.slane %v1649, 5
      %v1998 = vrot.slane %v1997, 4
      %v1999 = vrot.slane %v1650, 5
      %v2000 = vsel %vm547, %v1998, %v1999
      %v2001 = vrot.slane %v1651, 5
      %v2002 = vrot.slane %v2001, 4
      %v2003 = vrot.slane %v1652, 5
      %v2004 = vsel %vm547, %v2002, %v2003
      %v2005 = vrot.slane %v1653, 5
      %v2006 = vrot.slane %v2005, 4
      %v2007 = vrot.slane %v1654, 5
      %v2008 = vsel %vm547, %v2006, %v2007
      %v2009 = vrot.slane %v1655, 5
      %v2010 = vrot.slane %v2009, 4
      %v2011 = vrot.slane %v1656, 5
      %v2012 = vsel %vm547, %v2010, %v2011
      %v2013 = vrot.slane %v1657, 5
      %v2014 = vrot.slane %v2013, 4
      %v2015 = vrot.slane %v1658, 5
      %v2016 = vsel %vm547, %v2014, %v2015
      %v2017 = vrot.slane %v1659, 5
      %v2018 = vrot.slane %v2017, 4
      %v2019 = vrot.slane %v1660, 5
      %v2020 = vsel %vm547, %v2018, %v2019
      %v2021 = vrot.slane %v1661, 5
      %v2022 = vrot.slane %v2021, 4
      %v2023 = vrot.slane %v1662, 5
      %v2024 = vsel %vm547, %v2022, %v2023
      %v2025 = vrot.slane %v1663, 5
      %v2026 = vrot.slane %v2025, 4
      %v2027 = vrot.slane %v1664, 5
      %v2028 = vsel %vm547, %v2026, %v2027
      %s2029 = scalar_lea.vmem %s1, 44
      %v2030 = vld [vmem:[%s2029] sm:$0xf]
      %v2031 = vunpack.c.l.b16 %v2000
      %v2032 = vunpack.c.l.b16 %v2004
      %v2033 = vunpack.c.l.b16 %v2008
      %v2034 = vunpack.c.l.b16 %v2012
      %v2035 = vunpack.c.l.b16 %v2016
      %v2036 = vunpack.c.l.b16 %v2020
      %v2037 = vunpack.c.l.b16 %v2024
      %v2038 = vunpack.c.l.b16 %v2028
      %v2039 = vpack.c.b16 %v2032, %v2031
      %v2040 = vpack.c.b16 %v2034, %v2033
      %v2041 = vpack.c.b16 %v2036, %v2035
      %v2042 = vpack.c.b16 %v2038, %v2037
      %v2044 = vsel %vm355, %v2039, 0
      %v2047 = vsel %vm355, %v2040, 0
      %v2050 = vsel %vm355, %v2041, 0
      %v2053 = vsel %vm355, %v2042, 0
      %v2056 = vsel %vm368, %v2030, 0
      %2058 = vmatprep.subr.bf16.mxu0 0
      %2059 = vmatpush1.bf16.msra.mxu0 %v2056
      %2060 = vmatprep.subr.bf16.mxu0 0
      %2061 = vmatpush1.bf16.msra.mxu0 0
      %2062 = vmatprep.subr.bf16.mxu0 0
      %2063 = vmatpush1.bf16.msra.mxu0 0
      %2064 = vmatprep.subr.bf16.mxu0 0
      %2065 = vmatpush1.bf16.msra.mxu0 0
      %2066 = vmatprep.subr.bf16.mxu0 0
      %2067 = vmatpush1.bf16.msra.mxu0 0
      %2068 = vmatprep.subr.bf16.mxu0 0
      %2069 = vmatpush1.bf16.msra.mxu0 0
      %2070 = vmatprep.subr.bf16.mxu0 0
      %2071 = vmatpush1.bf16.msra.mxu0 0
      %2072 = vmatprep.subr.bf16.mxu0 0
      %2073 = vmatpush1.bf16.msra.mxu0 0
      %2074 = vmatprep.subr.bf16.mxu0 0
      %2075 = vmatpush1.bf16.msra.mxu0 0
      %2076 = vmatprep.subr.bf16.mxu0 0
      %2077 = vmatpush1.bf16.msra.mxu0 0
      %2078 = vmatprep.subr.bf16.mxu0 0
      %2079 = vmatpush1.bf16.msra.mxu0 0
      %2080 = vmatprep.subr.bf16.mxu0 0
      %2081 = vmatpush1.bf16.msra.mxu0 0
      %2082 = vmatprep.subr.bf16.mxu0 0
      %2083 = vmatpush1.bf16.msra.mxu0 0
      %2084 = vmatprep.subr.bf16.mxu0 0
      %2085 = vmatpush1.bf16.msra.mxu0 0
      %2086 = vmatprep.subr.bf16.mxu0 0
      %2087 = vmatpush1.bf16.msra.mxu0 0
      %2088 = vmatprep.subr.bf16.mxu0 0
      %2089 = vmatpush1.bf16.msra.mxu0 0
      %2090 = vmatprep.mubr.bf16.mxu0 0
      %2091 = vmatmul.mubr.bf16.gmra.mrb[0].mxu0 %v2044
      %v2092 = vpop.f32.mrb[0].mxu0
      %v2093 = vadd.f32 0.0, %v2092
      %v2094 = vpop.f32.mrb[0].mxu0
      %v2095 = vpop.f32.mrb[0].mxu0
      %v2096 = vadd.f32 0.0, %v2095
      %v2097 = vpop.f32.mrb[0].mxu0
      %2098 = vmatprep.mubr.bf16.mxu0 0
      %2099 = vmatmul.mubr.bf16.gmra.mrb[0].mxu0 %v2047
      %v2100 = vpop.f32.mrb[0].mxu0
      %v2101 = vadd.f32 0.0, %v2100
      %v2102 = vpop.f32.mrb[0].mxu0
      %v2103 = vpop.f32.mrb[0].mxu0
      %v2104 = vadd.f32 0.0, %v2103
      %v2105 = vpop.f32.mrb[0].mxu0
      %2106 = vmatprep.mubr.bf16.mxu0 0
      %2107 = vmatmul.mubr.bf16.gmra.mrb[0].mxu0 %v2050
      %v2108 = vpop.f32.mrb[0].mxu0
      %v2109 = vadd.f32 0.0, %v2108
      %v2110 = vpop.f32.mrb[0].mxu0
      %v2111 = vpop.f32.mrb[0].mxu0
      %v2112 = vadd.f32 0.0, %v2111
      %v2113 = vpop.f32.mrb[0].mxu0
      %2114 = vmatprep.mubr.bf16.mxu0 0
      %2115 = vmatmul.mubr.bf16.gmra.mrb[0].mxu0 %v2053
      %v2116 = vpop.f32.mrb[0].mxu0
      %v2117 = vadd.f32 0.0, %v2116
      %v2118 = vpop.f32.mrb[0].mxu0
      %v2119 = vpop.f32.mrb[0].mxu0
      %v2120 = vadd.f32 0.0, %v2119
      %v2121 = vpop.f32.mrb[0].mxu0
      %2122 = vdwg.mxu0
      %v2123 = vadd.f32 %v1981, %v2093
      %v2124 = vadd.f32 %v1982, %v2096
      %v2125 = vadd.f32 %v1983, %v2101
      %v2126 = vadd.f32 %v1984, %v2104
      %v2127 = vadd.f32 %v1985, %v2109
      %v2128 = vadd.f32 %v1986, %v2112
      %v2129 = vadd.f32 %v1987, %v2117
      %v2130 = vadd.f32 %v1988, %v2120
      %s2131 = scalar_lea.vmem %s197, 32
      %v2132 = vld [vmem:[%s2131] sm:$0xf]
      %v2133 = vld [vmem:[%s2131 + $0x4] sm:$0x1]
      %v2134 = vld [vmem:[%s2131 + $0x10] sm:$0xf]
      %v2135 = vld [vmem:[%s2131 + $0x14] sm:$0x1]
      %v2136 = vld [vmem:[%s2131 + $0x20] sm:$0xf]
      %v2137 = vld [vmem:[%s2131 + $0x24] sm:$0x1]
      %v2138 = vld [vmem:[%s2131 + $0x30] sm:$0xf]
      %v2139 = vld [vmem:[%s2131 + $0x34] sm:$0x1]
      %v2140 = vld [vmem:[%s2131 + $0x40] sm:$0xf]
      %v2141 = vld [vmem:[%s2131 + $0x44] sm:$0x1]
      %v2142 = vld [vmem:[%s2131 + $0x50] sm:$0xf]
      %v2143 = vld [vmem:[%s2131 + $0x54] sm:$0x1]
      %v2144 = vld [vmem:[%s2131 + $0x60] sm:$0xf]
      %v2145 = vld [vmem:[%s2131 + $0x64] sm:$0x1]
      %v2146 = vld [vmem:[%s2131 + $0x70] sm:$0xf]
      %v2147 = vld [vmem:[%s2131 + $0x74] sm:$0x1]
      %s2148 = scalar_lea.vmem %s1, 48
      %v2149 = vld [vmem:[%s2148] sm:$0xf]
      %v2158 = vunpack.c.l.b16 %v2132
      %v2159 = vunpack.c.l.b16 %v2134
      %v2160 = vunpack.c.l.b16 %v2136
      %v2161 = vunpack.c.l.b16 %v2138
      %v2162 = vunpack.c.l.b16 %v2140
      %v2163 = vunpack.c.l.b16 %v2142
      %v2164 = vunpack.c.l.b16 %v2144
      %v2165 = vunpack.c.l.b16 %v2146
      %v2166 = vpack.c.b16 %v2159, %v2158
      %v2167 = vpack.c.b16 %v2161, %v2160
      %v2168 = vpack.c.b16 %v2163, %v2162
      %v2169 = vpack.c.b16 %v2165, %v2164
      %v2171 = vsel %vm355, %v2166, 0
      %v2174 = vsel %vm355, %v2167, 0
      %v2177 = vsel %vm355, %v2168, 0
      %v2180 = vsel %vm355, %v2169, 0
      %v2183 = vsel %vm368, %v2149, 0
      %2185 = vmatprep.subr.bf16.mxu0 0
      %2186 = vmatpush1.bf16.msra.mxu0 %v2183
      %2187 = vmatprep.subr.bf16.mxu0 0
      %2188 = vmatpush1.bf16.msra.mxu0 0
      %2189 = vmatprep.subr.bf16.mxu0 0
      %2190 = vmatpush1.bf16.msra.mxu0 0
      %2191 = vmatprep.subr.bf16.mxu0 0
      %2192 = vmatpush1.bf16.msra.mxu0 0
      %2193 = vmatprep.subr.bf16.mxu0 0
      %2194 = vmatpush1.bf16.msra.mxu0 0
      %2195 = vmatprep.subr.bf16.mxu0 0
      %2196 = vmatpush1.bf16.msra.mxu0 0
      %2197 = vmatprep.subr.bf16.mxu0 0
      %2198 = vmatpush1.bf16.msra.mxu0 0
      %2199 = vmatprep.subr.bf16.mxu0 0
      %2200 = vmatpush1.bf16.msra.mxu0 0
      %2201 = vmatprep.subr.bf16.mxu0 0
      %2202 = vmatpush1.bf16.msra.mxu0 0
      %2203 = vmatprep.subr.bf16.mxu0 0
      %2204 = vmatpush1.bf16.msra.mxu0 0
      %2205 = vmatprep.subr.bf16.mxu0 0
      %2206 = vmatpush1.bf16.msra.mxu0 0
      %2207 = vmatprep.subr.bf16.mxu0 0
      %2208 = vmatpush1.bf16.msra.mxu0 0
      %2209 = vmatprep.subr.bf16.mxu0 0
      %2210 = vmatpush1.bf16.msra.mxu0 0
      %2211 = vmatprep.subr.bf16.mxu0 0
      %2212 = vmatpush1.bf16.msra.mxu0 0
      %2213 = vmatprep.subr.bf16.mxu0 0
      %2214 = vmatpush1.bf16.msra.mxu0 0
      %2215 = vmatprep.subr.bf16.mxu0 0
      %2216 = vmatpush1.bf16.msra.mxu0 0
      %2217 = vmatprep.mubr.bf16.mxu0 0
      %2218 = vmatmul.mubr.bf16.gmra.mrb[0].mxu0 %v2171
      %v2219 = vpop.f32.mrb[0].mxu0
      %v2220 = vadd.f32 0.0, %v2219
      %v2221 = vpop.f32.mrb[0].mxu0
      %v2222 = vpop.f32.mrb[0].mxu0
      %v2223 = vadd.f32 0.0, %v2222
      %v2224 = vpop.f32.mrb[0].mxu0
      %2225 = vmatprep.mubr.bf16.mxu0 0
      %2226 = vmatmul.mubr.bf16.gmra.mrb[0].mxu0 %v2174
      %v2227 = vpop.f32.mrb[0].mxu0
      %v2228 = vadd.f32 0.0, %v2227
      %v2229 = vpop.f32.mrb[0].mxu0
      %v2230 = vpop.f32.mrb[0].mxu0
      %v2231 = vadd.f32 0.0, %v2230
      %v2232 = vpop.f32.mrb[0].mxu0
      %2233 = vmatprep.mubr.bf16.mxu0 0
      %2234 = vmatmul.mubr.bf16.gmra.mrb[0].mxu0 %v2177
      %v2235 = vpop.f32.mrb[0].mxu0
      %v2236 = vadd.f32 0.0, %v2235
      %v2237 = vpop.f32.mrb[0].mxu0
      %v2238 = vpop.f32.mrb[0].mxu0
      %v2239 = vadd.f32 0.0, %v2238
      %v2240 = vpop.f32.mrb[0].mxu0
      %2241 = vmatprep.mubr.bf16.mxu0 0
      %2242 = vmatmul.mubr.bf16.gmra.mrb[0].mxu0 %v2180
      %v2243 = vpop.f32.mrb[0].mxu0
      %v2244 = vadd.f32 0.0, %v2243
      %v2245 = vpop.f32.mrb[0].mxu0
      %v2246 = vpop.f32.mrb[0].mxu0
      %v2247 = vadd.f32 0.0, %v2246
      %v2248 = vpop.f32.mrb[0].mxu0
      %2249 = vdwg.mxu0
      %v2250 = vadd.f32 %v2123, %v2220
      %v2251 = vadd.f32 %v2124, %v2223
      %v2252 = vadd.f32 %v2125, %v2228
      %v2253 = vadd.f32 %v2126, %v2231
      %v2254 = vadd.f32 %v2127, %v2236
      %v2255 = vadd.f32 %v2128, %v2239
      %v2256 = vadd.f32 %v2129, %v2244
      %v2257 = vadd.f32 %v2130, %v2247
      %v2259 = vshrl.u32 %v2132, 16
      %v2261 = vrot.slane %v2259, 4
      %v2262 = vshll.u32 %v2132, 16
      %v2264 = vrot.slane %v2262, 5
      %v2265 = vor.u32 %v2261, %v2264
      %v2266 = vrot.slane %v2265, 4
      %v2268 = vshll.u32 %v2133, 16
      %v2270 = vrot.slane %v2268, 5
      %v2271 = vsel %vm228, %v2266, %v2270
      %v2273 = vshrl.u32 %v2134, 16
      %v2275 = vrot.slane %v2273, 4
      %v2276 = vshll.u32 %v2134, 16
      %v2278 = vrot.slane %v2276, 5
      %v2279 = vor.u32 %v2275, %v2278
      %v2280 = vrot.slane %v2279, 4
      %v2282 = vshll.u32 %v2135, 16
      %v2284 = vrot.slane %v2282, 5
      %v2285 = vsel %vm228, %v2280, %v2284
      %v2287 = vshrl.u32 %v2136, 16
      %v2289 = vrot.slane %v2287, 4
      %v2290 = vshll.u32 %v2136, 16
      %v2292 = vrot.slane %v2290, 5
      %v2293 = vor.u32 %v2289, %v2292
      %v2294 = vrot.slane %v2293, 4
      %v2296 = vshll.u32 %v2137, 16
      %v2298 = vrot.slane %v2296, 5
      %v2299 = vsel %vm228, %v2294, %v2298
      %v2301 = vshrl.u32 %v2138, 16
      %v2303 = vrot.slane %v2301, 4
      %v2304 = vshll.u32 %v2138, 16
      %v2306 = vrot.slane %v2304, 5
      %v2307 = vor.u32 %v2303, %v2306
      %v2308 = vrot.slane %v2307, 4
      %v2310 = vshll.u32 %v2139, 16
      %v2312 = vrot.slane %v2310, 5
      %v2313 = vsel %vm228, %v2308, %v2312
      %v2315 = vshrl.u32 %v2140, 16
      %v2317 = vrot.slane %v2315, 4
      %v2318 = vshll.u32 %v2140, 16
      %v2320 = vrot.slane %v2318, 5
      %v2321 = vor.u32 %v2317, %v2320
      %v2322 = vrot.slane %v2321, 4
      %v2324 = vshll.u32 %v2141, 16
      %v2326 = vrot.slane %v2324, 5
      %v2327 = vsel %vm228, %v2322, %v2326
      %v2329 = vshrl.u32 %v2142, 16
      %v2331 = vrot.slane %v2329, 4
      %v2332 = vshll.u32 %v2142, 16
      %v2334 = vrot.slane %v2332, 5
      %v2335 = vor.u32 %v2331, %v2334
      %v2336 = vrot.slane %v2335, 4
      %v2338 = vshll.u32 %v2143, 16
      %v2340 = vrot.slane %v2338, 5
      %v2341 = vsel %vm228, %v2336, %v2340
      %v2343 = vshrl.u32 %v2144, 16
      %v2345 = vrot.slane %v2343, 4
      %v2346 = vshll.u32 %v2144, 16
      %v2348 = vrot.slane %v2346, 5
      %v2349 = vor.u32 %v2345, %v2348
      %v2350 = vrot.slane %v2349, 4
      %v2352 = vshll.u32 %v2145, 16
      %v2354 = vrot.slane %v2352, 5
      %v2355 = vsel %vm228, %v2350, %v2354
      %v2357 = vshrl.u32 %v2146, 16
      %v2359 = vrot.slane %v2357, 4
      %v2360 = vshll.u32 %v2146, 16
      %v2362 = vrot.slane %v2360, 5
      %v2363 = vor.u32 %v2359, %v2362
      %v2364 = vrot.slane %v2363, 4
      %v2366 = vshll.u32 %v2147, 16
      %v2368 = vrot.slane %v2366, 5
      %v2369 = vsel %vm228, %v2364, %v2368
      %s2370 = scalar_lea.vmem %s1, 52
      %v2371 = vld [vmem:[%s2370] sm:$0xf]
      %v2372 = vunpack.c.l.b16 %v2271
      %v2373 = vunpack.c.l.b16 %v2285
      %v2374 = vunpack.c.l.b16 %v2299
      %v2375 = vunpack.c.l.b16 %v2313
      %v2376 = vunpack.c.l.b16 %v2327
      %v2377 = vunpack.c.l.b16 %v2341
      %v2378 = vunpack.c.l.b16 %v2355
      %v2379 = vunpack.c.l.b16 %v2369
      %v2380 = vpack.c.b16 %v2373, %v2372
      %v2381 = vpack.c.b16 %v2375, %v2374
      %v2382 = vpack.c.b16 %v2377, %v2376
      %v2383 = vpack.c.b16 %v2379, %v2378
      %v2385 = vsel %vm355, %v2380, 0
      %v2388 = vsel %vm355, %v2381, 0
      %v2391 = vsel %vm355, %v2382, 0
      %v2394 = vsel %vm355, %v2383, 0
      %v2397 = vsel %vm368, %v2371, 0
      %2399 = vmatprep.subr.bf16.mxu0 0
      %2400 = vmatpush1.bf16.msra.mxu0 %v2397
      %2401 = vmatprep.subr.bf16.mxu0 0
      %2402 = vmatpush1.bf16.msra.mxu0 0
      %2403 = vmatprep.subr.bf16.mxu0 0
      %2404 = vmatpush1.bf16.msra.mxu0 0
      %2405 = vmatprep.subr.bf16.mxu0 0
      %2406 = vmatpush1.bf16.msra.mxu0 0
      %2407 = vmatprep.subr.bf16.mxu0 0
      %2408 = vmatpush1.bf16.msra.mxu0 0
      %2409 = vmatprep.subr.bf16.mxu0 0
      %2410 = vmatpush1.bf16.msra.mxu0 0
      %2411 = vmatprep.subr.bf16.mxu0 0
      %2412 = vmatpush1.bf16.msra.mxu0 0
      %2413 = vmatprep.subr.bf16.mxu0 0
      %2414 = vmatpush1.bf16.msra.mxu0 0
      %2415 = vmatprep.subr.bf16.mxu0 0
      %2416 = vmatpush1.bf16.msra.mxu0 0
      %2417 = vmatprep.subr.bf16.mxu0 0
      %2418 = vmatpush1.bf16.msra.mxu0 0
      %2419 = vmatprep.subr.bf16.mxu0 0
      %2420 = vmatpush1.bf16.msra.mxu0 0
      %2421 = vmatprep.subr.bf16.mxu0 0
      %2422 = vmatpush1.bf16.msra.mxu0 0
      %2423 = vmatprep.subr.bf16.mxu0 0
      %2424 = vmatpush1.bf16.msra.mxu0 0
      %2425 = vmatprep.subr.bf16.mxu0 0
      %2426 = vmatpush1.bf16.msra.mxu0 0
      %2427 = vmatprep.subr.bf16.mxu0 0
      %2428 = vmatpush1.bf16.msra.mxu0 0
      %2429 = vmatprep.subr.bf16.mxu0 0
      %2430 = vmatpush1.bf16.msra.mxu0 0
      %2431 = vmatprep.mubr.bf16.mxu0 0
      %2432 = vmatmul.mubr.bf16.gmra.mrb[0].mxu0 %v2385
      %v2433 = vpop.f32.mrb[0].mxu0
      %v2434 = vadd.f32 0.0, %v2433
      %v2435 = vpop.f32.mrb[0].mxu0
      %v2436 = vpop.f32.mrb[0].mxu0
      %v2437 = vadd.f32 0.0, %v2436
      %v2438 = vpop.f32.mrb[0].mxu0
      %2439 = vmatprep.mubr.bf16.mxu0 0
      %2440 = vmatmul.mubr.bf16.gmra.mrb[0].mxu0 %v2388
      %v2441 = vpop.f32.mrb[0].mxu0
      %v2442 = vadd.f32 0.0, %v2441
      %v2443 = vpop.f32.mrb[0].mxu0
      %v2444 = vpop.f32.mrb[0].mxu0
      %v2445 = vadd.f32 0.0, %v2444
      %v2446 = vpop.f32.mrb[0].mxu0
      %2447 = vmatprep.mubr.bf16.mxu0 0
      %2448 = vmatmul.mubr.bf16.gmra.mrb[0].mxu0 %v2391
      %v2449 = vpop.f32.mrb[0].mxu0
      %v2450 = vadd.f32 0.0, %v2449
      %v2451 = vpop.f32.mrb[0].mxu0
      %v2452 = vpop.f32.mrb[0].mxu0
      %v2453 = vadd.f32 0.0, %v2452
      %v2454 = vpop.f32.mrb[0].mxu0
      %2455 = vmatprep.mubr.bf16.mxu0 0
      %2456 = vmatmul.mubr.bf16.gmra.mrb[0].mxu0 %v2394
      %v2457 = vpop.f32.mrb[0].mxu0
      %v2458 = vadd.f32 0.0, %v2457
      %v2459 = vpop.f32.mrb[0].mxu0
      %v2460 = vpop.f32.mrb[0].mxu0
      %v2461 = vadd.f32 0.0, %v2460
      %v2462 = vpop.f32.mrb[0].mxu0
      %2463 = vdwg.mxu0
      %v2464 = vadd.f32 %v2250, %v2434
      %v2465 = vadd.f32 %v2251, %v2437
      %v2466 = vadd.f32 %v2252, %v2442
      %v2467 = vadd.f32 %v2253, %v2445
      %v2468 = vadd.f32 %v2254, %v2450
      %v2469 = vadd.f32 %v2255, %v2453
      %v2470 = vadd.f32 %v2256, %v2458
      %v2471 = vadd.f32 %v2257, %v2461
      %v2480 = vrot.slane %v2132, 5
      %v2481 = vrot.slane %v2480, 4
      %v2482 = vrot.slane %v2133, 5
      %v2483 = vsel %vm547, %v2481, %v2482
      %v2484 = vrot.slane %v2134, 5
      %v2485 = vrot.slane %v2484, 4
      %v2486 = vrot.slane %v2135, 5
      %v2487 = vsel %vm547, %v2485, %v2486
      %v2488 = vrot.slane %v2136, 5
      %v2489 = vrot.slane %v2488, 4
      %v2490 = vrot.slane %v2137, 5
      %v2491 = vsel %vm547, %v2489, %v2490
      %v2492 = vrot.slane %v2138, 5
      %v2493 = vrot.slane %v2492, 4
      %v2494 = vrot.slane %v2139, 5
      %v2495 = vsel %vm547, %v2493, %v2494
      %v2496 = vrot.slane %v2140, 5
      %v2497 = vrot.slane %v2496, 4
      %v2498 = vrot.slane %v2141, 5
      %v2499 = vsel %vm547, %v2497, %v2498
      %v2500 = vrot.slane %v2142, 5
      %v2501 = vrot.slane %v2500, 4
      %v2502 = vrot.slane %v2143, 5
      %v2503 = vsel %vm547, %v2501, %v2502
      %v2504 = vrot.slane %v2144, 5
      %v2505 = vrot.slane %v2504, 4
      %v2506 = vrot.slane %v2145, 5
      %v2507 = vsel %vm547, %v2505, %v2506
      %v2508 = vrot.slane %v2146, 5
      %v2509 = vrot.slane %v2508, 4
      %v2510 = vrot.slane %v2147, 5
      %v2511 = vsel %vm547, %v2509, %v2510
      %s2512 = scalar_lea.vmem %s1, 56
      %v2513 = vld [vmem:[%s2512] sm:$0xf]
      %v2514 = vunpack.c.l.b16 %v2483
      %v2515 = vunpack.c.l.b16 %v2487
      %v2516 = vunpack.c.l.b16 %v2491
      %v2517 = vunpack.c.l.b16 %v2495
      %v2518 = vunpack.c.l.b16 %v2499
      %v2519 = vunpack.c.l.b16 %v2503
      %v2520 = vunpack.c.l.b16 %v2507
      %v2521 = vunpack.c.l.b16 %v2511
      %v2522 = vpack.c.b16 %v2515, %v2514
      %v2523 = vpack.c.b16 %v2517, %v2516
      %v2524 = vpack.c.b16 %v2519, %v2518
      %v2525 = vpack.c.b16 %v2521, %v2520
      %v2527 = vsel %vm355, %v2522, 0
      %v2530 = vsel %vm355, %v2523, 0
      %v2533 = vsel %vm355, %v2524, 0
      %v2536 = vsel %vm355, %v2525, 0
      %v2539 = vsel %vm368, %v2513, 0
      %2541 = vmatprep.subr.bf16.mxu0 0
      %2542 = vmatpush1.bf16.msra.mxu0 %v2539
      %2543 = vmatprep.subr.bf16.mxu0 0
      %2544 = vmatpush1.bf16.msra.mxu0 0
      %2545 = vmatprep.subr.bf16.mxu0 0
      %2546 = vmatpush1.bf16.msra.mxu0 0
      %2547 = vmatprep.subr.bf16.mxu0 0
      %2548 = vmatpush1.bf16.msra.mxu0 0
      %2549 = vmatprep.subr.bf16.mxu0 0
      %2550 = vmatpush1.bf16.msra.mxu0 0
      %2551 = vmatprep.subr.bf16.mxu0 0
      %2552 = vmatpush1.bf16.msra.mxu0 0
      %2553 = vmatprep.subr.bf16.mxu0 0
      %2554 = vmatpush1.bf16.msra.mxu0 0
      %2555 = vmatprep.subr.bf16.mxu0 0
      %2556 = vmatpush1.bf16.msra.mxu0 0
      %2557 = vmatprep.subr.bf16.mxu0 0
      %2558 = vmatpush1.bf16.msra.mxu0 0
      %2559 = vmatprep.subr.bf16.mxu0 0
      %2560 = vmatpush1.bf16.msra.mxu0 0
      %2561 = vmatprep.subr.bf16.mxu0 0
      %2562 = vmatpush1.bf16.msra.mxu0 0
      %2563 = vmatprep.subr.bf16.mxu0 0
      %2564 = vmatpush1.bf16.msra.mxu0 0
      %2565 = vmatprep.subr.bf16.mxu0 0
      %2566 = vmatpush1.bf16.msra.mxu0 0
      %2567 = vmatprep.subr.bf16.mxu0 0
      %2568 = vmatpush1.bf16.msra.mxu0 0
      %2569 = vmatprep.subr.bf16.mxu0 0
      %2570 = vmatpush1.bf16.msra.mxu0 0
      %2571 = vmatprep.subr.bf16.mxu0 0
      %2572 = vmatpush1.bf16.msra.mxu0 0
      %2573 = vmatprep.mubr.bf16.mxu0 0
      %2574 = vmatmul.mubr.bf16.gmra.mrb[0].mxu0 %v2527
      %v2575 = vpop.f32.mrb[0].mxu0
      %v2576 = vadd.f32 0.0, %v2575
      %v2577 = vpop.f32.mrb[0].mxu0
      %v2578 = vpop.f32.mrb[0].mxu0
      %v2579 = vadd.f32 0.0, %v2578
      %v2580 = vpop.f32.mrb[0].mxu0
      %2581 = vmatprep.mubr.bf16.mxu0 0
      %2582 = vmatmul.mubr.bf16.gmra.mrb[0].mxu0 %v2530
      %v2583 = vpop.f32.mrb[0].mxu0
      %v2584 = vadd.f32 0.0, %v2583
      %v2585 = vpop.f32.mrb[0].mxu0
      %v2586 = vpop.f32.mrb[0].mxu0
      %v2587 = vadd.f32 0.0, %v2586
      %v2588 = vpop.f32.mrb[0].mxu0
      %2589 = vmatprep.mubr.bf16.mxu0 0
      %2590 = vmatmul.mubr.bf16.gmra.mrb[0].mxu0 %v2533
      %v2591 = vpop.f32.mrb[0].mxu0
      %v2592 = vadd.f32 0.0, %v2591
      %v2593 = vpop.f32.mrb[0].mxu0
      %v2594 = vpop.f32.mrb[0].mxu0
      %v2595 = vadd.f32 0.0, %v2594
      %v2596 = vpop.f32.mrb[0].mxu0
      %2597 = vmatprep.mubr.bf16.mxu0 0
      %2598 = vmatmul.mubr.bf16.gmra.mrb[0].mxu0 %v2536
      %v2599 = vpop.f32.mrb[0].mxu0
      %v2600 = vadd.f32 0.0, %v2599
      %v2601 = vpop.f32.mrb[0].mxu0
      %v2602 = vpop.f32.mrb[0].mxu0
      %v2603 = vadd.f32 0.0, %v2602
      %v2604 = vpop.f32.mrb[0].mxu0
      %2605 = vdwg.mxu0
      %v2606 = vadd.f32 %v2464, %v2576
      %v2607 = vadd.f32 %v2465, %v2579
      %v2608 = vadd.f32 %v2466, %v2584
      %v2609 = vadd.f32 %v2467, %v2587
      %v2610 = vadd.f32 %v2468, %v2592
      %v2611 = vadd.f32 %v2469, %v2595
      %v2612 = vadd.f32 %v2470, %v2600
      %v2613 = vadd.f32 %v2471, %v2603
      %v2614 = vld [vmem:[%s2] sm:$0x1]
      %v2616 = vlaneseq
      %v2617 = vshrl.u32 %v2616, 7
      %v2618 = vsub.s32 0, %v2617
      %v2619 = vrot.slane %v2614, %v2618
      %v2621 = vadd.f32 %v2606, %v2619
      %v2622 = vadd.f32 %v2607, %v2619
      %v2623 = vadd.f32 %v2608, %v2619
      %v2624 = vadd.f32 %v2609, %v2619
      %v2625 = vadd.f32 %v2610, %v2619
      %v2626 = vadd.f32 %v2611, %v2619
      %v2627 = vadd.f32 %v2612, %v2619
      %v2628 = vadd.f32 %v2613, %v2619
      %vm2629 = vcmp.gt.f32.partialorder %v2621, 0.0
      %vm2630 = vcmp.gt.f32.partialorder %v2622, 0.0
      %vm2631 = vcmp.gt.f32.partialorder %v2623, 0.0
      %vm2632 = vcmp.gt.f32.partialorder %v2624, 0.0
      %vm2633 = vcmp.gt.f32.partialorder %v2625, 0.0
      %vm2634 = vcmp.gt.f32.partialorder %v2626, 0.0
      %vm2635 = vcmp.gt.f32.partialorder %v2627, 0.0
      %vm2636 = vcmp.gt.f32.partialorder %v2628, 0.0
      %v2637 = vmul.f32 %v2621, 0.2
      %v2638 = vmul.f32 %v2622, 0.2
      %v2639 = vmul.f32 %v2623, 0.2
      %v2640 = vmul.f32 %v2624, 0.2
      %v2641 = vmul.f32 %v2625, 0.2
      %v2642 = vmul.f32 %v2626, 0.2
      %v2643 = vmul.f32 %v2627, 0.2
      %v2644 = vmul.f32 %v2628, 0.2
      %v2645 = vsel %vm2629, %v2621, %v2637
      %v2646 = vsel %vm2630, %v2622, %v2638
      %v2647 = vsel %vm2631, %v2623, %v2639
      %v2648 = vsel %vm2632, %v2624, %v2640
      %v2649 = vsel %vm2633, %v2625, %v2641
      %v2650 = vsel %vm2634, %v2626, %v2642
      %v2651 = vsel %vm2635, %v2627, %v2643
      %v2652 = vsel %vm2636, %v2628, %v2644
      %v2653 = vpack.c.bf16 %v2645, %v2645
      %v2654 = vpack.c.bf16 %v2646, %v2646
      %v2655 = vpack.c.bf16 %v2647, %v2647
      %v2656 = vpack.c.bf16 %v2648, %v2648
      %v2657 = vpack.c.bf16 %v2649, %v2649
      %v2658 = vpack.c.bf16 %v2650, %v2650
      %v2659 = vpack.c.bf16 %v2651, %v2651
      %v2660 = vpack.c.bf16 %v2652, %v2652
      %2661 = vst [vmem:[%s206] sm:$0xf] %v2653
      %2662 = vst [vmem:[%s206 + $0x4] sm:$0xf] %v2654
      %2663 = vst [vmem:[%s206 + $0x8] sm:$0xf] %v2655
      %2664 = vst [vmem:[%s206 + $0xc] sm:$0xf] %v2656
      %2665 = vst [vmem:[%s206 + $0x10] sm:$0xf] %v2657
      %2666 = vst [vmem:[%s206 + $0x14] sm:$0xf] %v2658
      %2667 = vst [vmem:[%s206 + $0x18] sm:$0xf] %v2659
      %2668 = vst [vmem:[%s206 + $0x1c] sm:$0xf] %v2660
      %s2669 = smul.u32 8, %s19
      %p2670 = scmp.lt.s32.totalorder %s18, 1
      %s2671 = scalar_select %p2670, %s18, 1
      %p2672 = scmp.lt.s32.totalorder %s2669, 7
      %s2673 = scalar_select %p2672, %s2669, 7
      %s2674 = smul.addr %s2671, 8
      %s2675 = sadd.s32 %s2673, %s2674
      %s2676 = smul.addr %s2675, 4
      %s2677 = scalar_lea.vmem %s3, %s2676
      // Predicated region
      $region33: #{dis_conv_module_forward.4} parent=31 // pred_check
        %p2678 = pneg %p116
      $region34: #{dis_conv_module_forward.4} parent=31 // pred_check_branch
        %2680 = sbr.rel (%p2678) target = $region36
      $region35: #{dis_conv_module_forward.4} parent=31 // pred_region
        %s2681 = smul.u32 8, %s19
      $region36: #{dis_conv_module_forward.4} parent=31 // pred_fallthru
        _
    $region32: #{dis_conv_module_forward.4} parent=5 // pred_fallthru
      _
    %p2682 = scmp.le.s32.totalorder 2, %s9
    // Predicated region
    $region37: #{dis_conv_module_forward.4} parent=5 // pred_check
      %p2683 = pneg %p2682
    $region38: #{dis_conv_module_forward.4} parent=5 // pred_check_branch
      %2685 = sbr.rel (%p2683) target = $region40
    $region39: #{dis_conv_module_forward.4} parent=5 // pred_region
      %s2686 = ssub.s32 %s9, 2
      // Predicated region
      $region41: #{dis_conv_module_forward.4} parent=39 // pred_check
        %p2687 = pneg %p122
      $region42: #{dis_conv_module_forward.4} parent=39 // pred_check_branch
        %2689 = sbr.rel (%p2687) target = $region44
      $region43: #{dis_conv_module_forward.4} parent=39 // pred_region
        %s2690 = smul.u32 8, %s21
        %p2691 = scmp.lt.s32.totalorder %s20, 1
        %s2692 = scalar_select %p2691, %s20, 1
        %p2693 = scmp.lt.s32.totalorder %s2690, 7
        %s2694 = scalar_select %p2693, %s2690, 7
        %s2695 = smul.addr %s2692, 8
        %s2696 = sadd.s32 %s2694, %s2695
        %s2697 = smul.addr %s2696, 4
        %s2698 = scalar_lea.vmem %s3, %s2697
      $region44: #{dis_conv_module_forward.4} parent=39 // pred_fallthru
        _
    $region40: #{dis_conv_module_forward.4} parent=5 // pred_fallthru
      _
  $region6: #{dis_conv_module_forward.4} parent=0 // loop_footer
    %s13 = sadd.s32 1, %s9
  $region7: #{dis_conv_module_forward.4} parent=0 // loop_footer_branch
    %8 = sbr.rel target = $region3
  $region8: #{dis_conv_module_forward.4} parent=0 // loop_exit
    _

// kernel: dis_conv_module_forward.7
$region0: #{dis_conv_module_forward.7}
  #allocation0 [shape = 'u32[]', space=smem, size = 0x4, offset = 0x4, fixed_abs, tag = 'smem constant byte address 0x4 - core index']
  #allocation1 [shape = 'u32[144,128]{1,0:T(1,128)}', space=vmem, size = 0x12000, scoped, tag = 'internal scratch']
  %s0 = inlined_call_operand.vmem [shape: bf16[2,1,3,2,3,64], index: 0, kind: input, shape index: {}]
  %s1 = inlined_call_operand.vmem [shape: bf16[5,3,64,128], index: 1, kind: input, shape index: {}]
  %s2 = inlined_call_operand.vmem [shape: f32[1,128], index: 2, kind: input, shape index: {}]
  %s3 = inlined_call_operand.vmem [shape: f32[2,1,1,128], index: 3, kind: output, shape index: {}]
  %s4 = sld [smem:[#allocation0]]
  $region45: #{dis_conv_module_forward.7} parent=0
    _
  %s6 = ssub.s32 1, %s4
  %s7 = scalar_select 0, %s6, %s4
  loop: start=0, step=1, limit=4
  $region2: #{dis_conv_module_forward.7} parent=0 // loop_pre_header
    _
  $region3: #{dis_conv_module_forward.7} parent=0 // loop_header
    %s9 = sphi 0, %s13
    %p10 = scmp.ge.s32.totalorder %s9, 4
    %s16 = sphi 0, %s28
    %s17 = sphi 0, %s24
    %s18 = sphi 0, %s16
    %s19 = sphi 0, %s17
    %s20 = sphi 0, %s18
    %s21 = sphi 0, %s19
    %s33 = sphi 0, %s35
    %s36 = sphi 0, %s33
    %s37 = sphi 0, %s36
    %s53 = sphi 0, %s37
    %s57 = sphi 0, %s57
    %s59 = sphi 0, %s57
    %s60 = sphi 0, %s59
    %s74 = sphi 0, %s60
    %s78 = sphi 0, %s78
    %s80 = sphi 0, %s78
    %s81 = sphi 0, %s80
    %s95 = sphi 0, %s81
    %s103 = sphi 0, %s105
    %s106 = sphi 0, %s103
    %s107 = sphi 0, %s106
    %s123 = sphi 0, %s107
  $region4: #{dis_conv_module_forward.7} parent=0 // loop_header_branch
    %12 = sbr.rel (%p10) target = $region8
  $region5: #{dis_conv_module_forward.7} parent=0 // loop_body
    %s14 = ssub.s32 %s9, 1
    %s15 = ssub.s32 %s9, 2
    %s22 = sadd.s32 1, %s17
    %p23 = scmp.ge.s32.totalorder %s22, 1
    %s24 = scalar_select %p23, 0, %s22
    %s25 = sadd.s32 1, %s16
    %s26 = scalar_select %p23, %s25, %s16
    %p27 = scmp.ge.s32.totalorder %s26, 2
    %s28 = scalar_select %p27, 0, %s26
    %s29 = ssub.s32 %s16, %s28
    %s30 = ssub.s32 %s17, %s24
    %s31 = sor.u32 %s29, %s30
    %p32 = scmp.eq.s32.totalorder %s31, 0
    %s34 = sadd.s32 %s33, 1
    %s35 = scalar_select %p32, %s33, %s34
    %p38 = pneg %p32
    %p39 = scmp.eq.s32.totalorder %s9, 1
    %p40 = por %p38, %p39
    %p41 = scmp.ne.s32.totalorder %s33, %s36
    %p42 = scmp.eq.s32.totalorder %s9, 0
    %p43 = por %p41, %p42
    %p44 = scmp.ne.s32.totalorder %s33, %s36
    %p45 = scmp.eq.s32.totalorder %s14, 1
    %p46 = por %p44, %p45
    %p47 = scmp.ne.s32.totalorder %s36, %s37
    %p48 = scmp.eq.s32.totalorder %s14, 0
    %p49 = por %p47, %p48
    %p50 = scmp.ne.s32.totalorder %s36, %s37
    %p51 = scmp.eq.s32.totalorder %s15, 1
    %p52 = por %p50, %p51
    %p54 = scmp.ne.s32.totalorder %s37, %s53
    %p55 = scmp.eq.s32.totalorder %s15, 0
    %p56 = por %p54, %p55
    %s58 = sadd.s32 %s57, 1
    %p61 = scmp.eq.s32.totalorder %s9, 1
    %p62 = scmp.ne.s32.totalorder %s57, %s59
    %p63 = scmp.eq.s32.totalorder %s9, 0
    %p64 = por %p62, %p63
    %p65 = scmp.ne.s32.totalorder %s57, %s59
    %p66 = scmp.eq.s32.totalorder %s14, 1
    %p67 = por %p65, %p66
    %p68 = scmp.ne.s32.totalorder %s59, %s60
    %p69 = scmp.eq.s32.totalorder %s14, 0
    %p70 = por %p68, %p69
    %p71 = scmp.ne.s32.totalorder %s59, %s60
    %p72 = scmp.eq.s32.totalorder %s15, 1
    %p73 = por %p71, %p72
    %p75 = scmp.ne.s32.totalorder %s60, %s74
    %p76 = scmp.eq.s32.totalorder %s15, 0
    %p77 = por %p75, %p76
    %s79 = sadd.s32 %s78, 1
    %p82 = scmp.eq.s32.totalorder %s9, 1
    %p83 = scmp.ne.s32.totalorder %s78, %s80
    %p84 = scmp.eq.s32.totalorder %s9, 0
    %p85 = por %p83, %p84
    %p86 = scmp.ne.s32.totalorder %s78, %s80
    %p87 = scmp.eq.s32.totalorder %s14, 1
    %p88 = por %p86, %p87
    %p89 = scmp.ne.s32.totalorder %s80, %s81
    %p90 = scmp.eq.s32.totalorder %s14, 0
    %p91 = por %p89, %p90
    %p92 = scmp.ne.s32.totalorder %s80, %s81
    %p93 = scmp.eq.s32.totalorder %s15, 1
    %p94 = por %p92, %p93
    %p96 = scmp.ne.s32.totalorder %s81, %s95
    %p97 = scmp.eq.s32.totalorder %s15, 0
    %p98 = por %p96, %p97
    %s99 = ssub.s32 %s16, %s28
    %s100 = ssub.s32 %s17, %s24
    %s101 = sor.u32 %s99, %s100
    %p102 = scmp.eq.s32.totalorder %s101, 0
    %s104 = sadd.s32 %s103, 1
    %s105 = scalar_select %p102, %s103, %s104
    %p108 = pneg %p102
    %p109 = scmp.eq.s32.totalorder %s9, 1
    %p110 = por %p108, %p109
    %p111 = scmp.ne.s32.totalorder %s103, %s106
    %p112 = scmp.eq.s32.totalorder %s9, 0
    %p113 = por %p111, %p112
    %p114 = scmp.ne.s32.totalorder %s103, %s106
    %p115 = scmp.eq.s32.totalorder %s14, 1
    %p116 = por %p114, %p115
    %p117 = scmp.ne.s32.totalorder %s106, %s107
    %p118 = scmp.eq.s32.totalorder %s14, 0
    %p119 = por %p117, %p118
    %p120 = scmp.ne.s32.totalorder %s106, %s107
    %p121 = scmp.eq.s32.totalorder %s15, 1
    %p122 = por %p120, %p121
    %p124 = scmp.ne.s32.totalorder %s107, %s123
    %p125 = scmp.eq.s32.totalorder %s15, 0
    %p126 = por %p124, %p125
    %p127 = scmp.le.s32.totalorder 1, %s9
    %p128 = scmp.lt.s32.totalorder %s9, 3
    %p129 = pnand %p127, %p128
    %p130 = pneg %p129
    // Predicated region
    $region9: #{dis_conv_module_forward.7} parent=5 // pred_check
      _
    $region10: #{dis_conv_module_forward.7} parent=5 // pred_check_branch
      %132 = sbr.rel (%p129) target = $region12
    $region11: #{dis_conv_module_forward.7} parent=5 // pred_region
      %s133 = ssub.s32 %s9, 1
      // Predicated region
      $region13: #{dis_conv_module_forward.7} parent=11 // pred_check
        %p134 = pneg %p70
      $region14: #{dis_conv_module_forward.7} parent=11 // pred_check_branch
        %136 = sbr.rel (%p134) target = $region16
      $region15: #{dis_conv_module_forward.7} parent=11 // pred_region
        _
      $region16: #{dis_conv_module_forward.7} parent=11 // pred_fallthru
        _
      // Predicated region
      $region17: #{dis_conv_module_forward.7} parent=11 // pred_check
        %p137 = pneg %p91
      $region18: #{dis_conv_module_forward.7} parent=11 // pred_check_branch
        %139 = sbr.rel (%p137) target = $region20
      $region19: #{dis_conv_module_forward.7} parent=11 // pred_region
        _
      $region20: #{dis_conv_module_forward.7} parent=11 // pred_fallthru
        _
    $region12: #{dis_conv_module_forward.7} parent=5 // pred_fallthru
      _
    %p140 = scmp.lt.s32.totalorder %s9, 2
    // Predicated region
    $region21: #{dis_conv_module_forward.7} parent=5 // pred_check
      %p141 = pneg %p140
    $region22: #{dis_conv_module_forward.7} parent=5 // pred_check_branch
      %143 = sbr.rel (%p141) target = $region24
    $region23: #{dis_conv_module_forward.7} parent=5 // pred_region
      // Predicated region
      $region25: #{dis_conv_module_forward.7} parent=23 // pred_check
        %p144 = pneg %p43
      $region26: #{dis_conv_module_forward.7} parent=23 // pred_check_branch
        %146 = sbr.rel (%p144) target = $region28
      $region27: #{dis_conv_module_forward.7} parent=23 // pred_region
        %p147 = scmp.lt.s32.totalorder %s16, 1
        %s148 = scalar_select %p147, %s16, 1
        %p149 = scmp.lt.s32.totalorder %s17, 0
        %s150 = scalar_select %p149, %s17, 0
        %s151 = smul.addr %s150, 6
        %s152 = smul.addr %s148, 6
        %s153 = sadd.s32 %s151, %s152
        %s154 = smul.addr %s153, 2
        %s155 = scalar_lea.vmem %s0, %s154
      $region28: #{dis_conv_module_forward.7} parent=23 // pred_fallthru
        _
    $region24: #{dis_conv_module_forward.7} parent=5 // pred_fallthru
      _
    %p156 = scmp.le.s32.totalorder 1, %s9
    %p157 = scmp.lt.s32.totalorder %s9, 3
    %p158 = pnand %p156, %p157
    %p159 = pneg %p158
    // Predicated region
    $region29: #{dis_conv_module_forward.7} parent=5 // pred_check
      _
    $region30: #{dis_conv_module_forward.7} parent=5 // pred_check_branch
      %161 = sbr.rel (%p158) target = $region32
    $region31: #{dis_conv_module_forward.7} parent=5 // pred_region
      %s162 = ssub.s32 %s9, 1
      %p163 = scmp.lt.s32.totalorder %s18, 1
      %s164 = scalar_select %p163, %s18, 1
      %p165 = scmp.lt.s32.totalorder %s19, 0
      %s166 = scalar_select %p165, %s19, 0
      %s167 = smul.addr %s166, 6
      %s168 = smul.addr %s164, 6
      %s169 = sadd.s32 %s167, %s168
      %s170 = smul.addr %s169, 2
      %s171 = scalar_lea.vmem %s0, %s170
      %p172 = pneg %p49
      %p173 = pneg %p46
      %p174 = pneg %p70
      %p175 = pneg %p67
      %p176 = pneg %p91
      %p177 = pneg %p88
      %p178 = pneg %p119
      %p179 = pneg %p116
      %p180 = scmp.lt.s32.totalorder %s18, 1
      %s181 = scalar_select %p180, %s18, 1
      %p182 = scmp.lt.s32.totalorder %s19, 0
      %s183 = scalar_select %p182, %s19, 0
      %s184 = sadd.s32 %s183, %s181
      %s185 = scalar_lea.vmem %s3, %s184
      %p186 = scmp.lt.s32.totalorder %s18, 1
      %s187 = scalar_select %p186, %s18, 1
      %p188 = scmp.lt.s32.totalorder %s19, 0
      %s189 = scalar_select %p188, %s19, 0
      %s190 = smul.addr %s189, 6
      %s191 = smul.addr %s187, 6
      %s192 = sadd.s32 %s190, %s191
      %s193 = smul.addr %s192, 2
      %s194 = scalar_lea.vmem %s0, %s193
      %p195 = scmp.lt.s32.totalorder %s18, 1
      %s196 = scalar_select %p195, %s18, 1
      %p197 = scmp.lt.s32.totalorder %s19, 0
      %s198 = scalar_select %p197, %s19, 0
      %s199 = sadd.s32 %s198, %s196
      %s200 = scalar_lea.vmem %s3, %s199
      %v202 = vld [vmem:[%s194] sm:$0x3]
      %v203 = vld [vmem:[%s1] sm:$0xf]
      %v204 = vld [vmem:[%s1 + $0x4] sm:$0xf]
      %v205 = vld [vmem:[%s1 + $0x8] sm:$0xf]
      %v206 = vld [vmem:[%s1 + $0xc] sm:$0xf]
      %v207 = vld [vmem:[%s1 + $0x10] sm:$0xf]
      %v208 = vld [vmem:[%s1 + $0x14] sm:$0xf]
      %v209 = vld [vmem:[%s1 + $0x18] sm:$0xf]
      %v210 = vld [vmem:[%s1 + $0x1c] sm:$0xf]
      %s211 = scalar_lea.vmem %s1, 32
      %v212 = vld [vmem:[%s211] sm:$0xf]
      %v213 = vld [vmem:[%s211 + $0x4] sm:$0xf]
      %v214 = vld [vmem:[%s211 + $0x8] sm:$0xf]
      %v215 = vld [vmem:[%s211 + $0xc] sm:$0xf]
      %v216 = vld [vmem:[%s211 + $0x10] sm:$0xf]
      %v217 = vld [vmem:[%s211 + $0x14] sm:$0xf]
      %v218 = vld [vmem:[%s211 + $0x18] sm:$0xf]
      %v219 = vld [vmem:[%s211 + $0x1c] sm:$0xf]
      %v222 = vunpack.c.l.s4 1983009808
      %v223 = vunpack.c.0.s8 %v222
      %v224 = vlaneseq
      %v225 = vshrl.u32 %v224, 7
      %v226 = vsub.s32 %v223, %v225
      %v227 = vrot.slane %v202, %v226
      %v229 = vshrl.u32 %v227, 16
      %v239 = vunpack.c.l.b16 %v212
      %v240 = vunpack.c.l.b16 %v213
      %v241 = vunpack.c.l.b16 %v214
      %v242 = vunpack.c.l.b16 %v215
      %v243 = vunpack.c.l.b16 %v216
      %v244 = vunpack.c.l.b16 %v217
      %v245 = vunpack.c.l.b16 %v218
      %v246 = vunpack.c.l.b16 %v219
      %v247 = vpack.c.b16 %v240, %v239
      %v248 = vpack.c.b16 %v242, %v241
      %v249 = vpack.c.b16 %v244, %v243
      %v250 = vpack.c.b16 %v246, %v245
      %vm255 = vcmask 523264
      %v257 = vsel %vm255, %v229, 0
      %259 = vmatprep.subr.bf16.mxu0 0
      %260 = vmatpush1.bf16.msra.mxu0 %v247
      %261 = vmatprep.subr.bf16.mxu0 0
      %262 = vmatpush1.bf16.msra.mxu0 %v248
      %263 = vmatprep.subr.bf16.mxu0 0
      %264 = vmatpush1.bf16.msra.mxu0 %v249
      %265 = vmatprep.subr.bf16.mxu0 0
      %266 = vmatpush1.bf16.msra.mxu0 %v250
      %267 = vmatprep.subr.bf16.mxu0 0
      %268 = vmatpush1.bf16.msra.mxu0 0
      %269 = vmatprep.subr.bf16.mxu0 0
      %270 = vmatpush1.bf16.msra.mxu0 0
      %271 = vmatprep.subr.bf16.mxu0 0
      %272 = vmatpush1.bf16.msra.mxu0 0
      %273 = vmatprep.subr.bf16.mxu0 0
      %274 = vmatpush1.bf16.msra.mxu0 0
      %275 = vmatprep.subr.bf16.mxu0 0
      %276 = vmatpush1.bf16.msra.mxu0 0
      %277 = vmatprep.subr.bf16.mxu0 0
      %278 = vmatpush1.bf16.msra.mxu0 0
      %279 = vmatprep.subr.bf16.mxu0 0
      %280 = vmatpush1.bf16.msra.mxu0 0
      %281 = vmatprep.subr.bf16.mxu0 0
      %282 = vmatpush1.bf16.msra.mxu0 0
      %283 = vmatprep.subr.bf16.mxu0 0
      %284 = vmatpush1.bf16.msra.mxu0 0
      %285 = vmatprep.subr.bf16.mxu0 0
      %286 = vmatpush1.bf16.msra.mxu0 0
      %287 = vmatprep.subr.bf16.mxu0 0
      %288 = vmatpush1.bf16.msra.mxu0 0
      %289 = vmatprep.subr.bf16.mxu0 0
      %290 = vmatpush1.bf16.msra.mxu0 0
      %291 = vmatprep.mubr.bf16.mxu0 0
      %292 = vmatmul.mubr.bf16.gmra.mrb[0].mxu0 %v257
      %v293 = vpop.f32.mrb[0].mxu0
      %v294 = vadd.f32 0.0, %v293
      %v295 = vpop.f32.mrb[0].mxu0
      %v296 = vpop.f32.mrb[0].mxu0
      %v297 = vpop.f32.mrb[0].mxu0
      %298 = vdwg.mxu0
      %v307 = vunpack.c.l.b16 %v203
      %v308 = vunpack.c.l.b16 %v204
      %v309 = vunpack.c.l.b16 %v205
      %v310 = vunpack.c.l.b16 %v206
      %v311 = vunpack.c.l.b16 %v207
      %v312 = vunpack.c.l.b16 %v208
      %v313 = vunpack.c.l.b16 %v209
      %v314 = vunpack.c.l.b16 %v210
      %v315 = vpack.c.b16 %v308, %v307
      %v316 = vpack.c.b16 %v310, %v309
      %v317 = vpack.c.b16 %v312, %v311
      %v318 = vpack.c.b16 %v314, %v313
      %v324 = vsel %vm255, %v202, 0
      %326 = vmatprep.subr.bf16.mxu0 0
      %327 = vmatpush1.bf16.msra.mxu0 %v315
      %328 = vmatprep.subr.bf16.mxu0 0
      %329 = vmatpush1.bf16.msra.mxu0 %v316
      %330 = vmatprep.subr.bf16.mxu0 0
      %331 = vmatpush1.bf16.msra.mxu0 %v317
      %332 = vmatprep.subr.bf16.mxu0 0
      %333 = vmatpush1.bf16.msra.mxu0 %v318
      %334 = vmatprep.subr.bf16.mxu0 0
      %335 = vmatpush1.bf16.msra.mxu0 0
      %336 = vmatprep.subr.bf16.mxu0 0
      %337 = vmatpush1.bf16.msra.mxu0 0
      %338 = vmatprep.subr.bf16.mxu0 0
      %339 = vmatpush1.bf16.msra.mxu0 0
      %340 = vmatprep.subr.bf16.mxu0 0
      %341 = vmatpush1.bf16.msra.mxu0 0
      %342 = vmatprep.subr.bf16.mxu0 0
      %343 = vmatpush1.bf16.msra.mxu0 0
      %344 = vmatprep.subr.bf16.mxu0 0
      %345 = vmatpush1.bf16.msra.mxu0 0
      %346 = vmatprep.subr.bf16.mxu0 0
      %347 = vmatpush1.bf16.msra.mxu0 0
      %348 = vmatprep.subr.bf16.mxu0 0
      %349 = vmatpush1.bf16.msra.mxu0 0
      %350 = vmatprep.subr.bf16.mxu0 0
      %351 = vmatpush1.bf16.msra.mxu0 0
      %352 = vmatprep.subr.bf16.mxu0 0
      %353 = vmatpush1.bf16.msra.mxu0 0
      %354 = vmatprep.subr.bf16.mxu0 0
      %355 = vmatpush1.bf16.msra.mxu0 0
      %356 = vmatprep.subr.bf16.mxu0 0
      %357 = vmatpush1.bf16.msra.mxu0 0
      %358 = vmatprep.mubr.bf16.mxu0 0
      %359 = vmatmul.mubr.bf16.gmra.mrb[0].mxu0 %v324
      %v360 = vpop.f32.mrb[0].mxu0
      %v361 = vadd.f32 %v294, %v360
      %v362 = vpop.f32.mrb[0].mxu0
      %v363 = vpop.f32.mrb[0].mxu0
      %v364 = vpop.f32.mrb[0].mxu0
      %365 = vdwg.mxu0
      %s366 = scalar_lea.vmem %s1, 64
      %v367 = vld [vmem:[%s366] sm:$0xf]
      %v368 = vld [vmem:[%s366 + $0x4] sm:$0xf]
      %v369 = vld [vmem:[%s366 + $0x8] sm:$0xf]
      %v370 = vld [vmem:[%s366 + $0xc] sm:$0xf]
      %v371 = vld [vmem:[%s366 + $0x10] sm:$0xf]
      %v372 = vld [vmem:[%s366 + $0x14] sm:$0xf]
      %v373 = vld [vmem:[%s366 + $0x18] sm:$0xf]
      %v374 = vld [vmem:[%s366 + $0x1c] sm:$0xf]
      %v375 = vrot.slane %v227, 1
      %v384 = vunpack.c.l.b16 %v367
      %v385 = vunpack.c.l.b16 %v368
      %v386 = vunpack.c.l.b16 %v369
      %v387 = vunpack.c.l.b16 %v370
      %v388 = vunpack.c.l.b16 %v371
      %v389 = vunpack.c.l.b16 %v372
      %v390 = vunpack.c.l.b16 %v373
      %v391 = vunpack.c.l.b16 %v374
      %v392 = vpack.c.b16 %v385, %v384
      %v393 = vpack.c.b16 %v387, %v386
      %v394 = vpack.c.b16 %v389, %v388
      %v395 = vpack.c.b16 %v391, %v390
      %v401 = vsel %vm255, %v375, 0
      %403 = vmatprep.subr.bf16.mxu0 0
      %404 = vmatpush1.bf16.msra.mxu0 %v392
      %405 = vmatprep.subr.bf16.mxu0 0
      %406 = vmatpush1.bf16.msra.mxu0 %v393
      %407 = vmatprep.subr.bf16.mxu0 0
      %408 = vmatpush1.bf16.msra.mxu0 %v394
      %409 = vmatprep.subr.bf16.mxu0 0
      %410 = vmatpush1.bf16.msra.mxu0 %v395
      %411 = vmatprep.subr.bf16.mxu0 0
      %412 = vmatpush1.bf16.msra.mxu0 0
      %413 = vmatprep.subr.bf16.mxu0 0
      %414 = vmatpush1.bf16.msra.mxu0 0
      %415 = vmatprep.subr.bf16.mxu0 0
      %416 = vmatpush1.bf16.msra.mxu0 0
      %417 = vmatprep.subr.bf16.mxu0 0
      %418 = vmatpush1.bf16.msra.mxu0 0
      %419 = vmatprep.subr.bf16.mxu0 0
      %420 = vmatpush1.bf16.msra.mxu0 0
      %421 = vmatprep.subr.bf16.mxu0 0
      %422 = vmatpush1.bf16.msra.mxu0 0
      %423 = vmatprep.subr.bf16.mxu0 0
      %424 = vmatpush1.bf16.msra.mxu0 0
      %425 = vmatprep.subr.bf16.mxu0 0
      %426 = vmatpush1.bf16.msra.mxu0 0
      %427 = vmatprep.subr.bf16.mxu0 0
      %428 = vmatpush1.bf16.msra.mxu0 0
      %429 = vmatprep.subr.bf16.mxu0 0
      %430 = vmatpush1.bf16.msra.mxu0 0
      %431 = vmatprep.subr.bf16.mxu0 0
      %432 = vmatpush1.bf16.msra.mxu0 0
      %433 = vmatprep.subr.bf16.mxu0 0
      %434 = vmatpush1.bf16.msra.mxu0 0
      %435 = vmatprep.mubr.bf16.mxu0 0
      %436 = vmatmul.mubr.bf16.gmra.mrb[0].mxu0 %v401
      %v437 = vpop.f32.mrb[0].mxu0
      %v438 = vadd.f32 0.0, %v437
      %v439 = vpop.f32.mrb[0].mxu0
      %v440 = vpop.f32.mrb[0].mxu0
      %v441 = vpop.f32.mrb[0].mxu0
      %442 = vdwg.mxu0
      %v443 = vadd.f32 %v361, %v438
      %s444 = scalar_lea.vmem %s194, 2
      %v445 = vld [vmem:[%s444] sm:$0x3]
      %s446 = scalar_lea.vmem %s1, 96
      %v447 = vld [vmem:[%s446] sm:$0xf]
      %v448 = vld [vmem:[%s446 + $0x4] sm:$0xf]
      %v449 = vld [vmem:[%s446 + $0x8] sm:$0xf]
      %v450 = vld [vmem:[%s446 + $0xc] sm:$0xf]
      %v451 = vld [vmem:[%s446 + $0x10] sm:$0xf]
      %v452 = vld [vmem:[%s446 + $0x14] sm:$0xf]
      %v453 = vld [vmem:[%s446 + $0x18] sm:$0xf]
      %v454 = vld [vmem:[%s446 + $0x1c] sm:$0xf]
      %v463 = vunpack.c.l.b16 %v447
      %v464 = vunpack.c.l.b16 %v448
      %v465 = vunpack.c.l.b16 %v449
      %v466 = vunpack.c.l.b16 %v450
      %v467 = vunpack.c.l.b16 %v451
      %v468 = vunpack.c.l.b16 %v452
      %v469 = vunpack.c.l.b16 %v453
      %v470 = vunpack.c.l.b16 %v454
      %v471 = vpack.c.b16 %v464, %v463
      %v472 = vpack.c.b16 %v466, %v465
      %v473 = vpack.c.b16 %v468, %v467
      %v474 = vpack.c.b16 %v470, %v469
      %v480 = vsel %vm255, %v445, 0
      %482 = vmatprep.subr.bf16.mxu0 0
      %483 = vmatpush1.bf16.msra.mxu0 %v471
      %484 = vmatprep.subr.bf16.mxu0 0
      %485 = vmatpush1.bf16.msra.mxu0 %v472
      %486 = vmatprep.subr.bf16.mxu0 0
      %487 = vmatpush1.bf16.msra.mxu0 %v473
      %488 = vmatprep.subr.bf16.mxu0 0
      %489 = vmatpush1.bf16.msra.mxu0 %v474
      %490 = vmatprep.subr.bf16.mxu0 0
      %491 = vmatpush1.bf16.msra.mxu0 0
      %492 = vmatprep.subr.bf16.mxu0 0
      %493 = vmatpush1.bf16.msra.mxu0 0
      %494 = vmatprep.subr.bf16.mxu0 0
      %495 = vmatpush1.bf16.msra.mxu0 0
      %496 = vmatprep.subr.bf16.mxu0 0
      %497 = vmatpush1.bf16.msra.mxu0 0
      %498 = vmatprep.subr.bf16.mxu0 0
      %499 = vmatpush1.bf16.msra.mxu0 0
      %500 = vmatprep.subr.bf16.mxu0 0
      %501 = vmatpush1.bf16.msra.mxu0 0
      %502 = vmatprep.subr.bf16.mxu0 0
      %503 = vmatpush1.bf16.msra.mxu0 0
      %504 = vmatprep.subr.bf16.mxu0 0
      %505 = vmatpush1.bf16.msra.mxu0 0
      %506 = vmatprep.subr.bf16.mxu0 0
      %507 = vmatpush1.bf16.msra.mxu0 0
      %508 = vmatprep.subr.bf16.mxu0 0
      %509 = vmatpush1.bf16.msra.mxu0 0
      %510 = vmatprep.subr.bf16.mxu0 0
      %511 = vmatpush1.bf16.msra.mxu0 0
      %512 = vmatprep.subr.bf16.mxu0 0
      %513 = vmatpush1.bf16.msra.mxu0 0
      %514 = vmatprep.mubr.bf16.mxu0 0
      %515 = vmatmul.mubr.bf16.gmra.mrb[0].mxu0 %v480
      %v516 = vpop.f32.mrb[0].mxu0
      %v517 = vadd.f32 0.0, %v516
      %v518 = vpop.f32.mrb[0].mxu0
      %v519 = vpop.f32.mrb[0].mxu0
      %v520 = vpop.f32.mrb[0].mxu0
      %521 = vdwg.mxu0
      %v522 = vadd.f32 %v443, %v517
      %s523 = scalar_lea.vmem %s1, 128
      %v524 = vld [vmem:[%s523] sm:$0xf]
      %v525 = vld [vmem:[%s523 + $0x4] sm:$0xf]
      %v526 = vld [vmem:[%s523 + $0x8] sm:$0xf]
      %v527 = vld [vmem:[%s523 + $0xc] sm:$0xf]
      %v528 = vld [vmem:[%s523 + $0x10] sm:$0xf]
      %v529 = vld [vmem:[%s523 + $0x14] sm:$0xf]
      %v530 = vld [vmem:[%s523 + $0x18] sm:$0xf]
      %v531 = vld [vmem:[%s523 + $0x1c] sm:$0xf]
      %v534 = vunpack.c.l.s4 1983009808
      %v535 = vunpack.c.0.s8 %v534
      %v536 = vlaneseq
      %v537 = vshrl.u32 %v536, 7
      %v538 = vsub.s32 %v535, %v537
      %v539 = vrot.slane %v445, %v538
      %v541 = vshrl.u32 %v539, 16
      %v551 = vunpack.c.l.b16 %v524
      %v552 = vunpack.c.l.b16 %v525
      %v553 = vunpack.c.l.b16 %v526
      %v554 = vunpack.c.l.b16 %v527
      %v555 = vunpack.c.l.b16 %v528
      %v556 = vunpack.c.l.b16 %v529
      %v557 = vunpack.c.l.b16 %v530
      %v558 = vunpack.c.l.b16 %v531
      %v559 = vpack.c.b16 %v552, %v551
      %v560 = vpack.c.b16 %v554, %v553
      %v561 = vpack.c.b16 %v556, %v555
      %v562 = vpack.c.b16 %v558, %v557
      %v568 = vsel %vm255, %v541, 0
      %570 = vmatprep.subr.bf16.mxu0 0
      %571 = vmatpush1.bf16.msra.mxu0 %v559
      %572 = vmatprep.subr.bf16.mxu0 0
      %573 = vmatpush1.bf16.msra.mxu0 %v560
      %574 = vmatprep.subr.bf16.mxu0 0
      %575 = vmatpush1.bf16.msra.mxu0 %v561
      %576 = vmatprep.subr.bf16.mxu0 0
      %577 = vmatpush1.bf16.msra.mxu0 %v562
      %578 = vmatprep.subr.bf16.mxu0 0
      %579 = vmatpush1.bf16.msra.mxu0 0
      %580 = vmatprep.subr.bf16.mxu0 0
      %581 = vmatpush1.bf16.msra.mxu0 0
      %582 = vmatprep.subr.bf16.mxu0 0
      %583 = vmatpush1.bf16.msra.mxu0 0
      %584 = vmatprep.subr.bf16.mxu0 0
      %585 = vmatpush1.bf16.msra.mxu0 0
      %586 = vmatprep.subr.bf16.mxu0 0
      %587 = vmatpush1.bf16.msra.mxu0 0
      %588 = vmatprep.subr.bf16.mxu0 0
      %589 = vmatpush1.bf16.msra.mxu0 0
      %590 = vmatprep.subr.bf16.mxu0 0
      %591 = vmatpush1.bf16.msra.mxu0 0
      %592 = vmatprep.subr.bf16.mxu0 0
      %593 = vmatpush1.bf16.msra.mxu0 0
      %594 = vmatprep.subr.bf16.mxu0 0
      %595 = vmatpush1.bf16.msra.mxu0 0
      %596 = vmatprep.subr.bf16.mxu0 0
      %597 = vmatpush1.bf16.msra.mxu0 0
      %598 = vmatprep.subr.bf16.mxu0 0
      %599 = vmatpush1.bf16.msra.mxu0 0
      %600 = vmatprep.subr.bf16.mxu0 0
      %601 = vmatpush1.bf16.msra.mxu0 0
      %602 = vmatprep.mubr.bf16.mxu0 0
      %603 = vmatmul.mubr.bf16.gmra.mrb[0].mxu0 %v568
      %v604 = vpop.f32.mrb[0].mxu0
      %v605 = vadd.f32 0.0, %v604
      %v606 = vpop.f32.mrb[0].mxu0
      %v607 = vpop.f32.mrb[0].mxu0
      %v608 = vpop.f32.mrb[0].mxu0
      %609 = vdwg.mxu0
      %v610 = vadd.f32 %v522, %v605
      %s611 = scalar_lea.vmem %s1, 160
      %v612 = vld [vmem:[%s611] sm:$0xf]
      %v613 = vld [vmem:[%s611 + $0x4] sm:$0xf]
      %v614 = vld [vmem:[%s611 + $0x8] sm:$0xf]
      %v615 = vld [vmem:[%s611 + $0xc] sm:$0xf]
      %v616 = vld [vmem:[%s611 + $0x10] sm:$0xf]
      %v617 = vld [vmem:[%s611 + $0x14] sm:$0xf]
      %v618 = vld [vmem:[%s611 + $0x18] sm:$0xf]
      %v619 = vld [vmem:[%s611 + $0x1c] sm:$0xf]
      %v620 = vrot.slane %v539, 1
      %v629 = vunpack.c.l.b16 %v612
      %v630 = vunpack.c.l.b16 %v613
      %v631 = vunpack.c.l.b16 %v614
      %v632 = vunpack.c.l.b16 %v615
      %v633 = vunpack.c.l.b16 %v616
      %v634 = vunpack.c.l.b16 %v617
      %v635 = vunpack.c.l.b16 %v618
      %v636 = vunpack.c.l.b16 %v619
      %v637 = vpack.c.b16 %v630, %v629
      %v638 = vpack.c.b16 %v632, %v631
      %v639 = vpack.c.b16 %v634, %v633
      %v640 = vpack.c.b16 %v636, %v635
      %v646 = vsel %vm255, %v620, 0
      %648 = vmatprep.subr.bf16.mxu0 0
      %649 = vmatpush1.bf16.msra.mxu0 %v637
      %650 = vmatprep.subr.bf16.mxu0 0
      %651 = vmatpush1.bf16.msra.mxu0 %v638
      %652 = vmatprep.subr.bf16.mxu0 0
      %653 = vmatpush1.bf16.msra.mxu0 %v639
      %654 = vmatprep.subr.bf16.mxu0 0
      %655 = vmatpush1.bf16.msra.mxu0 %v640
      %656 = vmatprep.subr.bf16.mxu0 0
      %657 = vmatpush1.bf16.msra.mxu0 0
      %658 = vmatprep.subr.bf16.mxu0 0
      %659 = vmatpush1.bf16.msra.mxu0 0
      %660 = vmatprep.subr.bf16.mxu0 0
      %661 = vmatpush1.bf16.msra.mxu0 0
      %662 = vmatprep.subr.bf16.mxu0 0
      %663 = vmatpush1.bf16.msra.mxu0 0
      %664 = vmatprep.subr.bf16.mxu0 0
      %665 = vmatpush1.bf16.msra.mxu0 0
      %666 = vmatprep.subr.bf16.mxu0 0
      %667 = vmatpush1.bf16.msra.mxu0 0
      %668 = vmatprep.subr.bf16.mxu0 0
      %669 = vmatpush1.bf16.msra.mxu0 0
      %670 = vmatprep.subr.bf16.mxu0 0
      %671 = vmatpush1.bf16.msra.mxu0 0
      %672 = vmatprep.subr.bf16.mxu0 0
      %673 = vmatpush1.bf16.msra.mxu0 0
      %674 = vmatprep.subr.bf16.mxu0 0
      %675 = vmatpush1.bf16.msra.mxu0 0
      %676 = vmatprep.subr.bf16.mxu0 0
      %677 = vmatpush1.bf16.msra.mxu0 0
      %678 = vmatprep.subr.bf16.mxu0 0
      %679 = vmatpush1.bf16.msra.mxu0 0
      %680 = vmatprep.mubr.bf16.mxu0 0
      %681 = vmatmul.mubr.bf16.gmra.mrb[0].mxu0 %v646
      %v682 = vpop.f32.mrb[0].mxu0
      %v683 = vadd.f32 0.0, %v682
      %v684 = vpop.f32.mrb[0].mxu0
      %v685 = vpop.f32.mrb[0].mxu0
      %v686 = vpop.f32.mrb[0].mxu0
      %687 = vdwg.mxu0
      %v688 = vadd.f32 %v610, %v683
      %s689 = scalar_lea.vmem %s194, 4
      %v690 = vld [vmem:[%s689] sm:$0x3]
      %s691 = scalar_lea.vmem %s1, 192
      %v692 = vld [vmem:[%s691] sm:$0xf]
      %v693 = vld [vmem:[%s691 + $0x4] sm:$0xf]
      %v694 = vld [vmem:[%s691 + $0x8] sm:$0xf]
      %v695 = vld [vmem:[%s691 + $0xc] sm:$0xf]
      %v696 = vld [vmem:[%s691 + $0x10] sm:$0xf]
      %v697 = vld [vmem:[%s691 + $0x14] sm:$0xf]
      %v698 = vld [vmem:[%s691 + $0x18] sm:$0xf]
      %v699 = vld [vmem:[%s691 + $0x1c] sm:$0xf]
      %v708 = vunpack.c.l.b16 %v692
      %v709 = vunpack.c.l.b16 %v693
      %v710 = vunpack.c.l.b16 %v694
      %v711 = vunpack.c.l.b16 %v695
      %v712 = vunpack.c.l.b16 %v696
      %v713 = vunpack.c.l.b16 %v697
      %v714 = vunpack.c.l.b16 %v698
      %v715 = vunpack.c.l.b16 %v699
      %v716 = vpack.c.b16 %v709, %v708
      %v717 = vpack.c.b16 %v711, %v710
      %v718 = vpack.c.b16 %v713, %v712
      %v719 = vpack.c.b16 %v715, %v714
      %v725 = vsel %vm255, %v690, 0
      %727 = vmatprep.subr.bf16.mxu0 0
      %728 = vmatpush1.bf16.msra.mxu0 %v716
      %729 = vmatprep.subr.bf16.mxu0 0
      %730 = vmatpush1.bf16.msra.mxu0 %v717
      %731 = vmatprep.subr.bf16.mxu0 0
      %732 = vmatpush1.bf16.msra.mxu0 %v718
      %733 = vmatprep.subr.bf16.mxu0 0
      %734 = vmatpush1.bf16.msra.mxu0 %v719
      %735 = vmatprep.subr.bf16.mxu0 0
      %736 = vmatpush1.bf16.msra.mxu0 0
      %737 = vmatprep.subr.bf16.mxu0 0
      %738 = vmatpush1.bf16.msra.mxu0 0
      %739 = vmatprep.subr.bf16.mxu0 0
      %740 = vmatpush1.bf16.msra.mxu0 0
      %741 = vmatprep.subr.bf16.mxu0 0
      %742 = vmatpush1.bf16.msra.mxu0 0
      %743 = vmatprep.subr.bf16.mxu0 0
      %744 = vmatpush1.bf16.msra.mxu0 0
      %745 = vmatprep.subr.bf16.mxu0 0
      %746 = vmatpush1.bf16.msra.mxu0 0
      %747 = vmatprep.subr.bf16.mxu0 0
      %748 = vmatpush1.bf16.msra.mxu0 0
      %749 = vmatprep.subr.bf16.mxu0 0
      %750 = vmatpush1.bf16.msra.mxu0 0
      %751 = vmatprep.subr.bf16.mxu0 0
      %752 = vmatpush1.bf16.msra.mxu0 0
      %753 = vmatprep.subr.bf16.mxu0 0
      %754 = vmatpush1.bf16.msra.mxu0 0
      %755 = vmatprep.subr.bf16.mxu0 0
      %756 = vmatpush1.bf16.msra.mxu0 0
      %757 = vmatprep.subr.bf16.mxu0 0
      %758 = vmatpush1.bf16.msra.mxu0 0
      %759 = vmatprep.mubr.bf16.mxu0 0
      %760 = vmatmul.mubr.bf16.gmra.mrb[0].mxu0 %v725
      %v761 = vpop.f32.mrb[0].mxu0
      %v762 = vadd.f32 0.0, %v761
      %v763 = vpop.f32.mrb[0].mxu0
      %v764 = vpop.f32.mrb[0].mxu0
      %v765 = vpop.f32.mrb[0].mxu0
      %766 = vdwg.mxu0
      %v767 = vadd.f32 %v688, %v762
      %s768 = scalar_lea.vmem %s1, 224
      %v769 = vld [vmem:[%s768] sm:$0xf]
      %v770 = vld [vmem:[%s768 + $0x4] sm:$0xf]
      %v771 = vld [vmem:[%s768 + $0x8] sm:$0xf]
      %v772 = vld [vmem:[%s768 + $0xc] sm:$0xf]
      %v773 = vld [vmem:[%s768 + $0x10] sm:$0xf]
      %v774 = vld [vmem:[%s768 + $0x14] sm:$0xf]
      %v775 = vld [vmem:[%s768 + $0x18] sm:$0xf]
      %v776 = vld [vmem:[%s768 + $0x1c] sm:$0xf]
      %v779 = vunpack.c.l.s4 1983009808
      %v780 = vunpack.c.0.s8 %v779
      %v781 = vlaneseq
      %v782 = vshrl.u32 %v781, 7
      %v783 = vsub.s32 %v780, %v782
      %v784 = vrot.slane %v690, %v783
      %v786 = vshrl.u32 %v784, 16
      %v796 = vunpack.c.l.b16 %v769
      %v797 = vunpack.c.l.b16 %v770
      %v798 = vunpack.c.l.b16 %v771
      %v799 = vunpack.c.l.b16 %v772
      %v800 = vunpack.c.l.b16 %v773
      %v801 = vunpack.c.l.b16 %v774
      %v802 = vunpack.c.l.b16 %v775
      %v803 = vunpack.c.l.b16 %v776
      %v804 = vpack.c.b16 %v797, %v796
      %v805 = vpack.c.b16 %v799, %v798
      %v806 = vpack.c.b16 %v801, %v800
      %v807 = vpack.c.b16 %v803, %v802
      %v813 = vsel %vm255, %v786, 0
      %815 = vmatprep.subr.bf16.mxu0 0
      %816 = vmatpush1.bf16.msra.mxu0 %v804
      %817 = vmatprep.subr.bf16.mxu0 0
      %818 = vmatpush1.bf16.msra.mxu0 %v805
      %819 = vmatprep.subr.bf16.mxu0 0
      %820 = vmatpush1.bf16.msra.mxu0 %v806
      %821 = vmatprep.subr.bf16.mxu0 0
      %822 = vmatpush1.bf16.msra.mxu0 %v807
      %823 = vmatprep.subr.bf16.mxu0 0
      %824 = vmatpush1.bf16.msra.mxu0 0
      %825 = vmatprep.subr.bf16.mxu0 0
      %826 = vmatpush1.bf16.msra.mxu0 0
      %827 = vmatprep.subr.bf16.mxu0 0
      %828 = vmatpush1.bf16.msra.mxu0 0
      %829 = vmatprep.subr.bf16.mxu0 0
      %830 = vmatpush1.bf16.msra.mxu0 0
      %831 = vmatprep.subr.bf16.mxu0 0
      %832 = vmatpush1.bf16.msra.mxu0 0
      %833 = vmatprep.subr.bf16.mxu0 0
      %834 = vmatpush1.bf16.msra.mxu0 0
      %835 = vmatprep.subr.bf16.mxu0 0
      %836 = vmatpush1.bf16.msra.mxu0 0
      %837 = vmatprep.subr.bf16.mxu0 0
      %838 = vmatpush1.bf16.msra.mxu0 0
      %839 = vmatprep.subr.bf16.mxu0 0
      %840 = vmatpush1.bf16.msra.mxu0 0
      %841 = vmatprep.subr.bf16.mxu0 0
      %842 = vmatpush1.bf16.msra.mxu0 0
      %843 = vmatprep.subr.bf16.mxu0 0
      %844 = vmatpush1.bf16.msra.mxu0 0
      %845 = vmatprep.subr.bf16.mxu0 0
      %846 = vmatpush1.bf16.msra.mxu0 0
      %847 = vmatprep.mubr.bf16.mxu0 0
      %848 = vmatmul.mubr.bf16.gmra.mrb[0].mxu0 %v813
      %v849 = vpop.f32.mrb[0].mxu0
      %v850 = vadd.f32 0.0, %v849
      %v851 = vpop.f32.mrb[0].mxu0
      %v852 = vpop.f32.mrb[0].mxu0
      %v853 = vpop.f32.mrb[0].mxu0
      %854 = vdwg.mxu0
      %v855 = vadd.f32 %v767, %v850
      %s856 = scalar_lea.vmem %s1, 256
      %v857 = vld [vmem:[%s856] sm:$0xf]
      %v858 = vld [vmem:[%s856 + $0x4] sm:$0xf]
      %v859 = vld [vmem:[%s856 + $0x8] sm:$0xf]
      %v860 = vld [vmem:[%s856 + $0xc] sm:$0xf]
      %v861 = vld [vmem:[%s856 + $0x10] sm:$0xf]
      %v862 = vld [vmem:[%s856 + $0x14] sm:$0xf]
      %v863 = vld [vmem:[%s856 + $0x18] sm:$0xf]
      %v864 = vld [vmem:[%s856 + $0x1c] sm:$0xf]
      %v865 = vrot.slane %v784, 1
      %v874 = vunpack.c.l.b16 %v857
      %v875 = vunpack.c.l.b16 %v858
      %v876 = vunpack.c.l.b16 %v859
      %v877 = vunpack.c.l.b16 %v860
      %v878 = vunpack.c.l.b16 %v861
      %v879 = vunpack.c.l.b16 %v862
      %v880 = vunpack.c.l.b16 %v863
      %v881 = vunpack.c.l.b16 %v864
      %v882 = vpack.c.b16 %v875, %v874
      %v883 = vpack.c.b16 %v877, %v876
      %v884 = vpack.c.b16 %v879, %v878
      %v885 = vpack.c.b16 %v881, %v880
      %v891 = vsel %vm255, %v865, 0
      %893 = vmatprep.subr.bf16.mxu0 0
      %894 = vmatpush1.bf16.msra.mxu0 %v882
      %895 = vmatprep.subr.bf16.mxu0 0
      %896 = vmatpush1.bf16.msra.mxu0 %v883
      %897 = vmatprep.subr.bf16.mxu0 0
      %898 = vmatpush1.bf16.msra.mxu0 %v884
      %899 = vmatprep.subr.bf16.mxu0 0
      %900 = vmatpush1.bf16.msra.mxu0 %v885
      %901 = vmatprep.subr.bf16.mxu0 0
      %902 = vmatpush1.bf16.msra.mxu0 0
      %903 = vmatprep.subr.bf16.mxu0 0
      %904 = vmatpush1.bf16.msra.mxu0 0
      %905 = vmatprep.subr.bf16.mxu0 0
      %906 = vmatpush1.bf16.msra.mxu0 0
      %907 = vmatprep.subr.bf16.mxu0 0
      %908 = vmatpush1.bf16.msra.mxu0 0
      %909 = vmatprep.subr.bf16.mxu0 0
      %910 = vmatpush1.bf16.msra.mxu0 0
      %911 = vmatprep.subr.bf16.mxu0 0
      %912 = vmatpush1.bf16.msra.mxu0 0
      %913 = vmatprep.subr.bf16.mxu0 0
      %914 = vmatpush1.bf16.msra.mxu0 0
      %915 = vmatprep.subr.bf16.mxu0 0
      %916 = vmatpush1.bf16.msra.mxu0 0
      %917 = vmatprep.subr.bf16.mxu0 0
      %918 = vmatpush1.bf16.msra.mxu0 0
      %919 = vmatprep.subr.bf16.mxu0 0
      %920 = vmatpush1.bf16.msra.mxu0 0
      %921 = vmatprep.subr.bf16.mxu0 0
      %922 = vmatpush1.bf16.msra.mxu0 0
      %923 = vmatprep.subr.bf16.mxu0 0
      %924 = vmatpush1.bf16.msra.mxu0 0
      %925 = vmatprep.mubr.bf16.mxu0 0
      %926 = vmatmul.mubr.bf16.gmra.mrb[0].mxu0 %v891
      %v927 = vpop.f32.mrb[0].mxu0
      %v928 = vadd.f32 0.0, %v927
      %v929 = vpop.f32.mrb[0].mxu0
      %v930 = vpop.f32.mrb[0].mxu0
      %v931 = vpop.f32.mrb[0].mxu0
      %932 = vdwg.mxu0
      %v933 = vadd.f32 %v855, %v928
      %s934 = scalar_lea.vmem %s194, 6
      %v935 = vld [vmem:[%s934] sm:$0x3]
      %s936 = scalar_lea.vmem %s1, 288
      %v937 = vld [vmem:[%s936] sm:$0xf]
      %v938 = vld [vmem:[%s936 + $0x4] sm:$0xf]
      %v939 = vld [vmem:[%s936 + $0x8] sm:$0xf]
      %v940 = vld [vmem:[%s936 + $0xc] sm:$0xf]
      %v941 = vld [vmem:[%s936 + $0x10] sm:$0xf]
      %v942 = vld [vmem:[%s936 + $0x14] sm:$0xf]
      %v943 = vld [vmem:[%s936 + $0x18] sm:$0xf]
      %v944 = vld [vmem:[%s936 + $0x1c] sm:$0xf]
      %v953 = vunpack.c.l.b16 %v937
      %v954 = vunpack.c.l.b16 %v938
      %v955 = vunpack.c.l.b16 %v939
      %v956 = vunpack.c.l.b16 %v940
      %v957 = vunpack.c.l.b16 %v941
      %v958 = vunpack.c.l.b16 %v942
      %v959 = vunpack.c.l.b16 %v943
      %v960 = vunpack.c.l.b16 %v944
      %v961 = vpack.c.b16 %v954, %v953
      %v962 = vpack.c.b16 %v956, %v955
      %v963 = vpack.c.b16 %v958, %v957
      %v964 = vpack.c.b16 %v960, %v959
      %v970 = vsel %vm255, %v935, 0
      %972 = vmatprep.subr.bf16.mxu0 0
      %973 = vmatpush1.bf16.msra.mxu0 %v961
      %974 = vmatprep.subr.bf16.mxu0 0
      %975 = vmatpush1.bf16.msra.mxu0 %v962
      %976 = vmatprep.subr.bf16.mxu0 0
      %977 = vmatpush1.bf16.msra.mxu0 %v963
      %978 = vmatprep.subr.bf16.mxu0 0
      %979 = vmatpush1.bf16.msra.mxu0 %v964
      %980 = vmatprep.subr.bf16.mxu0 0
      %981 = vmatpush1.bf16.msra.mxu0 0
      %982 = vmatprep.subr.bf16.mxu0 0
      %983 = vmatpush1.bf16.msra.mxu0 0
      %984 = vmatprep.subr.bf16.mxu0 0
      %985 = vmatpush1.bf16.msra.mxu0 0
      %986 = vmatprep.subr.bf16.mxu0 0
      %987 = vmatpush1.bf16.msra.mxu0 0
      %988 = vmatprep.subr.bf16.mxu0 0
      %989 = vmatpush1.bf16.msra.mxu0 0
      %990 = vmatprep.subr.bf16.mxu0 0
      %991 = vmatpush1.bf16.msra.mxu0 0
      %992 = vmatprep.subr.bf16.mxu0 0
      %993 = vmatpush1.bf16.msra.mxu0 0
      %994 = vmatprep.subr.bf16.mxu0 0
      %995 = vmatpush1.bf16.msra.mxu0 0
      %996 = vmatprep.subr.bf16.mxu0 0
      %997 = vmatpush1.bf16.msra.mxu0 0
      %998 = vmatprep.subr.bf16.mxu0 0
      %999 = vmatpush1.bf16.msra.mxu0 0
      %1000 = vmatprep.subr.bf16.mxu0 0
      %1001 = vmatpush1.bf16.msra.mxu0 0
      %1002 = vmatprep.subr.bf16.mxu0 0
      %1003 = vmatpush1.bf16.msra.mxu0 0
      %1004 = vmatprep.mubr.bf16.mxu0 0
      %1005 = vmatmul.mubr.bf16.gmra.mrb[0].mxu0 %v970
      %v1006 = vpop.f32.mrb[0].mxu0
      %v1007 = vadd.f32 0.0, %v1006
      %v1008 = vpop.f32.mrb[0].mxu0
      %v1009 = vpop.f32.mrb[0].mxu0
      %v1010 = vpop.f32.mrb[0].mxu0
      %1011 = vdwg.mxu0
      %v1012 = vadd.f32 %v933, %v1007
      %s1013 = scalar_lea.vmem %s1, 320
      %v1014 = vld [vmem:[%s1013] sm:$0xf]
      %v1015 = vld [vmem:[%s1013 + $0x4] sm:$0xf]
      %v1016 = vld [vmem:[%s1013 + $0x8] sm:$0xf]
      %v1017 = vld [vmem:[%s1013 + $0xc] sm:$0xf]
      %v1018 = vld [vmem:[%s1013 + $0x10] sm:$0xf]
      %v1019 = vld [vmem:[%s1013 + $0x14] sm:$0xf]
      %v1020 = vld [vmem:[%s1013 + $0x18] sm:$0xf]
      %v1021 = vld [vmem:[%s1013 + $0x1c] sm:$0xf]
      %v1024 = vunpack.c.l.s4 1983009808
      %v1025 = vunpack.c.0.s8 %v1024
      %v1026 = vlaneseq
      %v1027 = vshrl.u32 %v1026, 7
      %v1028 = vsub.s32 %v1025, %v1027
      %v1029 = vrot.slane %v935, %v1028
      %v1031 = vshrl.u32 %v1029, 16
      %v1041 = vunpack.c.l.b16 %v1014
      %v1042 = vunpack.c.l.b16 %v1015
      %v1043 = vunpack.c.l.b16 %v1016
      %v1044 = vunpack.c.l.b16 %v1017
      %v1045 = vunpack.c.l.b16 %v1018
      %v1046 = vunpack.c.l.b16 %v1019
      %v1047 = vunpack.c.l.b16 %v1020
      %v1048 = vunpack.c.l.b16 %v1021
      %v1049 = vpack.c.b16 %v1042, %v1041
      %v1050 = vpack.c.b16 %v1044, %v1043
      %v1051 = vpack.c.b16 %v1046, %v1045
      %v1052 = vpack.c.b16 %v1048, %v1047
      %v1058 = vsel %vm255, %v1031, 0
      %1060 = vmatprep.subr.bf16.mxu0 0
      %1061 = vmatpush1.bf16.msra.mxu0 %v1049
      %1062 = vmatprep.subr.bf16.mxu0 0
      %1063 = vmatpush1.bf16.msra.mxu0 %v1050
      %1064 = vmatprep.subr.bf16.mxu0 0
      %1065 = vmatpush1.bf16.msra.mxu0 %v1051
      %1066 = vmatprep.subr.bf16.mxu0 0
      %1067 = vmatpush1.bf16.msra.mxu0 %v1052
      %1068 = vmatprep.subr.bf16.mxu0 0
      %1069 = vmatpush1.bf16.msra.mxu0 0
      %1070 = vmatprep.subr.bf16.mxu0 0
      %1071 = vmatpush1.bf16.msra.mxu0 0
      %1072 = vmatprep.subr.bf16.mxu0 0
      %1073 = vmatpush1.bf16.msra.mxu0 0
      %1074 = vmatprep.subr.bf16.mxu0 0
      %1075 = vmatpush1.bf16.msra.mxu0 0
      %1076 = vmatprep.subr.bf16.mxu0 0
      %1077 = vmatpush1.bf16.msra.mxu0 0
      %1078 = vmatprep.subr.bf16.mxu0 0
      %1079 = vmatpush1.bf16.msra.mxu0 0
      %1080 = vmatprep.subr.bf16.mxu0 0
      %1081 = vmatpush1.bf16.msra.mxu0 0
      %1082 = vmatprep.subr.bf16.mxu0 0
      %1083 = vmatpush1.bf16.msra.mxu0 0
      %1084 = vmatprep.subr.bf16.mxu0 0
      %1085 = vmatpush1.bf16.msra.mxu0 0
      %1086 = vmatprep.subr.bf16.mxu0 0
      %1087 = vmatpush1.bf16.msra.mxu0 0
      %1088 = vmatprep.subr.bf16.mxu0 0
      %1089 = vmatpush1.bf16.msra.mxu0 0
      %1090 = vmatprep.subr.bf16.mxu0 0
      %1091 = vmatpush1.bf16.msra.mxu0 0
      %1092 = vmatprep.mubr.bf16.mxu0 0
      %1093 = vmatmul.mubr.bf16.gmra.mrb[0].mxu0 %v1058
      %v1094 = vpop.f32.mrb[0].mxu0
      %v1095 = vadd.f32 0.0, %v1094
      %v1096 = vpop.f32.mrb[0].mxu0
      %v1097 = vpop.f32.mrb[0].mxu0
      %v1098 = vpop.f32.mrb[0].mxu0
      %1099 = vdwg.mxu0
      %v1100 = vadd.f32 %v1012, %v1095
      %s1101 = scalar_lea.vmem %s1, 352
      %v1102 = vld [vmem:[%s1101] sm:$0xf]
      %v1103 = vld [vmem:[%s1101 + $0x4] sm:$0xf]
      %v1104 = vld [vmem:[%s1101 + $0x8] sm:$0xf]
      %v1105 = vld [vmem:[%s1101 + $0xc] sm:$0xf]
      %v1106 = vld [vmem:[%s1101 + $0x10] sm:$0xf]
      %v1107 = vld [vmem:[%s1101 + $0x14] sm:$0xf]
      %v1108 = vld [vmem:[%s1101 + $0x18] sm:$0xf]
      %v1109 = vld [vmem:[%s1101 + $0x1c] sm:$0xf]
      %v1110 = vrot.slane %v1029, 1
      %v1119 = vunpack.c.l.b16 %v1102
      %v1120 = vunpack.c.l.b16 %v1103
      %v1121 = vunpack.c.l.b16 %v1104
      %v1122 = vunpack.c.l.b16 %v1105
      %v1123 = vunpack.c.l.b16 %v1106
      %v1124 = vunpack.c.l.b16 %v1107
      %v1125 = vunpack.c.l.b16 %v1108
      %v1126 = vunpack.c.l.b16 %v1109
      %v1127 = vpack.c.b16 %v1120, %v1119
      %v1128 = vpack.c.b16 %v1122, %v1121
      %v1129 = vpack.c.b16 %v1124, %v1123
      %v1130 = vpack.c.b16 %v1126, %v1125
      %v1136 = vsel %vm255, %v1110, 0
      %1138 = vmatprep.subr.bf16.mxu0 0
      %1139 = vmatpush1.bf16.msra.mxu0 %v1127
      %1140 = vmatprep.subr.bf16.mxu0 0
      %1141 = vmatpush1.bf16.msra.mxu0 %v1128
      %1142 = vmatprep.subr.bf16.mxu0 0
      %1143 = vmatpush1.bf16.msra.mxu0 %v1129
      %1144 = vmatprep.subr.bf16.mxu0 0
      %1145 = vmatpush1.bf16.msra.mxu0 %v1130
      %1146 = vmatprep.subr.bf16.mxu0 0
      %1147 = vmatpush1.bf16.msra.mxu0 0
      %1148 = vmatprep.subr.bf16.mxu0 0
      %1149 = vmatpush1.bf16.msra.mxu0 0
      %1150 = vmatprep.subr.bf16.mxu0 0
      %1151 = vmatpush1.bf16.msra.mxu0 0
      %1152 = vmatprep.subr.bf16.mxu0 0
      %1153 = vmatpush1.bf16.msra.mxu0 0
      %1154 = vmatprep.subr.bf16.mxu0 0
      %1155 = vmatpush1.bf16.msra.mxu0 0
      %1156 = vmatprep.subr.bf16.mxu0 0
      %1157 = vmatpush1.bf16.msra.mxu0 0
      %1158 = vmatprep.subr.bf16.mxu0 0
      %1159 = vmatpush1.bf16.msra.mxu0 0
      %1160 = vmatprep.subr.bf16.mxu0 0
      %1161 = vmatpush1.bf16.msra.mxu0 0
      %1162 = vmatprep.subr.bf16.mxu0 0
      %1163 = vmatpush1.bf16.msra.mxu0 0
      %1164 = vmatprep.subr.bf16.mxu0 0
      %1165 = vmatpush1.bf16.msra.mxu0 0
      %1166 = vmatprep.subr.bf16.mxu0 0
      %1167 = vmatpush1.bf16.msra.mxu0 0
      %1168 = vmatprep.subr.bf16.mxu0 0
      %1169 = vmatpush1.bf16.msra.mxu0 0
      %1170 = vmatprep.mubr.bf16.mxu0 0
      %1171 = vmatmul.mubr.bf16.gmra.mrb[0].mxu0 %v1136
      %v1172 = vpop.f32.mrb[0].mxu0
      %v1173 = vadd.f32 0.0, %v1172
      %v1174 = vpop.f32.mrb[0].mxu0
      %v1175 = vpop.f32.mrb[0].mxu0
      %v1176 = vpop.f32.mrb[0].mxu0
      %1177 = vdwg.mxu0
      %v1178 = vadd.f32 %v1100, %v1173
      %s1179 = scalar_lea.vmem %s194, 8
      %v1180 = vld [vmem:[%s1179] sm:$0x3]
      %s1181 = scalar_lea.vmem %s1, 384
      %v1182 = vld [vmem:[%s1181] sm:$0xf]
      %v1183 = vld [vmem:[%s1181 + $0x4] sm:$0xf]
      %v1184 = vld [vmem:[%s1181 + $0x8] sm:$0xf]
      %v1185 = vld [vmem:[%s1181 + $0xc] sm:$0xf]
      %v1186 = vld [vmem:[%s1181 + $0x10] sm:$0xf]
      %v1187 = vld [vmem:[%s1181 + $0x14] sm:$0xf]
      %v1188 = vld [vmem:[%s1181 + $0x18] sm:$0xf]
      %v1189 = vld [vmem:[%s1181 + $0x1c] sm:$0xf]
      %v1198 = vunpack.c.l.b16 %v1182
      %v1199 = vunpack.c.l.b16 %v1183
      %v1200 = vunpack.c.l.b16 %v1184
      %v1201 = vunpack.c.l.b16 %v1185
      %v1202 = vunpack.c.l.b16 %v1186
      %v1203 = vunpack.c.l.b16 %v1187
      %v1204 = vunpack.c.l.b16 %v1188
      %v1205 = vunpack.c.l.b16 %v1189
      %v1206 = vpack.c.b16 %v1199, %v1198
      %v1207 = vpack.c.b16 %v1201, %v1200
      %v1208 = vpack.c.b16 %v1203, %v1202
      %v1209 = vpack.c.b16 %v1205, %v1204
      %v1215 = vsel %vm255, %v1180, 0
      %1217 = vmatprep.subr.bf16.mxu0 0
      %1218 = vmatpush1.bf16.msra.mxu0 %v1206
      %1219 = vmatprep.subr.bf16.mxu0 0
      %1220 = vmatpush1.bf16.msra.mxu0 %v1207
      %1221 = vmatprep.subr.bf16.mxu0 0
      %1222 = vmatpush1.bf16.msra.mxu0 %v1208
      %1223 = vmatprep.subr.bf16.mxu0 0
      %1224 = vmatpush1.bf16.msra.mxu0 %v1209
      %1225 = vmatprep.subr.bf16.mxu0 0
      %1226 = vmatpush1.bf16.msra.mxu0 0
      %1227 = vmatprep.subr.bf16.mxu0 0
      %1228 = vmatpush1.bf16.msra.mxu0 0
      %1229 = vmatprep.subr.bf16.mxu0 0
      %1230 = vmatpush1.bf16.msra.mxu0 0
      %1231 = vmatprep.subr.bf16.mxu0 0
      %1232 = vmatpush1.bf16.msra.mxu0 0
      %1233 = vmatprep.subr.bf16.mxu0 0
      %1234 = vmatpush1.bf16.msra.mxu0 0
      %1235 = vmatprep.subr.bf16.mxu0 0
      %1236 = vmatpush1.bf16.msra.mxu0 0
      %1237 = vmatprep.subr.bf16.mxu0 0
      %1238 = vmatpush1.bf16.msra.mxu0 0
      %1239 = vmatprep.subr.bf16.mxu0 0
      %1240 = vmatpush1.bf16.msra.mxu0 0
      %1241 = vmatprep.subr.bf16.mxu0 0
      %1242 = vmatpush1.bf16.msra.mxu0 0
      %1243 = vmatprep.subr.bf16.mxu0 0
      %1244 = vmatpush1.bf16.msra.mxu0 0
      %1245 = vmatprep.subr.bf16.mxu0 0
      %1246 = vmatpush1.bf16.msra.mxu0 0
      %1247 = vmatprep.subr.bf16.mxu0 0
      %1248 = vmatpush1.bf16.msra.mxu0 0
      %1249 = vmatprep.mubr.bf16.mxu0 0
      %1250 = vmatmul.mubr.bf16.gmra.mrb[0].mxu0 %v1215
      %v1251 = vpop.f32.mrb[0].mxu0
      %v1252 = vadd.f32 0.0, %v1251
      %v1253 = vpop.f32.mrb[0].mxu0
      %v1254 = vpop.f32.mrb[0].mxu0
      %v1255 = vpop.f32.mrb[0].mxu0
      %1256 = vdwg.mxu0
      %v1257 = vadd.f32 %v1178, %v1252
      %s1258 = scalar_lea.vmem %s1, 416
      %v1259 = vld [vmem:[%s1258] sm:$0xf]
      %v1260 = vld [vmem:[%s1258 + $0x4] sm:$0xf]
      %v1261 = vld [vmem:[%s1258 + $0x8] sm:$0xf]
      %v1262 = vld [vmem:[%s1258 + $0xc] sm:$0xf]
      %v1263 = vld [vmem:[%s1258 + $0x10] sm:$0xf]
      %v1264 = vld [vmem:[%s1258 + $0x14] sm:$0xf]
      %v1265 = vld [vmem:[%s1258 + $0x18] sm:$0xf]
      %v1266 = vld [vmem:[%s1258 + $0x1c] sm:$0xf]
      %v1269 = vunpack.c.l.s4 1983009808
      %v1270 = vunpack.c.0.s8 %v1269
      %v1271 = vlaneseq
      %v1272 = vshrl.u32 %v1271, 7
      %v1273 = vsub.s32 %v1270, %v1272
      %v1274 = vrot.slane %v1180, %v1273
      %v1276 = vshrl.u32 %v1274, 16
      %v1286 = vunpack.c.l.b16 %v1259
      %v1287 = vunpack.c.l.b16 %v1260
      %v1288 = vunpack.c.l.b16 %v1261
      %v1289 = vunpack.c.l.b16 %v1262
      %v1290 = vunpack.c.l.b16 %v1263
      %v1291 = vunpack.c.l.b16 %v1264
      %v1292 = vunpack.c.l.b16 %v1265
      %v1293 = vunpack.c.l.b16 %v1266
      %v1294 = vpack.c.b16 %v1287, %v1286
      %v1295 = vpack.c.b16 %v1289, %v1288
      %v1296 = vpack.c.b16 %v1291, %v1290
      %v1297 = vpack.c.b16 %v1293, %v1292
      %v1303 = vsel %vm255, %v1276, 0
      %1305 = vmatprep.subr.bf16.mxu0 0
      %1306 = vmatpush1.bf16.msra.mxu0 %v1294
      %1307 = vmatprep.subr.bf16.mxu0 0
      %1308 = vmatpush1.bf16.msra.mxu0 %v1295
      %1309 = vmatprep.subr.bf16.mxu0 0
      %1310 = vmatpush1.bf16.msra.mxu0 %v1296
      %1311 = vmatprep.subr.bf16.mxu0 0
      %1312 = vmatpush1.bf16.msra.mxu0 %v1297
      %1313 = vmatprep.subr.bf16.mxu0 0
      %1314 = vmatpush1.bf16.msra.mxu0 0
      %1315 = vmatprep.subr.bf16.mxu0 0
      %1316 = vmatpush1.bf16.msra.mxu0 0
      %1317 = vmatprep.subr.bf16.mxu0 0
      %1318 = vmatpush1.bf16.msra.mxu0 0
      %1319 = vmatprep.subr.bf16.mxu0 0
      %1320 = vmatpush1.bf16.msra.mxu0 0
      %1321 = vmatprep.subr.bf16.mxu0 0
      %1322 = vmatpush1.bf16.msra.mxu0 0
      %1323 = vmatprep.subr.bf16.mxu0 0
      %1324 = vmatpush1.bf16.msra.mxu0 0
      %1325 = vmatprep.subr.bf16.mxu0 0
      %1326 = vmatpush1.bf16.msra.mxu0 0
      %1327 = vmatprep.subr.bf16.mxu0 0
      %1328 = vmatpush1.bf16.msra.mxu0 0
      %1329 = vmatprep.subr.bf16.mxu0 0
      %1330 = vmatpush1.bf16.msra.mxu0 0
      %1331 = vmatprep.subr.bf16.mxu0 0
      %1332 = vmatpush1.bf16.msra.mxu0 0
      %1333 = vmatprep.subr.bf16.mxu0 0
      %1334 = vmatpush1.bf16.msra.mxu0 0
      %1335 = vmatprep.subr.bf16.mxu0 0
      %1336 = vmatpush1.bf16.msra.mxu0 0
      %1337 = vmatprep.mubr.bf16.mxu0 0
      %1338 = vmatmul.mubr.bf16.gmra.mrb[0].mxu0 %v1303
      %v1339 = vpop.f32.mrb[0].mxu0
      %v1340 = vadd.f32 0.0, %v1339
      %v1341 = vpop.f32.mrb[0].mxu0
      %v1342 = vpop.f32.mrb[0].mxu0
      %v1343 = vpop.f32.mrb[0].mxu0
      %1344 = vdwg.mxu0
      %v1345 = vadd.f32 %v1257, %v1340
      %s1346 = scalar_lea.vmem %s1, 448
      %v1347 = vld [vmem:[%s1346] sm:$0xf]
      %v1348 = vld [vmem:[%s1346 + $0x4] sm:$0xf]
      %v1349 = vld [vmem:[%s1346 + $0x8] sm:$0xf]
      %v1350 = vld [vmem:[%s1346 + $0xc] sm:$0xf]
      %v1351 = vld [vmem:[%s1346 + $0x10] sm:$0xf]
      %v1352 = vld [vmem:[%s1346 + $0x14] sm:$0xf]
      %v1353 = vld [vmem:[%s1346 + $0x18] sm:$0xf]
      %v1354 = vld [vmem:[%s1346 + $0x1c] sm:$0xf]
      %v1355 = vrot.slane %v1274, 1
      %v1364 = vunpack.c.l.b16 %v1347
      %v1365 = vunpack.c.l.b16 %v1348
      %v1366 = vunpack.c.l.b16 %v1349
      %v1367 = vunpack.c.l.b16 %v1350
      %v1368 = vunpack.c.l.b16 %v1351
      %v1369 = vunpack.c.l.b16 %v1352
      %v1370 = vunpack.c.l.b16 %v1353
      %v1371 = vunpack.c.l.b16 %v1354
      %v1372 = vpack.c.b16 %v1365, %v1364
      %v1373 = vpack.c.b16 %v1367, %v1366
      %v1374 = vpack.c.b16 %v1369, %v1368
      %v1375 = vpack.c.b16 %v1371, %v1370
      %v1381 = vsel %vm255, %v1355, 0
      %1383 = vmatprep.subr.bf16.mxu0 0
      %1384 = vmatpush1.bf16.msra.mxu0 %v1372
      %1385 = vmatprep.subr.bf16.mxu0 0
      %1386 = vmatpush1.bf16.msra.mxu0 %v1373
      %1387 = vmatprep.subr.bf16.mxu0 0
      %1388 = vmatpush1.bf16.msra.mxu0 %v1374
      %1389 = vmatprep.subr.bf16.mxu0 0
      %1390 = vmatpush1.bf16.msra.mxu0 %v1375
      %1391 = vmatprep.subr.bf16.mxu0 0
      %1392 = vmatpush1.bf16.msra.mxu0 0
      %1393 = vmatprep.subr.bf16.mxu0 0
      %1394 = vmatpush1.bf16.msra.mxu0 0
      %1395 = vmatprep.subr.bf16.mxu0 0
      %1396 = vmatpush1.bf16.msra.mxu0 0
      %1397 = vmatprep.subr.bf16.mxu0 0
      %1398 = vmatpush1.bf16.msra.mxu0 0
      %1399 = vmatprep.subr.bf16.mxu0 0
      %1400 = vmatpush1.bf16.msra.mxu0 0
      %1401 = vmatprep.subr.bf16.mxu0 0
      %1402 = vmatpush1.bf16.msra.mxu0 0
      %1403 = vmatprep.subr.bf16.mxu0 0
      %1404 = vmatpush1.bf16.msra.mxu0 0
      %1405 = vmatprep.subr.bf16.mxu0 0
      %1406 = vmatpush1.bf16.msra.mxu0 0
      %1407 = vmatprep.subr.bf16.mxu0 0
      %1408 = vmatpush1.bf16.msra.mxu0 0
      %1409 = vmatprep.subr.bf16.mxu0 0
      %1410 = vmatpush1.bf16.msra.mxu0 0
      %1411 = vmatprep.subr.bf16.mxu0 0
      %1412 = vmatpush1.bf16.msra.mxu0 0
      %1413 = vmatprep.subr.bf16.mxu0 0
      %1414 = vmatpush1.bf16.msra.mxu0 0
      %1415 = vmatprep.mubr.bf16.mxu0 0
      %1416 = vmatmul.mubr.bf16.gmra.mrb[0].mxu0 %v1381
      %v1417 = vpop.f32.mrb[0].mxu0
      %v1418 = vadd.f32 0.0, %v1417
      %v1419 = vpop.f32.mrb[0].mxu0
      %v1420 = vpop.f32.mrb[0].mxu0
      %v1421 = vpop.f32.mrb[0].mxu0
      %1422 = vdwg.mxu0
      %v1423 = vadd.f32 %v1345, %v1418
      %v1424 = vld [vmem:[%s2] sm:$0x1]
      %v1425 = vadd.f32 %v1423, %v1424
      %vm1426 = vcmp.gt.f32.partialorder %v1425, 0.0
      %v1427 = vmul.f32 %v1425, 0.2
      %v1428 = vsel %vm1426, %v1425, %v1427
      %1429 = vst [vmem:[%s200] sm:$0x1] %v1428
      %p1430 = scmp.lt.s32.totalorder %s18, 1
      %s1431 = scalar_select %p1430, %s18, 1
      %p1432 = scmp.lt.s32.totalorder %s19, 0
      %s1433 = scalar_select %p1432, %s19, 0
      %s1434 = sadd.s32 %s1433, %s1431
      %s1435 = scalar_lea.vmem %s3, %s1434
      // Predicated region
      $region33: #{dis_conv_module_forward.7} parent=31 // pred_check
        %p1436 = pneg %p116
      $region34: #{dis_conv_module_forward.7} parent=31 // pred_check_branch
        %1438 = sbr.rel (%p1436) target = $region36
      $region35: #{dis_conv_module_forward.7} parent=31 // pred_region
        _
      $region36: #{dis_conv_module_forward.7} parent=31 // pred_fallthru
        _
    $region32: #{dis_conv_module_forward.7} parent=5 // pred_fallthru
      _
    %p1439 = scmp.le.s32.totalorder 2, %s9
    // Predicated region
    $region37: #{dis_conv_module_forward.7} parent=5 // pred_check
      %p1440 = pneg %p1439
    $region38: #{dis_conv_module_forward.7} parent=5 // pred_check_branch
      %1442 = sbr.rel (%p1440) target = $region40
    $region39: #{dis_conv_module_forward.7} parent=5 // pred_region
      %s1443 = ssub.s32 %s9, 2
      // Predicated region
      $region41: #{dis_conv_module_forward.7} parent=39 // pred_check
        %p1444 = pneg %p122
      $region42: #{dis_conv_module_forward.7} parent=39 // pred_check_branch
        %1446 = sbr.rel (%p1444) target = $region44
      $region43: #{dis_conv_module_forward.7} parent=39 // pred_region
        %p1447 = scmp.lt.s32.totalorder %s20, 1
        %s1448 = scalar_select %p1447, %s20, 1
        %p1449 = scmp.lt.s32.totalorder %s21, 0
        %s1450 = scalar_select %p1449, %s21, 0
        %s1451 = sadd.s32 %s1450, %s1448
        %s1452 = scalar_lea.vmem %s3, %s1451
      $region44: #{dis_conv_module_forward.7} parent=39 // pred_fallthru
        _
    $region40: #{dis_conv_module_forward.7} parent=5 // pred_fallthru
      _
  $region6: #{dis_conv_module_forward.7} parent=0 // loop_footer
    %s13 = sadd.s32 1, %s9
  $region7: #{dis_conv_module_forward.7} parent=0 // loop_footer_branch
    %8 = sbr.rel target = $region3
  $region8: #{dis_conv_module_forward.7} parent=0 // loop_exit
    _

</llo_original>
